<compile_context>
chip_gen: v7x
topology: tpu7x:2x2x1
jax: 0.10.0
libtpu: 0.0.40
codegen_flags: <defaults>
</compile_context>

<pallas_src>
import functools

import jax
import jax.numpy as jnp
from jax.experimental import pallas as pl
from jax.experimental.pallas import tpu as pltpu


def _round_up(x, m):
    return (x + m - 1) // m * m


@functools.lru_cache(maxsize=1)
def _num_parallel_cores():
    # v7x has 2 TensorCores per chip worth feeding through a "parallel" grid
    # axis; v5e/v6e have one, where a single big grid step is cheapest.
    try:
        kind = jax.devices()[0].device_kind.lower()
    except Exception:
        return 1
    return 2 if ("v7" in kind or "7x" in kind) else 1


# ---------------------------------------------------------------------------
# Kernel 1: conv1-as-GEMM + bias + ReLU + 2x2/stride-2 max pool
# ---------------------------------------------------------------------------

def _conv_relu_pool_kernel(cols_ref, w_ref, b_ref, o_ref):
    # cols_ref: (4, TM, Kp) bf16 — slab s is pooling-window position (u, v);
    #           rows within a slab are ordered (batch, pooled_h, pooled_w).
    # w_ref: (Kp, 128) bf16 zero-padded weights; b_ref: (1, 128) f32 bias.
    TM = o_ref.shape[0]
    Kp = w_ref.shape[0]
    cols = cols_ref[...].reshape(4 * TM, Kp)          # leading-dim merge (free)
    g = jnp.dot(cols, w_ref[...], preferred_element_type=jnp.float32)
    m = jnp.maximum(jnp.maximum(g[0:TM], g[TM:2 * TM]),
                    jnp.maximum(g[2 * TM:3 * TM], g[3 * TM:4 * TM]))
    # maxpool(relu(conv + b)) == relu(max_s(conv_s) + b): bias is constant over
    # the 2x2 window and relu is monotone.
    o_ref[...] = jnp.maximum(m + b_ref[...], 0.0).astype(o_ref.dtype)


def conv1_relu_pool(x_nchw, w_mat, b_vec):
    """conv1 (k=5, valid, stride 1) + bias + ReLU + 2x2/2 max pool.

    x_nchw: (B, 3, H, W) float.  Returns (B, H', W', 6) bf16 NHWC, H'=(H-4)//2.
    """
    B, C, H, W = x_nchw.shape
    k = 5
    Ho, Wo = H - k + 1, W - k + 1
    Hp, Wp = Ho // 2, Wo // 2
    M4 = B * Hp * Wp                       # pooled output rows
    K = k * k * C
    Kp = w_mat.shape[0]

    G = _num_parallel_cores()
    if M4 < 32 * G:
        G = 1
    TM = _round_up(-(-M4 // G), 16)        # 16-aligned for bf16 sublane packing
    M4p = TM * G

    # bf16 BEFORE the gather; patches pulled straight from NCHW (no transpose).
    # Feature order within a row is (Cin, kh, kw), matching the prepped weights;
    # the 4 pooling-window positions (u, v) are the outermost slabs.
    xb = x_nchw.astype(jnp.bfloat16)
    patches = [xb[:, :, di:di + Ho, dj:dj + Wo]
               for di in range(k) for dj in range(k)]
    p = jnp.stack(patches, axis=2)                    # (B, C, kk, Ho, Wo)
    p = p.reshape(B, C, k * k, Hp, 2, Wp, 2)          # i=(ph,u), j=(pw,v)
    p = jnp.transpose(p, (4, 6, 0, 3, 5, 1, 2))       # (u, v, B, Hp, Wp, C, kk)
    p = p.reshape(4, M4, K)
    cols = jnp.pad(p, ((0, 0), (0, M4p - M4), (0, Kp - K)))

    out = pl.pallas_call(
        _conv_relu_pool_kernel,
        out_shape=jax.ShapeDtypeStruct((M4p, 128), jnp.bfloat16),
        grid=(G,),
        in_specs=[
            pl.BlockSpec((4, TM, Kp), lambda i: (0, i, 0)),
            pl.BlockSpec((Kp, 128), lambda i: (0, 0)),
            pl.BlockSpec((1, 128), lambda i: (0, 0)),
        ],
        out_specs=pl.BlockSpec((TM, 128), lambda i: (i, 0)),
        compiler_params=pltpu.CompilerParams(
            dimension_semantics=("parallel",)),
        cost_estimate=pl.CostEstimate(
            flops=2 * 4 * M4p * Kp * 128,
            transcendentals=0,
            bytes_accessed=(cols.size * 2 + w_mat.size * 2 + 512
                            + M4p * 128 * 2)),
    )(cols, w_mat, b_vec)

    return out[:M4, :6].reshape(B, Hp, Wp, 6)


# ---------------------------------------------------------------------------
# Kernel 2: fused conv2 (+bias+ReLU+pool) and fc1 -> relu -> ... -> fc4
# ---------------------------------------------------------------------------

def _conv2_fc_head_kernel(cols_ref, w2_ref, b2_ref, w1s_ref, b1_ref,
                          wf2_ref, bf2_ref, wf3_ref, bf3_ref,
                          wf4_ref, bf4_ref, o_ref):
    # cols_ref: (4, M2p, 256) bf16; rows within a slab ordered
    #           ((ph*5+pw)*BP + b) with the batch padded to BP rows / position.
    # w1s_ref:  (25, 128, 128) bf16 — fc1 weight rows for spatial position p.
    BP = o_ref.shape[0]
    M2p = cols_ref.shape[1]
    Kp = w2_ref.shape[0]

    # conv2 GEMM over the 4 pooling slabs as one MXU call; pool = max of slabs.
    cols = cols_ref[...].reshape(4 * M2p, Kp)
    g = jnp.dot(cols, w2_ref[...], preferred_element_type=jnp.float32)
    m = jnp.maximum(jnp.maximum(g[0:M2p], g[M2p:2 * M2p]),
                    jnp.maximum(g[2 * M2p:3 * M2p], g[3 * M2p:4 * M2p]))
    h = jnp.maximum(m + b2_ref[...], 0.0)             # (M2p, 128) f32, pooled act

    # fc1 as an accumulation over the 25 pooled spatial positions: no
    # cross-lane reshape of the conv2 output is needed.
    acc = jnp.zeros((BP, 128), jnp.float32)
    for p in range(25):
        a_p = h[p * BP:(p + 1) * BP, :].astype(jnp.bfloat16)   # aligned 8-row slab
        acc = acc + jnp.dot(a_p, w1s_ref[p], preferred_element_type=jnp.float32)
    h1 = jnp.maximum(acc + b1_ref[...], 0.0)

    h2 = jnp.maximum(
        jnp.dot(h1.astype(jnp.bfloat16), wf2_ref[...],
                preferred_element_type=jnp.float32) + bf2_ref[...], 0.0)
    h3 = jnp.maximum(
        jnp.dot(h2.astype(jnp.bfloat16), wf3_ref[...],
                preferred_element_type=jnp.float32) + bf3_ref[...], 0.0)
    o_ref[...] = (jnp.dot(h3.astype(jnp.bfloat16), wf4_ref[...],
                          preferred_element_type=jnp.float32) + bf4_ref[...])


def conv2_fc_head(a1, prep):
    """Fused conv2+bias+ReLU+pool and the whole FC head.  a1: (B,14,14,6) NHWC."""
    B, H, W, C = a1.shape
    k = 5
    Ho, Wo = H - k + 1, W - k + 1          # 10, 10
    Hp, Wp = Ho // 2, Wo // 2              # 5, 5
    K = k * k * C                          # 150
    Kp = prep["conv2_w"].shape[0]          # 256
    BP = _round_up(max(B, 8), 8)           # per-position batch slab, 8-aligned
    M2 = Hp * Wp * BP                      # 200 at B=2
    M2p = _round_up(M2, 16)                # 208

    # bf16 before the gather (no-op here: a1 is already bf16 from kernel 1).
    a1 = a1.astype(jnp.bfloat16)
    patches = [a1[:, di:di + Ho, dj:dj + Wo, :]
               for di in range(k) for dj in range(k)]
    p = jnp.stack(patches, axis=3)                    # (B, Ho, Wo, kk, C)
    p = p.reshape(B, Hp, 2, Wp, 2, k * k, C)          # i=(ph,u), j=(pw,v)
    p = jnp.transpose(p, (2, 4, 1, 3, 0, 5, 6))       # (u, v, ph, pw, B, kk, C)
    p = p.reshape(4, Hp * Wp, B, K)
    p = jnp.pad(p, ((0, 0), (0, 0), (0, BP - B), (0, 0)))
    p = p.reshape(4, Hp * Wp * BP, K)                 # row = (ph*5+pw)*BP + b
    cols = jnp.pad(p, ((0, 0), (0, M2p - M2), (0, Kp - K)))

    (W1s, B1, W2, B2, W3, B3, W4, B4) = prep["fc"]
    zero2 = lambda i: (0, 0)
    out = pl.pallas_call(
        _conv2_fc_head_kernel,
        out_shape=jax.ShapeDtypeStruct((BP, 128), jnp.float32),
        grid=(1,),
        in_specs=[
            pl.BlockSpec((4, M2p, Kp), lambda i: (0, 0, 0)),
            pl.BlockSpec(prep["conv2_w"].shape, zero2),
            pl.BlockSpec(prep["conv2_b"].shape, zero2),
            pl.BlockSpec(W1s.shape, lambda i: (0, 0, 0)),
            pl.BlockSpec(B1.shape, zero2),
            pl.BlockSpec(W2.shape, zero2), pl.BlockSpec(B2.shape, zero2),
            pl.BlockSpec(W3.shape, zero2), pl.BlockSpec(B3.shape, zero2),
            pl.BlockSpec(W4.shape, zero2), pl.BlockSpec(B4.shape, zero2),
        ],
        out_specs=pl.BlockSpec((BP, 128), zero2),
        compiler_params=pltpu.CompilerParams(
            dimension_semantics=("arbitrary",)),
    )(cols, prep["conv2_w"], prep["conv2_b"],
      W1s, B1, W2, B2, W3, B3, W4, B4)

    return out[:B, :2]


# ---------------------------------------------------------------------------
# Parameter init (torch-style layouts) and one-time kernel-ready preparation
# ---------------------------------------------------------------------------

def init_params(key):
    def uniform(key, shape, fan_in):
        bound = 1.0 / jnp.sqrt(fan_in)
        return jax.random.uniform(key, shape, jnp.float32, -bound, bound)

    keys = jax.random.split(key, 12)
    p = {}
    p["conv1_w"] = uniform(keys[0], (6, 3, 5, 5), 3 * 5 * 5)
    p["conv1_b"] = uniform(keys[1], (6,), 3 * 5 * 5)
    p["conv2_w"] = uniform(keys[2], (16, 6, 5, 5), 6 * 5 * 5)
    p["conv2_b"] = uniform(keys[3], (16,), 6 * 5 * 5)
    p["fc1_w"] = uniform(keys[4], (400, 120), 400)   # row = c*25+ph*5+pw (torch flatten)
    p["fc1_b"] = uniform(keys[5], (120,), 400)
    p["fc2_w"] = uniform(keys[6], (120, 84), 120)
    p["fc2_b"] = uniform(keys[7], (84,), 120)
    p["fc3_w"] = uniform(keys[8], (84, 10), 84)
    p["fc3_b"] = uniform(keys[9], (10,), 84)
    p["fc4_w"] = uniform(keys[10], (10, 2), 10)
    p["fc4_b"] = uniform(keys[11], (2,), 10)
    return p


def _pad_bias(b):
    return jnp.pad(b.astype(jnp.float32), (0, 128 - b.shape[0])).reshape(1, 128)


def _prep_conv(w_oihw, b, row_order):
    O, C, kh, kw = w_oihw.shape
    K = kh * kw * C
    Kp = _round_up(K, 128)
    if row_order == "ckk":      # rows ordered (Cin, kh, kw): NCHW patch gather
        w_mat = jnp.transpose(w_oihw, (1, 2, 3, 0)).reshape(K, O)
    else:                       # rows ordered (kh, kw, Cin): NHWC patch gather
        w_mat = jnp.transpose(w_oihw, (2, 3, 1, 0)).reshape(K, O)
    w_mat = jnp.pad(w_mat, ((0, Kp - K), (0, 128 - O))).astype(jnp.bfloat16)
    return w_mat, _pad_bias(b)


def _prep_fc(w, b):
    K, N = w.shape
    wq = jnp.pad(w, ((0, 128 - K), (0, 128 - N))).astype(jnp.bfloat16)
    return wq, _pad_bias(b)


def prepare_params(p):
    """One-time weight re-layout: 128-lane padding, bf16 cast, per-position fc1 split."""
    c1w, c1b = _prep_conv(p["conv1_w"], p["conv1_b"], "ckk")
    c2w, c2b = _prep_conv(p["conv2_w"], p["conv2_b"], "kkc")
    # fc1 weight split per pooled spatial position p = ph*5+pw:
    # W1s[p, c, n] = fc1_w[c*25 + p, n] (torch NCHW flatten order), zero-padded.
    w1 = jnp.transpose(p["fc1_w"].reshape(16, 25, 120), (1, 0, 2))   # (p, c, n)
    W1s = jnp.pad(w1, ((0, 0), (0, 128 - 16), (0, 128 - 120))).astype(jnp.bfloat16)
    B1 = _pad_bias(p["fc1_b"])
    W2, B2 = _prep_fc(p["fc2_w"], p["fc2_b"])
    W3, B3 = _prep_fc(p["fc3_w"], p["fc3_b"])
    W4, B4 = _prep_fc(p["fc4_w"], p["fc4_b"])
    return {
        "conv1_w": c1w, "conv1_b": c1b,
        "conv2_w": c2w, "conv2_b": c2b,
        "fc": (W1s, B1, W2, B2, W3, B3, W4, B4),
    }


# ---------------------------------------------------------------------------
# Forward pass (mirrors lenet5.forward)
# ---------------------------------------------------------------------------

def lenet5_forward(prep, x_nchw):
    a1 = conv1_relu_pool(x_nchw, prep["conv1_w"], prep["conv1_b"])   # (B,14,14,6) bf16
    return conv2_fc_head(a1, prep)                                   # (B, 2) f32


if __name__ == "__main__":
    key = jax.random.PRNGKey(0)
    pkey, xkey = jax.random.split(key)
    params = init_params(pkey)
    prep = prepare_params(params)

    # LeNet-5 needs 32x32 spatial input so that 16*5*5 = 400 features reach fc1.
    x = jax.random.normal(xkey, (2, 3, 32, 32), jnp.float32)

    fwd = jax.jit(lenet5_forward)
    out = jax.block_until_ready(fwd(prep, x))
    assert out.shape == (2, 2), out.shape
    print("KERNEL_OK")
</pallas_src>

<mosaic_0001>
module attributes {stable_mosaic.version = 11 : i64} {
  func.func @_conv_relu_pool_kernel(%arg0: i32, %arg1: memref<4x400x128xbf16, #tpu.memory_space<vmem>>, %arg2: memref<128x128xbf16, #tpu.memory_space<vmem>>, %arg3: memref<1x128xf32, #tpu.memory_space<vmem>>, %arg4: memref<400x128xbf16, #tpu.memory_space<vmem>>) attributes {dimension_semantics = [#tpu.dimension_semantics<parallel>], iteration_bounds = array<i64: 1>, scalar_prefetch = 0 : i64, scratch_operands = 0 : i64, tpu.core_type = #tpu.core_type<tc>, window_params = [{transform_indices = @transform_0, window_bounds = array<i64: 4, 400, 128>}, {pipeline_mode = #tpu.pipeline_mode<synchronous>, transform_indices = @transform_1, window_bounds = array<i64: 128, 128>}, {pipeline_mode = #tpu.pipeline_mode<synchronous>, transform_indices = @transform_2, window_bounds = array<i64: 1, 128>}, {transform_indices = @transform_3, window_bounds = array<i64: 400, 128>}]} {
    %c0 = arith.constant 0 : index
    %c0_0 = arith.constant 0 : index
    %c0_1 = arith.constant 0 : index
    %0 = vector.load %arg1[%c0, %c0_0, %c0_1] : memref<4x400x128xbf16, #tpu.memory_space<vmem>>, vector<4x400x128xbf16>
    %1 = vector.shape_cast %0 : vector<4x400x128xbf16> to vector<1600x128xbf16>
    %c0_2 = arith.constant 0 : index
    %c0_3 = arith.constant 0 : index
    %2 = vector.load %arg2[%c0_2, %c0_3] : memref<128x128xbf16, #tpu.memory_space<vmem>>, vector<128x128xbf16>
    %cst = arith.constant dense<0.000000e+00> : vector<1600x128xf32>
    %3 = tpu.matmul %1, %2, %cst {dimension_numbers = #tpu.dot_dimension_numbers<[1], [0], [0], [1], [0, 0, 1, 1], [], []>} : vector<1600x128xbf16>, vector<128x128xbf16>, vector<1600x128xf32> -> vector<1600x128xf32>
    %4 = vector.extract_strided_slice %3 {offsets = [0, 0], sizes = [400, 128], strides = [1, 1]} : vector<1600x128xf32> to vector<400x128xf32>
    %5 = vector.extract_strided_slice %3 {offsets = [400, 0], sizes = [400, 128], strides = [1, 1]} : vector<1600x128xf32> to vector<400x128xf32>
    %6 = arith.maximumf %4, %5 : vector<400x128xf32>
    %7 = vector.extract_strided_slice %3 {offsets = [800, 0], sizes = [400, 128], strides = [1, 1]} : vector<1600x128xf32> to vector<400x128xf32>
    %8 = vector.extract_strided_slice %3 {offsets = [1200, 0], sizes = [400, 128], strides = [1, 1]} : vector<1600x128xf32> to vector<400x128xf32>
    %9 = arith.maximumf %7, %8 : vector<400x128xf32>
    %10 = arith.maximumf %6, %9 : vector<400x128xf32>
    %c0_4 = arith.constant 0 : index
    %c0_5 = arith.constant 0 : index
    %11 = vector.load %arg3[%c0_4, %c0_5] : memref<1x128xf32, #tpu.memory_space<vmem>>, vector<1x128xf32>
    %12 = vector.broadcast %11 : vector<1x128xf32> to vector<400x128xf32>
    %13 = arith.addf %10, %12 : vector<400x128xf32>
    %cst_6 = arith.constant 0.000000e+00 : f32
    %14 = vector.broadcast %cst_6 : f32 to vector<400x128xf32>
    %15 = arith.maximumf %13, %14 : vector<400x128xf32>
    %16 = arith.truncf %15 : vector<400x128xf32> to vector<400x128xbf16>
    %c0_7 = arith.constant 0 : index
    %c0_8 = arith.constant 0 : index
    %17 = vector.load %arg4[%c0_7, %c0_8] : memref<400x128xbf16, #tpu.memory_space<vmem>>, vector<400x128xbf16>
    tpu.vector_store %arg4[%c0_7, %c0_8], %16 {strides = array<i32>} : memref<400x128xbf16, #tpu.memory_space<vmem>>, vector<400x128xbf16>,
    return
  }
  func.func @transform_0(%arg0: i32) -> (i32, i32, i32) {
    %c0_i32 = arith.constant 0 : i32
    %c0_i32_0 = arith.constant 0 : i32
    %c0_i32_1 = arith.constant 0 : i32
    return %c0_i32, %arg0, %c0_i32_0 : i32, i32, i32
  }
  func.func @transform_1(%arg0: i32) -> (i32, i32) {
    %c0_i32 = arith.constant 0 : i32
    %c0_i32_0 = arith.constant 0 : i32
    %c0_i32_1 = arith.constant 0 : i32
    return %c0_i32, %c0_i32_0 : i32, i32
  }
  func.func @transform_2(%arg0: i32) -> (i32, i32) {
    %c0_i32 = arith.constant 0 : i32
    %c0_i32_0 = arith.constant 0 : i32
    %c0_i32_1 = arith.constant 0 : i32
    return %c0_i32, %c0_i32_0 : i32, i32
  }
  func.func @transform_3(%arg0: i32) -> (i32, i32) {
    %c0_i32 = arith.constant 0 : i32
    %c0_i32_0 = arith.constant 0 : i32
    return %arg0, %c0_i32 : i32, i32
  }
}

module attributes {stable_mosaic.version = 11 : i64} {
  func.func @_conv2_fc_head_kernel(%arg0: i32, %arg1: memref<4x208x256xbf16, #tpu.memory_space<vmem>>, %arg2: memref<256x128xbf16, #tpu.memory_space<vmem>>, %arg3: memref<1x128xf32, #tpu.memory_space<vmem>>, %arg4: memref<25x128x128xbf16, #tpu.memory_space<vmem>>, %arg5: memref<1x128xf32, #tpu.memory_space<vmem>>, %arg6: memref<128x128xbf16, #tpu.memory_space<vmem>>, %arg7: memref<1x128xf32, #tpu.memory_space<vmem>>, %arg8: memref<128x128xbf16, #tpu.memory_space<vmem>>, %arg9: memref<1x128xf32, #tpu.memory_space<vmem>>, %arg10: memref<128x128xbf16, #tpu.memory_space<vmem>>, %arg11: memref<1x128xf32, #tpu.memory_space<vmem>>, %arg12: memref<8x128xf32, #tpu.memory_space<vmem>>) attributes {dimension_semantics = [#tpu.dimension_semantics<arbitrary>], iteration_bounds = array<i64: 1>, scalar_prefetch = 0 : i64, scratch_operands = 0 : i64, tpu.core_type = #tpu.core_type<tc>, window_params = [{pipeline_mode = #tpu.pipeline_mode<synchronous>, transform_indices = @transform_0, window_bounds = array<i64: 4, 208, 256>}, {pipeline_mode = #tpu.pipeline_mode<synchronous>, transform_indices = @transform_1, window_bounds = array<i64: 256, 128>}, {pipeline_mode = #tpu.pipeline_mode<synchronous>, transform_indices = @transform_2, window_bounds = array<i64: 1, 128>}, {pipeline_mode = #tpu.pipeline_mode<synchronous>, transform_indices = @transform_3, window_bounds = array<i64: 25, 128, 128>}, {pipeline_mode = #tpu.pipeline_mode<synchronous>, transform_indices = @transform_4, window_bounds = array<i64: 1, 128>}, {pipeline_mode = #tpu.pipeline_mode<synchronous>, transform_indices = @transform_5, window_bounds = array<i64: 128, 128>}, {pipeline_mode = #tpu.pipeline_mode<synchronous>, transform_indices = @transform_6, window_bounds = array<i64: 1, 128>}, {pipeline_mode = #tpu.pipeline_mode<synchronous>, transform_indices = @transform_7, window_bounds = array<i64: 128, 128>}, {pipeline_mode = #tpu.pipeline_mode<synchronous>, transform_indices = @transform_8, window_bounds = array<i64: 1, 128>}, {pipeline_mode = #tpu.pipeline_mode<synchronous>, transform_indices = @transform_9, window_bounds = array<i64: 128, 128>}, {pipeline_mode = #tpu.pipeline_mode<synchronous>, transform_indices = @transform_10, window_bounds = array<i64: 1, 128>}, {pipeline_mode = #tpu.pipeline_mode<synchronous>, transform_indices = @transform_11, window_bounds = array<i64: 8, 128>}]} {
    %c0 = arith.constant 0 : index
    %c0_0 = arith.constant 0 : index
    %c0_1 = arith.constant 0 : index
    %0 = vector.load %arg1[%c0, %c0_0, %c0_1] : memref<4x208x256xbf16, #tpu.memory_space<vmem>>, vector<4x208x256xbf16>
    %1 = vector.shape_cast %0 : vector<4x208x256xbf16> to vector<832x256xbf16>
    %c0_2 = arith.constant 0 : index
    %c0_3 = arith.constant 0 : index
    %2 = vector.load %arg2[%c0_2, %c0_3] : memref<256x128xbf16, #tpu.memory_space<vmem>>, vector<256x128xbf16>
    %cst = arith.constant dense<0.000000e+00> : vector<832x128xf32>
    %3 = tpu.matmul %1, %2, %cst {dimension_numbers = #tpu.dot_dimension_numbers<[1], [0], [0], [1], [0, 0, 1, 1], [], []>} : vector<832x256xbf16>, vector<256x128xbf16>, vector<832x128xf32> -> vector<832x128xf32>
    %4 = vector.extract_strided_slice %3 {offsets = [0, 0], sizes = [208, 128], strides = [1, 1]} : vector<832x128xf32> to vector<208x128xf32>
    %5 = vector.extract_strided_slice %3 {offsets = [208, 0], sizes = [208, 128], strides = [1, 1]} : vector<832x128xf32> to vector<208x128xf32>
    %6 = arith.maximumf %4, %5 : vector<208x128xf32>
    %7 = vector.extract_strided_slice %3 {offsets = [416, 0], sizes = [208, 128], strides = [1, 1]} : vector<832x128xf32> to vector<208x128xf32>
    %8 = vector.extract_strided_slice %3 {offsets = [624, 0], sizes = [208, 128], strides = [1, 1]} : vector<832x128xf32> to vector<208x128xf32>
    %9 = arith.maximumf %7, %8 : vector<208x128xf32>
    %10 = arith.maximumf %6, %9 : vector<208x128xf32>
    %c0_4 = arith.constant 0 : index
    %c0_5 = arith.constant 0 : index
    %11 = vector.load %arg3[%c0_4, %c0_5] : memref<1x128xf32, #tpu.memory_space<vmem>>, vector<1x128xf32>
    %12 = vector.broadcast %11 : vector<1x128xf32> to vector<208x128xf32>
    %13 = arith.addf %10, %12 : vector<208x128xf32>
    %cst_6 = arith.constant 0.000000e+00 : f32
    %14 = vector.broadcast %cst_6 : f32 to vector<208x128xf32>
    %15 = arith.maximumf %13, %14 : vector<208x128xf32>
    %cst_7 = arith.constant 0.000000e+00 : f32
    %16 = vector.broadcast %cst_7 : f32 to vector<8x128xf32>
    %17 = vector.extract_strided_slice %15 {offsets = [0, 0], sizes = [8, 128], strides = [1, 1]} : vector<208x128xf32> to vector<8x128xf32>
    %18 = arith.truncf %17 : vector<8x128xf32> to vector<8x128xbf16>
    %c0_8 = arith.constant 0 : index
    %c0_9 = arith.constant 0 : index
    %c0_10 = arith.constant 0 : index
    %19 = vector.load %arg4[%c0_8, %c0_9, %c0_10] : memref<25x128x128xbf16, #tpu.memory_space<vmem>>, vector<1x128x128xbf16>
    %20 = vector.shape_cast %19 : vector<1x128x128xbf16> to vector<128x128xbf16>
    %cst_11 = arith.constant dense<0.000000e+00> : vector<8x128xf32>
    %21 = tpu.matmul %18, %20, %cst_11 {dimension_numbers = #tpu.dot_dimension_numbers<[1], [0], [0], [1], [0, 0, 1, 1], [], []>} : vector<8x128xbf16>, vector<128x128xbf16>, vector<8x128xf32> -> vector<8x128xf32>
    %22 = arith.addf %16, %21 : vector<8x128xf32>
    %23 = vector.extract_strided_slice %15 {offsets = [8, 0], sizes = [8, 128], strides = [1, 1]} : vector<208x128xf32> to vector<8x128xf32>
    %24 = arith.truncf %23 : vector<8x128xf32> to vector<8x128xbf16>
    %c1 = arith.constant 1 : index
    %c0_12 = arith.constant 0 : index
    %c0_13 = arith.constant 0 : index
    %25 = vector.load %arg4[%c1, %c0_12, %c0_13] : memref<25x128x128xbf16, #tpu.memory_space<vmem>>, vector<1x128x128xbf16>
    %26 = vector.shape_cast %25 : vector<1x128x128xbf16> to vector<128x128xbf16>
    %cst_14 = arith.constant dense<0.000000e+00> : vector<8x128xf32>
    %27 = tpu.matmul %24, %26, %cst_14 {dimension_numbers = #tpu.dot_dimension_numbers<[1], [0], [0], [1], [0, 0, 1, 1], [], []>} : vector<8x128xbf16>, vector<128x128xbf16>, vector<8x128xf32> -> vector<8x128xf32>
    %28 = arith.addf %22, %27 : vector<8x128xf32>
    %29 = vector.extract_strided_slice %15 {offsets = [16, 0], sizes = [8, 128], strides = [1, 1]} : vector<208x128xf32> to vector<8x128xf32>
    %30 = arith.truncf %29 : vector<8x128xf32> to vector<8x128xbf16>
    %c2 = arith.constant 2 : index
    %c0_15 = arith.constant 0 : index
    %c0_16 = arith.constant 0 : index
    %31 = vector.load %arg4[%c2, %c0_15, %c0_16] : memref<25x128x128xbf16, #tpu.memory_space<vmem>>, vector<1x128x128xbf16>
    %32 = vector.shape_cast %31 : vector<1x128x128xbf16> to vector<128x128xbf16>
    %cst_17 = arith.constant dense<0.000000e+00> : vector<8x128xf32>
    %33 = tpu.matmul %30, %32, %cst_17 {dimension_numbers = #tpu.dot_dimension_numbers<[1], [0], [0], [1], [0, 0, 1, 1], [], []>} : vector<8x128xbf16>, vector<128x128xbf16>, vector<8x128xf32> -> vector<8x128xf32>
    %34 = arith.addf %28, %33 : vector<8x128xf32>
    %35 = vector.extract_strided_slice %15 {offsets = [24, 0], sizes = [8, 128], strides = [1, 1]} : vector<208x128xf32> to vector<8x128xf32>
    %36 = arith.truncf %35 : vector<8x128xf32> to vector<8x128xbf16>
    %c3 = arith.constant 3 : index
    %c0_18 = arith.constant 0 : index
    %c0_19 = arith.constant 0 : index
    %37 = vector.load %arg4[%c3, %c0_18, %c0_19] : memref<25x128x128xbf16, #tpu.memory_space<vmem>>, vector<1x128x128xbf16>
    %38 = vector.shape_cast %37 : vector<1x128x128xbf16> to vector<128x128xbf16>
    %cst_20 = arith.constant dense<0.000000e+00> : vector<8x128xf32>
    %39 = tpu.matmul %36, %38, %cst_20 {dimension_numbers = #tpu.dot_dimension_numbers<[1], [0], [0], [1], [0, 0, 1, 1], [], []>} : vector<8x128xbf16>, vector<128x128xbf16>, vector<8x128xf32> -> vector<8x128xf32>
    %40 = arith.addf %34, %39 : vector<8x128xf32>
    %41 = vector.extract_strided_slice %15 {offsets = [32, 0], sizes = [8, 128], strides = [1, 1]} : vector<208x128xf32> to vector<8x128xf32>
    %42 = arith.truncf %41 : vector<8x128xf32> to vector<8x128xbf16>
    %c4 = arith.constant 4 : index
    %c0_21 = arith.constant 0 : index
    %c0_22 = arith.constant 0 : index
    %43 = vector.load %arg4[%c4, %c0_21, %c0_22] : memref<25x128x128xbf16, #tpu.memory_space<vmem>>, vector<1x128x128xbf16>
    %44 = vector.shape_cast %43 : vector<1x128x128xbf16> to vector<128x128xbf16>
    %cst_23 = arith.constant dense<0.000000e+00> : vector<8x128xf32>
    %45 = tpu.matmul %42, %44, %cst_23 {dimension_numbers = #tpu.dot_dimension_numbers<[1], [0], [0], [1], [0, 0, 1, 1], [], []>} : vector<8x128xbf16>, vector<128x128xbf16>, vector<8x128xf32> -> vector<8x128xf32>
    %46 = arith.addf %40, %45 : vector<8x128xf32>
    %47 = vector.extract_strided_slice %15 {offsets = [40, 0], sizes = [8, 128], strides = [1, 1]} : vector<208x128xf32> to vector<8x128xf32>
    %48 = arith.truncf %47 : vector<8x128xf32> to vector<8x128xbf16>
    %c5 = arith.constant 5 : index
    %c0_24 = arith.constant 0 : index
    %c0_25 = arith.constant 0 : index
    %49 = vector.load %arg4[%c5, %c0_24, %c0_25] : memref<25x128x128xbf16, #tpu.memory_space<vmem>>, vector<1x128x128xbf16>
    %50 = vector.shape_cast %49 : vector<1x128x128xbf16> to vector<128x128xbf16>
    %cst_26 = arith.constant dense<0.000000e+00> : vector<8x128xf32>
    %51 = tpu.matmul %48, %50, %cst_26 {dimension_numbers = #tpu.dot_dimension_numbers<[1], [0], [0], [1], [0, 0, 1, 1], [], []>} : vector<8x128xbf16>, vector<128x128xbf16>, vector<8x128xf32> -> vector<8x128xf32>
    %52 = arith.addf %46, %51 : vector<8x128xf32>
    %53 = vector.extract_strided_slice %15 {offsets = [48, 0], sizes = [8, 128], strides = [1, 1]} : vector<208x128xf32> to vector<8x128xf32>
    %54 = arith.truncf %53 : vector<8x128xf32> to vector<8x128xbf16>
    %c6 = arith.constant 6 : index
    %c0_27 = arith.constant 0 : index
    %c0_28 = arith.constant 0 : index
    %55 = vector.load %arg4[%c6, %c0_27, %c0_28] : memref<25x128x128xbf16, #tpu.memory_space<vmem>>, vector<1x128x128xbf16>
    %56 = vector.shape_cast %55 : vector<1x128x128xbf16> to vector<128x128xbf16>
    %cst_29 = arith.constant dense<0.000000e+00> : vector<8x128xf32>
    %57 = tpu.matmul %54, %56, %cst_29 {dimension_numbers = #tpu.dot_dimension_numbers<[1], [0], [0], [1], [0, 0, 1, 1], [], []>} : vector<8x128xbf16>, vector<128x128xbf16>, vector<8x128xf32> -> vector<8x128xf32>
    %58 = arith.addf %52, %57 : vector<8x128xf32>
    %59 = vector.extract_strided_slice %15 {offsets = [56, 0], sizes = [8, 128], strides = [1, 1]} : vector<208x128xf32> to vector<8x128xf32>
    %60 = arith.truncf %59 : vector<8x128xf32> to vector<8x128xbf16>
    %c7 = arith.constant 7 : index
    %c0_30 = arith.constant 0 : index
    %c0_31 = arith.constant 0 : index
    %61 = vector.load %arg4[%c7, %c0_30, %c0_31] : memref<25x128x128xbf16, #tpu.memory_space<vmem>>, vector<1x128x128xbf16>
    %62 = vector.shape_cast %61 : vector<1x128x128xbf16> to vector<128x128xbf16>
    %cst_32 = arith.constant dense<0.000000e+00> : vector<8x128xf32>
    %63 = tpu.matmul %60, %62, %cst_32 {dimension_numbers = #tpu.dot_dimension_numbers<[1], [0], [0], [1], [0, 0, 1, 1], [], []>} : vector<8x128xbf16>, vector<128x128xbf16>, vector<8x128xf32> -> vector<8x128xf32>
    %64 = arith.addf %58, %63 : vector<8x128xf32>
    %65 = vector.extract_strided_slice %15 {offsets = [64, 0], sizes = [8, 128], strides = [1, 1]} : vector<208x128xf32> to vector<8x128xf32>
    %66 = arith.truncf %65 : vector<8x128xf32> to vector<8x128xbf16>
    %c8 = arith.constant 8 : index
    %c0_33 = arith.constant 0 : index
    %c0_34 = arith.constant 0 : index
    %67 = vector.load %arg4[%c8, %c0_33, %c0_34] : memref<25x128x128xbf16, #tpu.memory_space<vmem>>, vector<1x128x128xbf16>
    %68 = vector.shape_cast %67 : vector<1x128x128xbf16> to vector<128x128xbf16>
    %cst_35 = arith.constant dense<0.000000e+00> : vector<8x128xf32>
    %69 = tpu.matmul %66, %68, %cst_35 {dimension_numbers = #tpu.dot_dimension_numbers<[1], [0], [0], [1], [0, 0, 1, 1], [], []>} : vector<8x128xbf16>, vector<128x128xbf16>, vector<8x128xf32> -> vector<8x128xf32>
    %70 = arith.addf %64, %69 : vector<8x128xf32>
    %71 = vector.extract_strided_slice %15 {offsets = [72, 0], sizes = [8, 128], strides = [1, 1]} : vector<208x128xf32> to vector<8x128xf32>
    %72 = arith.truncf %71 : vector<8x128xf32> to vector<8x128xbf16>
    %c9 = arith.constant 9 : index
    %c0_36 = arith.constant 0 : index
    %c0_37 = arith.constant 0 : index
    %73 = vector.load %arg4[%c9, %c0_36, %c0_37] : memref<25x128x128xbf16, #tpu.memory_space<vmem>>, vector<1x128x128xbf16>
    %74 = vector.shape_cast %73 : vector<1x128x128xbf16> to vector<128x128xbf16>
    %cst_38 = arith.constant dense<0.000000e+00> : vector<8x128xf32>
    %75 = tpu.matmul %72, %74, %cst_38 {dimension_numbers = #tpu.dot_dimension_numbers<[1], [0], [0], [1], [0, 0, 1, 1], [], []>} : vector<8x128xbf16>, vector<128x128xbf16>, vector<8x128xf32> -> vector<8x128xf32>
    %76 = arith.addf %70, %75 : vector<8x128xf32>
    %77 = vector.extract_strided_slice %15 {offsets = [80, 0], sizes = [8, 128], strides = [1, 1]} : vector<208x128xf32> to vector<8x128xf32>
    %78 = arith.truncf %77 : vector<8x128xf32> to vector<8x128xbf16>
    %c10 = arith.constant 10 : index
    %c0_39 = arith.constant 0 : index
    %c0_40 = arith.constant 0 : index
    %79 = vector.load %arg4[%c10, %c0_39, %c0_40] : memref<25x128x128xbf16, #tpu.memory_space<vmem>>, vector<1x128x128xbf16>
    %80 = vector.shape_cast %79 : vector<1x128x128xbf16> to vector<128x128xbf16>
    %cst_41 = arith.constant dense<0.000000e+00> : vector<8x128xf32>
    %81 = tpu.matmul %78, %80, %cst_41 {dimension_numbers = #tpu.dot_dimension_numbers<[1], [0], [0], [1], [0, 0, 1, 1], [], []>} : vector<8x128xbf16>, vector<128x128xbf16>, vector<8x128xf32> -> vector<8x128xf32>
    %82 = arith.addf %76, %81 : vector<8x128xf32>
    %83 = vector.extract_strided_slice %15 {offsets = [88, 0], sizes = [8, 128], strides = [1, 1]} : vector<208x128xf32> to vector<8x128xf32>
    %84 = arith.truncf %83 : vector<8x128xf32> to vector<8x128xbf16>
    %c11 = arith.constant 11 : index
    %c0_42 = arith.constant 0 : index
    %c0_43 = arith.constant 0 : index
    %85 = vector.load %arg4[%c11, %c0_42, %c0_43] : memref<25x128x128xbf16, #tpu.memory_space<vmem>>, vector<1x128x128xbf16>
    %86 = vector.shape_cast %85 : vector<1x128x128xbf16> to vector<128x128xbf16>
    %cst_44 = arith.constant dense<0.000000e+00> : vector<8x128xf32>
    %87 = tpu.matmul %84, %86, %cst_44 {dimension_numbers = #tpu.dot_dimension_numbers<[1], [0], [0], [1], [0, 0, 1, 1], [], []>} : vector<8x128xbf16>, vector<128x128xbf16>, vector<8x128xf32> -> vector<8x128xf32>
    %88 = arith.addf %82, %87 : vector<8x128xf32>
    %89 = vector.extract_strided_slice %15 {offsets = [96, 0], sizes = [8, 128], strides = [1, 1]} : vector<208x128xf32> to vector<8x128xf32>
    %90 = arith.truncf %89 : vector<8x128xf32> to vector<8x128xbf16>
    %c12 = arith.constant 12 : index
    %c0_45 = arith.constant 0 : index
    %c0_46 = arith.constant 0 : index
    %91 = vector.load %arg4[%c12, %c0_45, %c0_46] : memref<25x128x128xbf16, #tpu.memory_space<vmem>>, vector<1x128x128xbf16>
    %92 = vector.shape_cast %91 : vector<1x128x128xbf16> to vector<128x128xbf16>
    %cst_47 = arith.constant dense<0.000000e+00> : vector<8x128xf32>
    %93 = tpu.matmul %90, %92, %cst_47 {dimension_numbers = #tpu.dot_dimension_numbers<[1], [0], [0], [1], [0, 0, 1, 1], [], []>} : vector<8x128xbf16>, vector<128x128xbf16>, vector<8x128xf32> -> vector<8x128xf32>
    %94 = arith.addf %88, %93 : vector<8x128xf32>
    %95 = vector.extract_strided_slice %15 {offsets = [104, 0], sizes = [8, 128], strides = [1, 1]} : vector<208x128xf32> to vector<8x128xf32>
    %96 = arith.truncf %95 : vector<8x128xf32> to vector<8x128xbf16>
    %c13 = arith.constant 13 : index
    %c0_48 = arith.constant 0 : index
    %c0_49 = arith.constant 0 : index
    %97 = vector.load %arg4[%c13, %c0_48, %c0_49] : memref<25x128x128xbf16, #tpu.memory_space<vmem>>, vector<1x128x128xbf16>
    %98 = vector.shape_cast %97 : vector<1x128x128xbf16> to vector<128x128xbf16>
    %cst_50 = arith.constant dense<0.000000e+00> : vector<8x128xf32>
    %99 = tpu.matmul %96, %98, %cst_50 {dimension_numbers = #tpu.dot_dimension_numbers<[1], [0], [0], [1], [0, 0, 1, 1], [], []>} : vector<8x128xbf16>, vector<128x128xbf16>, vector<8x128xf32> -> vector<8x128xf32>
    %100 = arith.addf %94, %99 : vector<8x128xf32>
    %101 = vector.extract_strided_slice %15 {offsets = [112, 0], sizes = [8, 128], strides = [1, 1]} : vector<208x128xf32> to vector<8x128xf32>
    %102 = arith.truncf %101 : vector<8x128xf32> to vector<8x128xbf16>
    %c14 = arith.constant 14 : index
    %c0_51 = arith.constant 0 : index
    %c0_52 = arith.constant 0 : index
    %103 = vector.load %arg4[%c14, %c0_51, %c0_52] : memref<25x128x128xbf16, #tpu.memory_space<vmem>>, vector<1x128x128xbf16>
    %104 = vector.shape_cast %103 : vector<1x128x128xbf16> to vector<128x128xbf16>
    %cst_53 = arith.constant dense<0.000000e+00> : vector<8x128xf32>
    %105 = tpu.matmul %102, %104, %cst_53 {dimension_numbers = #tpu.dot_dimension_numbers<[1], [0], [0], [1], [0, 0, 1, 1], [], []>} : vector<8x128xbf16>, vector<128x128xbf16>, vector<8x128xf32> -> vector<8x128xf32>
    %106 = arith.addf %100, %105 : vector<8x128xf32>
    %107 = vector.extract_strided_slice %15 {offsets = [120, 0], sizes = [8, 128], strides = [1, 1]} : vector<208x128xf32> to vector<8x128xf32>
    %108 = arith.truncf %107 : vector<8x128xf32> to vector<8x128xbf16>
    %c15 = arith.constant 15 : index
    %c0_54 = arith.constant 0 : index
    %c0_55 = arith.constant 0 : index
    %109 = vector.load %arg4[%c15, %c0_54, %c0_55] : memref<25x128x128xbf16, #tpu.memory_space<vmem>>, vector<1x128x128xbf16>
    %110 = vector.shape_cast %109 : vector<1x128x128xbf16> to vector<128x128xbf16>
    %cst_56 = arith.constant dense<0.000000e+00> : vector<8x128xf32>
    %111 = tpu.matmul %108, %110, %cst_56 {dimension_numbers = #tpu.dot_dimension_numbers<[1], [0], [0], [1], [0, 0, 1, 1], [], []>} : vector<8x128xbf16>, vector<128x128xbf16>, vector<8x128xf32> -> vector<8x128xf32>
    %112 = arith.addf %106, %111 : vector<8x128xf32>
    %113 = vector.extract_strided_slice %15 {offsets = [128, 0], sizes = [8, 128], strides = [1, 1]} : vector<208x128xf32> to vector<8x128xf32>
    %114 = arith.truncf %113 : vector<8x128xf32> to vector<8x128xbf16>
    %c16 = arith.constant 16 : index
    %c0_57 = arith.constant 0 : index
    %c0_58 = arith.constant 0 : index
    %115 = vector.load %arg4[%c16, %c0_57, %c0_58] : memref<25x128x128xbf16, #tpu.memory_space<vmem>>, vector<1x128x128xbf16>
    %116 = vector.shape_cast %115 : vector<1x128x128xbf16> to vector<128x128xbf16>
    %cst_59 = arith.constant dense<0.000000e+00> : vector<8x128xf32>
    %117 = tpu.matmul %114, %116, %cst_59 {dimension_numbers = #tpu.dot_dimension_numbers<[1], [0], [0], [1], [0, 0, 1, 1], [], []>} : vector<8x128xbf16>, vector<128x128xbf16>, vector<8x128xf32> -> vector<8x128xf32>
    %118 = arith.addf %112, %117 : vector<8x128xf32>
    %119 = vector.extract_strided_slice %15 {offsets = [136, 0], sizes = [8, 128], strides = [1, 1]} : vector<208x128xf32> to vector<8x128xf32>
    %120 = arith.truncf %119 : vector<8x128xf32> to vector<8x128xbf16>
    %c17 = arith.constant 17 : index
    %c0_60 = arith.constant 0 : index
    %c0_61 = arith.constant 0 : index
    %121 = vector.load %arg4[%c17, %c0_60, %c0_61] : memref<25x128x128xbf16, #tpu.memory_space<vmem>>, vector<1x128x128xbf16>
    %122 = vector.shape_cast %121 : vector<1x128x128xbf16> to vector<128x128xbf16>
    %cst_62 = arith.constant dense<0.000000e+00> : vector<8x128xf32>
    %123 = tpu.matmul %120, %122, %cst_62 {dimension_numbers = #tpu.dot_dimension_numbers<[1], [0], [0], [1], [0, 0, 1, 1], [], []>} : vector<8x128xbf16>, vector<128x128xbf16>, vector<8x128xf32> -> vector<8x128xf32>
    %124 = arith.addf %118, %123 : vector<8x128xf32>
    %125 = vector.extract_strided_slice %15 {offsets = [144, 0], sizes = [8, 128], strides = [1, 1]} : vector<208x128xf32> to vector<8x128xf32>
    %126 = arith.truncf %125 : vector<8x128xf32> to vector<8x128xbf16>
    %c18 = arith.constant 18 : index
    %c0_63 = arith.constant 0 : index
    %c0_64 = arith.constant 0 : index
    %127 = vector.load %arg4[%c18, %c0_63, %c0_64] : memref<25x128x128xbf16, #tpu.memory_space<vmem>>, vector<1x128x128xbf16>
    %128 = vector.shape_cast %127 : vector<1x128x128xbf16> to vector<128x128xbf16>
    %cst_65 = arith.constant dense<0.000000e+00> : vector<8x128xf32>
    %129 = tpu.matmul %126, %128, %cst_65 {dimension_numbers = #tpu.dot_dimension_numbers<[1], [0], [0], [1], [0, 0, 1, 1], [], []>} : vector<8x128xbf16>, vector<128x128xbf16>, vector<8x128xf32> -> vector<8x128xf32>
    %130 = arith.addf %124, %129 : vector<8x128xf32>
    %131 = vector.extract_strided_slice %15 {offsets = [152, 0], sizes = [8, 128], strides = [1, 1]} : vector<208x128xf32> to vector<8x128xf32>
    %132 = arith.truncf %131 : vector<8x128xf32> to vector<8x128xbf16>
    %c19 = arith.constant 19 : index
    %c0_66 = arith.constant 0 : index
    %c0_67 = arith.constant 0 : index
    %133 = vector.load %arg4[%c19, %c0_66, %c0_67] : memref<25x128x128xbf16, #tpu.memory_space<vmem>>, vector<1x128x128xbf16>
    %134 = vector.shape_cast %133 : vector<1x128x128xbf16> to vector<128x128xbf16>
    %cst_68 = arith.constant dense<0.000000e+00> : vector<8x128xf32>
    %135 = tpu.matmul %132, %134, %cst_68 {dimension_numbers = #tpu.dot_dimension_numbers<[1], [0], [0], [1], [0, 0, 1, 1], [], []>} : vector<8x128xbf16>, vector<128x128xbf16>, vector<8x128xf32> -> vector<8x128xf32>
    %136 = arith.addf %130, %135 : vector<8x128xf32>
    %137 = vector.extract_strided_slice %15 {offsets = [160, 0], sizes = [8, 128], strides = [1, 1]} : vector<208x128xf32> to vector<8x128xf32>
    %138 = arith.truncf %137 : vector<8x128xf32> to vector<8x128xbf16>
    %c20 = arith.constant 20 : index
    %c0_69 = arith.constant 0 : index
    %c0_70 = arith.constant 0 : index
    %139 = vector.load %arg4[%c20, %c0_69, %c0_70] : memref<25x128x128xbf16, #tpu.memory_space<vmem>>, vector<1x128x128xbf16>
    %140 = vector.shape_cast %139 : vector<1x128x128xbf16> to vector<128x128xbf16>
    %cst_71 = arith.constant dense<0.000000e+00> : vector<8x128xf32>
    %141 = tpu.matmul %138, %140, %cst_71 {dimension_numbers = #tpu.dot_dimension_numbers<[1], [0], [0], [1], [0, 0, 1, 1], [], []>} : vector<8x128xbf16>, vector<128x128xbf16>, vector<8x128xf32> -> vector<8x128xf32>
    %142 = arith.addf %136, %141 : vector<8x128xf32>
    %143 = vector.extract_strided_slice %15 {offsets = [168, 0], sizes = [8, 128], strides = [1, 1]} : vector<208x128xf32> to vector<8x128xf32>
    %144 = arith.truncf %143 : vector<8x128xf32> to vector<8x128xbf16>
    %c21 = arith.constant 21 : index
    %c0_72 = arith.constant 0 : index
    %c0_73 = arith.constant 0 : index
    %145 = vector.load %arg4[%c21, %c0_72, %c0_73] : memref<25x128x128xbf16, #tpu.memory_space<vmem>>, vector<1x128x128xbf16>
    %146 = vector.shape_cast %145 : vector<1x128x128xbf16> to vector<128x128xbf16>
    %cst_74 = arith.constant dense<0.000000e+00> : vector<8x128xf32>
    %147 = tpu.matmul %144, %146, %cst_74 {dimension_numbers = #tpu.dot_dimension_numbers<[1], [0], [0], [1], [0, 0, 1, 1], [], []>} : vector<8x128xbf16>, vector<128x128xbf16>, vector<8x128xf32> -> vector<8x128xf32>
    %148 = arith.addf %142, %147 : vector<8x128xf32>
    %149 = vector.extract_strided_slice %15 {offsets = [176, 0], sizes = [8, 128], strides = [1, 1]} : vector<208x128xf32> to vector<8x128xf32>
    %150 = arith.truncf %149 : vector<8x128xf32> to vector<8x128xbf16>
    %c22 = arith.constant 22 : index
    %c0_75 = arith.constant 0 : index
    %c0_76 = arith.constant 0 : index
    %151 = vector.load %arg4[%c22, %c0_75, %c0_76] : memref<25x128x128xbf16, #tpu.memory_space<vmem>>, vector<1x128x128xbf16>
    %152 = vector.shape_cast %151 : vector<1x128x128xbf16> to vector<128x128xbf16>
    %cst_77 = arith.constant dense<0.000000e+00> : vector<8x128xf32>
    %153 = tpu.matmul %150, %152, %cst_77 {dimension_numbers = #tpu.dot_dimension_numbers<[1], [0], [0], [1], [0, 0, 1, 1], [], []>} : vector<8x128xbf16>, vector<128x128xbf16>, vector<8x128xf32> -> vector<8x128xf32>
    %154 = arith.addf %148, %153 : vector<8x128xf32>
    %155 = vector.extract_strided_slice %15 {offsets = [184, 0], sizes = [8, 128], strides = [1, 1]} : vector<208x128xf32> to vector<8x128xf32>
    %156 = arith.truncf %155 : vector<8x128xf32> to vector<8x128xbf16>
    %c23 = arith.constant 23 : index
    %c0_78 = arith.constant 0 : index
    %c0_79 = arith.constant 0 : index
    %157 = vector.load %arg4[%c23, %c0_78, %c0_79] : memref<25x128x128xbf16, #tpu.memory_space<vmem>>, vector<1x128x128xbf16>
    %158 = vector.shape_cast %157 : vector<1x128x128xbf16> to vector<128x128xbf16>
    %cst_80 = arith.constant dense<0.000000e+00> : vector<8x128xf32>
    %159 = tpu.matmul %156, %158, %cst_80 {dimension_numbers = #tpu.dot_dimension_numbers<[1], [0], [0], [1], [0, 0, 1, 1], [], []>} : vector<8x128xbf16>, vector<128x128xbf16>, vector<8x128xf32> -> vector<8x128xf32>
    %160 = arith.addf %154, %159 : vector<8x128xf32>
    %161 = vector.extract_strided_slice %15 {offsets = [192, 0], sizes = [8, 128], strides = [1, 1]} : vector<208x128xf32> to vector<8x128xf32>
    %162 = arith.truncf %161 : vector<8x128xf32> to vector<8x128xbf16>
    %c24 = arith.constant 24 : index
    %c0_81 = arith.constant 0 : index
    %c0_82 = arith.constant 0 : index
    %163 = vector.load %arg4[%c24, %c0_81, %c0_82] : memref<25x128x128xbf16, #tpu.memory_space<vmem>>, vector<1x128x128xbf16>
    %164 = vector.shape_cast %163 : vector<1x128x128xbf16> to vector<128x128xbf16>
    %cst_83 = arith.constant dense<0.000000e+00> : vector<8x128xf32>
    %165 = tpu.matmul %162, %164, %cst_83 {dimension_numbers = #tpu.dot_dimension_numbers<[1], [0], [0], [1], [0, 0, 1, 1], [], []>} : vector<8x128xbf16>, vector<128x128xbf16>, vector<8x128xf32> -> vector<8x128xf32>
    %166 = arith.addf %160, %165 : vector<8x128xf32>
    %c0_84 = arith.constant 0 : index
    %c0_85 = arith.constant 0 : index
    %167 = vector.load %arg5[%c0_84, %c0_85] : memref<1x128xf32, #tpu.memory_space<vmem>>, vector<1x128xf32>
    %168 = vector.broadcast %167 : vector<1x128xf32> to vector<8x128xf32>
    %169 = arith.addf %166, %168 : vector<8x128xf32>
    %cst_86 = arith.constant 0.000000e+00 : f32
    %170 = vector.broadcast %cst_86 : f32 to vector<8x128xf32>
    %171 = arith.maximumf %169, %170 : vector<8x128xf32>
    %172 = arith.truncf %171 : vector<8x128xf32> to vector<8x128xbf16>
    %c0_87 = arith.constant 0 : index
    %c0_88 = arith.constant 0 : index
    %173 = vector.load %arg6[%c0_87, %c0_88] : memref<128x128xbf16, #tpu.memory_space<vmem>>, vector<128x128xbf16>
    %cst_89 = arith.constant dense<0.000000e+00> : vector<8x128xf32>
    %174 = tpu.matmul %172, %173, %cst_89 {dimension_numbers = #tpu.dot_dimension_numbers<[1], [0], [0], [1], [0, 0, 1, 1], [], []>} : vector<8x128xbf16>, vector<128x128xbf16>, vector<8x128xf32> -> vector<8x128xf32>
    %c0_90 = arith.constant 0 : index
    %c0_91 = arith.constant 0 : index
    %175 = vector.load %arg7[%c0_90, %c0_91] : memref<1x128xf32, #tpu.memory_space<vmem>>, vector<1x128xf32>
    %176 = vector.broadcast %175 : vector<1x128xf32> to vector<8x128xf32>
    %177 = arith.addf %174, %176 : vector<8x128xf32>
    %cst_92 = arith.constant 0.000000e+00 : f32
    %178 = vector.broadcast %cst_92 : f32 to vector<8x128xf32>
    %179 = arith.maximumf %177, %178 : vector<8x128xf32>
    %180 = arith.truncf %179 : vector<8x128xf32> to vector<8x128xbf16>
    %c0_93 = arith.constant 0 : index
    %c0_94 = arith.constant 0 : index
    %181 = vector.load %arg8[%c0_93, %c0_94] : memref<128x128xbf16, #tpu.memory_space<vmem>>, vector<128x128xbf16>
    %cst_95 = arith.constant dense<0.000000e+00> : vector<8x128xf32>
    %182 = tpu.matmul %180, %181, %cst_95 {dimension_numbers = #tpu.dot_dimension_numbers<[1], [0], [0], [1], [0, 0, 1, 1], [], []>} : vector<8x128xbf16>, vector<128x128xbf16>, vector<8x128xf32> -> vector<8x128xf32>
    %c0_96 = arith.constant 0 : index
    %c0_97 = arith.constant 0 : index
    %183 = vector.load %arg9[%c0_96, %c0_97] : memref<1x128xf32, #tpu.memory_space<vmem>>, vector<1x128xf32>
    %184 = vector.broadcast %183 : vector<1x128xf32> to vector<8x128xf32>
    %185 = arith.addf %182, %184 : vector<8x128xf32>
    %cst_98 = arith.constant 0.000000e+00 : f32
    %186 = vector.broadcast %cst_98 : f32 to vector<8x128xf32>
    %187 = arith.maximumf %185, %186 : vector<8x128xf32>
    %188 = arith.truncf %187 : vector<8x128xf32> to vector<8x128xbf16>
    %c0_99 = arith.constant 0 : index
    %c0_100 = arith.constant 0 : index
    %189 = vector.load %arg10[%c0_99, %c0_100] : memref<128x128xbf16, #tpu.memory_space<vmem>>, vector<128x128xbf16>
    %cst_101 = arith.constant dense<0.000000e+00> : vector<8x128xf32>
    %190 = tpu.matmul %188, %189, %cst_101 {dimension_numbers = #tpu.dot_dimension_numbers<[1], [0], [0], [1], [0, 0, 1, 1], [], []>} : vector<8x128xbf16>, vector<128x128xbf16>, vector<8x128xf32> -> vector<8x128xf32>
    %c0_102 = arith.constant 0 : index
    %c0_103 = arith.constant 0 : index
    %191 = vector.load %arg11[%c0_102, %c0_103] : memref<1x128xf32, #tpu.memory_space<vmem>>, vector<1x128xf32>
    %192 = vector.broadcast %191 : vector<1x128xf32> to vector<8x128xf32>
    %193 = arith.addf %190, %192 : vector<8x128xf32>
    %c0_104 = arith.constant 0 : index
    %c0_105 = arith.constant 0 : index
    %194 = vector.load %arg12[%c0_104, %c0_105] : memref<8x128xf32, #tpu.memory_space<vmem>>, vector<8x128xf32>
    tpu.vector_store %arg12[%c0_104, %c0_105], %193 {strides = array<i32>} : memref<8x128xf32, #tpu.memory_space<vmem>>, vector<8x128xf32>,
    return
  }
  func.func @transform_0(%arg0: i32) -> (i32, i32, i32) {
    %c0_i32 = arith.constant 0 : i32
    %c0_i32_0 = arith.constant 0 : i32
    %c0_i32_1 = arith.constant 0 : i32
    %c0_i32_2 = arith.constant 0 : i32
    return %c0_i32, %c0_i32_0, %c0_i32_1 : i32, i32, i32
  }
  func.func @transform_1(%arg0: i32) -> (i32, i32) {
    %c0_i32 = arith.constant 0 : i32
    %c0_i32_0 = arith.constant 0 : i32
    %c0_i32_1 = arith.constant 0 : i32
    return %c0_i32, %c0_i32_0 : i32, i32
  }
  func.func @transform_2(%arg0: i32) -> (i32, i32) {
    %c0_i32 = arith.constant 0 : i32
    %c0_i32_0 = arith.constant 0 : i32
    %c0_i32_1 = arith.constant 0 : i32
    return %c0_i32, %c0_i32_0 : i32, i32
  }
  func.func @transform_3(%arg0: i32) -> (i32, i32, i32) {
    %c0_i32 = arith.constant 0 : i32
    %c0_i32_0 = arith.constant 0 : i32
    %c0_i32_1 = arith.constant 0 : i32
    %c0_i32_2 = arith.constant 0 : i32
    return %c0_i32, %c0_i32_0, %c0_i32_1 : i32, i32, i32
  }
  func.func @transform_4(%arg0: i32) -> (i32, i32) {
    %c0_i32 = arith.constant 0 : i32
    %c0_i32_0 = arith.constant 0 : i32
    %c0_i32_1 = arith.constant 0 : i32
    return %c0_i32, %c0_i32_0 : i32, i32
  }
  func.func @transform_5(%arg0: i32) -> (i32, i32) {
    %c0_i32 = arith.constant 0 : i32
    %c0_i32_0 = arith.constant 0 : i32
    %c0_i32_1 = arith.constant 0 : i32
    return %c0_i32, %c0_i32_0 : i32, i32
  }
  func.func @transform_6(%arg0: i32) -> (i32, i32) {
    %c0_i32 = arith.constant 0 : i32
    %c0_i32_0 = arith.constant 0 : i32
    %c0_i32_1 = arith.constant 0 : i32
    return %c0_i32, %c0_i32_0 : i32, i32
  }
  func.func @transform_7(%arg0: i32) -> (i32, i32) {
    %c0_i32 = arith.constant 0 : i32
    %c0_i32_0 = arith.constant 0 : i32
    %c0_i32_1 = arith.constant 0 : i32
    return %c0_i32, %c0_i32_0 : i32, i32
  }
  func.func @transform_8(%arg0: i32) -> (i32, i32) {
    %c0_i32 = arith.constant 0 : i32
    %c0_i32_0 = arith.constant 0 : i32
    %c0_i32_1 = arith.constant 0 : i32
    return %c0_i32, %c0_i32_0 : i32, i32
  }
  func.func @transform_9(%arg0: i32) -> (i32, i32) {
    %c0_i32 = arith.constant 0 : i32
    %c0_i32_0 = arith.constant 0 : i32
    %c0_i32_1 = arith.constant 0 : i32
    return %c0_i32, %c0_i32_0 : i32, i32
  }
  func.func @transform_10(%arg0: i32) -> (i32, i32) {
    %c0_i32 = arith.constant 0 : i32
    %c0_i32_0 = arith.constant 0 : i32
    %c0_i32_1 = arith.constant 0 : i32
    return %c0_i32, %c0_i32_0 : i32, i32
  }
  func.func @transform_11(%arg0: i32) -> (i32, i32) {
    %c0_i32 = arith.constant 0 : i32
    %c0_i32_0 = arith.constant 0 : i32
    %c0_i32_1 = arith.constant 0 : i32
    return %c0_i32, %c0_i32_0 : i32, i32
  }
}

</mosaic_0001>

<llo_original>
// kernel: lenet5_forward.2
$region0: #{lenet5_forward.2}
  #allocation0 [shape = 'u32[]', space=smem, size = 0x4, offset = 0x4, fixed_abs, tag = 'smem constant byte address 0x4 - core index']
  #allocation1 [shape = 'u32[144,128]{1,0:T(1,128)}', space=vmem, size = 0x12000, scoped, tag = 'internal scratch']
  %s0 = inlined_call_operand.vmem [shape: bf16[4,400,128], index: 0, kind: input, shape index: {}]
  %s1 = inlined_call_operand.vmem [shape: bf16[128,128], index: 1, kind: input, shape index: {}]
  %s2 = inlined_call_operand.vmem [shape: f32[1,128], index: 2, kind: input, shape index: {}]
  %s3 = inlined_call_operand.vmem [shape: bf16[400,128], index: 3, kind: output, shape index: {}]
  %s4 = sld [smem:[#allocation0]]
  $region22: #{lenet5_forward.2} parent=0
    _
  %s6 = ssub.s32 1, %s4
  %s7 = scalar_select 0, %s6, %s4
  // Predicated region
  $region2: #{lenet5_forward.2} parent=0 // pred_check
    _
  $region3: #{lenet5_forward.2} parent=0 // pred_check_branch
    %9 = sbr.rel (0) target = $region5
  $region4: #{lenet5_forward.2} parent=0 // pred_region
    _
  $region5: #{lenet5_forward.2} parent=0 // pred_fallthru
    _
  // Predicated region
  $region6: #{lenet5_forward.2} parent=0 // pred_check
    _
  $region7: #{lenet5_forward.2} parent=0 // pred_check_branch
    %11 = sbr.rel (0) target = $region9
  $region8: #{lenet5_forward.2} parent=0 // pred_region
    _
  $region9: #{lenet5_forward.2} parent=0 // pred_fallthru
    _
  // Predicated region
  $region10: #{lenet5_forward.2} parent=0 // pred_check
    _
  $region11: #{lenet5_forward.2} parent=0 // pred_check_branch
    %13 = sbr.rel (0) target = $region13
  $region12: #{lenet5_forward.2} parent=0 // pred_region
    _
  $region13: #{lenet5_forward.2} parent=0 // pred_fallthru
    _
  %v15 = vld [vmem:[%s0] sm:$0xf]
  %v16 = vld [vmem:[%s0 + $0x4] sm:$0xf]
  %v17 = vld [vmem:[%s0 + $0x8] sm:$0xf]
  %v18 = vld [vmem:[%s0 + $0xc] sm:$0xf]
  %v19 = vld [vmem:[%s0 + $0x10] sm:$0xf]
  %v20 = vld [vmem:[%s0 + $0x14] sm:$0xf]
  %v21 = vld [vmem:[%s0 + $0x18] sm:$0xf]
  %v22 = vld [vmem:[%s0 + $0x1c] sm:$0xf]
  %v23 = vld [vmem:[%s0 + $0x20] sm:$0xf]
  %v24 = vld [vmem:[%s0 + $0x24] sm:$0xf]
  %v25 = vld [vmem:[%s0 + $0x28] sm:$0xf]
  %v26 = vld [vmem:[%s0 + $0x2c] sm:$0xf]
  %v27 = vld [vmem:[%s0 + $0x30] sm:$0xf]
  %v28 = vld [vmem:[%s0 + $0x34] sm:$0xf]
  %v29 = vld [vmem:[%s0 + $0x38] sm:$0xf]
  %v30 = vld [vmem:[%s0 + $0x3c] sm:$0xf]
  %v31 = vld [vmem:[%s0 + $0x40] sm:$0xf]
  %v32 = vld [vmem:[%s0 + $0x44] sm:$0xf]
  %v33 = vld [vmem:[%s0 + $0x48] sm:$0xf]
  %v34 = vld [vmem:[%s0 + $0x4c] sm:$0xf]
  %v35 = vld [vmem:[%s0 + $0x50] sm:$0xf]
  %v36 = vld [vmem:[%s0 + $0x54] sm:$0xf]
  %v37 = vld [vmem:[%s0 + $0x58] sm:$0xf]
  %v38 = vld [vmem:[%s0 + $0x5c] sm:$0xf]
  %v39 = vld [vmem:[%s0 + $0x60] sm:$0xf]
  %v40 = vld [vmem:[%s0 + $0x64] sm:$0xf]
  %v41 = vld [vmem:[%s0 + $0x68] sm:$0xf]
  %v42 = vld [vmem:[%s0 + $0x6c] sm:$0xf]
  %v43 = vld [vmem:[%s0 + $0x70] sm:$0xf]
  %v44 = vld [vmem:[%s0 + $0x74] sm:$0xf]
  %v45 = vld [vmem:[%s0 + $0x78] sm:$0xf]
  %v46 = vld [vmem:[%s0 + $0x7c] sm:$0xf]
  %v47 = vld [vmem:[%s0 + $0x80] sm:$0xf]
  %v48 = vld [vmem:[%s0 + $0x84] sm:$0xf]
  %v49 = vld [vmem:[%s0 + $0x88] sm:$0xf]
  %v50 = vld [vmem:[%s0 + $0x8c] sm:$0xf]
  %v51 = vld [vmem:[%s0 + $0x90] sm:$0xf]
  %v52 = vld [vmem:[%s0 + $0x94] sm:$0xf]
  %v53 = vld [vmem:[%s0 + $0x98] sm:$0xf]
  %v54 = vld [vmem:[%s0 + $0x9c] sm:$0xf]
  %v55 = vld [vmem:[%s0 + $0xa0] sm:$0xf]
  %v56 = vld [vmem:[%s0 + $0xa4] sm:$0xf]
  %v57 = vld [vmem:[%s0 + $0xa8] sm:$0xf]
  %v58 = vld [vmem:[%s0 + $0xac] sm:$0xf]
  %v59 = vld [vmem:[%s0 + $0xb0] sm:$0xf]
  %v60 = vld [vmem:[%s0 + $0xb4] sm:$0xf]
  %v61 = vld [vmem:[%s0 + $0xb8] sm:$0xf]
  %v62 = vld [vmem:[%s0 + $0xbc] sm:$0xf]
  %v63 = vld [vmem:[%s0 + $0xc0] sm:$0xf]
  %v64 = vld [vmem:[%s0 + $0xc4] sm:$0xf]
  %v65 = vld [vmem:[%s0 + $0xc8] sm:$0xf]
  %v66 = vld [vmem:[%s0 + $0xcc] sm:$0xf]
  %v67 = vld [vmem:[%s0 + $0xd0] sm:$0xf]
  %v68 = vld [vmem:[%s0 + $0xd4] sm:$0xf]
  %v69 = vld [vmem:[%s0 + $0xd8] sm:$0xf]
  %v70 = vld [vmem:[%s0 + $0xdc] sm:$0xf]
  %v71 = vld [vmem:[%s0 + $0xe0] sm:$0xf]
  %v72 = vld [vmem:[%s0 + $0xe4] sm:$0xf]
  %v73 = vld [vmem:[%s0 + $0xe8] sm:$0xf]
  %v74 = vld [vmem:[%s0 + $0xec] sm:$0xf]
  %v75 = vld [vmem:[%s0 + $0xf0] sm:$0xf]
  %v76 = vld [vmem:[%s0 + $0xf4] sm:$0xf]
  %v77 = vld [vmem:[%s0 + $0xf8] sm:$0xf]
  %v78 = vld [vmem:[%s0 + $0xfc] sm:$0xf]
  %v79 = vld [vmem:[%s0 + $0x100] sm:$0xf]
  %v80 = vld [vmem:[%s0 + $0x104] sm:$0xf]
  %v81 = vld [vmem:[%s0 + $0x108] sm:$0xf]
  %v82 = vld [vmem:[%s0 + $0x10c] sm:$0xf]
  %v83 = vld [vmem:[%s0 + $0x110] sm:$0xf]
  %v84 = vld [vmem:[%s0 + $0x114] sm:$0xf]
  %v85 = vld [vmem:[%s0 + $0x118] sm:$0xf]
  %v86 = vld [vmem:[%s0 + $0x11c] sm:$0xf]
  %v87 = vld [vmem:[%s0 + $0x120] sm:$0xf]
  %v88 = vld [vmem:[%s0 + $0x124] sm:$0xf]
  %v89 = vld [vmem:[%s0 + $0x128] sm:$0xf]
  %v90 = vld [vmem:[%s0 + $0x12c] sm:$0xf]
  %v91 = vld [vmem:[%s0 + $0x130] sm:$0xf]
  %v92 = vld [vmem:[%s0 + $0x134] sm:$0xf]
  %v93 = vld [vmem:[%s0 + $0x138] sm:$0xf]
  %v94 = vld [vmem:[%s0 + $0x13c] sm:$0xf]
  %v95 = vld [vmem:[%s0 + $0x140] sm:$0xf]
  %v96 = vld [vmem:[%s0 + $0x144] sm:$0xf]
  %v97 = vld [vmem:[%s0 + $0x148] sm:$0xf]
  %v98 = vld [vmem:[%s0 + $0x14c] sm:$0xf]
  %v99 = vld [vmem:[%s0 + $0x150] sm:$0xf]
  %v100 = vld [vmem:[%s0 + $0x154] sm:$0xf]
  %v101 = vld [vmem:[%s0 + $0x158] sm:$0xf]
  %v102 = vld [vmem:[%s0 + $0x15c] sm:$0xf]
  %v103 = vld [vmem:[%s0 + $0x160] sm:$0xf]
  %v104 = vld [vmem:[%s0 + $0x164] sm:$0xf]
  %v105 = vld [vmem:[%s0 + $0x168] sm:$0xf]
  %v106 = vld [vmem:[%s0 + $0x16c] sm:$0xf]
  %v107 = vld [vmem:[%s0 + $0x170] sm:$0xf]
  %v108 = vld [vmem:[%s0 + $0x174] sm:$0xf]
  %v109 = vld [vmem:[%s0 + $0x178] sm:$0xf]
  %v110 = vld [vmem:[%s0 + $0x17c] sm:$0xf]
  %v111 = vld [vmem:[%s0 + $0x180] sm:$0xf]
  %v112 = vld [vmem:[%s0 + $0x184] sm:$0xf]
  %v113 = vld [vmem:[%s0 + $0x188] sm:$0xf]
  %v114 = vld [vmem:[%s0 + $0x18c] sm:$0xf]
  %v115 = vld [vmem:[%s0 + $0x190] sm:$0xf]
  %v116 = vld [vmem:[%s0 + $0x194] sm:$0xf]
  %v117 = vld [vmem:[%s0 + $0x198] sm:$0xf]
  %v118 = vld [vmem:[%s0 + $0x19c] sm:$0xf]
  %v119 = vld [vmem:[%s0 + $0x1a0] sm:$0xf]
  %v120 = vld [vmem:[%s0 + $0x1a4] sm:$0xf]
  %v121 = vld [vmem:[%s0 + $0x1a8] sm:$0xf]
  %v122 = vld [vmem:[%s0 + $0x1ac] sm:$0xf]
  %v123 = vld [vmem:[%s0 + $0x1b0] sm:$0xf]
  %v124 = vld [vmem:[%s0 + $0x1b4] sm:$0xf]
  %v125 = vld [vmem:[%s0 + $0x1b8] sm:$0xf]
  %v126 = vld [vmem:[%s0 + $0x1bc] sm:$0xf]
  %v127 = vld [vmem:[%s0 + $0x1c0] sm:$0xf]
  %v128 = vld [vmem:[%s0 + $0x1c4] sm:$0xf]
  %v129 = vld [vmem:[%s0 + $0x1c8] sm:$0xf]
  %v130 = vld [vmem:[%s0 + $0x1cc] sm:$0xf]
  %v131 = vld [vmem:[%s0 + $0x1d0] sm:$0xf]
  %v132 = vld [vmem:[%s0 + $0x1d4] sm:$0xf]
  %v133 = vld [vmem:[%s0 + $0x1d8] sm:$0xf]
  %v134 = vld [vmem:[%s0 + $0x1dc] sm:$0xf]
  %v135 = vld [vmem:[%s0 + $0x1e0] sm:$0xf]
  %v136 = vld [vmem:[%s0 + $0x1e4] sm:$0xf]
  %v137 = vld [vmem:[%s0 + $0x1e8] sm:$0xf]
  %v138 = vld [vmem:[%s0 + $0x1ec] sm:$0xf]
  %v139 = vld [vmem:[%s0 + $0x1f0] sm:$0xf]
  %v140 = vld [vmem:[%s0 + $0x1f4] sm:$0xf]
  %v141 = vld [vmem:[%s0 + $0x1f8] sm:$0xf]
  %v142 = vld [vmem:[%s0 + $0x1fc] sm:$0xf]
  %v143 = vld [vmem:[%s0 + $0x200] sm:$0xf]
  %v144 = vld [vmem:[%s0 + $0x204] sm:$0xf]
  %v145 = vld [vmem:[%s0 + $0x208] sm:$0xf]
  %v146 = vld [vmem:[%s0 + $0x20c] sm:$0xf]
  %v147 = vld [vmem:[%s0 + $0x210] sm:$0xf]
  %v148 = vld [vmem:[%s0 + $0x214] sm:$0xf]
  %v149 = vld [vmem:[%s0 + $0x218] sm:$0xf]
  %v150 = vld [vmem:[%s0 + $0x21c] sm:$0xf]
  %v151 = vld [vmem:[%s0 + $0x220] sm:$0xf]
  %v152 = vld [vmem:[%s0 + $0x224] sm:$0xf]
  %v153 = vld [vmem:[%s0 + $0x228] sm:$0xf]
  %v154 = vld [vmem:[%s0 + $0x22c] sm:$0xf]
  %v155 = vld [vmem:[%s0 + $0x230] sm:$0xf]
  %v156 = vld [vmem:[%s0 + $0x234] sm:$0xf]
  %v157 = vld [vmem:[%s0 + $0x238] sm:$0xf]
  %v158 = vld [vmem:[%s0 + $0x23c] sm:$0xf]
  %v159 = vld [vmem:[%s0 + $0x240] sm:$0xf]
  %v160 = vld [vmem:[%s0 + $0x244] sm:$0xf]
  %v161 = vld [vmem:[%s0 + $0x248] sm:$0xf]
  %v162 = vld [vmem:[%s0 + $0x24c] sm:$0xf]
  %v163 = vld [vmem:[%s0 + $0x250] sm:$0xf]
  %v164 = vld [vmem:[%s0 + $0x254] sm:$0xf]
  %v165 = vld [vmem:[%s0 + $0x258] sm:$0xf]
  %v166 = vld [vmem:[%s0 + $0x25c] sm:$0xf]
  %v167 = vld [vmem:[%s0 + $0x260] sm:$0xf]
  %v168 = vld [vmem:[%s0 + $0x264] sm:$0xf]
  %v169 = vld [vmem:[%s0 + $0x268] sm:$0xf]
  %v170 = vld [vmem:[%s0 + $0x26c] sm:$0xf]
  %v171 = vld [vmem:[%s0 + $0x270] sm:$0xf]
  %v172 = vld [vmem:[%s0 + $0x274] sm:$0xf]
  %v173 = vld [vmem:[%s0 + $0x278] sm:$0xf]
  %v174 = vld [vmem:[%s0 + $0x27c] sm:$0xf]
  %v175 = vld [vmem:[%s0 + $0x280] sm:$0xf]
  %v176 = vld [vmem:[%s0 + $0x284] sm:$0xf]
  %v177 = vld [vmem:[%s0 + $0x288] sm:$0xf]
  %v178 = vld [vmem:[%s0 + $0x28c] sm:$0xf]
  %v179 = vld [vmem:[%s0 + $0x290] sm:$0xf]
  %v180 = vld [vmem:[%s0 + $0x294] sm:$0xf]
  %v181 = vld [vmem:[%s0 + $0x298] sm:$0xf]
  %v182 = vld [vmem:[%s0 + $0x29c] sm:$0xf]
  %v183 = vld [vmem:[%s0 + $0x2a0] sm:$0xf]
  %v184 = vld [vmem:[%s0 + $0x2a4] sm:$0xf]
  %v185 = vld [vmem:[%s0 + $0x2a8] sm:$0xf]
  %v186 = vld [vmem:[%s0 + $0x2ac] sm:$0xf]
  %v187 = vld [vmem:[%s0 + $0x2b0] sm:$0xf]
  %v188 = vld [vmem:[%s0 + $0x2b4] sm:$0xf]
  %v189 = vld [vmem:[%s0 + $0x2b8] sm:$0xf]
  %v190 = vld [vmem:[%s0 + $0x2bc] sm:$0xf]
  %v191 = vld [vmem:[%s0 + $0x2c0] sm:$0xf]
  %v192 = vld [vmem:[%s0 + $0x2c4] sm:$0xf]
  %v193 = vld [vmem:[%s0 + $0x2c8] sm:$0xf]
  %v194 = vld [vmem:[%s0 + $0x2cc] sm:$0xf]
  %v195 = vld [vmem:[%s0 + $0x2d0] sm:$0xf]
  %v196 = vld [vmem:[%s0 + $0x2d4] sm:$0xf]
  %v197 = vld [vmem:[%s0 + $0x2d8] sm:$0xf]
  %v198 = vld [vmem:[%s0 + $0x2dc] sm:$0xf]
  %v199 = vld [vmem:[%s0 + $0x2e0] sm:$0xf]
  %v200 = vld [vmem:[%s0 + $0x2e4] sm:$0xf]
  %v201 = vld [vmem:[%s0 + $0x2e8] sm:$0xf]
  %v202 = vld [vmem:[%s0 + $0x2ec] sm:$0xf]
  %v203 = vld [vmem:[%s0 + $0x2f0] sm:$0xf]
  %v204 = vld [vmem:[%s0 + $0x2f4] sm:$0xf]
  %v205 = vld [vmem:[%s0 + $0x2f8] sm:$0xf]
  %v206 = vld [vmem:[%s0 + $0x2fc] sm:$0xf]
  %v207 = vld [vmem:[%s0 + $0x300] sm:$0xf]
  %v208 = vld [vmem:[%s0 + $0x304] sm:$0xf]
  %v209 = vld [vmem:[%s0 + $0x308] sm:$0xf]
  %v210 = vld [vmem:[%s0 + $0x30c] sm:$0xf]
  %v211 = vld [vmem:[%s0 + $0x310] sm:$0xf]
  %v212 = vld [vmem:[%s0 + $0x314] sm:$0xf]
  %v213 = vld [vmem:[%s0 + $0x318] sm:$0xf]
  %v214 = vld [vmem:[%s0 + $0x31c] sm:$0xf]
  %v215 = vld [vmem:[%s1] sm:$0xf]
  %v216 = vld [vmem:[%s1 + $0x4] sm:$0xf]
  %v217 = vld [vmem:[%s1 + $0x8] sm:$0xf]
  %v218 = vld [vmem:[%s1 + $0xc] sm:$0xf]
  %v219 = vld [vmem:[%s1 + $0x10] sm:$0xf]
  %v220 = vld [vmem:[%s1 + $0x14] sm:$0xf]
  %v221 = vld [vmem:[%s1 + $0x18] sm:$0xf]
  %v222 = vld [vmem:[%s1 + $0x1c] sm:$0xf]
  %v223 = vld [vmem:[%s1 + $0x20] sm:$0xf]
  %v224 = vld [vmem:[%s1 + $0x24] sm:$0xf]
  %v225 = vld [vmem:[%s1 + $0x28] sm:$0xf]
  %v226 = vld [vmem:[%s1 + $0x2c] sm:$0xf]
  %v227 = vld [vmem:[%s1 + $0x30] sm:$0xf]
  %v228 = vld [vmem:[%s1 + $0x34] sm:$0xf]
  %v229 = vld [vmem:[%s1 + $0x38] sm:$0xf]
  %v230 = vld [vmem:[%s1 + $0x3c] sm:$0xf]
  %v431 = vunpack.c.l.b16 %v15
  %v432 = vunpack.c.l.b16 %v16
  %v433 = vunpack.c.l.b16 %v17
  %v434 = vunpack.c.l.b16 %v18
  %v435 = vunpack.c.l.b16 %v19
  %v436 = vunpack.c.l.b16 %v20
  %v437 = vunpack.c.l.b16 %v21
  %v438 = vunpack.c.l.b16 %v22
  %v439 = vunpack.c.l.b16 %v23
  %v440 = vunpack.c.l.b16 %v24
  %v441 = vunpack.c.l.b16 %v25
  %v442 = vunpack.c.l.b16 %v26
  %v443 = vunpack.c.l.b16 %v27
  %v444 = vunpack.c.l.b16 %v28
  %v445 = vunpack.c.l.b16 %v29
  %v446 = vunpack.c.l.b16 %v30
  %v447 = vunpack.c.l.b16 %v31
  %v448 = vunpack.c.l.b16 %v32
  %v449 = vunpack.c.l.b16 %v33
  %v450 = vunpack.c.l.b16 %v34
  %v451 = vunpack.c.l.b16 %v35
  %v452 = vunpack.c.l.b16 %v36
  %v453 = vunpack.c.l.b16 %v37
  %v454 = vunpack.c.l.b16 %v38
  %v455 = vunpack.c.l.b16 %v39
  %v456 = vunpack.c.l.b16 %v40
  %v457 = vunpack.c.l.b16 %v41
  %v458 = vunpack.c.l.b16 %v42
  %v459 = vunpack.c.l.b16 %v43
  %v460 = vunpack.c.l.b16 %v44
  %v461 = vunpack.c.l.b16 %v45
  %v462 = vunpack.c.l.b16 %v46
  %v463 = vunpack.c.l.b16 %v47
  %v464 = vunpack.c.l.b16 %v48
  %v465 = vunpack.c.l.b16 %v49
  %v466 = vunpack.c.l.b16 %v50
  %v467 = vunpack.c.l.b16 %v51
  %v468 = vunpack.c.l.b16 %v52
  %v469 = vunpack.c.l.b16 %v53
  %v470 = vunpack.c.l.b16 %v54
  %v471 = vunpack.c.l.b16 %v55
  %v472 = vunpack.c.l.b16 %v56
  %v473 = vunpack.c.l.b16 %v57
  %v474 = vunpack.c.l.b16 %v58
  %v475 = vunpack.c.l.b16 %v59
  %v476 = vunpack.c.l.b16 %v60
  %v477 = vunpack.c.l.b16 %v61
  %v478 = vunpack.c.l.b16 %v62
  %v479 = vunpack.c.l.b16 %v63
  %v480 = vunpack.c.l.b16 %v64
  %v481 = vunpack.c.l.b16 %v65
  %v482 = vunpack.c.l.b16 %v66
  %v483 = vunpack.c.l.b16 %v67
  %v484 = vunpack.c.l.b16 %v68
  %v485 = vunpack.c.l.b16 %v69
  %v486 = vunpack.c.l.b16 %v70
  %v487 = vunpack.c.l.b16 %v71
  %v488 = vunpack.c.l.b16 %v72
  %v489 = vunpack.c.l.b16 %v73
  %v490 = vunpack.c.l.b16 %v74
  %v491 = vunpack.c.l.b16 %v75
  %v492 = vunpack.c.l.b16 %v76
  %v493 = vunpack.c.l.b16 %v77
  %v494 = vunpack.c.l.b16 %v78
  %v495 = vunpack.c.l.b16 %v79
  %v496 = vunpack.c.l.b16 %v80
  %v497 = vunpack.c.l.b16 %v81
  %v498 = vunpack.c.l.b16 %v82
  %v499 = vunpack.c.l.b16 %v83
  %v500 = vunpack.c.l.b16 %v84
  %v501 = vunpack.c.l.b16 %v85
  %v502 = vunpack.c.l.b16 %v86
  %v503 = vunpack.c.l.b16 %v87
  %v504 = vunpack.c.l.b16 %v88
  %v505 = vunpack.c.l.b16 %v89
  %v506 = vunpack.c.l.b16 %v90
  %v507 = vunpack.c.l.b16 %v91
  %v508 = vunpack.c.l.b16 %v92
  %v509 = vunpack.c.l.b16 %v93
  %v510 = vunpack.c.l.b16 %v94
  %v511 = vunpack.c.l.b16 %v95
  %v512 = vunpack.c.l.b16 %v96
  %v513 = vunpack.c.l.b16 %v97
  %v514 = vunpack.c.l.b16 %v98
  %v515 = vunpack.c.l.b16 %v99
  %v516 = vunpack.c.l.b16 %v100
  %v517 = vunpack.c.l.b16 %v101
  %v518 = vunpack.c.l.b16 %v102
  %v519 = vunpack.c.l.b16 %v103
  %v520 = vunpack.c.l.b16 %v104
  %v521 = vunpack.c.l.b16 %v105
  %v522 = vunpack.c.l.b16 %v106
  %v523 = vunpack.c.l.b16 %v107
  %v524 = vunpack.c.l.b16 %v108
  %v525 = vunpack.c.l.b16 %v109
  %v526 = vunpack.c.l.b16 %v110
  %v527 = vunpack.c.l.b16 %v111
  %v528 = vunpack.c.l.b16 %v112
  %v529 = vunpack.c.l.b16 %v113
  %v530 = vunpack.c.l.b16 %v114
  %v531 = vunpack.c.l.b16 %v115
  %v532 = vunpack.c.l.b16 %v116
  %v533 = vunpack.c.l.b16 %v117
  %v534 = vunpack.c.l.b16 %v118
  %v535 = vunpack.c.l.b16 %v119
  %v536 = vunpack.c.l.b16 %v120
  %v537 = vunpack.c.l.b16 %v121
  %v538 = vunpack.c.l.b16 %v122
  %v539 = vunpack.c.l.b16 %v123
  %v540 = vunpack.c.l.b16 %v124
  %v541 = vunpack.c.l.b16 %v125
  %v542 = vunpack.c.l.b16 %v126
  %v543 = vunpack.c.l.b16 %v127
  %v544 = vunpack.c.l.b16 %v128
  %v545 = vunpack.c.l.b16 %v129
  %v546 = vunpack.c.l.b16 %v130
  %v547 = vunpack.c.l.b16 %v131
  %v548 = vunpack.c.l.b16 %v132
  %v549 = vunpack.c.l.b16 %v133
  %v550 = vunpack.c.l.b16 %v134
  %v551 = vunpack.c.l.b16 %v135
  %v552 = vunpack.c.l.b16 %v136
  %v553 = vunpack.c.l.b16 %v137
  %v554 = vunpack.c.l.b16 %v138
  %v555 = vunpack.c.l.b16 %v139
  %v556 = vunpack.c.l.b16 %v140
  %v557 = vunpack.c.l.b16 %v141
  %v558 = vunpack.c.l.b16 %v142
  %v559 = vunpack.c.l.b16 %v143
  %v560 = vunpack.c.l.b16 %v144
  %v561 = vunpack.c.l.b16 %v145
  %v562 = vunpack.c.l.b16 %v146
  %v563 = vunpack.c.l.b16 %v147
  %v564 = vunpack.c.l.b16 %v148
  %v565 = vunpack.c.l.b16 %v149
  %v566 = vunpack.c.l.b16 %v150
  %v567 = vunpack.c.l.b16 %v151
  %v568 = vunpack.c.l.b16 %v152
  %v569 = vunpack.c.l.b16 %v153
  %v570 = vunpack.c.l.b16 %v154
  %v571 = vunpack.c.l.b16 %v155
  %v572 = vunpack.c.l.b16 %v156
  %v573 = vunpack.c.l.b16 %v157
  %v574 = vunpack.c.l.b16 %v158
  %v575 = vunpack.c.l.b16 %v159
  %v576 = vunpack.c.l.b16 %v160
  %v577 = vunpack.c.l.b16 %v161
  %v578 = vunpack.c.l.b16 %v162
  %v579 = vunpack.c.l.b16 %v163
  %v580 = vunpack.c.l.b16 %v164
  %v581 = vunpack.c.l.b16 %v165
  %v582 = vunpack.c.l.b16 %v166
  %v583 = vunpack.c.l.b16 %v167
  %v584 = vunpack.c.l.b16 %v168
  %v585 = vunpack.c.l.b16 %v169
  %v586 = vunpack.c.l.b16 %v170
  %v587 = vunpack.c.l.b16 %v171
  %v588 = vunpack.c.l.b16 %v172
  %v589 = vunpack.c.l.b16 %v173
  %v590 = vunpack.c.l.b16 %v174
  %v591 = vunpack.c.l.b16 %v175
  %v592 = vunpack.c.l.b16 %v176
  %v593 = vunpack.c.l.b16 %v177
  %v594 = vunpack.c.l.b16 %v178
  %v595 = vunpack.c.l.b16 %v179
  %v596 = vunpack.c.l.b16 %v180
  %v597 = vunpack.c.l.b16 %v181
  %v598 = vunpack.c.l.b16 %v182
  %v599 = vunpack.c.l.b16 %v183
  %v600 = vunpack.c.l.b16 %v184
  %v601 = vunpack.c.l.b16 %v185
  %v602 = vunpack.c.l.b16 %v186
  %v603 = vunpack.c.l.b16 %v187
  %v604 = vunpack.c.l.b16 %v188
  %v605 = vunpack.c.l.b16 %v189
  %v606 = vunpack.c.l.b16 %v190
  %v607 = vunpack.c.l.b16 %v191
  %v608 = vunpack.c.l.b16 %v192
  %v609 = vunpack.c.l.b16 %v193
  %v610 = vunpack.c.l.b16 %v194
  %v611 = vunpack.c.l.b16 %v195
  %v612 = vunpack.c.l.b16 %v196
  %v613 = vunpack.c.l.b16 %v197
  %v614 = vunpack.c.l.b16 %v198
  %v615 = vunpack.c.l.b16 %v199
  %v616 = vunpack.c.l.b16 %v200
  %v617 = vunpack.c.l.b16 %v201
  %v618 = vunpack.c.l.b16 %v202
  %v619 = vunpack.c.l.b16 %v203
  %v620 = vunpack.c.l.b16 %v204
  %v621 = vunpack.c.l.b16 %v205
  %v622 = vunpack.c.l.b16 %v206
  %v623 = vunpack.c.l.b16 %v207
  %v624 = vunpack.c.l.b16 %v208
  %v625 = vunpack.c.l.b16 %v209
  %v626 = vunpack.c.l.b16 %v210
  %v627 = vunpack.c.l.b16 %v211
  %v628 = vunpack.c.l.b16 %v212
  %v629 = vunpack.c.l.b16 %v213
  %v630 = vunpack.c.l.b16 %v214
  %v631 = vpack.c.b16 %v432, %v431
  %v632 = vpack.c.b16 %v434, %v433
  %v633 = vpack.c.b16 %v436, %v435
  %v634 = vpack.c.b16 %v438, %v437
  %v635 = vpack.c.b16 %v440, %v439
  %v636 = vpack.c.b16 %v442, %v441
  %v637 = vpack.c.b16 %v444, %v443
  %v638 = vpack.c.b16 %v446, %v445
  %v639 = vpack.c.b16 %v448, %v447
  %v640 = vpack.c.b16 %v450, %v449
  %v641 = vpack.c.b16 %v452, %v451
  %v642 = vpack.c.b16 %v454, %v453
  %v643 = vpack.c.b16 %v456, %v455
  %v644 = vpack.c.b16 %v458, %v457
  %v645 = vpack.c.b16 %v460, %v459
  %v646 = vpack.c.b16 %v462, %v461
  %v647 = vpack.c.b16 %v464, %v463
  %v648 = vpack.c.b16 %v466, %v465
  %v649 = vpack.c.b16 %v468, %v467
  %v650 = vpack.c.b16 %v470, %v469
  %v651 = vpack.c.b16 %v472, %v471
  %v652 = vpack.c.b16 %v474, %v473
  %v653 = vpack.c.b16 %v476, %v475
  %v654 = vpack.c.b16 %v478, %v477
  %v655 = vpack.c.b16 %v480, %v479
  %v656 = vpack.c.b16 %v482, %v481
  %v657 = vpack.c.b16 %v484, %v483
  %v658 = vpack.c.b16 %v486, %v485
  %v659 = vpack.c.b16 %v488, %v487
  %v660 = vpack.c.b16 %v490, %v489
  %v661 = vpack.c.b16 %v492, %v491
  %v662 = vpack.c.b16 %v494, %v493
  %v663 = vpack.c.b16 %v496, %v495
  %v664 = vpack.c.b16 %v498, %v497
  %v665 = vpack.c.b16 %v500, %v499
  %v666 = vpack.c.b16 %v502, %v501
  %v667 = vpack.c.b16 %v504, %v503
  %v668 = vpack.c.b16 %v506, %v505
  %v669 = vpack.c.b16 %v508, %v507
  %v670 = vpack.c.b16 %v510, %v509
  %v671 = vpack.c.b16 %v512, %v511
  %v672 = vpack.c.b16 %v514, %v513
  %v673 = vpack.c.b16 %v516, %v515
  %v674 = vpack.c.b16 %v518, %v517
  %v675 = vpack.c.b16 %v520, %v519
  %v676 = vpack.c.b16 %v522, %v521
  %v677 = vpack.c.b16 %v524, %v523
  %v678 = vpack.c.b16 %v526, %v525
  %v679 = vpack.c.b16 %v528, %v527
  %v680 = vpack.c.b16 %v530, %v529
  %v681 = vpack.c.b16 %v532, %v531
  %v682 = vpack.c.b16 %v534, %v533
  %v683 = vpack.c.b16 %v536, %v535
  %v684 = vpack.c.b16 %v538, %v537
  %v685 = vpack.c.b16 %v540, %v539
  %v686 = vpack.c.b16 %v542, %v541
  %v687 = vpack.c.b16 %v544, %v543
  %v688 = vpack.c.b16 %v546, %v545
  %v689 = vpack.c.b16 %v548, %v547
  %v690 = vpack.c.b16 %v550, %v549
  %v691 = vpack.c.b16 %v552, %v551
  %v692 = vpack.c.b16 %v554, %v553
  %v693 = vpack.c.b16 %v556, %v555
  %v694 = vpack.c.b16 %v558, %v557
  %v695 = vpack.c.b16 %v560, %v559
  %v696 = vpack.c.b16 %v562, %v561
  %v697 = vpack.c.b16 %v564, %v563
  %v698 = vpack.c.b16 %v566, %v565
  %v699 = vpack.c.b16 %v568, %v567
  %v700 = vpack.c.b16 %v570, %v569
  %v701 = vpack.c.b16 %v572, %v571
  %v702 = vpack.c.b16 %v574, %v573
  %v703 = vpack.c.b16 %v576, %v575
  %v704 = vpack.c.b16 %v578, %v577
  %v705 = vpack.c.b16 %v580, %v579
  %v706 = vpack.c.b16 %v582, %v581
  %v707 = vpack.c.b16 %v584, %v583
  %v708 = vpack.c.b16 %v586, %v585
  %v709 = vpack.c.b16 %v588, %v587
  %v710 = vpack.c.b16 %v590, %v589
  %v711 = vpack.c.b16 %v592, %v591
  %v712 = vpack.c.b16 %v594, %v593
  %v713 = vpack.c.b16 %v596, %v595
  %v714 = vpack.c.b16 %v598, %v597
  %v715 = vpack.c.b16 %v600, %v599
  %v716 = vpack.c.b16 %v602, %v601
  %v717 = vpack.c.b16 %v604, %v603
  %v718 = vpack.c.b16 %v606, %v605
  %v719 = vpack.c.b16 %v608, %v607
  %v720 = vpack.c.b16 %v610, %v609
  %v721 = vpack.c.b16 %v612, %v611
  %v722 = vpack.c.b16 %v614, %v613
  %v723 = vpack.c.b16 %v616, %v615
  %v724 = vpack.c.b16 %v618, %v617
  %v725 = vpack.c.b16 %v620, %v619
  %v726 = vpack.c.b16 %v622, %v621
  %v727 = vpack.c.b16 %v624, %v623
  %v728 = vpack.c.b16 %v626, %v625
  %v729 = vpack.c.b16 %v628, %v627
  %v730 = vpack.c.b16 %v630, %v629
  %v847 = vunpack.c.l.b16 %v215
  %v848 = vunpack.c.l.b16 %v216
  %v849 = vunpack.c.l.b16 %v217
  %v850 = vunpack.c.l.b16 %v218
  %v851 = vunpack.c.l.b16 %v219
  %v852 = vunpack.c.l.b16 %v220
  %v853 = vunpack.c.l.b16 %v221
  %v854 = vunpack.c.l.b16 %v222
  %v855 = vunpack.c.l.b16 %v223
  %v856 = vunpack.c.l.b16 %v224
  %v857 = vunpack.c.l.b16 %v225
  %v858 = vunpack.c.l.b16 %v226
  %v859 = vunpack.c.l.b16 %v227
  %v860 = vunpack.c.l.b16 %v228
  %v861 = vunpack.c.l.b16 %v229
  %v862 = vunpack.c.l.b16 %v230
  %v863 = vpack.c.b16 %v848, %v847
  %v864 = vpack.c.b16 %v850, %v849
  %v865 = vpack.c.b16 %v852, %v851
  %v866 = vpack.c.b16 %v854, %v853
  %v867 = vpack.c.b16 %v856, %v855
  %v868 = vpack.c.b16 %v858, %v857
  %v869 = vpack.c.b16 %v860, %v859
  %v870 = vpack.c.b16 %v862, %v861
  %879 = vmatprep.subr.bf16.mxu0 0
  %880 = vmatpush1.bf16.msra.mxu0 %v863
  %881 = vmatprep.subr.bf16.mxu0 0
  %882 = vmatpush1.bf16.msra.mxu0 %v864
  %883 = vmatprep.subr.bf16.mxu0 0
  %884 = vmatpush1.bf16.msra.mxu0 %v865
  %885 = vmatprep.subr.bf16.mxu0 0
  %886 = vmatpush1.bf16.msra.mxu0 %v866
  %887 = vmatprep.subr.bf16.mxu0 0
  %888 = vmatpush1.bf16.msra.mxu0 %v867
  %889 = vmatprep.subr.bf16.mxu0 0
  %890 = vmatpush1.bf16.msra.mxu0 %v868
  %891 = vmatprep.subr.bf16.mxu0 0
  %892 = vmatpush1.bf16.msra.mxu0 %v869
  %893 = vmatprep.subr.bf16.mxu0 0
  %894 = vmatpush1.bf16.msra.mxu0 %v870
  %895 = vmatprep.subr.bf16.mxu0 0
  %896 = vmatpush1.bf16.msra.mxu0 0
  %897 = vmatprep.subr.bf16.mxu0 0
  %898 = vmatpush1.bf16.msra.mxu0 0
  %899 = vmatprep.subr.bf16.mxu0 0
  %900 = vmatpush1.bf16.msra.mxu0 0
  %901 = vmatprep.subr.bf16.mxu0 0
  %902 = vmatpush1.bf16.msra.mxu0 0
  %903 = vmatprep.subr.bf16.mxu0 0
  %904 = vmatpush1.bf16.msra.mxu0 0
  %905 = vmatprep.subr.bf16.mxu0 0
  %906 = vmatpush1.bf16.msra.mxu0 0
  %907 = vmatprep.subr.bf16.mxu0 0
  %908 = vmatpush1.bf16.msra.mxu0 0
  %909 = vmatprep.subr.bf16.mxu0 0
  %910 = vmatpush1.bf16.msra.mxu0 0
  %911 = vmatprep.mubr.bf16.mxu0 0
  %912 = vmatmul.mubr.bf16.gmra.mrb[0].mxu0 %v631
  %v913 = vpop.f32.mrb[0].mxu0
  %v914 = vadd.f32 0.0, %v913
  %v915 = vpop.f32.mrb[0].mxu0
  %v916 = vpop.f32.mrb[0].mxu0
  %v917 = vadd.f32 0.0, %v916
  %v918 = vpop.f32.mrb[0].mxu0
  %919 = vmatprep.mubr.bf16.mxu0 0
  %920 = vmatmul.mubr.bf16.gmra.mrb[0].mxu0 %v632
  %v921 = vpop.f32.mrb[0].mxu0
  %v922 = vadd.f32 0.0, %v921
  %v923 = vpop.f32.mrb[0].mxu0
  %v924 = vpop.f32.mrb[0].mxu0
  %v925 = vadd.f32 0.0, %v924
  %v926 = vpop.f32.mrb[0].mxu0
  %927 = vmatprep.mubr.bf16.mxu0 0
  %928 = vmatmul.mubr.bf16.gmra.mrb[0].mxu0 %v633
  %v929 = vpop.f32.mrb[0].mxu0
  %v930 = vadd.f32 0.0, %v929
  %v931 = vpop.f32.mrb[0].mxu0
  %v932 = vpop.f32.mrb[0].mxu0
  %v933 = vadd.f32 0.0, %v932
  %v934 = vpop.f32.mrb[0].mxu0
  %935 = vmatprep.mubr.bf16.mxu0 0
  %936 = vmatmul.mubr.bf16.gmra.mrb[0].mxu0 %v634
  %v937 = vpop.f32.mrb[0].mxu0
  %v938 = vadd.f32 0.0, %v937
  %v939 = vpop.f32.mrb[0].mxu0
  %v940 = vpop.f32.mrb[0].mxu0
  %v941 = vadd.f32 0.0, %v940
  %v942 = vpop.f32.mrb[0].mxu0
  %943 = vmatprep.mubr.bf16.mxu0 0
  %944 = vmatmul.mubr.bf16.gmra.mrb[0].mxu0 %v635
  %v945 = vpop.f32.mrb[0].mxu0
  %v946 = vadd.f32 0.0, %v945
  %v947 = vpop.f32.mrb[0].mxu0
  %v948 = vpop.f32.mrb[0].mxu0
  %v949 = vadd.f32 0.0, %v948
  %v950 = vpop.f32.mrb[0].mxu0
  %951 = vmatprep.mubr.bf16.mxu0 0
  %952 = vmatmul.mubr.bf16.gmra.mrb[0].mxu0 %v636
  %v953 = vpop.f32.mrb[0].mxu0
  %v954 = vadd.f32 0.0, %v953
  %v955 = vpop.f32.mrb[0].mxu0
  %v956 = vpop.f32.mrb[0].mxu0
  %v957 = vadd.f32 0.0, %v956
  %v958 = vpop.f32.mrb[0].mxu0
  %959 = vmatprep.mubr.bf16.mxu0 0
  %960 = vmatmul.mubr.bf16.gmra.mrb[0].mxu0 %v637
  %v961 = vpop.f32.mrb[0].mxu0
  %v962 = vadd.f32 0.0, %v961
  %v963 = vpop.f32.mrb[0].mxu0
  %v964 = vpop.f32.mrb[0].mxu0
  %v965 = vadd.f32 0.0, %v964
  %v966 = vpop.f32.mrb[0].mxu0
  %967 = vmatprep.mubr.bf16.mxu0 0
  %968 = vmatmul.mubr.bf16.gmra.mrb[0].mxu0 %v638
  %v969 = vpop.f32.mrb[0].mxu0
  %v970 = vadd.f32 0.0, %v969
  %v971 = vpop.f32.mrb[0].mxu0
  %v972 = vpop.f32.mrb[0].mxu0
  %v973 = vadd.f32 0.0, %v972
  %v974 = vpop.f32.mrb[0].mxu0
  %975 = vmatprep.mubr.bf16.mxu0 0
  %976 = vmatmul.mubr.bf16.gmra.mrb[0].mxu0 %v639
  %v977 = vpop.f32.mrb[0].mxu0
  %v978 = vadd.f32 0.0, %v977
  %v979 = vpop.f32.mrb[0].mxu0
  %v980 = vpop.f32.mrb[0].mxu0
  %v981 = vadd.f32 0.0, %v980
  %v982 = vpop.f32.mrb[0].mxu0
  %983 = vmatprep.mubr.bf16.mxu0 0
  %984 = vmatmul.mubr.bf16.gmra.mrb[0].mxu0 %v640
  %v985 = vpop.f32.mrb[0].mxu0
  %v986 = vadd.f32 0.0, %v985
  %v987 = vpop.f32.mrb[0].mxu0
  %v988 = vpop.f32.mrb[0].mxu0
  %v989 = vadd.f32 0.0, %v988
  %v990 = vpop.f32.mrb[0].mxu0
  %991 = vmatprep.mubr.bf16.mxu0 0
  %992 = vmatmul.mubr.bf16.gmra.mrb[0].mxu0 %v641
  %v993 = vpop.f32.mrb[0].mxu0
  %v994 = vadd.f32 0.0, %v993
  %v995 = vpop.f32.mrb[0].mxu0
  %v996 = vpop.f32.mrb[0].mxu0
  %v997 = vadd.f32 0.0, %v996
  %v998 = vpop.f32.mrb[0].mxu0
  %999 = vmatprep.mubr.bf16.mxu0 0
  %1000 = vmatmul.mubr.bf16.gmra.mrb[0].mxu0 %v642
  %v1001 = vpop.f32.mrb[0].mxu0
  %v1002 = vadd.f32 0.0, %v1001
  %v1003 = vpop.f32.mrb[0].mxu0
  %v1004 = vpop.f32.mrb[0].mxu0
  %v1005 = vadd.f32 0.0, %v1004
  %v1006 = vpop.f32.mrb[0].mxu0
  %1007 = vmatprep.mubr.bf16.mxu0 0
  %1008 = vmatmul.mubr.bf16.gmra.mrb[0].mxu0 %v643
  %v1009 = vpop.f32.mrb[0].mxu0
  %v1010 = vadd.f32 0.0, %v1009
  %v1011 = vpop.f32.mrb[0].mxu0
  %v1012 = vpop.f32.mrb[0].mxu0
  %v1013 = vadd.f32 0.0, %v1012
  %v1014 = vpop.f32.mrb[0].mxu0
  %1015 = vmatprep.mubr.bf16.mxu0 0
  %1016 = vmatmul.mubr.bf16.gmra.mrb[0].mxu0 %v644
  %v1017 = vpop.f32.mrb[0].mxu0
  %v1018 = vadd.f32 0.0, %v1017
  %v1019 = vpop.f32.mrb[0].mxu0
  %v1020 = vpop.f32.mrb[0].mxu0
  %v1021 = vadd.f32 0.0, %v1020
  %v1022 = vpop.f32.mrb[0].mxu0
  %1023 = vmatprep.mubr.bf16.mxu0 0
  %1024 = vmatmul.mubr.bf16.gmra.mrb[0].mxu0 %v645
  %v1025 = vpop.f32.mrb[0].mxu0
  %v1026 = vadd.f32 0.0, %v1025
  %v1027 = vpop.f32.mrb[0].mxu0
  %v1028 = vpop.f32.mrb[0].mxu0
  %v1029 = vadd.f32 0.0, %v1028
  %v1030 = vpop.f32.mrb[0].mxu0
  %1031 = vmatprep.mubr.bf16.mxu0 0
  %1032 = vmatmul.mubr.bf16.gmra.mrb[0].mxu0 %v646
  %v1033 = vpop.f32.mrb[0].mxu0
  %v1034 = vadd.f32 0.0, %v1033
  %v1035 = vpop.f32.mrb[0].mxu0
  %v1036 = vpop.f32.mrb[0].mxu0
  %v1037 = vadd.f32 0.0, %v1036
  %v1038 = vpop.f32.mrb[0].mxu0
  %1039 = vmatprep.mubr.bf16.mxu0 0
  %1040 = vmatmul.mubr.bf16.gmra.mrb[0].mxu0 %v647
  %v1041 = vpop.f32.mrb[0].mxu0
  %v1042 = vadd.f32 0.0, %v1041
  %v1043 = vpop.f32.mrb[0].mxu0
  %v1044 = vpop.f32.mrb[0].mxu0
  %v1045 = vadd.f32 0.0, %v1044
  %v1046 = vpop.f32.mrb[0].mxu0
  %1047 = vmatprep.mubr.bf16.mxu0 0
  %1048 = vmatmul.mubr.bf16.gmra.mrb[0].mxu0 %v648
  %v1049 = vpop.f32.mrb[0].mxu0
  %v1050 = vadd.f32 0.0, %v1049
  %v1051 = vpop.f32.mrb[0].mxu0
  %v1052 = vpop.f32.mrb[0].mxu0
  %v1053 = vadd.f32 0.0, %v1052
  %v1054 = vpop.f32.mrb[0].mxu0
  %1055 = vmatprep.mubr.bf16.mxu0 0
  %1056 = vmatmul.mubr.bf16.gmra.mrb[0].mxu0 %v649
  %v1057 = vpop.f32.mrb[0].mxu0
  %v1058 = vadd.f32 0.0, %v1057
  %v1059 = vpop.f32.mrb[0].mxu0
  %v1060 = vpop.f32.mrb[0].mxu0
  %v1061 = vadd.f32 0.0, %v1060
  %v1062 = vpop.f32.mrb[0].mxu0
  %1063 = vmatprep.mubr.bf16.mxu0 0
  %1064 = vmatmul.mubr.bf16.gmra.mrb[0].mxu0 %v650
  %v1065 = vpop.f32.mrb[0].mxu0
  %v1066 = vadd.f32 0.0, %v1065
  %v1067 = vpop.f32.mrb[0].mxu0
  %v1068 = vpop.f32.mrb[0].mxu0
  %v1069 = vadd.f32 0.0, %v1068
  %v1070 = vpop.f32.mrb[0].mxu0
  %1071 = vmatprep.mubr.bf16.mxu0 0
  %1072 = vmatmul.mubr.bf16.gmra.mrb[0].mxu0 %v651
  %v1073 = vpop.f32.mrb[0].mxu0
  %v1074 = vadd.f32 0.0, %v1073
  %v1075 = vpop.f32.mrb[0].mxu0
  %v1076 = vpop.f32.mrb[0].mxu0
  %v1077 = vadd.f32 0.0, %v1076
  %v1078 = vpop.f32.mrb[0].mxu0
  %1079 = vmatprep.mubr.bf16.mxu0 0
  %1080 = vmatmul.mubr.bf16.gmra.mrb[0].mxu0 %v652
  %v1081 = vpop.f32.mrb[0].mxu0
  %v1082 = vadd.f32 0.0, %v1081
  %v1083 = vpop.f32.mrb[0].mxu0
  %v1084 = vpop.f32.mrb[0].mxu0
  %v1085 = vadd.f32 0.0, %v1084
  %v1086 = vpop.f32.mrb[0].mxu0
  %1087 = vmatprep.mubr.bf16.mxu0 0
  %1088 = vmatmul.mubr.bf16.gmra.mrb[0].mxu0 %v653
  %v1089 = vpop.f32.mrb[0].mxu0
  %v1090 = vadd.f32 0.0, %v1089
  %v1091 = vpop.f32.mrb[0].mxu0
  %v1092 = vpop.f32.mrb[0].mxu0
  %v1093 = vadd.f32 0.0, %v1092
  %v1094 = vpop.f32.mrb[0].mxu0
  %1095 = vmatprep.mubr.bf16.mxu0 0
  %1096 = vmatmul.mubr.bf16.gmra.mrb[0].mxu0 %v654
  %v1097 = vpop.f32.mrb[0].mxu0
  %v1098 = vadd.f32 0.0, %v1097
  %v1099 = vpop.f32.mrb[0].mxu0
  %v1100 = vpop.f32.mrb[0].mxu0
  %v1101 = vadd.f32 0.0, %v1100
  %v1102 = vpop.f32.mrb[0].mxu0
  %1103 = vmatprep.mubr.bf16.mxu0 0
  %1104 = vmatmul.mubr.bf16.gmra.mrb[0].mxu0 %v655
  %v1105 = vpop.f32.mrb[0].mxu0
  %v1106 = vadd.f32 0.0, %v1105
  %v1107 = vpop.f32.mrb[0].mxu0
  %v1108 = vpop.f32.mrb[0].mxu0
  %v1109 = vadd.f32 0.0, %v1108
  %v1110 = vpop.f32.mrb[0].mxu0
  %1111 = vmatprep.mubr.bf16.mxu0 0
  %1112 = vmatmul.mubr.bf16.gmra.mrb[0].mxu0 %v656
  %v1113 = vpop.f32.mrb[0].mxu0
  %v1114 = vadd.f32 0.0, %v1113
  %v1115 = vpop.f32.mrb[0].mxu0
  %v1116 = vpop.f32.mrb[0].mxu0
  %v1117 = vadd.f32 0.0, %v1116
  %v1118 = vpop.f32.mrb[0].mxu0
  %1119 = vmatprep.mubr.bf16.mxu0 0
  %1120 = vmatmul.mubr.bf16.gmra.mrb[0].mxu0 %v657
  %v1121 = vpop.f32.mrb[0].mxu0
  %v1122 = vadd.f32 0.0, %v1121
  %v1123 = vpop.f32.mrb[0].mxu0
  %v1124 = vpop.f32.mrb[0].mxu0
  %v1125 = vadd.f32 0.0, %v1124
  %v1126 = vpop.f32.mrb[0].mxu0
  %1127 = vmatprep.mubr.bf16.mxu0 0
  %1128 = vmatmul.mubr.bf16.gmra.mrb[0].mxu0 %v658
  %v1129 = vpop.f32.mrb[0].mxu0
  %v1130 = vadd.f32 0.0, %v1129
  %v1131 = vpop.f32.mrb[0].mxu0
  %v1132 = vpop.f32.mrb[0].mxu0
  %v1133 = vadd.f32 0.0, %v1132
  %v1134 = vpop.f32.mrb[0].mxu0
  %1135 = vmatprep.mubr.bf16.mxu0 0
  %1136 = vmatmul.mubr.bf16.gmra.mrb[0].mxu0 %v659
  %v1137 = vpop.f32.mrb[0].mxu0
  %v1138 = vadd.f32 0.0, %v1137
  %v1139 = vpop.f32.mrb[0].mxu0
  %v1140 = vpop.f32.mrb[0].mxu0
  %v1141 = vadd.f32 0.0, %v1140
  %v1142 = vpop.f32.mrb[0].mxu0
  %1143 = vmatprep.mubr.bf16.mxu0 0
  %1144 = vmatmul.mubr.bf16.gmra.mrb[0].mxu0 %v660
  %v1145 = vpop.f32.mrb[0].mxu0
  %v1146 = vadd.f32 0.0, %v1145
  %v1147 = vpop.f32.mrb[0].mxu0
  %v1148 = vpop.f32.mrb[0].mxu0
  %v1149 = vadd.f32 0.0, %v1148
  %v1150 = vpop.f32.mrb[0].mxu0
  %1151 = vmatprep.mubr.bf16.mxu0 0
  %1152 = vmatmul.mubr.bf16.gmra.mrb[0].mxu0 %v661
  %v1153 = vpop.f32.mrb[0].mxu0
  %v1154 = vadd.f32 0.0, %v1153
  %v1155 = vpop.f32.mrb[0].mxu0
  %v1156 = vpop.f32.mrb[0].mxu0
  %v1157 = vadd.f32 0.0, %v1156
  %v1158 = vpop.f32.mrb[0].mxu0
  %1159 = vmatprep.mubr.bf16.mxu0 0
  %1160 = vmatmul.mubr.bf16.gmra.mrb[0].mxu0 %v662
  %v1161 = vpop.f32.mrb[0].mxu0
  %v1162 = vadd.f32 0.0, %v1161
  %v1163 = vpop.f32.mrb[0].mxu0
  %v1164 = vpop.f32.mrb[0].mxu0
  %v1165 = vadd.f32 0.0, %v1164
  %v1166 = vpop.f32.mrb[0].mxu0
  %1167 = vmatprep.mubr.bf16.mxu0 0
  %1168 = vmatmul.mubr.bf16.gmra.mrb[0].mxu0 %v663
  %v1169 = vpop.f32.mrb[0].mxu0
  %v1170 = vadd.f32 0.0, %v1169
  %v1171 = vpop.f32.mrb[0].mxu0
  %v1172 = vpop.f32.mrb[0].mxu0
  %v1173 = vadd.f32 0.0, %v1172
  %v1174 = vpop.f32.mrb[0].mxu0
  %1175 = vmatprep.mubr.bf16.mxu0 0
  %1176 = vmatmul.mubr.bf16.gmra.mrb[0].mxu0 %v664
  %v1177 = vpop.f32.mrb[0].mxu0
  %v1178 = vadd.f32 0.0, %v1177
  %v1179 = vpop.f32.mrb[0].mxu0
  %v1180 = vpop.f32.mrb[0].mxu0
  %v1181 = vadd.f32 0.0, %v1180
  %v1182 = vpop.f32.mrb[0].mxu0
  %1183 = vmatprep.mubr.bf16.mxu0 0
  %1184 = vmatmul.mubr.bf16.gmra.mrb[0].mxu0 %v665
  %v1185 = vpop.f32.mrb[0].mxu0
  %v1186 = vadd.f32 0.0, %v1185
  %v1187 = vpop.f32.mrb[0].mxu0
  %v1188 = vpop.f32.mrb[0].mxu0
  %v1189 = vadd.f32 0.0, %v1188
  %v1190 = vpop.f32.mrb[0].mxu0
  %1191 = vmatprep.mubr.bf16.mxu0 0
  %1192 = vmatmul.mubr.bf16.gmra.mrb[0].mxu0 %v666
  %v1193 = vpop.f32.mrb[0].mxu0
  %v1194 = vadd.f32 0.0, %v1193
  %v1195 = vpop.f32.mrb[0].mxu0
  %v1196 = vpop.f32.mrb[0].mxu0
  %v1197 = vadd.f32 0.0, %v1196
  %v1198 = vpop.f32.mrb[0].mxu0
  %1199 = vmatprep.mubr.bf16.mxu0 0
  %1200 = vmatmul.mubr.bf16.gmra.mrb[0].mxu0 %v667
  %v1201 = vpop.f32.mrb[0].mxu0
  %v1202 = vadd.f32 0.0, %v1201
  %v1203 = vpop.f32.mrb[0].mxu0
  %v1204 = vpop.f32.mrb[0].mxu0
  %v1205 = vadd.f32 0.0, %v1204
  %v1206 = vpop.f32.mrb[0].mxu0
  %1207 = vmatprep.mubr.bf16.mxu0 0
  %1208 = vmatmul.mubr.bf16.gmra.mrb[0].mxu0 %v668
  %v1209 = vpop.f32.mrb[0].mxu0
  %v1210 = vadd.f32 0.0, %v1209
  %v1211 = vpop.f32.mrb[0].mxu0
  %v1212 = vpop.f32.mrb[0].mxu0
  %v1213 = vadd.f32 0.0, %v1212
  %v1214 = vpop.f32.mrb[0].mxu0
  %1215 = vmatprep.mubr.bf16.mxu0 0
  %1216 = vmatmul.mubr.bf16.gmra.mrb[0].mxu0 %v669
  %v1217 = vpop.f32.mrb[0].mxu0
  %v1218 = vadd.f32 0.0, %v1217
  %v1219 = vpop.f32.mrb[0].mxu0
  %v1220 = vpop.f32.mrb[0].mxu0
  %v1221 = vadd.f32 0.0, %v1220
  %v1222 = vpop.f32.mrb[0].mxu0
  %1223 = vmatprep.mubr.bf16.mxu0 0
  %1224 = vmatmul.mubr.bf16.gmra.mrb[0].mxu0 %v670
  %v1225 = vpop.f32.mrb[0].mxu0
  %v1226 = vadd.f32 0.0, %v1225
  %v1227 = vpop.f32.mrb[0].mxu0
  %v1228 = vpop.f32.mrb[0].mxu0
  %v1229 = vadd.f32 0.0, %v1228
  %v1230 = vpop.f32.mrb[0].mxu0
  %1231 = vmatprep.mubr.bf16.mxu0 0
  %1232 = vmatmul.mubr.bf16.gmra.mrb[0].mxu0 %v671
  %v1233 = vpop.f32.mrb[0].mxu0
  %v1234 = vadd.f32 0.0, %v1233
  %v1235 = vpop.f32.mrb[0].mxu0
  %v1236 = vpop.f32.mrb[0].mxu0
  %v1237 = vadd.f32 0.0, %v1236
  %v1238 = vpop.f32.mrb[0].mxu0
  %1239 = vmatprep.mubr.bf16.mxu0 0
  %1240 = vmatmul.mubr.bf16.gmra.mrb[0].mxu0 %v672
  %v1241 = vpop.f32.mrb[0].mxu0
  %v1242 = vadd.f32 0.0, %v1241
  %v1243 = vpop.f32.mrb[0].mxu0
  %v1244 = vpop.f32.mrb[0].mxu0
  %v1245 = vadd.f32 0.0, %v1244
  %v1246 = vpop.f32.mrb[0].mxu0
  %1247 = vmatprep.mubr.bf16.mxu0 0
  %1248 = vmatmul.mubr.bf16.gmra.mrb[0].mxu0 %v673
  %v1249 = vpop.f32.mrb[0].mxu0
  %v1250 = vadd.f32 0.0, %v1249
  %v1251 = vpop.f32.mrb[0].mxu0
  %v1252 = vpop.f32.mrb[0].mxu0
  %v1253 = vadd.f32 0.0, %v1252
  %v1254 = vpop.f32.mrb[0].mxu0
  %1255 = vmatprep.mubr.bf16.mxu0 0
  %1256 = vmatmul.mubr.bf16.gmra.mrb[0].mxu0 %v674
  %v1257 = vpop.f32.mrb[0].mxu0
  %v1258 = vadd.f32 0.0, %v1257
  %v1259 = vpop.f32.mrb[0].mxu0
  %v1260 = vpop.f32.mrb[0].mxu0
  %v1261 = vadd.f32 0.0, %v1260
  %v1262 = vpop.f32.mrb[0].mxu0
  %1263 = vmatprep.mubr.bf16.mxu0 0
  %1264 = vmatmul.mubr.bf16.gmra.mrb[0].mxu0 %v675
  %v1265 = vpop.f32.mrb[0].mxu0
  %v1266 = vadd.f32 0.0, %v1265
  %v1267 = vpop.f32.mrb[0].mxu0
  %v1268 = vpop.f32.mrb[0].mxu0
  %v1269 = vadd.f32 0.0, %v1268
  %v1270 = vpop.f32.mrb[0].mxu0
  %1271 = vmatprep.mubr.bf16.mxu0 0
  %1272 = vmatmul.mubr.bf16.gmra.mrb[0].mxu0 %v676
  %v1273 = vpop.f32.mrb[0].mxu0
  %v1274 = vadd.f32 0.0, %v1273
  %v1275 = vpop.f32.mrb[0].mxu0
  %v1276 = vpop.f32.mrb[0].mxu0
  %v1277 = vadd.f32 0.0, %v1276
  %v1278 = vpop.f32.mrb[0].mxu0
  %1279 = vmatprep.mubr.bf16.mxu0 0
  %1280 = vmatmul.mubr.bf16.gmra.mrb[0].mxu0 %v677
  %v1281 = vpop.f32.mrb[0].mxu0
  %v1282 = vadd.f32 0.0, %v1281
  %v1283 = vpop.f32.mrb[0].mxu0
  %v1284 = vpop.f32.mrb[0].mxu0
  %v1285 = vadd.f32 0.0, %v1284
  %v1286 = vpop.f32.mrb[0].mxu0
  %1287 = vmatprep.mubr.bf16.mxu0 0
  %1288 = vmatmul.mubr.bf16.gmra.mrb[0].mxu0 %v678
  %v1289 = vpop.f32.mrb[0].mxu0
  %v1290 = vadd.f32 0.0, %v1289
  %v1291 = vpop.f32.mrb[0].mxu0
  %v1292 = vpop.f32.mrb[0].mxu0
  %v1293 = vadd.f32 0.0, %v1292
  %v1294 = vpop.f32.mrb[0].mxu0
  %1295 = vmatprep.mubr.bf16.mxu0 0
  %1296 = vmatmul.mubr.bf16.gmra.mrb[0].mxu0 %v679
  %v1297 = vpop.f32.mrb[0].mxu0
  %v1298 = vadd.f32 0.0, %v1297
  %v1299 = vpop.f32.mrb[0].mxu0
  %v1300 = vpop.f32.mrb[0].mxu0
  %v1301 = vadd.f32 0.0, %v1300
  %v1302 = vpop.f32.mrb[0].mxu0
  %1303 = vmatprep.mubr.bf16.mxu0 0
  %1304 = vmatmul.mubr.bf16.gmra.mrb[0].mxu0 %v680
  %v1305 = vpop.f32.mrb[0].mxu0
  %v1306 = vadd.f32 0.0, %v1305
  %v1307 = vpop.f32.mrb[0].mxu0
  %v1308 = vpop.f32.mrb[0].mxu0
  %v1309 = vadd.f32 0.0, %v1308
  %v1310 = vpop.f32.mrb[0].mxu0
  %1311 = vmatprep.mubr.bf16.mxu0 0
  %1312 = vmatmul.mubr.bf16.gmra.mrb[0].mxu0 %v681
  %v1313 = vpop.f32.mrb[0].mxu0
  %v1314 = vadd.f32 0.0, %v1313
  %v1315 = vpop.f32.mrb[0].mxu0
  %v1316 = vpop.f32.mrb[0].mxu0
  %v1317 = vadd.f32 0.0, %v1316
  %v1318 = vpop.f32.mrb[0].mxu0
  %1319 = vmatprep.mubr.bf16.mxu0 0
  %1320 = vmatmul.mubr.bf16.gmra.mrb[0].mxu0 %v682
  %v1321 = vpop.f32.mrb[0].mxu0
  %v1322 = vadd.f32 0.0, %v1321
  %v1323 = vpop.f32.mrb[0].mxu0
  %v1324 = vpop.f32.mrb[0].mxu0
  %v1325 = vadd.f32 0.0, %v1324
  %v1326 = vpop.f32.mrb[0].mxu0
  %1327 = vmatprep.mubr.bf16.mxu0 0
  %1328 = vmatmul.mubr.bf16.gmra.mrb[0].mxu0 %v683
  %v1329 = vpop.f32.mrb[0].mxu0
  %v1330 = vadd.f32 0.0, %v1329
  %v1331 = vpop.f32.mrb[0].mxu0
  %v1332 = vpop.f32.mrb[0].mxu0
  %v1333 = vadd.f32 0.0, %v1332
  %v1334 = vpop.f32.mrb[0].mxu0
  %1335 = vmatprep.mubr.bf16.mxu0 0
  %1336 = vmatmul.mubr.bf16.gmra.mrb[0].mxu0 %v684
  %v1337 = vpop.f32.mrb[0].mxu0
  %v1338 = vadd.f32 0.0, %v1337
  %v1339 = vpop.f32.mrb[0].mxu0
  %v1340 = vpop.f32.mrb[0].mxu0
  %v1341 = vadd.f32 0.0, %v1340
  %v1342 = vpop.f32.mrb[0].mxu0
  %1343 = vmatprep.mubr.bf16.mxu0 0
  %1344 = vmatmul.mubr.bf16.gmra.mrb[0].mxu0 %v685
  %v1345 = vpop.f32.mrb[0].mxu0
  %v1346 = vadd.f32 0.0, %v1345
  %v1347 = vpop.f32.mrb[0].mxu0
  %v1348 = vpop.f32.mrb[0].mxu0
  %v1349 = vadd.f32 0.0, %v1348
  %v1350 = vpop.f32.mrb[0].mxu0
  %1351 = vmatprep.mubr.bf16.mxu0 0
  %1352 = vmatmul.mubr.bf16.gmra.mrb[0].mxu0 %v686
  %v1353 = vpop.f32.mrb[0].mxu0
  %v1354 = vadd.f32 0.0, %v1353
  %v1355 = vpop.f32.mrb[0].mxu0
  %v1356 = vpop.f32.mrb[0].mxu0
  %v1357 = vadd.f32 0.0, %v1356
  %v1358 = vpop.f32.mrb[0].mxu0
  %1359 = vmatprep.mubr.bf16.mxu0 0
  %1360 = vmatmul.mubr.bf16.gmra.mrb[0].mxu0 %v687
  %v1361 = vpop.f32.mrb[0].mxu0
  %v1362 = vadd.f32 0.0, %v1361
  %v1363 = vpop.f32.mrb[0].mxu0
  %v1364 = vpop.f32.mrb[0].mxu0
  %v1365 = vadd.f32 0.0, %v1364
  %v1366 = vpop.f32.mrb[0].mxu0
  %1367 = vmatprep.mubr.bf16.mxu0 0
  %1368 = vmatmul.mubr.bf16.gmra.mrb[0].mxu0 %v688
  %v1369 = vpop.f32.mrb[0].mxu0
  %v1370 = vadd.f32 0.0, %v1369
  %v1371 = vpop.f32.mrb[0].mxu0
  %v1372 = vpop.f32.mrb[0].mxu0
  %v1373 = vadd.f32 0.0, %v1372
  %v1374 = vpop.f32.mrb[0].mxu0
  %1375 = vmatprep.mubr.bf16.mxu0 0
  %1376 = vmatmul.mubr.bf16.gmra.mrb[0].mxu0 %v689
  %v1377 = vpop.f32.mrb[0].mxu0
  %v1378 = vadd.f32 0.0, %v1377
  %v1379 = vpop.f32.mrb[0].mxu0
  %v1380 = vpop.f32.mrb[0].mxu0
  %v1381 = vadd.f32 0.0, %v1380
  %v1382 = vpop.f32.mrb[0].mxu0
  %1383 = vmatprep.mubr.bf16.mxu0 0
  %1384 = vmatmul.mubr.bf16.gmra.mrb[0].mxu0 %v690
  %v1385 = vpop.f32.mrb[0].mxu0
  %v1386 = vadd.f32 0.0, %v1385
  %v1387 = vpop.f32.mrb[0].mxu0
  %v1388 = vpop.f32.mrb[0].mxu0
  %v1389 = vadd.f32 0.0, %v1388
  %v1390 = vpop.f32.mrb[0].mxu0
  %1391 = vmatprep.mubr.bf16.mxu0 0
  %1392 = vmatmul.mubr.bf16.gmra.mrb[0].mxu0 %v691
  %v1393 = vpop.f32.mrb[0].mxu0
  %v1394 = vadd.f32 0.0, %v1393
  %v1395 = vpop.f32.mrb[0].mxu0
  %v1396 = vpop.f32.mrb[0].mxu0
  %v1397 = vadd.f32 0.0, %v1396
  %v1398 = vpop.f32.mrb[0].mxu0
  %1399 = vmatprep.mubr.bf16.mxu0 0
  %1400 = vmatmul.mubr.bf16.gmra.mrb[0].mxu0 %v692
  %v1401 = vpop.f32.mrb[0].mxu0
  %v1402 = vadd.f32 0.0, %v1401
  %v1403 = vpop.f32.mrb[0].mxu0
  %v1404 = vpop.f32.mrb[0].mxu0
  %v1405 = vadd.f32 0.0, %v1404
  %v1406 = vpop.f32.mrb[0].mxu0
  %1407 = vmatprep.mubr.bf16.mxu0 0
  %1408 = vmatmul.mubr.bf16.gmra.mrb[0].mxu0 %v693
  %v1409 = vpop.f32.mrb[0].mxu0
  %v1410 = vadd.f32 0.0, %v1409
  %v1411 = vpop.f32.mrb[0].mxu0
  %v1412 = vpop.f32.mrb[0].mxu0
  %v1413 = vadd.f32 0.0, %v1412
  %v1414 = vpop.f32.mrb[0].mxu0
  %1415 = vmatprep.mubr.bf16.mxu0 0
  %1416 = vmatmul.mubr.bf16.gmra.mrb[0].mxu0 %v694
  %v1417 = vpop.f32.mrb[0].mxu0
  %v1418 = vadd.f32 0.0, %v1417
  %v1419 = vpop.f32.mrb[0].mxu0
  %v1420 = vpop.f32.mrb[0].mxu0
  %v1421 = vadd.f32 0.0, %v1420
  %v1422 = vpop.f32.mrb[0].mxu0
  %1423 = vmatprep.mubr.bf16.mxu0 0
  %1424 = vmatmul.mubr.bf16.gmra.mrb[0].mxu0 %v695
  %v1425 = vpop.f32.mrb[0].mxu0
  %v1426 = vadd.f32 0.0, %v1425
  %v1427 = vpop.f32.mrb[0].mxu0
  %v1428 = vpop.f32.mrb[0].mxu0
  %v1429 = vadd.f32 0.0, %v1428
  %v1430 = vpop.f32.mrb[0].mxu0
  %1431 = vmatprep.mubr.bf16.mxu0 0
  %1432 = vmatmul.mubr.bf16.gmra.mrb[0].mxu0 %v696
  %v1433 = vpop.f32.mrb[0].mxu0
  %v1434 = vadd.f32 0.0, %v1433
  %v1435 = vpop.f32.mrb[0].mxu0
  %v1436 = vpop.f32.mrb[0].mxu0
  %v1437 = vadd.f32 0.0, %v1436
  %v1438 = vpop.f32.mrb[0].mxu0
  %1439 = vmatprep.mubr.bf16.mxu0 0
  %1440 = vmatmul.mubr.bf16.gmra.mrb[0].mxu0 %v697
  %v1441 = vpop.f32.mrb[0].mxu0
  %v1442 = vadd.f32 0.0, %v1441
  %v1443 = vpop.f32.mrb[0].mxu0
  %v1444 = vpop.f32.mrb[0].mxu0
  %v1445 = vadd.f32 0.0, %v1444
  %v1446 = vpop.f32.mrb[0].mxu0
  %1447 = vmatprep.mubr.bf16.mxu0 0
  %1448 = vmatmul.mubr.bf16.gmra.mrb[0].mxu0 %v698
  %v1449 = vpop.f32.mrb[0].mxu0
  %v1450 = vadd.f32 0.0, %v1449
  %v1451 = vpop.f32.mrb[0].mxu0
  %v1452 = vpop.f32.mrb[0].mxu0
  %v1453 = vadd.f32 0.0, %v1452
  %v1454 = vpop.f32.mrb[0].mxu0
  %1455 = vmatprep.mubr.bf16.mxu0 0
  %1456 = vmatmul.mubr.bf16.gmra.mrb[0].mxu0 %v699
  %v1457 = vpop.f32.mrb[0].mxu0
  %v1458 = vadd.f32 0.0, %v1457
  %v1459 = vpop.f32.mrb[0].mxu0
  %v1460 = vpop.f32.mrb[0].mxu0
  %v1461 = vadd.f32 0.0, %v1460
  %v1462 = vpop.f32.mrb[0].mxu0
  %1463 = vmatprep.mubr.bf16.mxu0 0
  %1464 = vmatmul.mubr.bf16.gmra.mrb[0].mxu0 %v700
  %v1465 = vpop.f32.mrb[0].mxu0
  %v1466 = vadd.f32 0.0, %v1465
  %v1467 = vpop.f32.mrb[0].mxu0
  %v1468 = vpop.f32.mrb[0].mxu0
  %v1469 = vadd.f32 0.0, %v1468
  %v1470 = vpop.f32.mrb[0].mxu0
  %1471 = vmatprep.mubr.bf16.mxu0 0
  %1472 = vmatmul.mubr.bf16.gmra.mrb[0].mxu0 %v701
  %v1473 = vpop.f32.mrb[0].mxu0
  %v1474 = vadd.f32 0.0, %v1473
  %v1475 = vpop.f32.mrb[0].mxu0
  %v1476 = vpop.f32.mrb[0].mxu0
  %v1477 = vadd.f32 0.0, %v1476
  %v1478 = vpop.f32.mrb[0].mxu0
  %1479 = vmatprep.mubr.bf16.mxu0 0
  %1480 = vmatmul.mubr.bf16.gmra.mrb[0].mxu0 %v702
  %v1481 = vpop.f32.mrb[0].mxu0
  %v1482 = vadd.f32 0.0, %v1481
  %v1483 = vpop.f32.mrb[0].mxu0
  %v1484 = vpop.f32.mrb[0].mxu0
  %v1485 = vadd.f32 0.0, %v1484
  %v1486 = vpop.f32.mrb[0].mxu0
  %1487 = vmatprep.mubr.bf16.mxu0 0
  %1488 = vmatmul.mubr.bf16.gmra.mrb[0].mxu0 %v703
  %v1489 = vpop.f32.mrb[0].mxu0
  %v1490 = vadd.f32 0.0, %v1489
  %v1491 = vpop.f32.mrb[0].mxu0
  %v1492 = vpop.f32.mrb[0].mxu0
  %v1493 = vadd.f32 0.0, %v1492
  %v1494 = vpop.f32.mrb[0].mxu0
  %1495 = vmatprep.mubr.bf16.mxu0 0
  %1496 = vmatmul.mubr.bf16.gmra.mrb[0].mxu0 %v704
  %v1497 = vpop.f32.mrb[0].mxu0
  %v1498 = vadd.f32 0.0, %v1497
  %v1499 = vpop.f32.mrb[0].mxu0
  %v1500 = vpop.f32.mrb[0].mxu0
  %v1501 = vadd.f32 0.0, %v1500
  %v1502 = vpop.f32.mrb[0].mxu0
  %1503 = vmatprep.mubr.bf16.mxu0 0
  %1504 = vmatmul.mubr.bf16.gmra.mrb[0].mxu0 %v705
  %v1505 = vpop.f32.mrb[0].mxu0
  %v1506 = vadd.f32 0.0, %v1505
  %v1507 = vpop.f32.mrb[0].mxu0
  %v1508 = vpop.f32.mrb[0].mxu0
  %v1509 = vadd.f32 0.0, %v1508
  %v1510 = vpop.f32.mrb[0].mxu0
  %1511 = vmatprep.mubr.bf16.mxu0 0
  %1512 = vmatmul.mubr.bf16.gmra.mrb[0].mxu0 %v706
  %v1513 = vpop.f32.mrb[0].mxu0
  %v1514 = vadd.f32 0.0, %v1513
  %v1515 = vpop.f32.mrb[0].mxu0
  %v1516 = vpop.f32.mrb[0].mxu0
  %v1517 = vadd.f32 0.0, %v1516
  %v1518 = vpop.f32.mrb[0].mxu0
  %1519 = vmatprep.mubr.bf16.mxu0 0
  %1520 = vmatmul.mubr.bf16.gmra.mrb[0].mxu0 %v707
  %v1521 = vpop.f32.mrb[0].mxu0
  %v1522 = vadd.f32 0.0, %v1521
  %v1523 = vpop.f32.mrb[0].mxu0
  %v1524 = vpop.f32.mrb[0].mxu0
  %v1525 = vadd.f32 0.0, %v1524
  %v1526 = vpop.f32.mrb[0].mxu0
  %1527 = vmatprep.mubr.bf16.mxu0 0
  %1528 = vmatmul.mubr.bf16.gmra.mrb[0].mxu0 %v708
  %v1529 = vpop.f32.mrb[0].mxu0
  %v1530 = vadd.f32 0.0, %v1529
  %v1531 = vpop.f32.mrb[0].mxu0
  %v1532 = vpop.f32.mrb[0].mxu0
  %v1533 = vadd.f32 0.0, %v1532
  %v1534 = vpop.f32.mrb[0].mxu0
  %1535 = vmatprep.mubr.bf16.mxu0 0
  %1536 = vmatmul.mubr.bf16.gmra.mrb[0].mxu0 %v709
  %v1537 = vpop.f32.mrb[0].mxu0
  %v1538 = vadd.f32 0.0, %v1537
  %v1539 = vpop.f32.mrb[0].mxu0
  %v1540 = vpop.f32.mrb[0].mxu0
  %v1541 = vadd.f32 0.0, %v1540
  %v1542 = vpop.f32.mrb[0].mxu0
  %1543 = vmatprep.mubr.bf16.mxu0 0
  %1544 = vmatmul.mubr.bf16.gmra.mrb[0].mxu0 %v710
  %v1545 = vpop.f32.mrb[0].mxu0
  %v1546 = vadd.f32 0.0, %v1545
  %v1547 = vpop.f32.mrb[0].mxu0
  %v1548 = vpop.f32.mrb[0].mxu0
  %v1549 = vadd.f32 0.0, %v1548
  %v1550 = vpop.f32.mrb[0].mxu0
  %1551 = vmatprep.mubr.bf16.mxu0 0
  %1552 = vmatmul.mubr.bf16.gmra.mrb[0].mxu0 %v711
  %v1553 = vpop.f32.mrb[0].mxu0
  %v1554 = vadd.f32 0.0, %v1553
  %v1555 = vpop.f32.mrb[0].mxu0
  %v1556 = vpop.f32.mrb[0].mxu0
  %v1557 = vadd.f32 0.0, %v1556
  %v1558 = vpop.f32.mrb[0].mxu0
  %1559 = vmatprep.mubr.bf16.mxu0 0
  %1560 = vmatmul.mubr.bf16.gmra.mrb[0].mxu0 %v712
  %v1561 = vpop.f32.mrb[0].mxu0
  %v1562 = vadd.f32 0.0, %v1561
  %v1563 = vpop.f32.mrb[0].mxu0
  %v1564 = vpop.f32.mrb[0].mxu0
  %v1565 = vadd.f32 0.0, %v1564
  %v1566 = vpop.f32.mrb[0].mxu0
  %1567 = vmatprep.mubr.bf16.mxu0 0
  %1568 = vmatmul.mubr.bf16.gmra.mrb[0].mxu0 %v713
  %v1569 = vpop.f32.mrb[0].mxu0
  %v1570 = vadd.f32 0.0, %v1569
  %v1571 = vpop.f32.mrb[0].mxu0
  %v1572 = vpop.f32.mrb[0].mxu0
  %v1573 = vadd.f32 0.0, %v1572
  %v1574 = vpop.f32.mrb[0].mxu0
  %1575 = vmatprep.mubr.bf16.mxu0 0
  %1576 = vmatmul.mubr.bf16.gmra.mrb[0].mxu0 %v714
  %v1577 = vpop.f32.mrb[0].mxu0
  %v1578 = vadd.f32 0.0, %v1577
  %v1579 = vpop.f32.mrb[0].mxu0
  %v1580 = vpop.f32.mrb[0].mxu0
  %v1581 = vadd.f32 0.0, %v1580
  %v1582 = vpop.f32.mrb[0].mxu0
  %1583 = vmatprep.mubr.bf16.mxu0 0
  %1584 = vmatmul.mubr.bf16.gmra.mrb[0].mxu0 %v715
  %v1585 = vpop.f32.mrb[0].mxu0
  %v1586 = vadd.f32 0.0, %v1585
  %v1587 = vpop.f32.mrb[0].mxu0
  %v1588 = vpop.f32.mrb[0].mxu0
  %v1589 = vadd.f32 0.0, %v1588
  %v1590 = vpop.f32.mrb[0].mxu0
  %1591 = vmatprep.mubr.bf16.mxu0 0
  %1592 = vmatmul.mubr.bf16.gmra.mrb[0].mxu0 %v716
  %v1593 = vpop.f32.mrb[0].mxu0
  %v1594 = vadd.f32 0.0, %v1593
  %v1595 = vpop.f32.mrb[0].mxu0
  %v1596 = vpop.f32.mrb[0].mxu0
  %v1597 = vadd.f32 0.0, %v1596
  %v1598 = vpop.f32.mrb[0].mxu0
  %1599 = vmatprep.mubr.bf16.mxu0 0
  %1600 = vmatmul.mubr.bf16.gmra.mrb[0].mxu0 %v717
  %v1601 = vpop.f32.mrb[0].mxu0
  %v1602 = vadd.f32 0.0, %v1601
  %v1603 = vpop.f32.mrb[0].mxu0
  %v1604 = vpop.f32.mrb[0].mxu0
  %v1605 = vadd.f32 0.0, %v1604
  %v1606 = vpop.f32.mrb[0].mxu0
  %1607 = vmatprep.mubr.bf16.mxu0 0
  %1608 = vmatmul.mubr.bf16.gmra.mrb[0].mxu0 %v718
  %v1609 = vpop.f32.mrb[0].mxu0
  %v1610 = vadd.f32 0.0, %v1609
  %v1611 = vpop.f32.mrb[0].mxu0
  %v1612 = vpop.f32.mrb[0].mxu0
  %v1613 = vadd.f32 0.0, %v1612
  %v1614 = vpop.f32.mrb[0].mxu0
  %1615 = vmatprep.mubr.bf16.mxu0 0
  %1616 = vmatmul.mubr.bf16.gmra.mrb[0].mxu0 %v719
  %v1617 = vpop.f32.mrb[0].mxu0
  %v1618 = vadd.f32 0.0, %v1617
  %v1619 = vpop.f32.mrb[0].mxu0
  %v1620 = vpop.f32.mrb[0].mxu0
  %v1621 = vadd.f32 0.0, %v1620
  %v1622 = vpop.f32.mrb[0].mxu0
  %1623 = vmatprep.mubr.bf16.mxu0 0
  %1624 = vmatmul.mubr.bf16.gmra.mrb[0].mxu0 %v720
  %v1625 = vpop.f32.mrb[0].mxu0
  %v1626 = vadd.f32 0.0, %v1625
  %v1627 = vpop.f32.mrb[0].mxu0
  %v1628 = vpop.f32.mrb[0].mxu0
  %v1629 = vadd.f32 0.0, %v1628
  %v1630 = vpop.f32.mrb[0].mxu0
  %1631 = vmatprep.mubr.bf16.mxu0 0
  %1632 = vmatmul.mubr.bf16.gmra.mrb[0].mxu0 %v721
  %v1633 = vpop.f32.mrb[0].mxu0
  %v1634 = vadd.f32 0.0, %v1633
  %v1635 = vpop.f32.mrb[0].mxu0
  %v1636 = vpop.f32.mrb[0].mxu0
  %v1637 = vadd.f32 0.0, %v1636
  %v1638 = vpop.f32.mrb[0].mxu0
  %1639 = vmatprep.mubr.bf16.mxu0 0
  %1640 = vmatmul.mubr.bf16.gmra.mrb[0].mxu0 %v722
  %v1641 = vpop.f32.mrb[0].mxu0
  %v1642 = vadd.f32 0.0, %v1641
  %v1643 = vpop.f32.mrb[0].mxu0
  %v1644 = vpop.f32.mrb[0].mxu0
  %v1645 = vadd.f32 0.0, %v1644
  %v1646 = vpop.f32.mrb[0].mxu0
  %1647 = vmatprep.mubr.bf16.mxu0 0
  %1648 = vmatmul.mubr.bf16.gmra.mrb[0].mxu0 %v723
  %v1649 = vpop.f32.mrb[0].mxu0
  %v1650 = vadd.f32 0.0, %v1649
  %v1651 = vpop.f32.mrb[0].mxu0
  %v1652 = vpop.f32.mrb[0].mxu0
  %v1653 = vadd.f32 0.0, %v1652
  %v1654 = vpop.f32.mrb[0].mxu0
  %1655 = vmatprep.mubr.bf16.mxu0 0
  %1656 = vmatmul.mubr.bf16.gmra.mrb[0].mxu0 %v724
  %v1657 = vpop.f32.mrb[0].mxu0
  %v1658 = vadd.f32 0.0, %v1657
  %v1659 = vpop.f32.mrb[0].mxu0
  %v1660 = vpop.f32.mrb[0].mxu0
  %v1661 = vadd.f32 0.0, %v1660
  %v1662 = vpop.f32.mrb[0].mxu0
  %1663 = vmatprep.mubr.bf16.mxu0 0
  %1664 = vmatmul.mubr.bf16.gmra.mrb[0].mxu0 %v725
  %v1665 = vpop.f32.mrb[0].mxu0
  %v1666 = vadd.f32 0.0, %v1665
  %v1667 = vpop.f32.mrb[0].mxu0
  %v1668 = vpop.f32.mrb[0].mxu0
  %v1669 = vadd.f32 0.0, %v1668
  %v1670 = vpop.f32.mrb[0].mxu0
  %1671 = vmatprep.mubr.bf16.mxu0 0
  %1672 = vmatmul.mubr.bf16.gmra.mrb[0].mxu0 %v726
  %v1673 = vpop.f32.mrb[0].mxu0
  %v1674 = vadd.f32 0.0, %v1673
  %v1675 = vpop.f32.mrb[0].mxu0
  %v1676 = vpop.f32.mrb[0].mxu0
  %v1677 = vadd.f32 0.0, %v1676
  %v1678 = vpop.f32.mrb[0].mxu0
  %1679 = vmatprep.mubr.bf16.mxu0 0
  %1680 = vmatmul.mubr.bf16.gmra.mrb[0].mxu0 %v727
  %v1681 = vpop.f32.mrb[0].mxu0
  %v1682 = vadd.f32 0.0, %v1681
  %v1683 = vpop.f32.mrb[0].mxu0
  %v1684 = vpop.f32.mrb[0].mxu0
  %v1685 = vadd.f32 0.0, %v1684
  %v1686 = vpop.f32.mrb[0].mxu0
  %1687 = vmatprep.mubr.bf16.mxu0 0
  %1688 = vmatmul.mubr.bf16.gmra.mrb[0].mxu0 %v728
  %v1689 = vpop.f32.mrb[0].mxu0
  %v1690 = vadd.f32 0.0, %v1689
  %v1691 = vpop.f32.mrb[0].mxu0
  %v1692 = vpop.f32.mrb[0].mxu0
  %v1693 = vadd.f32 0.0, %v1692
  %v1694 = vpop.f32.mrb[0].mxu0
  %1695 = vmatprep.mubr.bf16.mxu0 0
  %1696 = vmatmul.mubr.bf16.gmra.mrb[0].mxu0 %v729
  %v1697 = vpop.f32.mrb[0].mxu0
  %v1698 = vadd.f32 0.0, %v1697
  %v1699 = vpop.f32.mrb[0].mxu0
  %v1700 = vpop.f32.mrb[0].mxu0
  %v1701 = vadd.f32 0.0, %v1700
  %v1702 = vpop.f32.mrb[0].mxu0
  %1703 = vmatprep.mubr.bf16.mxu0 0
  %1704 = vmatmul.mubr.bf16.gmra.mrb[0].mxu0 %v730
  %v1705 = vpop.f32.mrb[0].mxu0
  %v1706 = vadd.f32 0.0, %v1705
  %v1707 = vpop.f32.mrb[0].mxu0
  %v1708 = vpop.f32.mrb[0].mxu0
  %v1709 = vadd.f32 0.0, %v1708
  %v1710 = vpop.f32.mrb[0].mxu0
  %1711 = vdwg.mxu0
  %v1712 = vmax.f32 %v914, %v1114
  %v1713 = vmax.f32 %v917, %v1117
  %v1714 = vmax.f32 %v922, %v1122
  %v1715 = vmax.f32 %v925, %v1125
  %v1716 = vmax.f32 %v930, %v1130
  %v1717 = vmax.f32 %v933, %v1133
  %v1718 = vmax.f32 %v938, %v1138
  %v1719 = vmax.f32 %v941, %v1141
  %v1720 = vmax.f32 %v946, %v1146
  %v1721 = vmax.f32 %v949, %v1149
  %v1722 = vmax.f32 %v954, %v1154
  %v1723 = vmax.f32 %v957, %v1157
  %v1724 = vmax.f32 %v962, %v1162
  %v1725 = vmax.f32 %v965, %v1165
  %v1726 = vmax.f32 %v970, %v1170
  %v1727 = vmax.f32 %v973, %v1173
  %v1728 = vmax.f32 %v978, %v1178
  %v1729 = vmax.f32 %v981, %v1181
  %v1730 = vmax.f32 %v986, %v1186
  %v1731 = vmax.f32 %v989, %v1189
  %v1732 = vmax.f32 %v994, %v1194
  %v1733 = vmax.f32 %v997, %v1197
  %v1734 = vmax.f32 %v1002, %v1202
  %v1735 = vmax.f32 %v1005, %v1205
  %v1736 = vmax.f32 %v1010, %v1210
  %v1737 = vmax.f32 %v1013, %v1213
  %v1738 = vmax.f32 %v1018, %v1218
  %v1739 = vmax.f32 %v1021, %v1221
  %v1740 = vmax.f32 %v1026, %v1226
  %v1741 = vmax.f32 %v1029, %v1229
  %v1742 = vmax.f32 %v1034, %v1234
  %v1743 = vmax.f32 %v1037, %v1237
  %v1744 = vmax.f32 %v1042, %v1242
  %v1745 = vmax.f32 %v1045, %v1245
  %v1746 = vmax.f32 %v1050, %v1250
  %v1747 = vmax.f32 %v1053, %v1253
  %v1748 = vmax.f32 %v1058, %v1258
  %v1749 = vmax.f32 %v1061, %v1261
  %v1750 = vmax.f32 %v1066, %v1266
  %v1751 = vmax.f32 %v1069, %v1269
  %v1752 = vmax.f32 %v1074, %v1274
  %v1753 = vmax.f32 %v1077, %v1277
  %v1754 = vmax.f32 %v1082, %v1282
  %v1755 = vmax.f32 %v1085, %v1285
  %v1756 = vmax.f32 %v1090, %v1290
  %v1757 = vmax.f32 %v1093, %v1293
  %v1758 = vmax.f32 %v1098, %v1298
  %v1759 = vmax.f32 %v1101, %v1301
  %v1760 = vmax.f32 %v1106, %v1306
  %v1761 = vmax.f32 %v1109, %v1309
  %v1762 = vmax.f32 %v1314, %v1514
  %v1763 = vmax.f32 %v1317, %v1517
  %v1764 = vmax.f32 %v1322, %v1522
  %v1765 = vmax.f32 %v1325, %v1525
  %v1766 = vmax.f32 %v1330, %v1530
  %v1767 = vmax.f32 %v1333, %v1533
  %v1768 = vmax.f32 %v1338, %v1538
  %v1769 = vmax.f32 %v1341, %v1541
  %v1770 = vmax.f32 %v1346, %v1546
  %v1771 = vmax.f32 %v1349, %v1549
  %v1772 = vmax.f32 %v1354, %v1554
  %v1773 = vmax.f32 %v1357, %v1557
  %v1774 = vmax.f32 %v1362, %v1562
  %v1775 = vmax.f32 %v1365, %v1565
  %v1776 = vmax.f32 %v1370, %v1570
  %v1777 = vmax.f32 %v1373, %v1573
  %v1778 = vmax.f32 %v1378, %v1578
  %v1779 = vmax.f32 %v1381, %v1581
  %v1780 = vmax.f32 %v1386, %v1586
  %v1781 = vmax.f32 %v1389, %v1589
  %v1782 = vmax.f32 %v1394, %v1594
  %v1783 = vmax.f32 %v1397, %v1597
  %v1784 = vmax.f32 %v1402, %v1602
  %v1785 = vmax.f32 %v1405, %v1605
  %v1786 = vmax.f32 %v1410, %v1610
  %v1787 = vmax.f32 %v1413, %v1613
  %v1788 = vmax.f32 %v1418, %v1618
  %v1789 = vmax.f32 %v1421, %v1621
  %v1790 = vmax.f32 %v1426, %v1626
  %v1791 = vmax.f32 %v1429, %v1629
  %v1792 = vmax.f32 %v1434, %v1634
  %v1793 = vmax.f32 %v1437, %v1637
  %v1794 = vmax.f32 %v1442, %v1642
  %v1795 = vmax.f32 %v1445, %v1645
  %v1796 = vmax.f32 %v1450, %v1650
  %v1797 = vmax.f32 %v1453, %v1653
  %v1798 = vmax.f32 %v1458, %v1658
  %v1799 = vmax.f32 %v1461, %v1661
  %v1800 = vmax.f32 %v1466, %v1666
  %v1801 = vmax.f32 %v1469, %v1669
  %v1802 = vmax.f32 %v1474, %v1674
  %v1803 = vmax.f32 %v1477, %v1677
  %v1804 = vmax.f32 %v1482, %v1682
  %v1805 = vmax.f32 %v1485, %v1685
  %v1806 = vmax.f32 %v1490, %v1690
  %v1807 = vmax.f32 %v1493, %v1693
  %v1808 = vmax.f32 %v1498, %v1698
  %v1809 = vmax.f32 %v1501, %v1701
  %v1810 = vmax.f32 %v1506, %v1706
  %v1811 = vmax.f32 %v1509, %v1709
  %v1812 = vmax.f32 %v1712, %v1762
  %v1813 = vmax.f32 %v1713, %v1763
  %v1814 = vmax.f32 %v1714, %v1764
  %v1815 = vmax.f32 %v1715, %v1765
  %v1816 = vmax.f32 %v1716, %v1766
  %v1817 = vmax.f32 %v1717, %v1767
  %v1818 = vmax.f32 %v1718, %v1768
  %v1819 = vmax.f32 %v1719, %v1769
  %v1820 = vmax.f32 %v1720, %v1770
  %v1821 = vmax.f32 %v1721, %v1771
  %v1822 = vmax.f32 %v1722, %v1772
  %v1823 = vmax.f32 %v1723, %v1773
  %v1824 = vmax.f32 %v1724, %v1774
  %v1825 = vmax.f32 %v1725, %v1775
  %v1826 = vmax.f32 %v1726, %v1776
  %v1827 = vmax.f32 %v1727, %v1777
  %v1828 = vmax.f32 %v1728, %v1778
  %v1829 = vmax.f32 %v1729, %v1779
  %v1830 = vmax.f32 %v1730, %v1780
  %v1831 = vmax.f32 %v1731, %v1781
  %v1832 = vmax.f32 %v1732, %v1782
  %v1833 = vmax.f32 %v1733, %v1783
  %v1834 = vmax.f32 %v1734, %v1784
  %v1835 = vmax.f32 %v1735, %v1785
  %v1836 = vmax.f32 %v1736, %v1786
  %v1837 = vmax.f32 %v1737, %v1787
  %v1838 = vmax.f32 %v1738, %v1788
  %v1839 = vmax.f32 %v1739, %v1789
  %v1840 = vmax.f32 %v1740, %v1790
  %v1841 = vmax.f32 %v1741, %v1791
  %v1842 = vmax.f32 %v1742, %v1792
  %v1843 = vmax.f32 %v1743, %v1793
  %v1844 = vmax.f32 %v1744, %v1794
  %v1845 = vmax.f32 %v1745, %v1795
  %v1846 = vmax.f32 %v1746, %v1796
  %v1847 = vmax.f32 %v1747, %v1797
  %v1848 = vmax.f32 %v1748, %v1798
  %v1849 = vmax.f32 %v1749, %v1799
  %v1850 = vmax.f32 %v1750, %v1800
  %v1851 = vmax.f32 %v1751, %v1801
  %v1852 = vmax.f32 %v1752, %v1802
  %v1853 = vmax.f32 %v1753, %v1803
  %v1854 = vmax.f32 %v1754, %v1804
  %v1855 = vmax.f32 %v1755, %v1805
  %v1856 = vmax.f32 %v1756, %v1806
  %v1857 = vmax.f32 %v1757, %v1807
  %v1858 = vmax.f32 %v1758, %v1808
  %v1859 = vmax.f32 %v1759, %v1809
  %v1860 = vmax.f32 %v1760, %v1810
  %v1861 = vmax.f32 %v1761, %v1811
  %v1862 = vld [vmem:[%s2] sm:$0x1]
  %v1864 = vlaneseq
  %v1865 = vshrl.u32 %v1864, 7
  %v1866 = vsub.s32 0, %v1865
  %v1867 = vrot.slane %v1862, %v1866
  %v1869 = vadd.f32 %v1812, %v1867
  %v1870 = vadd.f32 %v1813, %v1867
  %v1871 = vadd.f32 %v1814, %v1867
  %v1872 = vadd.f32 %v1815, %v1867
  %v1873 = vadd.f32 %v1816, %v1867
  %v1874 = vadd.f32 %v1817, %v1867
  %v1875 = vadd.f32 %v1818, %v1867
  %v1876 = vadd.f32 %v1819, %v1867
  %v1877 = vadd.f32 %v1820, %v1867
  %v1878 = vadd.f32 %v1821, %v1867
  %v1879 = vadd.f32 %v1822, %v1867
  %v1880 = vadd.f32 %v1823, %v1867
  %v1881 = vadd.f32 %v1824, %v1867
  %v1882 = vadd.f32 %v1825, %v1867
  %v1883 = vadd.f32 %v1826, %v1867
  %v1884 = vadd.f32 %v1827, %v1867
  %v1885 = vadd.f32 %v1828, %v1867
  %v1886 = vadd.f32 %v1829, %v1867
  %v1887 = vadd.f32 %v1830, %v1867
  %v1888 = vadd.f32 %v1831, %v1867
  %v1889 = vadd.f32 %v1832, %v1867
  %v1890 = vadd.f32 %v1833, %v1867
  %v1891 = vadd.f32 %v1834, %v1867
  %v1892 = vadd.f32 %v1835, %v1867
  %v1893 = vadd.f32 %v1836, %v1867
  %v1894 = vadd.f32 %v1837, %v1867
  %v1895 = vadd.f32 %v1838, %v1867
  %v1896 = vadd.f32 %v1839, %v1867
  %v1897 = vadd.f32 %v1840, %v1867
  %v1898 = vadd.f32 %v1841, %v1867
  %v1899 = vadd.f32 %v1842, %v1867
  %v1900 = vadd.f32 %v1843, %v1867
  %v1901 = vadd.f32 %v1844, %v1867
  %v1902 = vadd.f32 %v1845, %v1867
  %v1903 = vadd.f32 %v1846, %v1867
  %v1904 = vadd.f32 %v1847, %v1867
  %v1905 = vadd.f32 %v1848, %v1867
  %v1906 = vadd.f32 %v1849, %v1867
  %v1907 = vadd.f32 %v1850, %v1867
  %v1908 = vadd.f32 %v1851, %v1867
  %v1909 = vadd.f32 %v1852, %v1867
  %v1910 = vadd.f32 %v1853, %v1867
  %v1911 = vadd.f32 %v1854, %v1867
  %v1912 = vadd.f32 %v1855, %v1867
  %v1913 = vadd.f32 %v1856, %v1867
  %v1914 = vadd.f32 %v1857, %v1867
  %v1915 = vadd.f32 %v1858, %v1867
  %v1916 = vadd.f32 %v1859, %v1867
  %v1917 = vadd.f32 %v1860, %v1867
  %v1918 = vadd.f32 %v1861, %v1867
  %v1919 = vmax.f32 %v1869, 0.0
  %v1920 = vmax.f32 %v1870, 0.0
  %v1921 = vmax.f32 %v1871, 0.0
  %v1922 = vmax.f32 %v1872, 0.0
  %v1923 = vmax.f32 %v1873, 0.0
  %v1924 = vmax.f32 %v1874, 0.0
  %v1925 = vmax.f32 %v1875, 0.0
  %v1926 = vmax.f32 %v1876, 0.0
  %v1927 = vmax.f32 %v1877, 0.0
  %v1928 = vmax.f32 %v1878, 0.0
  %v1929 = vmax.f32 %v1879, 0.0
  %v1930 = vmax.f32 %v1880, 0.0
  %v1931 = vmax.f32 %v1881, 0.0
  %v1932 = vmax.f32 %v1882, 0.0
  %v1933 = vmax.f32 %v1883, 0.0
  %v1934 = vmax.f32 %v1884, 0.0
  %v1935 = vmax.f32 %v1885, 0.0
  %v1936 = vmax.f32 %v1886, 0.0
  %v1937 = vmax.f32 %v1887, 0.0
  %v1938 = vmax.f32 %v1888, 0.0
  %v1939 = vmax.f32 %v1889, 0.0
  %v1940 = vmax.f32 %v1890, 0.0
  %v1941 = vmax.f32 %v1891, 0.0
  %v1942 = vmax.f32 %v1892, 0.0
  %v1943 = vmax.f32 %v1893, 0.0
  %v1944 = vmax.f32 %v1894, 0.0
  %v1945 = vmax.f32 %v1895, 0.0
  %v1946 = vmax.f32 %v1896, 0.0
  %v1947 = vmax.f32 %v1897, 0.0
  %v1948 = vmax.f32 %v1898, 0.0
  %v1949 = vmax.f32 %v1899, 0.0
  %v1950 = vmax.f32 %v1900, 0.0
  %v1951 = vmax.f32 %v1901, 0.0
  %v1952 = vmax.f32 %v1902, 0.0
  %v1953 = vmax.f32 %v1903, 0.0
  %v1954 = vmax.f32 %v1904, 0.0
  %v1955 = vmax.f32 %v1905, 0.0
  %v1956 = vmax.f32 %v1906, 0.0
  %v1957 = vmax.f32 %v1907, 0.0
  %v1958 = vmax.f32 %v1908, 0.0
  %v1959 = vmax.f32 %v1909, 0.0
  %v1960 = vmax.f32 %v1910, 0.0
  %v1961 = vmax.f32 %v1911, 0.0
  %v1962 = vmax.f32 %v1912, 0.0
  %v1963 = vmax.f32 %v1913, 0.0
  %v1964 = vmax.f32 %v1914, 0.0
  %v1965 = vmax.f32 %v1915, 0.0
  %v1966 = vmax.f32 %v1916, 0.0
  %v1967 = vmax.f32 %v1917, 0.0
  %v1968 = vmax.f32 %v1918, 0.0
  %v1969 = vpack.c.bf16 %v1920, %v1919
  %v1970 = vpack.c.bf16 %v1922, %v1921
  %v1971 = vpack.c.bf16 %v1924, %v1923
  %v1972 = vpack.c.bf16 %v1926, %v1925
  %v1973 = vpack.c.bf16 %v1928, %v1927
  %v1974 = vpack.c.bf16 %v1930, %v1929
  %v1975 = vpack.c.bf16 %v1932, %v1931
  %v1976 = vpack.c.bf16 %v1934, %v1933
  %v1977 = vpack.c.bf16 %v1936, %v1935
  %v1978 = vpack.c.bf16 %v1938, %v1937
  %v1979 = vpack.c.bf16 %v1940, %v1939
  %v1980 = vpack.c.bf16 %v1942, %v1941
  %v1981 = vpack.c.bf16 %v1944, %v1943
  %v1982 = vpack.c.bf16 %v1946, %v1945
  %v1983 = vpack.c.bf16 %v1948, %v1947
  %v1984 = vpack.c.bf16 %v1950, %v1949
  %v1985 = vpack.c.bf16 %v1952, %v1951
  %v1986 = vpack.c.bf16 %v1954, %v1953
  %v1987 = vpack.c.bf16 %v1956, %v1955
  %v1988 = vpack.c.bf16 %v1958, %v1957
  %v1989 = vpack.c.bf16 %v1960, %v1959
  %v1990 = vpack.c.bf16 %v1962, %v1961
  %v1991 = vpack.c.bf16 %v1964, %v1963
  %v1992 = vpack.c.bf16 %v1966, %v1965
  %v1993 = vpack.c.bf16 %v1968, %v1967
  %v2019 = vunpack.c.l.b16 %v1969
  %v2020 = vunpack.c.h.b16 %v1969
  %v2021 = vunpack.c.l.b16 %v1970
  %v2022 = vunpack.c.h.b16 %v1970
  %v2023 = vunpack.c.l.b16 %v1971
  %v2024 = vunpack.c.h.b16 %v1971
  %v2025 = vunpack.c.l.b16 %v1972
  %v2026 = vunpack.c.h.b16 %v1972
  %v2027 = vunpack.c.l.b16 %v1973
  %v2028 = vunpack.c.h.b16 %v1973
  %v2029 = vunpack.c.l.b16 %v1974
  %v2030 = vunpack.c.h.b16 %v1974
  %v2031 = vunpack.c.l.b16 %v1975
  %v2032 = vunpack.c.h.b16 %v1975
  %v2033 = vunpack.c.l.b16 %v1976
  %v2034 = vunpack.c.h.b16 %v1976
  %v2035 = vunpack.c.l.b16 %v1977
  %v2036 = vunpack.c.h.b16 %v1977
  %v2037 = vunpack.c.l.b16 %v1978
  %v2038 = vunpack.c.h.b16 %v1978
  %v2039 = vunpack.c.l.b16 %v1979
  %v2040 = vunpack.c.h.b16 %v1979
  %v2041 = vunpack.c.l.b16 %v1980
  %v2042 = vunpack.c.h.b16 %v1980
  %v2043 = vunpack.c.l.b16 %v1981
  %v2044 = vunpack.c.h.b16 %v1981
  %v2045 = vunpack.c.l.b16 %v1982
  %v2046 = vunpack.c.h.b16 %v1982
  %v2047 = vunpack.c.l.b16 %v1983
  %v2048 = vunpack.c.h.b16 %v1983
  %v2049 = vunpack.c.l.b16 %v1984
  %v2050 = vunpack.c.h.b16 %v1984
  %v2051 = vunpack.c.l.b16 %v1985
  %v2052 = vunpack.c.h.b16 %v1985
  %v2053 = vunpack.c.l.b16 %v1986
  %v2054 = vunpack.c.h.b16 %v1986
  %v2055 = vunpack.c.l.b16 %v1987
  %v2056 = vunpack.c.h.b16 %v1987
  %v2057 = vunpack.c.l.b16 %v1988
  %v2058 = vunpack.c.h.b16 %v1988
  %v2059 = vunpack.c.l.b16 %v1989
  %v2060 = vunpack.c.h.b16 %v1989
  %v2061 = vunpack.c.l.b16 %v1990
  %v2062 = vunpack.c.h.b16 %v1990
  %v2063 = vunpack.c.l.b16 %v1991
  %v2064 = vunpack.c.h.b16 %v1991
  %v2065 = vunpack.c.l.b16 %v1992
  %v2066 = vunpack.c.h.b16 %v1992
  %v2067 = vunpack.c.l.b16 %v1993
  %v2068 = vunpack.c.h.b16 %v1993
  %v2069 = vpack.c.b16 %v2019, %v2019
  %v2070 = vpack.c.b16 %v2020, %v2020
  %v2071 = vpack.c.b16 %v2021, %v2021
  %v2072 = vpack.c.b16 %v2022, %v2022
  %v2073 = vpack.c.b16 %v2023, %v2023
  %v2074 = vpack.c.b16 %v2024, %v2024
  %v2075 = vpack.c.b16 %v2025, %v2025
  %v2076 = vpack.c.b16 %v2026, %v2026
  %v2077 = vpack.c.b16 %v2027, %v2027
  %v2078 = vpack.c.b16 %v2028, %v2028
  %v2079 = vpack.c.b16 %v2029, %v2029
  %v2080 = vpack.c.b16 %v2030, %v2030
  %v2081 = vpack.c.b16 %v2031, %v2031
  %v2082 = vpack.c.b16 %v2032, %v2032
  %v2083 = vpack.c.b16 %v2033, %v2033
  %v2084 = vpack.c.b16 %v2034, %v2034
  %v2085 = vpack.c.b16 %v2035, %v2035
  %v2086 = vpack.c.b16 %v2036, %v2036
  %v2087 = vpack.c.b16 %v2037, %v2037
  %v2088 = vpack.c.b16 %v2038, %v2038
  %v2089 = vpack.c.b16 %v2039, %v2039
  %v2090 = vpack.c.b16 %v2040, %v2040
  %v2091 = vpack.c.b16 %v2041, %v2041
  %v2092 = vpack.c.b16 %v2042, %v2042
  %v2093 = vpack.c.b16 %v2043, %v2043
  %v2094 = vpack.c.b16 %v2044, %v2044
  %v2095 = vpack.c.b16 %v2045, %v2045
  %v2096 = vpack.c.b16 %v2046, %v2046
  %v2097 = vpack.c.b16 %v2047, %v2047
  %v2098 = vpack.c.b16 %v2048, %v2048
  %v2099 = vpack.c.b16 %v2049, %v2049
  %v2100 = vpack.c.b16 %v2050, %v2050
  %v2101 = vpack.c.b16 %v2051, %v2051
  %v2102 = vpack.c.b16 %v2052, %v2052
  %v2103 = vpack.c.b16 %v2053, %v2053
  %v2104 = vpack.c.b16 %v2054, %v2054
  %v2105 = vpack.c.b16 %v2055, %v2055
  %v2106 = vpack.c.b16 %v2056, %v2056
  %v2107 = vpack.c.b16 %v2057, %v2057
  %v2108 = vpack.c.b16 %v2058, %v2058
  %v2109 = vpack.c.b16 %v2059, %v2059
  %v2110 = vpack.c.b16 %v2060, %v2060
  %v2111 = vpack.c.b16 %v2061, %v2061
  %v2112 = vpack.c.b16 %v2062, %v2062
  %v2113 = vpack.c.b16 %v2063, %v2063
  %v2114 = vpack.c.b16 %v2064, %v2064
  %v2115 = vpack.c.b16 %v2065, %v2065
  %v2116 = vpack.c.b16 %v2066, %v2066
  %v2117 = vpack.c.b16 %v2067, %v2067
  %v2118 = vpack.c.b16 %v2068, %v2068
  %2169 = vst [vmem:[%s3] sm:$0xf] %v2069
  %2170 = vst [vmem:[%s3 + $0x4] sm:$0xf] %v2070
  %2171 = vst [vmem:[%s3 + $0x8] sm:$0xf] %v2071
  %2172 = vst [vmem:[%s3 + $0xc] sm:$0xf] %v2072
  %2173 = vst [vmem:[%s3 + $0x10] sm:$0xf] %v2073
  %2174 = vst [vmem:[%s3 + $0x14] sm:$0xf] %v2074
  %2175 = vst [vmem:[%s3 + $0x18] sm:$0xf] %v2075
  %2176 = vst [vmem:[%s3 + $0x1c] sm:$0xf] %v2076
  %2177 = vst [vmem:[%s3 + $0x20] sm:$0xf] %v2077
  %2178 = vst [vmem:[%s3 + $0x24] sm:$0xf] %v2078
  %2179 = vst [vmem:[%s3 + $0x28] sm:$0xf] %v2079
  %2180 = vst [vmem:[%s3 + $0x2c] sm:$0xf] %v2080
  %2181 = vst [vmem:[%s3 + $0x30] sm:$0xf] %v2081
  %2182 = vst [vmem:[%s3 + $0x34] sm:$0xf] %v2082
  %2183 = vst [vmem:[%s3 + $0x38] sm:$0xf] %v2083
  %2184 = vst [vmem:[%s3 + $0x3c] sm:$0xf] %v2084
  %2185 = vst [vmem:[%s3 + $0x40] sm:$0xf] %v2085
  %2186 = vst [vmem:[%s3 + $0x44] sm:$0xf] %v2086
  %2187 = vst [vmem:[%s3 + $0x48] sm:$0xf] %v2087
  %2188 = vst [vmem:[%s3 + $0x4c] sm:$0xf] %v2088
  %2189 = vst [vmem:[%s3 + $0x50] sm:$0xf] %v2089
  %2190 = vst [vmem:[%s3 + $0x54] sm:$0xf] %v2090
  %2191 = vst [vmem:[%s3 + $0x58] sm:$0xf] %v2091
  %2192 = vst [vmem:[%s3 + $0x5c] sm:$0xf] %v2092
  %2193 = vst [vmem:[%s3 + $0x60] sm:$0xf] %v2093
  %2194 = vst [vmem:[%s3 + $0x64] sm:$0xf] %v2094
  %2195 = vst [vmem:[%s3 + $0x68] sm:$0xf] %v2095
  %2196 = vst [vmem:[%s3 + $0x6c] sm:$0xf] %v2096
  %2197 = vst [vmem:[%s3 + $0x70] sm:$0xf] %v2097
  %2198 = vst [vmem:[%s3 + $0x74] sm:$0xf] %v2098
  %2199 = vst [vmem:[%s3 + $0x78] sm:$0xf] %v2099
  %2200 = vst [vmem:[%s3 + $0x7c] sm:$0xf] %v2100
  %2201 = vst [vmem:[%s3 + $0x80] sm:$0xf] %v2101
  %2202 = vst [vmem:[%s3 + $0x84] sm:$0xf] %v2102
  %2203 = vst [vmem:[%s3 + $0x88] sm:$0xf] %v2103
  %2204 = vst [vmem:[%s3 + $0x8c] sm:$0xf] %v2104
  %2205 = vst [vmem:[%s3 + $0x90] sm:$0xf] %v2105
  %2206 = vst [vmem:[%s3 + $0x94] sm:$0xf] %v2106
  %2207 = vst [vmem:[%s3 + $0x98] sm:$0xf] %v2107
  %2208 = vst [vmem:[%s3 + $0x9c] sm:$0xf] %v2108
  %2209 = vst [vmem:[%s3 + $0xa0] sm:$0xf] %v2109
  %2210 = vst [vmem:[%s3 + $0xa4] sm:$0xf] %v2110
  %2211 = vst [vmem:[%s3 + $0xa8] sm:$0xf] %v2111
  %2212 = vst [vmem:[%s3 + $0xac] sm:$0xf] %v2112
  %2213 = vst [vmem:[%s3 + $0xb0] sm:$0xf] %v2113
  %2214 = vst [vmem:[%s3 + $0xb4] sm:$0xf] %v2114
  %2215 = vst [vmem:[%s3 + $0xb8] sm:$0xf] %v2115
  %2216 = vst [vmem:[%s3 + $0xbc] sm:$0xf] %v2116
  %2217 = vst [vmem:[%s3 + $0xc0] sm:$0xf] %v2117
  %2218 = vst [vmem:[%s3 + $0xc4] sm:$0xf] %v2118
  // Predicated region
  $region14: #{lenet5_forward.2} parent=0 // pred_check
    _
  $region15: #{lenet5_forward.2} parent=0 // pred_check_branch
    %2220 = sbr.rel (0) target = $region17
  $region16: #{lenet5_forward.2} parent=0 // pred_region
    _
  $region17: #{lenet5_forward.2} parent=0 // pred_fallthru
    _
  // Predicated region
  $region18: #{lenet5_forward.2} parent=0 // pred_check
    _
  $region19: #{lenet5_forward.2} parent=0 // pred_check_branch
    %2222 = sbr.rel (0) target = $region21
  $region20: #{lenet5_forward.2} parent=0 // pred_region
    _
  $region21: #{lenet5_forward.2} parent=0 // pred_fallthru
    _

// kernel: lenet5_forward.3
$region0: #{lenet5_forward.3}
  #allocation0 [shape = 'u32[]', space=smem, size = 0x4, offset = 0x4, fixed_abs, tag = 'smem constant byte address 0x4 - core index']
  #allocation1 [shape = 'u32[144,128]{1,0:T(1,128)}', space=vmem, size = 0x12000, scoped, tag = 'internal scratch']
  %s0 = inlined_call_operand.vmem [shape: bf16[4,208,256], index: 0, kind: input, shape index: {}]
  %s1 = inlined_call_operand.vmem [shape: bf16[256,128], index: 1, kind: input, shape index: {}]
  %s2 = inlined_call_operand.vmem [shape: f32[1,128], index: 2, kind: input, shape index: {}]
  %s3 = inlined_call_operand.vmem [shape: bf16[25,128,128], index: 3, kind: input, shape index: {}]
  %s4 = inlined_call_operand.vmem [shape: f32[1,128], index: 4, kind: input, shape index: {}]
  %s5 = inlined_call_operand.vmem [shape: bf16[128,128], index: 5, kind: input, shape index: {}]
  %s6 = inlined_call_operand.vmem [shape: f32[1,128], index: 6, kind: input, shape index: {}]
  %s7 = inlined_call_operand.vmem [shape: bf16[128,128], index: 7, kind: input, shape index: {}]
  %s8 = inlined_call_operand.vmem [shape: f32[1,128], index: 8, kind: input, shape index: {}]
  %s9 = inlined_call_operand.vmem [shape: bf16[128,128], index: 9, kind: input, shape index: {}]
  %s10 = inlined_call_operand.vmem [shape: f32[1,128], index: 10, kind: input, shape index: {}]
  %s11 = inlined_call_operand.vmem [shape: f32[8,128], index: 11, kind: output, shape index: {}]
  %s12 = sld [smem:[#allocation0]]
  $region54: #{lenet5_forward.3} parent=0
    _
  %s14 = ssub.s32 1, %s12
  %s15 = scalar_select 0, %s14, %s12
  // Predicated region
  $region2: #{lenet5_forward.3} parent=0 // pred_check
    _
  $region3: #{lenet5_forward.3} parent=0 // pred_check_branch
    %17 = sbr.rel (0) target = $region5
  $region4: #{lenet5_forward.3} parent=0 // pred_region
    _
  $region5: #{lenet5_forward.3} parent=0 // pred_fallthru
    _
  // Predicated region
  $region6: #{lenet5_forward.3} parent=0 // pred_check
    _
  $region7: #{lenet5_forward.3} parent=0 // pred_check_branch
    %19 = sbr.rel (0) target = $region9
  $region8: #{lenet5_forward.3} parent=0 // pred_region
    _
  $region9: #{lenet5_forward.3} parent=0 // pred_fallthru
    _
  // Predicated region
  $region10: #{lenet5_forward.3} parent=0 // pred_check
    _
  $region11: #{lenet5_forward.3} parent=0 // pred_check_branch
    %21 = sbr.rel (0) target = $region13
  $region12: #{lenet5_forward.3} parent=0 // pred_region
    _
  $region13: #{lenet5_forward.3} parent=0 // pred_fallthru
    _
  // Predicated region
  $region14: #{lenet5_forward.3} parent=0 // pred_check
    _
  $region15: #{lenet5_forward.3} parent=0 // pred_check_branch
    %23 = sbr.rel (0) target = $region17
  $region16: #{lenet5_forward.3} parent=0 // pred_region
    _
  $region17: #{lenet5_forward.3} parent=0 // pred_fallthru
    _
  // Predicated region
  $region18: #{lenet5_forward.3} parent=0 // pred_check
    _
  $region19: #{lenet5_forward.3} parent=0 // pred_check_branch
    %25 = sbr.rel (0) target = $region21
  $region20: #{lenet5_forward.3} parent=0 // pred_region
    _
  $region21: #{lenet5_forward.3} parent=0 // pred_fallthru
    _
  // Predicated region
  $region22: #{lenet5_forward.3} parent=0 // pred_check
    _
  $region23: #{lenet5_forward.3} parent=0 // pred_check_branch
    %27 = sbr.rel (0) target = $region25
  $region24: #{lenet5_forward.3} parent=0 // pred_region
    _
  $region25: #{lenet5_forward.3} parent=0 // pred_fallthru
    _
  // Predicated region
  $region26: #{lenet5_forward.3} parent=0 // pred_check
    _
  $region27: #{lenet5_forward.3} parent=0 // pred_check_branch
    %29 = sbr.rel (0) target = $region29
  $region28: #{lenet5_forward.3} parent=0 // pred_region
    _
  $region29: #{lenet5_forward.3} parent=0 // pred_fallthru
    _
  // Predicated region
  $region30: #{lenet5_forward.3} parent=0 // pred_check
    _
  $region31: #{lenet5_forward.3} parent=0 // pred_check_branch
    %31 = sbr.rel (0) target = $region33
  $region32: #{lenet5_forward.3} parent=0 // pred_region
    _
  $region33: #{lenet5_forward.3} parent=0 // pred_fallthru
    _
  // Predicated region
  $region34: #{lenet5_forward.3} parent=0 // pred_check
    _
  $region35: #{lenet5_forward.3} parent=0 // pred_check_branch
    %33 = sbr.rel (0) target = $region37
  $region36: #{lenet5_forward.3} parent=0 // pred_region
    _
  $region37: #{lenet5_forward.3} parent=0 // pred_fallthru
    _
  // Predicated region
  $region38: #{lenet5_forward.3} parent=0 // pred_check
    _
  $region39: #{lenet5_forward.3} parent=0 // pred_check_branch
    %35 = sbr.rel (0) target = $region41
  $region40: #{lenet5_forward.3} parent=0 // pred_region
    _
  $region41: #{lenet5_forward.3} parent=0 // pred_fallthru
    _
  // Predicated region
  $region42: #{lenet5_forward.3} parent=0 // pred_check
    _
  $region43: #{lenet5_forward.3} parent=0 // pred_check_branch
    %37 = sbr.rel (0) target = $region45
  $region44: #{lenet5_forward.3} parent=0 // pred_region
    _
  $region45: #{lenet5_forward.3} parent=0 // pred_fallthru
    _
  %v39 = vld [vmem:[%s0] sm:$0xff]
  %v40 = vld [vmem:[%s0 + $0x8] sm:$0xff]
  %v41 = vld [vmem:[%s0 + $0x10] sm:$0xff]
  %v42 = vld [vmem:[%s0 + $0x18] sm:$0xff]
  %v43 = vld [vmem:[%s0 + $0x20] sm:$0xff]
  %v44 = vld [vmem:[%s0 + $0x28] sm:$0xff]
  %v45 = vld [vmem:[%s0 + $0x30] sm:$0xff]
  %v46 = vld [vmem:[%s0 + $0x38] sm:$0xff]
  %v47 = vld [vmem:[%s0 + $0x40] sm:$0xff]
  %v48 = vld [vmem:[%s0 + $0x48] sm:$0xff]
  %v49 = vld [vmem:[%s0 + $0x50] sm:$0xff]
  %v50 = vld [vmem:[%s0 + $0x58] sm:$0xff]
  %v51 = vld [vmem:[%s0 + $0x60] sm:$0xff]
  %v52 = vld [vmem:[%s0 + $0x68] sm:$0xff]
  %v53 = vld [vmem:[%s0 + $0x70] sm:$0xff]
  %v54 = vld [vmem:[%s0 + $0x78] sm:$0xff]
  %v55 = vld [vmem:[%s0 + $0x80] sm:$0xff]
  %v56 = vld [vmem:[%s0 + $0x88] sm:$0xff]
  %v57 = vld [vmem:[%s0 + $0x90] sm:$0xff]
  %v58 = vld [vmem:[%s0 + $0x98] sm:$0xff]
  %v59 = vld [vmem:[%s0 + $0xa0] sm:$0xff]
  %v60 = vld [vmem:[%s0 + $0xa8] sm:$0xff]
  %v61 = vld [vmem:[%s0 + $0xb0] sm:$0xff]
  %v62 = vld [vmem:[%s0 + $0xb8] sm:$0xff]
  %v63 = vld [vmem:[%s0 + $0xc0] sm:$0xff]
  %v64 = vld [vmem:[%s0 + $0xc8] sm:$0xff]
  %v65 = vld [vmem:[%s0 + $0xd0] sm:$0xff]
  %v66 = vld [vmem:[%s0 + $0xd8] sm:$0xff]
  %v67 = vld [vmem:[%s0 + $0xe0] sm:$0xff]
  %v68 = vld [vmem:[%s0 + $0xe8] sm:$0xff]
  %v69 = vld [vmem:[%s0 + $0xf0] sm:$0xff]
  %v70 = vld [vmem:[%s0 + $0xf8] sm:$0xff]
  %v71 = vld [vmem:[%s0 + $0x100] sm:$0xff]
  %v72 = vld [vmem:[%s0 + $0x108] sm:$0xff]
  %v73 = vld [vmem:[%s0 + $0x110] sm:$0xff]
  %v74 = vld [vmem:[%s0 + $0x118] sm:$0xff]
  %v75 = vld [vmem:[%s0 + $0x120] sm:$0xff]
  %v76 = vld [vmem:[%s0 + $0x128] sm:$0xff]
  %v77 = vld [vmem:[%s0 + $0x130] sm:$0xff]
  %v78 = vld [vmem:[%s0 + $0x138] sm:$0xff]
  %v79 = vld [vmem:[%s0 + $0x140] sm:$0xff]
  %v80 = vld [vmem:[%s0 + $0x148] sm:$0xff]
  %v81 = vld [vmem:[%s0 + $0x150] sm:$0xff]
  %v82 = vld [vmem:[%s0 + $0x158] sm:$0xff]
  %v83 = vld [vmem:[%s0 + $0x160] sm:$0xff]
  %v84 = vld [vmem:[%s0 + $0x168] sm:$0xff]
  %v85 = vld [vmem:[%s0 + $0x170] sm:$0xff]
  %v86 = vld [vmem:[%s0 + $0x178] sm:$0xff]
  %v87 = vld [vmem:[%s0 + $0x180] sm:$0xff]
  %v88 = vld [vmem:[%s0 + $0x188] sm:$0xff]
  %v89 = vld [vmem:[%s0 + $0x190] sm:$0xff]
  %v90 = vld [vmem:[%s0 + $0x198] sm:$0xff]
  %v91 = vld [vmem:[%s0 + $0x1a0] sm:$0xff]
  %v92 = vld [vmem:[%s0 + $0x1a8] sm:$0xff]
  %v93 = vld [vmem:[%s0 + $0x1b0] sm:$0xff]
  %v94 = vld [vmem:[%s0 + $0x1b8] sm:$0xff]
  %v95 = vld [vmem:[%s0 + $0x1c0] sm:$0xff]
  %v96 = vld [vmem:[%s0 + $0x1c8] sm:$0xff]
  %v97 = vld [vmem:[%s0 + $0x1d0] sm:$0xff]
  %v98 = vld [vmem:[%s0 + $0x1d8] sm:$0xff]
  %v99 = vld [vmem:[%s0 + $0x1e0] sm:$0xff]
  %v100 = vld [vmem:[%s0 + $0x1e8] sm:$0xff]
  %v101 = vld [vmem:[%s0 + $0x1f0] sm:$0xff]
  %v102 = vld [vmem:[%s0 + $0x1f8] sm:$0xff]
  %v103 = vld [vmem:[%s0 + $0x200] sm:$0xff]
  %v104 = vld [vmem:[%s0 + $0x208] sm:$0xff]
  %v105 = vld [vmem:[%s0 + $0x210] sm:$0xff]
  %v106 = vld [vmem:[%s0 + $0x218] sm:$0xff]
  %v107 = vld [vmem:[%s0 + $0x220] sm:$0xff]
  %v108 = vld [vmem:[%s0 + $0x228] sm:$0xff]
  %v109 = vld [vmem:[%s0 + $0x230] sm:$0xff]
  %v110 = vld [vmem:[%s0 + $0x238] sm:$0xff]
  %v111 = vld [vmem:[%s0 + $0x240] sm:$0xff]
  %v112 = vld [vmem:[%s0 + $0x248] sm:$0xff]
  %v113 = vld [vmem:[%s0 + $0x250] sm:$0xff]
  %v114 = vld [vmem:[%s0 + $0x258] sm:$0xff]
  %v115 = vld [vmem:[%s0 + $0x260] sm:$0xff]
  %v116 = vld [vmem:[%s0 + $0x268] sm:$0xff]
  %v117 = vld [vmem:[%s0 + $0x270] sm:$0xff]
  %v118 = vld [vmem:[%s0 + $0x278] sm:$0xff]
  %v119 = vld [vmem:[%s0 + $0x280] sm:$0xff]
  %v120 = vld [vmem:[%s0 + $0x288] sm:$0xff]
  %v121 = vld [vmem:[%s0 + $0x290] sm:$0xff]
  %v122 = vld [vmem:[%s0 + $0x298] sm:$0xff]
  %v123 = vld [vmem:[%s0 + $0x2a0] sm:$0xff]
  %v124 = vld [vmem:[%s0 + $0x2a8] sm:$0xff]
  %v125 = vld [vmem:[%s0 + $0x2b0] sm:$0xff]
  %v126 = vld [vmem:[%s0 + $0x2b8] sm:$0xff]
  %v127 = vld [vmem:[%s0 + $0x2c0] sm:$0xff]
  %v128 = vld [vmem:[%s0 + $0x2c8] sm:$0xff]
  %v129 = vld [vmem:[%s0 + $0x2d0] sm:$0xff]
  %v130 = vld [vmem:[%s0 + $0x2d8] sm:$0xff]
  %v131 = vld [vmem:[%s0 + $0x2e0] sm:$0xff]
  %v132 = vld [vmem:[%s0 + $0x2e8] sm:$0xff]
  %v133 = vld [vmem:[%s0 + $0x2f0] sm:$0xff]
  %v134 = vld [vmem:[%s0 + $0x2f8] sm:$0xff]
  %v135 = vld [vmem:[%s0 + $0x300] sm:$0xff]
  %v136 = vld [vmem:[%s0 + $0x308] sm:$0xff]
  %v137 = vld [vmem:[%s0 + $0x310] sm:$0xff]
  %v138 = vld [vmem:[%s0 + $0x318] sm:$0xff]
  %v139 = vld [vmem:[%s0 + $0x320] sm:$0xff]
  %v140 = vld [vmem:[%s0 + $0x328] sm:$0xff]
  %v141 = vld [vmem:[%s0 + $0x330] sm:$0xff]
  %v142 = vld [vmem:[%s0 + $0x338] sm:$0xff]
  %v143 = vld [vmem:[%s1] sm:$0xf]
  %v144 = vld [vmem:[%s1 + $0x4] sm:$0xf]
  %v145 = vld [vmem:[%s1 + $0x8] sm:$0xf]
  %v146 = vld [vmem:[%s1 + $0xc] sm:$0xf]
  %v147 = vld [vmem:[%s1 + $0x10] sm:$0xf]
  %v148 = vld [vmem:[%s1 + $0x14] sm:$0xf]
  %v149 = vld [vmem:[%s1 + $0x18] sm:$0xf]
  %v150 = vld [vmem:[%s1 + $0x1c] sm:$0xf]
  %v151 = vld [vmem:[%s1 + $0x20] sm:$0xf]
  %v152 = vld [vmem:[%s1 + $0x24] sm:$0xf]
  %v153 = vld [vmem:[%s1 + $0x28] sm:$0xf]
  %v154 = vld [vmem:[%s1 + $0x2c] sm:$0xf]
  %v155 = vld [vmem:[%s1 + $0x30] sm:$0xf]
  %v156 = vld [vmem:[%s1 + $0x34] sm:$0xf]
  %v157 = vld [vmem:[%s1 + $0x38] sm:$0xf]
  %v158 = vld [vmem:[%s1 + $0x3c] sm:$0xf]
  %v159 = vld [vmem:[%s1 + $0x40] sm:$0xf]
  %v160 = vld [vmem:[%s1 + $0x44] sm:$0xf]
  %v161 = vld [vmem:[%s1 + $0x48] sm:$0xf]
  %v162 = vld [vmem:[%s1 + $0x4c] sm:$0xf]
  %v163 = vld [vmem:[%s1 + $0x50] sm:$0xf]
  %v164 = vld [vmem:[%s1 + $0x54] sm:$0xf]
  %v165 = vld [vmem:[%s1 + $0x58] sm:$0xf]
  %v166 = vld [vmem:[%s1 + $0x5c] sm:$0xf]
  %v167 = vld [vmem:[%s1 + $0x60] sm:$0xf]
  %v168 = vld [vmem:[%s1 + $0x64] sm:$0xf]
  %v169 = vld [vmem:[%s1 + $0x68] sm:$0xf]
  %v170 = vld [vmem:[%s1 + $0x6c] sm:$0xf]
  %v171 = vld [vmem:[%s1 + $0x70] sm:$0xf]
  %v172 = vld [vmem:[%s1 + $0x74] sm:$0xf]
  %v173 = vld [vmem:[%s1 + $0x78] sm:$0xf]
  %v174 = vld [vmem:[%s1 + $0x7c] sm:$0xf]
  %v279 = vunpack.c.l.b16 %v39
  %v280 = vunpack.c.h.b16 %v39
  %v281 = vunpack.c.l.b16 %v40
  %v282 = vunpack.c.h.b16 %v40
  %v283 = vunpack.c.l.b16 %v41
  %v284 = vunpack.c.h.b16 %v41
  %v285 = vunpack.c.l.b16 %v42
  %v286 = vunpack.c.h.b16 %v42
  %v287 = vunpack.c.l.b16 %v43
  %v288 = vunpack.c.h.b16 %v43
  %v289 = vunpack.c.l.b16 %v44
  %v290 = vunpack.c.h.b16 %v44
  %v291 = vunpack.c.l.b16 %v45
  %v292 = vunpack.c.h.b16 %v45
  %v293 = vunpack.c.l.b16 %v46
  %v294 = vunpack.c.h.b16 %v46
  %v295 = vunpack.c.l.b16 %v47
  %v296 = vunpack.c.h.b16 %v47
  %v297 = vunpack.c.l.b16 %v48
  %v298 = vunpack.c.h.b16 %v48
  %v299 = vunpack.c.l.b16 %v49
  %v300 = vunpack.c.h.b16 %v49
  %v301 = vunpack.c.l.b16 %v50
  %v302 = vunpack.c.h.b16 %v50
  %v303 = vunpack.c.l.b16 %v51
  %v304 = vunpack.c.h.b16 %v51
  %v305 = vunpack.c.l.b16 %v52
  %v306 = vunpack.c.h.b16 %v52
  %v307 = vunpack.c.l.b16 %v53
  %v308 = vunpack.c.h.b16 %v53
  %v309 = vunpack.c.l.b16 %v54
  %v310 = vunpack.c.h.b16 %v54
  %v311 = vunpack.c.l.b16 %v55
  %v312 = vunpack.c.h.b16 %v55
  %v313 = vunpack.c.l.b16 %v56
  %v314 = vunpack.c.h.b16 %v56
  %v315 = vunpack.c.l.b16 %v57
  %v316 = vunpack.c.h.b16 %v57
  %v317 = vunpack.c.l.b16 %v58
  %v318 = vunpack.c.h.b16 %v58
  %v319 = vunpack.c.l.b16 %v59
  %v320 = vunpack.c.h.b16 %v59
  %v321 = vunpack.c.l.b16 %v60
  %v322 = vunpack.c.h.b16 %v60
  %v323 = vunpack.c.l.b16 %v61
  %v324 = vunpack.c.h.b16 %v61
  %v325 = vunpack.c.l.b16 %v62
  %v326 = vunpack.c.h.b16 %v62
  %v327 = vunpack.c.l.b16 %v63
  %v328 = vunpack.c.h.b16 %v63
  %v329 = vunpack.c.l.b16 %v64
  %v330 = vunpack.c.h.b16 %v64
  %v331 = vunpack.c.l.b16 %v65
  %v332 = vunpack.c.h.b16 %v65
  %v333 = vunpack.c.l.b16 %v66
  %v334 = vunpack.c.h.b16 %v66
  %v335 = vunpack.c.l.b16 %v67
  %v336 = vunpack.c.h.b16 %v67
  %v337 = vunpack.c.l.b16 %v68
  %v338 = vunpack.c.h.b16 %v68
  %v339 = vunpack.c.l.b16 %v69
  %v340 = vunpack.c.h.b16 %v69
  %v341 = vunpack.c.l.b16 %v70
  %v342 = vunpack.c.h.b16 %v70
  %v343 = vunpack.c.l.b16 %v71
  %v344 = vunpack.c.h.b16 %v71
  %v345 = vunpack.c.l.b16 %v72
  %v346 = vunpack.c.h.b16 %v72
  %v347 = vunpack.c.l.b16 %v73
  %v348 = vunpack.c.h.b16 %v73
  %v349 = vunpack.c.l.b16 %v74
  %v350 = vunpack.c.h.b16 %v74
  %v351 = vunpack.c.l.b16 %v75
  %v352 = vunpack.c.h.b16 %v75
  %v353 = vunpack.c.l.b16 %v76
  %v354 = vunpack.c.h.b16 %v76
  %v355 = vunpack.c.l.b16 %v77
  %v356 = vunpack.c.h.b16 %v77
  %v357 = vunpack.c.l.b16 %v78
  %v358 = vunpack.c.h.b16 %v78
  %v359 = vunpack.c.l.b16 %v79
  %v360 = vunpack.c.h.b16 %v79
  %v361 = vunpack.c.l.b16 %v80
  %v362 = vunpack.c.h.b16 %v80
  %v363 = vunpack.c.l.b16 %v81
  %v364 = vunpack.c.h.b16 %v81
  %v365 = vunpack.c.l.b16 %v82
  %v366 = vunpack.c.h.b16 %v82
  %v367 = vunpack.c.l.b16 %v83
  %v368 = vunpack.c.h.b16 %v83
  %v369 = vunpack.c.l.b16 %v84
  %v370 = vunpack.c.h.b16 %v84
  %v371 = vunpack.c.l.b16 %v85
  %v372 = vunpack.c.h.b16 %v85
  %v373 = vunpack.c.l.b16 %v86
  %v374 = vunpack.c.h.b16 %v86
  %v375 = vunpack.c.l.b16 %v87
  %v376 = vunpack.c.h.b16 %v87
  %v377 = vunpack.c.l.b16 %v88
  %v378 = vunpack.c.h.b16 %v88
  %v379 = vunpack.c.l.b16 %v89
  %v380 = vunpack.c.h.b16 %v89
  %v381 = vunpack.c.l.b16 %v90
  %v382 = vunpack.c.h.b16 %v90
  %v383 = vunpack.c.l.b16 %v91
  %v384 = vunpack.c.h.b16 %v91
  %v385 = vunpack.c.l.b16 %v92
  %v386 = vunpack.c.h.b16 %v92
  %v387 = vunpack.c.l.b16 %v93
  %v388 = vunpack.c.h.b16 %v93
  %v389 = vunpack.c.l.b16 %v94
  %v390 = vunpack.c.h.b16 %v94
  %v391 = vunpack.c.l.b16 %v95
  %v392 = vunpack.c.h.b16 %v95
  %v393 = vunpack.c.l.b16 %v96
  %v394 = vunpack.c.h.b16 %v96
  %v395 = vunpack.c.l.b16 %v97
  %v396 = vunpack.c.h.b16 %v97
  %v397 = vunpack.c.l.b16 %v98
  %v398 = vunpack.c.h.b16 %v98
  %v399 = vunpack.c.l.b16 %v99
  %v400 = vunpack.c.h.b16 %v99
  %v401 = vunpack.c.l.b16 %v100
  %v402 = vunpack.c.h.b16 %v100
  %v403 = vunpack.c.l.b16 %v101
  %v404 = vunpack.c.h.b16 %v101
  %v405 = vunpack.c.l.b16 %v102
  %v406 = vunpack.c.h.b16 %v102
  %v407 = vunpack.c.l.b16 %v103
  %v408 = vunpack.c.h.b16 %v103
  %v409 = vunpack.c.l.b16 %v104
  %v410 = vunpack.c.h.b16 %v104
  %v411 = vunpack.c.l.b16 %v105
  %v412 = vunpack.c.h.b16 %v105
  %v413 = vunpack.c.l.b16 %v106
  %v414 = vunpack.c.h.b16 %v106
  %v415 = vunpack.c.l.b16 %v107
  %v416 = vunpack.c.h.b16 %v107
  %v417 = vunpack.c.l.b16 %v108
  %v418 = vunpack.c.h.b16 %v108
  %v419 = vunpack.c.l.b16 %v109
  %v420 = vunpack.c.h.b16 %v109
  %v421 = vunpack.c.l.b16 %v110
  %v422 = vunpack.c.h.b16 %v110
  %v423 = vunpack.c.l.b16 %v111
  %v424 = vunpack.c.h.b16 %v111
  %v425 = vunpack.c.l.b16 %v112
  %v426 = vunpack.c.h.b16 %v112
  %v427 = vunpack.c.l.b16 %v113
  %v428 = vunpack.c.h.b16 %v113
  %v429 = vunpack.c.l.b16 %v114
  %v430 = vunpack.c.h.b16 %v114
  %v431 = vunpack.c.l.b16 %v115
  %v432 = vunpack.c.h.b16 %v115
  %v433 = vunpack.c.l.b16 %v116
  %v434 = vunpack.c.h.b16 %v116
  %v435 = vunpack.c.l.b16 %v117
  %v436 = vunpack.c.h.b16 %v117
  %v437 = vunpack.c.l.b16 %v118
  %v438 = vunpack.c.h.b16 %v118
  %v439 = vunpack.c.l.b16 %v119
  %v440 = vunpack.c.h.b16 %v119
  %v441 = vunpack.c.l.b16 %v120
  %v442 = vunpack.c.h.b16 %v120
  %v443 = vunpack.c.l.b16 %v121
  %v444 = vunpack.c.h.b16 %v121
  %v445 = vunpack.c.l.b16 %v122
  %v446 = vunpack.c.h.b16 %v122
  %v447 = vunpack.c.l.b16 %v123
  %v448 = vunpack.c.h.b16 %v123
  %v449 = vunpack.c.l.b16 %v124
  %v450 = vunpack.c.h.b16 %v124
  %v451 = vunpack.c.l.b16 %v125
  %v452 = vunpack.c.h.b16 %v125
  %v453 = vunpack.c.l.b16 %v126
  %v454 = vunpack.c.h.b16 %v126
  %v455 = vunpack.c.l.b16 %v127
  %v456 = vunpack.c.h.b16 %v127
  %v457 = vunpack.c.l.b16 %v128
  %v458 = vunpack.c.h.b16 %v128
  %v459 = vunpack.c.l.b16 %v129
  %v460 = vunpack.c.h.b16 %v129
  %v461 = vunpack.c.l.b16 %v130
  %v462 = vunpack.c.h.b16 %v130
  %v463 = vunpack.c.l.b16 %v131
  %v464 = vunpack.c.h.b16 %v131
  %v465 = vunpack.c.l.b16 %v132
  %v466 = vunpack.c.h.b16 %v132
  %v467 = vunpack.c.l.b16 %v133
  %v468 = vunpack.c.h.b16 %v133
  %v469 = vunpack.c.l.b16 %v134
  %v470 = vunpack.c.h.b16 %v134
  %v471 = vunpack.c.l.b16 %v135
  %v472 = vunpack.c.h.b16 %v135
  %v473 = vunpack.c.l.b16 %v136
  %v474 = vunpack.c.h.b16 %v136
  %v475 = vunpack.c.l.b16 %v137
  %v476 = vunpack.c.h.b16 %v137
  %v477 = vunpack.c.l.b16 %v138
  %v478 = vunpack.c.h.b16 %v138
  %v479 = vunpack.c.l.b16 %v139
  %v480 = vunpack.c.h.b16 %v139
  %v481 = vunpack.c.l.b16 %v140
  %v482 = vunpack.c.h.b16 %v140
  %v483 = vunpack.c.l.b16 %v141
  %v484 = vunpack.c.h.b16 %v141
  %v485 = vunpack.c.l.b16 %v142
  %v486 = vunpack.c.h.b16 %v142
  %v487 = vpack.c.b16 %v281, %v279
  %v488 = vpack.c.b16 %v282, %v280
  %v489 = vpack.c.b16 %v285, %v283
  %v490 = vpack.c.b16 %v286, %v284
  %v491 = vpack.c.b16 %v289, %v287
  %v492 = vpack.c.b16 %v290, %v288
  %v493 = vpack.c.b16 %v293, %v291
  %v494 = vpack.c.b16 %v294, %v292
  %v495 = vpack.c.b16 %v297, %v295
  %v496 = vpack.c.b16 %v298, %v296
  %v497 = vpack.c.b16 %v301, %v299
  %v498 = vpack.c.b16 %v302, %v300
  %v499 = vpack.c.b16 %v305, %v303
  %v500 = vpack.c.b16 %v306, %v304
  %v501 = vpack.c.b16 %v309, %v307
  %v502 = vpack.c.b16 %v310, %v308
  %v503 = vpack.c.b16 %v313, %v311
  %v504 = vpack.c.b16 %v314, %v312
  %v505 = vpack.c.b16 %v317, %v315
  %v506 = vpack.c.b16 %v318, %v316
  %v507 = vpack.c.b16 %v321, %v319
  %v508 = vpack.c.b16 %v322, %v320
  %v509 = vpack.c.b16 %v325, %v323
  %v510 = vpack.c.b16 %v326, %v324
  %v511 = vpack.c.b16 %v329, %v327
  %v512 = vpack.c.b16 %v330, %v328
  %v513 = vpack.c.b16 %v333, %v331
  %v514 = vpack.c.b16 %v334, %v332
  %v515 = vpack.c.b16 %v337, %v335
  %v516 = vpack.c.b16 %v338, %v336
  %v517 = vpack.c.b16 %v341, %v339
  %v518 = vpack.c.b16 %v342, %v340
  %v519 = vpack.c.b16 %v345, %v343
  %v520 = vpack.c.b16 %v346, %v344
  %v521 = vpack.c.b16 %v349, %v347
  %v522 = vpack.c.b16 %v350, %v348
  %v523 = vpack.c.b16 %v353, %v351
  %v524 = vpack.c.b16 %v354, %v352
  %v525 = vpack.c.b16 %v357, %v355
  %v526 = vpack.c.b16 %v358, %v356
  %v527 = vpack.c.b16 %v361, %v359
  %v528 = vpack.c.b16 %v362, %v360
  %v529 = vpack.c.b16 %v365, %v363
  %v530 = vpack.c.b16 %v366, %v364
  %v531 = vpack.c.b16 %v369, %v367
  %v532 = vpack.c.b16 %v370, %v368
  %v533 = vpack.c.b16 %v373, %v371
  %v534 = vpack.c.b16 %v374, %v372
  %v535 = vpack.c.b16 %v377, %v375
  %v536 = vpack.c.b16 %v378, %v376
  %v537 = vpack.c.b16 %v381, %v379
  %v538 = vpack.c.b16 %v382, %v380
  %v539 = vpack.c.b16 %v385, %v383
  %v540 = vpack.c.b16 %v386, %v384
  %v541 = vpack.c.b16 %v389, %v387
  %v542 = vpack.c.b16 %v390, %v388
  %v543 = vpack.c.b16 %v393, %v391
  %v544 = vpack.c.b16 %v394, %v392
  %v545 = vpack.c.b16 %v397, %v395
  %v546 = vpack.c.b16 %v398, %v396
  %v547 = vpack.c.b16 %v401, %v399
  %v548 = vpack.c.b16 %v402, %v400
  %v549 = vpack.c.b16 %v405, %v403
  %v550 = vpack.c.b16 %v406, %v404
  %v551 = vpack.c.b16 %v409, %v407
  %v552 = vpack.c.b16 %v410, %v408
  %v553 = vpack.c.b16 %v413, %v411
  %v554 = vpack.c.b16 %v414, %v412
  %v555 = vpack.c.b16 %v417, %v415
  %v556 = vpack.c.b16 %v418, %v416
  %v557 = vpack.c.b16 %v421, %v419
  %v558 = vpack.c.b16 %v422, %v420
  %v559 = vpack.c.b16 %v425, %v423
  %v560 = vpack.c.b16 %v426, %v424
  %v561 = vpack.c.b16 %v429, %v427
  %v562 = vpack.c.b16 %v430, %v428
  %v563 = vpack.c.b16 %v433, %v431
  %v564 = vpack.c.b16 %v434, %v432
  %v565 = vpack.c.b16 %v437, %v435
  %v566 = vpack.c.b16 %v438, %v436
  %v567 = vpack.c.b16 %v441, %v439
  %v568 = vpack.c.b16 %v442, %v440
  %v569 = vpack.c.b16 %v445, %v443
  %v570 = vpack.c.b16 %v446, %v444
  %v571 = vpack.c.b16 %v449, %v447
  %v572 = vpack.c.b16 %v450, %v448
  %v573 = vpack.c.b16 %v453, %v451
  %v574 = vpack.c.b16 %v454, %v452
  %v575 = vpack.c.b16 %v457, %v455
  %v576 = vpack.c.b16 %v458, %v456
  %v577 = vpack.c.b16 %v461, %v459
  %v578 = vpack.c.b16 %v462, %v460
  %v579 = vpack.c.b16 %v465, %v463
  %v580 = vpack.c.b16 %v466, %v464
  %v581 = vpack.c.b16 %v469, %v467
  %v582 = vpack.c.b16 %v470, %v468
  %v583 = vpack.c.b16 %v473, %v471
  %v584 = vpack.c.b16 %v474, %v472
  %v585 = vpack.c.b16 %v477, %v475
  %v586 = vpack.c.b16 %v478, %v476
  %v587 = vpack.c.b16 %v481, %v479
  %v588 = vpack.c.b16 %v482, %v480
  %v589 = vpack.c.b16 %v485, %v483
  %v590 = vpack.c.b16 %v486, %v484
  %v727 = vunpack.c.l.b16 %v143
  %v728 = vunpack.c.l.b16 %v144
  %v729 = vunpack.c.l.b16 %v145
  %v730 = vunpack.c.l.b16 %v146
  %v731 = vunpack.c.l.b16 %v147
  %v732 = vunpack.c.l.b16 %v148
  %v733 = vunpack.c.l.b16 %v149
  %v734 = vunpack.c.l.b16 %v150
  %v735 = vunpack.c.l.b16 %v151
  %v736 = vunpack.c.l.b16 %v152
  %v737 = vunpack.c.l.b16 %v153
  %v738 = vunpack.c.l.b16 %v154
  %v739 = vunpack.c.l.b16 %v155
  %v740 = vunpack.c.l.b16 %v156
  %v741 = vunpack.c.l.b16 %v157
  %v742 = vunpack.c.l.b16 %v158
  %v743 = vunpack.c.l.b16 %v159
  %v744 = vunpack.c.l.b16 %v160
  %v745 = vunpack.c.l.b16 %v161
  %v746 = vunpack.c.l.b16 %v162
  %v747 = vunpack.c.l.b16 %v163
  %v748 = vunpack.c.l.b16 %v164
  %v749 = vunpack.c.l.b16 %v165
  %v750 = vunpack.c.l.b16 %v166
  %v751 = vunpack.c.l.b16 %v167
  %v752 = vunpack.c.l.b16 %v168
  %v753 = vunpack.c.l.b16 %v169
  %v754 = vunpack.c.l.b16 %v170
  %v755 = vunpack.c.l.b16 %v171
  %v756 = vunpack.c.l.b16 %v172
  %v757 = vunpack.c.l.b16 %v173
  %v758 = vunpack.c.l.b16 %v174
  %v759 = vpack.c.b16 %v728, %v727
  %v760 = vpack.c.b16 %v730, %v729
  %v761 = vpack.c.b16 %v732, %v731
  %v762 = vpack.c.b16 %v734, %v733
  %v763 = vpack.c.b16 %v736, %v735
  %v764 = vpack.c.b16 %v738, %v737
  %v765 = vpack.c.b16 %v740, %v739
  %v766 = vpack.c.b16 %v742, %v741
  %v767 = vpack.c.b16 %v744, %v743
  %v768 = vpack.c.b16 %v746, %v745
  %v769 = vpack.c.b16 %v748, %v747
  %v770 = vpack.c.b16 %v750, %v749
  %v771 = vpack.c.b16 %v752, %v751
  %v772 = vpack.c.b16 %v754, %v753
  %v773 = vpack.c.b16 %v756, %v755
  %v774 = vpack.c.b16 %v758, %v757
  %791 = vmatprep.subr.bf16.mxu0 0
  %792 = vmatpush1.bf16.msra.mxu0 %v759
  %793 = vmatprep.subr.bf16.mxu0 0
  %794 = vmatpush1.bf16.msra.mxu0 %v760
  %795 = vmatprep.subr.bf16.mxu0 0
  %796 = vmatpush1.bf16.msra.mxu0 %v761
  %797 = vmatprep.subr.bf16.mxu0 0
  %798 = vmatpush1.bf16.msra.mxu0 %v762
  %799 = vmatprep.subr.bf16.mxu0 0
  %800 = vmatpush1.bf16.msra.mxu0 %v763
  %801 = vmatprep.subr.bf16.mxu0 0
  %802 = vmatpush1.bf16.msra.mxu0 %v764
  %803 = vmatprep.subr.bf16.mxu0 0
  %804 = vmatpush1.bf16.msra.mxu0 %v765
  %805 = vmatprep.subr.bf16.mxu0 0
  %806 = vmatpush1.bf16.msra.mxu0 %v766
  %807 = vmatprep.subr.bf16.mxu0 0
  %808 = vmatpush1.bf16.msra.mxu0 %v767
  %809 = vmatprep.subr.bf16.mxu0 0
  %810 = vmatpush1.bf16.msra.mxu0 %v768
  %811 = vmatprep.subr.bf16.mxu0 0
  %812 = vmatpush1.bf16.msra.mxu0 %v769
  %813 = vmatprep.subr.bf16.mxu0 0
  %814 = vmatpush1.bf16.msra.mxu0 %v770
  %815 = vmatprep.subr.bf16.mxu0 0
  %816 = vmatpush1.bf16.msra.mxu0 %v771
  %817 = vmatprep.subr.bf16.mxu0 0
  %818 = vmatpush1.bf16.msra.mxu0 %v772
  %819 = vmatprep.subr.bf16.mxu0 0
  %820 = vmatpush1.bf16.msra.mxu0 %v773
  %821 = vmatprep.subr.bf16.mxu0 0
  %822 = vmatpush1.bf16.msra.mxu0 %v774
  %823 = vmatprep.mubr.bf16.mxu0 %v488
  %824 = vmatmul.mubr.bf16.gmra.mrb[0].mxu0 %v487
  %v825 = vpop.f32.mrb[0].mxu0
  %v826 = vadd.f32 0.0, %v825
  %v827 = vpop.f32.mrb[0].mxu0
  %v828 = vpop.f32.mrb[0].mxu0
  %v829 = vadd.f32 0.0, %v828
  %v830 = vpop.f32.mrb[0].mxu0
  %831 = vmatprep.mubr.bf16.mxu0 %v490
  %832 = vmatmul.mubr.bf16.gmra.mrb[0].mxu0 %v489
  %v833 = vpop.f32.mrb[0].mxu0
  %v834 = vadd.f32 0.0, %v833
  %v835 = vpop.f32.mrb[0].mxu0
  %v836 = vpop.f32.mrb[0].mxu0
  %v837 = vadd.f32 0.0, %v836
  %v838 = vpop.f32.mrb[0].mxu0
  %839 = vmatprep.mubr.bf16.mxu0 %v492
  %840 = vmatmul.mubr.bf16.gmra.mrb[0].mxu0 %v491
  %v841 = vpop.f32.mrb[0].mxu0
  %v842 = vadd.f32 0.0, %v841
  %v843 = vpop.f32.mrb[0].mxu0
  %v844 = vpop.f32.mrb[0].mxu0
  %v845 = vadd.f32 0.0, %v844
  %v846 = vpop.f32.mrb[0].mxu0
  %847 = vmatprep.mubr.bf16.mxu0 %v494
  %848 = vmatmul.mubr.bf16.gmra.mrb[0].mxu0 %v493
  %v849 = vpop.f32.mrb[0].mxu0
  %v850 = vadd.f32 0.0, %v849
  %v851 = vpop.f32.mrb[0].mxu0
  %v852 = vpop.f32.mrb[0].mxu0
  %v853 = vadd.f32 0.0, %v852
  %v854 = vpop.f32.mrb[0].mxu0
  %855 = vmatprep.mubr.bf16.mxu0 %v496
  %856 = vmatmul.mubr.bf16.gmra.mrb[0].mxu0 %v495
  %v857 = vpop.f32.mrb[0].mxu0
  %v858 = vadd.f32 0.0, %v857
  %v859 = vpop.f32.mrb[0].mxu0
  %v860 = vpop.f32.mrb[0].mxu0
  %v861 = vadd.f32 0.0, %v860
  %v862 = vpop.f32.mrb[0].mxu0
  %863 = vmatprep.mubr.bf16.mxu0 %v498
  %864 = vmatmul.mubr.bf16.gmra.mrb[0].mxu0 %v497
  %v865 = vpop.f32.mrb[0].mxu0
  %v866 = vadd.f32 0.0, %v865
  %v867 = vpop.f32.mrb[0].mxu0
  %v868 = vpop.f32.mrb[0].mxu0
  %v869 = vadd.f32 0.0, %v868
  %v870 = vpop.f32.mrb[0].mxu0
  %871 = vmatprep.mubr.bf16.mxu0 %v500
  %872 = vmatmul.mubr.bf16.gmra.mrb[0].mxu0 %v499
  %v873 = vpop.f32.mrb[0].mxu0
  %v874 = vadd.f32 0.0, %v873
  %v875 = vpop.f32.mrb[0].mxu0
  %v876 = vpop.f32.mrb[0].mxu0
  %v877 = vadd.f32 0.0, %v876
  %v878 = vpop.f32.mrb[0].mxu0
  %879 = vmatprep.mubr.bf16.mxu0 %v502
  %880 = vmatmul.mubr.bf16.gmra.mrb[0].mxu0 %v501
  %v881 = vpop.f32.mrb[0].mxu0
  %v882 = vadd.f32 0.0, %v881
  %v883 = vpop.f32.mrb[0].mxu0
  %v884 = vpop.f32.mrb[0].mxu0
  %v885 = vadd.f32 0.0, %v884
  %v886 = vpop.f32.mrb[0].mxu0
  %887 = vmatprep.mubr.bf16.mxu0 %v504
  %888 = vmatmul.mubr.bf16.gmra.mrb[0].mxu0 %v503
  %v889 = vpop.f32.mrb[0].mxu0
  %v890 = vadd.f32 0.0, %v889
  %v891 = vpop.f32.mrb[0].mxu0
  %v892 = vpop.f32.mrb[0].mxu0
  %v893 = vadd.f32 0.0, %v892
  %v894 = vpop.f32.mrb[0].mxu0
  %895 = vmatprep.mubr.bf16.mxu0 %v506
  %896 = vmatmul.mubr.bf16.gmra.mrb[0].mxu0 %v505
  %v897 = vpop.f32.mrb[0].mxu0
  %v898 = vadd.f32 0.0, %v897
  %v899 = vpop.f32.mrb[0].mxu0
  %v900 = vpop.f32.mrb[0].mxu0
  %v901 = vadd.f32 0.0, %v900
  %v902 = vpop.f32.mrb[0].mxu0
  %903 = vmatprep.mubr.bf16.mxu0 %v508
  %904 = vmatmul.mubr.bf16.gmra.mrb[0].mxu0 %v507
  %v905 = vpop.f32.mrb[0].mxu0
  %v906 = vadd.f32 0.0, %v905
  %v907 = vpop.f32.mrb[0].mxu0
  %v908 = vpop.f32.mrb[0].mxu0
  %v909 = vadd.f32 0.0, %v908
  %v910 = vpop.f32.mrb[0].mxu0
  %911 = vmatprep.mubr.bf16.mxu0 %v510
  %912 = vmatmul.mubr.bf16.gmra.mrb[0].mxu0 %v509
  %v913 = vpop.f32.mrb[0].mxu0
  %v914 = vadd.f32 0.0, %v913
  %v915 = vpop.f32.mrb[0].mxu0
  %v916 = vpop.f32.mrb[0].mxu0
  %v917 = vadd.f32 0.0, %v916
  %v918 = vpop.f32.mrb[0].mxu0
  %919 = vmatprep.mubr.bf16.mxu0 %v512
  %920 = vmatmul.mubr.bf16.gmra.mrb[0].mxu0 %v511
  %v921 = vpop.f32.mrb[0].mxu0
  %v922 = vadd.f32 0.0, %v921
  %v923 = vpop.f32.mrb[0].mxu0
  %v924 = vpop.f32.mrb[0].mxu0
  %v925 = vpop.f32.mrb[0].mxu0
  %926 = vmatprep.mubr.bf16.mxu0 %v514
  %927 = vmatmul.mubr.bf16.gmra.mrb[0].mxu0 %v513
  %v928 = vpop.f32.mrb[0].mxu0
  %v929 = vadd.f32 0.0, %v928
  %v930 = vpop.f32.mrb[0].mxu0
  %v931 = vpop.f32.mrb[0].mxu0
  %v932 = vadd.f32 0.0, %v931
  %v933 = vpop.f32.mrb[0].mxu0
  %934 = vmatprep.mubr.bf16.mxu0 %v516
  %935 = vmatmul.mubr.bf16.gmra.mrb[0].mxu0 %v515
  %v936 = vpop.f32.mrb[0].mxu0
  %v937 = vadd.f32 0.0, %v936
  %v938 = vpop.f32.mrb[0].mxu0
  %v939 = vpop.f32.mrb[0].mxu0
  %v940 = vadd.f32 0.0, %v939
  %v941 = vpop.f32.mrb[0].mxu0
  %942 = vmatprep.mubr.bf16.mxu0 %v518
  %943 = vmatmul.mubr.bf16.gmra.mrb[0].mxu0 %v517
  %v944 = vpop.f32.mrb[0].mxu0
  %v945 = vadd.f32 0.0, %v944
  %v946 = vpop.f32.mrb[0].mxu0
  %v947 = vpop.f32.mrb[0].mxu0
  %v948 = vadd.f32 0.0, %v947
  %v949 = vpop.f32.mrb[0].mxu0
  %950 = vmatprep.mubr.bf16.mxu0 %v520
  %951 = vmatmul.mubr.bf16.gmra.mrb[0].mxu0 %v519
  %v952 = vpop.f32.mrb[0].mxu0
  %v953 = vadd.f32 0.0, %v952
  %v954 = vpop.f32.mrb[0].mxu0
  %v955 = vpop.f32.mrb[0].mxu0
  %v956 = vadd.f32 0.0, %v955
  %v957 = vpop.f32.mrb[0].mxu0
  %958 = vmatprep.mubr.bf16.mxu0 %v522
  %959 = vmatmul.mubr.bf16.gmra.mrb[0].mxu0 %v521
  %v960 = vpop.f32.mrb[0].mxu0
  %v961 = vadd.f32 0.0, %v960
  %v962 = vpop.f32.mrb[0].mxu0
  %v963 = vpop.f32.mrb[0].mxu0
  %v964 = vadd.f32 0.0, %v963
  %v965 = vpop.f32.mrb[0].mxu0
  %966 = vmatprep.mubr.bf16.mxu0 %v524
  %967 = vmatmul.mubr.bf16.gmra.mrb[0].mxu0 %v523
  %v968 = vpop.f32.mrb[0].mxu0
  %v969 = vadd.f32 0.0, %v968
  %v970 = vpop.f32.mrb[0].mxu0
  %v971 = vpop.f32.mrb[0].mxu0
  %v972 = vadd.f32 0.0, %v971
  %v973 = vpop.f32.mrb[0].mxu0
  %974 = vmatprep.mubr.bf16.mxu0 %v526
  %975 = vmatmul.mubr.bf16.gmra.mrb[0].mxu0 %v525
  %v976 = vpop.f32.mrb[0].mxu0
  %v977 = vadd.f32 0.0, %v976
  %v978 = vpop.f32.mrb[0].mxu0
  %v979 = vpop.f32.mrb[0].mxu0
  %v980 = vadd.f32 0.0, %v979
  %v981 = vpop.f32.mrb[0].mxu0
  %982 = vmatprep.mubr.bf16.mxu0 %v528
  %983 = vmatmul.mubr.bf16.gmra.mrb[0].mxu0 %v527
  %v984 = vpop.f32.mrb[0].mxu0
  %v985 = vadd.f32 0.0, %v984
  %v986 = vpop.f32.mrb[0].mxu0
  %v987 = vpop.f32.mrb[0].mxu0
  %v988 = vadd.f32 0.0, %v987
  %v989 = vpop.f32.mrb[0].mxu0
  %990 = vmatprep.mubr.bf16.mxu0 %v530
  %991 = vmatmul.mubr.bf16.gmra.mrb[0].mxu0 %v529
  %v992 = vpop.f32.mrb[0].mxu0
  %v993 = vadd.f32 0.0, %v992
  %v994 = vpop.f32.mrb[0].mxu0
  %v995 = vpop.f32.mrb[0].mxu0
  %v996 = vadd.f32 0.0, %v995
  %v997 = vpop.f32.mrb[0].mxu0
  %998 = vmatprep.mubr.bf16.mxu0 %v532
  %999 = vmatmul.mubr.bf16.gmra.mrb[0].mxu0 %v531
  %v1000 = vpop.f32.mrb[0].mxu0
  %v1001 = vadd.f32 0.0, %v1000
  %v1002 = vpop.f32.mrb[0].mxu0
  %v1003 = vpop.f32.mrb[0].mxu0
  %v1004 = vadd.f32 0.0, %v1003
  %v1005 = vpop.f32.mrb[0].mxu0
  %1006 = vmatprep.mubr.bf16.mxu0 %v534
  %1007 = vmatmul.mubr.bf16.gmra.mrb[0].mxu0 %v533
  %v1008 = vpop.f32.mrb[0].mxu0
  %v1009 = vadd.f32 0.0, %v1008
  %v1010 = vpop.f32.mrb[0].mxu0
  %v1011 = vpop.f32.mrb[0].mxu0
  %v1012 = vadd.f32 0.0, %v1011
  %v1013 = vpop.f32.mrb[0].mxu0
  %1014 = vmatprep.mubr.bf16.mxu0 %v536
  %1015 = vmatmul.mubr.bf16.gmra.mrb[0].mxu0 %v535
  %v1016 = vpop.f32.mrb[0].mxu0
  %v1017 = vadd.f32 0.0, %v1016
  %v1018 = vpop.f32.mrb[0].mxu0
  %v1019 = vpop.f32.mrb[0].mxu0
  %v1020 = vadd.f32 0.0, %v1019
  %v1021 = vpop.f32.mrb[0].mxu0
  %1022 = vmatprep.mubr.bf16.mxu0 %v538
  %1023 = vmatmul.mubr.bf16.gmra.mrb[0].mxu0 %v537
  %v1024 = vpop.f32.mrb[0].mxu0
  %v1025 = vadd.f32 0.0, %v1024
  %v1026 = vpop.f32.mrb[0].mxu0
  %v1027 = vpop.f32.mrb[0].mxu0
  %v1028 = vpop.f32.mrb[0].mxu0
  %1029 = vmatprep.mubr.bf16.mxu0 %v540
  %1030 = vmatmul.mubr.bf16.gmra.mrb[0].mxu0 %v539
  %v1031 = vpop.f32.mrb[0].mxu0
  %v1032 = vadd.f32 0.0, %v1031
  %v1033 = vpop.f32.mrb[0].mxu0
  %v1034 = vpop.f32.mrb[0].mxu0
  %v1035 = vadd.f32 0.0, %v1034
  %v1036 = vpop.f32.mrb[0].mxu0
  %1037 = vmatprep.mubr.bf16.mxu0 %v542
  %1038 = vmatmul.mubr.bf16.gmra.mrb[0].mxu0 %v541
  %v1039 = vpop.f32.mrb[0].mxu0
  %v1040 = vadd.f32 0.0, %v1039
  %v1041 = vpop.f32.mrb[0].mxu0
  %v1042 = vpop.f32.mrb[0].mxu0
  %v1043 = vadd.f32 0.0, %v1042
  %v1044 = vpop.f32.mrb[0].mxu0
  %1045 = vmatprep.mubr.bf16.mxu0 %v544
  %1046 = vmatmul.mubr.bf16.gmra.mrb[0].mxu0 %v543
  %v1047 = vpop.f32.mrb[0].mxu0
  %v1048 = vadd.f32 0.0, %v1047
  %v1049 = vpop.f32.mrb[0].mxu0
  %v1050 = vpop.f32.mrb[0].mxu0
  %v1051 = vadd.f32 0.0, %v1050
  %v1052 = vpop.f32.mrb[0].mxu0
  %1053 = vmatprep.mubr.bf16.mxu0 %v546
  %1054 = vmatmul.mubr.bf16.gmra.mrb[0].mxu0 %v545
  %v1055 = vpop.f32.mrb[0].mxu0
  %v1056 = vadd.f32 0.0, %v1055
  %v1057 = vpop.f32.mrb[0].mxu0
  %v1058 = vpop.f32.mrb[0].mxu0
  %v1059 = vadd.f32 0.0, %v1058
  %v1060 = vpop.f32.mrb[0].mxu0
  %1061 = vmatprep.mubr.bf16.mxu0 %v548
  %1062 = vmatmul.mubr.bf16.gmra.mrb[0].mxu0 %v547
  %v1063 = vpop.f32.mrb[0].mxu0
  %v1064 = vadd.f32 0.0, %v1063
  %v1065 = vpop.f32.mrb[0].mxu0
  %v1066 = vpop.f32.mrb[0].mxu0
  %v1067 = vadd.f32 0.0, %v1066
  %v1068 = vpop.f32.mrb[0].mxu0
  %1069 = vmatprep.mubr.bf16.mxu0 %v550
  %1070 = vmatmul.mubr.bf16.gmra.mrb[0].mxu0 %v549
  %v1071 = vpop.f32.mrb[0].mxu0
  %v1072 = vadd.f32 0.0, %v1071
  %v1073 = vpop.f32.mrb[0].mxu0
  %v1074 = vpop.f32.mrb[0].mxu0
  %v1075 = vadd.f32 0.0, %v1074
  %v1076 = vpop.f32.mrb[0].mxu0
  %1077 = vmatprep.mubr.bf16.mxu0 %v552
  %1078 = vmatmul.mubr.bf16.gmra.mrb[0].mxu0 %v551
  %v1079 = vpop.f32.mrb[0].mxu0
  %v1080 = vadd.f32 0.0, %v1079
  %v1081 = vpop.f32.mrb[0].mxu0
  %v1082 = vpop.f32.mrb[0].mxu0
  %v1083 = vadd.f32 0.0, %v1082
  %v1084 = vpop.f32.mrb[0].mxu0
  %1085 = vmatprep.mubr.bf16.mxu0 %v554
  %1086 = vmatmul.mubr.bf16.gmra.mrb[0].mxu0 %v553
  %v1087 = vpop.f32.mrb[0].mxu0
  %v1088 = vadd.f32 0.0, %v1087
  %v1089 = vpop.f32.mrb[0].mxu0
  %v1090 = vpop.f32.mrb[0].mxu0
  %v1091 = vadd.f32 0.0, %v1090
  %v1092 = vpop.f32.mrb[0].mxu0
  %1093 = vmatprep.mubr.bf16.mxu0 %v556
  %1094 = vmatmul.mubr.bf16.gmra.mrb[0].mxu0 %v555
  %v1095 = vpop.f32.mrb[0].mxu0
  %v1096 = vadd.f32 0.0, %v1095
  %v1097 = vpop.f32.mrb[0].mxu0
  %v1098 = vpop.f32.mrb[0].mxu0
  %v1099 = vadd.f32 0.0, %v1098
  %v1100 = vpop.f32.mrb[0].mxu0
  %1101 = vmatprep.mubr.bf16.mxu0 %v558
  %1102 = vmatmul.mubr.bf16.gmra.mrb[0].mxu0 %v557
  %v1103 = vpop.f32.mrb[0].mxu0
  %v1104 = vadd.f32 0.0, %v1103
  %v1105 = vpop.f32.mrb[0].mxu0
  %v1106 = vpop.f32.mrb[0].mxu0
  %v1107 = vadd.f32 0.0, %v1106
  %v1108 = vpop.f32.mrb[0].mxu0
  %1109 = vmatprep.mubr.bf16.mxu0 %v560
  %1110 = vmatmul.mubr.bf16.gmra.mrb[0].mxu0 %v559
  %v1111 = vpop.f32.mrb[0].mxu0
  %v1112 = vadd.f32 0.0, %v1111
  %v1113 = vpop.f32.mrb[0].mxu0
  %v1114 = vpop.f32.mrb[0].mxu0
  %v1115 = vadd.f32 0.0, %v1114
  %v1116 = vpop.f32.mrb[0].mxu0
  %1117 = vmatprep.mubr.bf16.mxu0 %v562
  %1118 = vmatmul.mubr.bf16.gmra.mrb[0].mxu0 %v561
  %v1119 = vpop.f32.mrb[0].mxu0
  %v1120 = vadd.f32 0.0, %v1119
  %v1121 = vpop.f32.mrb[0].mxu0
  %v1122 = vpop.f32.mrb[0].mxu0
  %v1123 = vadd.f32 0.0, %v1122
  %v1124 = vpop.f32.mrb[0].mxu0
  %1125 = vmatprep.mubr.bf16.mxu0 %v564
  %1126 = vmatmul.mubr.bf16.gmra.mrb[0].mxu0 %v563
  %v1127 = vpop.f32.mrb[0].mxu0
  %v1128 = vadd.f32 0.0, %v1127
  %v1129 = vpop.f32.mrb[0].mxu0
  %v1130 = vpop.f32.mrb[0].mxu0
  %v1131 = vpop.f32.mrb[0].mxu0
  %1132 = vmatprep.mubr.bf16.mxu0 %v566
  %1133 = vmatmul.mubr.bf16.gmra.mrb[0].mxu0 %v565
  %v1134 = vpop.f32.mrb[0].mxu0
  %v1135 = vadd.f32 0.0, %v1134
  %v1136 = vpop.f32.mrb[0].mxu0
  %v1137 = vpop.f32.mrb[0].mxu0
  %v1138 = vadd.f32 0.0, %v1137
  %v1139 = vpop.f32.mrb[0].mxu0
  %1140 = vmatprep.mubr.bf16.mxu0 %v568
  %1141 = vmatmul.mubr.bf16.gmra.mrb[0].mxu0 %v567
  %v1142 = vpop.f32.mrb[0].mxu0
  %v1143 = vadd.f32 0.0, %v1142
  %v1144 = vpop.f32.mrb[0].mxu0
  %v1145 = vpop.f32.mrb[0].mxu0
  %v1146 = vadd.f32 0.0, %v1145
  %v1147 = vpop.f32.mrb[0].mxu0
  %1148 = vmatprep.mubr.bf16.mxu0 %v570
  %1149 = vmatmul.mubr.bf16.gmra.mrb[0].mxu0 %v569
  %v1150 = vpop.f32.mrb[0].mxu0
  %v1151 = vadd.f32 0.0, %v1150
  %v1152 = vpop.f32.mrb[0].mxu0
  %v1153 = vpop.f32.mrb[0].mxu0
  %v1154 = vadd.f32 0.0, %v1153
  %v1155 = vpop.f32.mrb[0].mxu0
  %1156 = vmatprep.mubr.bf16.mxu0 %v572
  %1157 = vmatmul.mubr.bf16.gmra.mrb[0].mxu0 %v571
  %v1158 = vpop.f32.mrb[0].mxu0
  %v1159 = vadd.f32 0.0, %v1158
  %v1160 = vpop.f32.mrb[0].mxu0
  %v1161 = vpop.f32.mrb[0].mxu0
  %v1162 = vadd.f32 0.0, %v1161
  %v1163 = vpop.f32.mrb[0].mxu0
  %1164 = vmatprep.mubr.bf16.mxu0 %v574
  %1165 = vmatmul.mubr.bf16.gmra.mrb[0].mxu0 %v573
  %v1166 = vpop.f32.mrb[0].mxu0
  %v1167 = vadd.f32 0.0, %v1166
  %v1168 = vpop.f32.mrb[0].mxu0
  %v1169 = vpop.f32.mrb[0].mxu0
  %v1170 = vadd.f32 0.0, %v1169
  %v1171 = vpop.f32.mrb[0].mxu0
  %1172 = vmatprep.mubr.bf16.mxu0 %v576
  %1173 = vmatmul.mubr.bf16.gmra.mrb[0].mxu0 %v575
  %v1174 = vpop.f32.mrb[0].mxu0
  %v1175 = vadd.f32 0.0, %v1174
  %v1176 = vpop.f32.mrb[0].mxu0
  %v1177 = vpop.f32.mrb[0].mxu0
  %v1178 = vadd.f32 0.0, %v1177
  %v1179 = vpop.f32.mrb[0].mxu0
  %1180 = vmatprep.mubr.bf16.mxu0 %v578
  %1181 = vmatmul.mubr.bf16.gmra.mrb[0].mxu0 %v577
  %v1182 = vpop.f32.mrb[0].mxu0
  %v1183 = vadd.f32 0.0, %v1182
  %v1184 = vpop.f32.mrb[0].mxu0
  %v1185 = vpop.f32.mrb[0].mxu0
  %v1186 = vadd.f32 0.0, %v1185
  %v1187 = vpop.f32.mrb[0].mxu0
  %1188 = vmatprep.mubr.bf16.mxu0 %v580
  %1189 = vmatmul.mubr.bf16.gmra.mrb[0].mxu0 %v579
  %v1190 = vpop.f32.mrb[0].mxu0
  %v1191 = vadd.f32 0.0, %v1190
  %v1192 = vpop.f32.mrb[0].mxu0
  %v1193 = vpop.f32.mrb[0].mxu0
  %v1194 = vadd.f32 0.0, %v1193
  %v1195 = vpop.f32.mrb[0].mxu0
  %1196 = vmatprep.mubr.bf16.mxu0 %v582
  %1197 = vmatmul.mubr.bf16.gmra.mrb[0].mxu0 %v581
  %v1198 = vpop.f32.mrb[0].mxu0
  %v1199 = vadd.f32 0.0, %v1198
  %v1200 = vpop.f32.mrb[0].mxu0
  %v1201 = vpop.f32.mrb[0].mxu0
  %v1202 = vadd.f32 0.0, %v1201
  %v1203 = vpop.f32.mrb[0].mxu0
  %1204 = vmatprep.mubr.bf16.mxu0 %v584
  %1205 = vmatmul.mubr.bf16.gmra.mrb[0].mxu0 %v583
  %v1206 = vpop.f32.mrb[0].mxu0
  %v1207 = vadd.f32 0.0, %v1206
  %v1208 = vpop.f32.mrb[0].mxu0
  %v1209 = vpop.f32.mrb[0].mxu0
  %v1210 = vadd.f32 0.0, %v1209
  %v1211 = vpop.f32.mrb[0].mxu0
  %1212 = vmatprep.mubr.bf16.mxu0 %v586
  %1213 = vmatmul.mubr.bf16.gmra.mrb[0].mxu0 %v585
  %v1214 = vpop.f32.mrb[0].mxu0
  %v1215 = vadd.f32 0.0, %v1214
  %v1216 = vpop.f32.mrb[0].mxu0
  %v1217 = vpop.f32.mrb[0].mxu0
  %v1218 = vadd.f32 0.0, %v1217
  %v1219 = vpop.f32.mrb[0].mxu0
  %1220 = vmatprep.mubr.bf16.mxu0 %v588
  %1221 = vmatmul.mubr.bf16.gmra.mrb[0].mxu0 %v587
  %v1222 = vpop.f32.mrb[0].mxu0
  %v1223 = vadd.f32 0.0, %v1222
  %v1224 = vpop.f32.mrb[0].mxu0
  %v1225 = vpop.f32.mrb[0].mxu0
  %v1226 = vadd.f32 0.0, %v1225
  %v1227 = vpop.f32.mrb[0].mxu0
  %1228 = vmatprep.mubr.bf16.mxu0 %v590
  %1229 = vmatmul.mubr.bf16.gmra.mrb[0].mxu0 %v589
  %v1230 = vpop.f32.mrb[0].mxu0
  %v1231 = vadd.f32 0.0, %v1230
  %v1232 = vpop.f32.mrb[0].mxu0
  %v1233 = vpop.f32.mrb[0].mxu0
  %v1234 = vpop.f32.mrb[0].mxu0
  %1235 = vdwg.mxu0
  %v1236 = vmax.f32 %v826, %v929
  %v1237 = vmax.f32 %v829, %v932
  %v1238 = vmax.f32 %v834, %v937
  %v1239 = vmax.f32 %v837, %v940
  %v1240 = vmax.f32 %v842, %v945
  %v1241 = vmax.f32 %v845, %v948
  %v1242 = vmax.f32 %v850, %v953
  %v1243 = vmax.f32 %v853, %v956
  %v1244 = vmax.f32 %v858, %v961
  %v1245 = vmax.f32 %v861, %v964
  %v1246 = vmax.f32 %v866, %v969
  %v1247 = vmax.f32 %v869, %v972
  %v1248 = vmax.f32 %v874, %v977
  %v1249 = vmax.f32 %v877, %v980
  %v1250 = vmax.f32 %v882, %v985
  %v1251 = vmax.f32 %v885, %v988
  %v1252 = vmax.f32 %v890, %v993
  %v1253 = vmax.f32 %v893, %v996
  %v1254 = vmax.f32 %v898, %v1001
  %v1255 = vmax.f32 %v901, %v1004
  %v1256 = vmax.f32 %v906, %v1009
  %v1257 = vmax.f32 %v909, %v1012
  %v1258 = vmax.f32 %v914, %v1017
  %v1259 = vmax.f32 %v917, %v1020
  %v1260 = vmax.f32 %v922, %v1025
  %v1261 = vmax.f32 %v1032, %v1135
  %v1262 = vmax.f32 %v1035, %v1138
  %v1263 = vmax.f32 %v1040, %v1143
  %v1264 = vmax.f32 %v1043, %v1146
  %v1265 = vmax.f32 %v1048, %v1151
  %v1266 = vmax.f32 %v1051, %v1154
  %v1267 = vmax.f32 %v1056, %v1159
  %v1268 = vmax.f32 %v1059, %v1162
  %v1269 = vmax.f32 %v1064, %v1167
  %v1270 = vmax.f32 %v1067, %v1170
  %v1271 = vmax.f32 %v1072, %v1175
  %v1272 = vmax.f32 %v1075, %v1178
  %v1273 = vmax.f32 %v1080, %v1183
  %v1274 = vmax.f32 %v1083, %v1186
  %v1275 = vmax.f32 %v1088, %v1191
  %v1276 = vmax.f32 %v1091, %v1194
  %v1277 = vmax.f32 %v1096, %v1199
  %v1278 = vmax.f32 %v1099, %v1202
  %v1279 = vmax.f32 %v1104, %v1207
  %v1280 = vmax.f32 %v1107, %v1210
  %v1281 = vmax.f32 %v1112, %v1215
  %v1282 = vmax.f32 %v1115, %v1218
  %v1283 = vmax.f32 %v1120, %v1223
  %v1284 = vmax.f32 %v1123, %v1226
  %v1285 = vmax.f32 %v1128, %v1231
  %v1286 = vmax.f32 %v1236, %v1261
  %v1287 = vmax.f32 %v1237, %v1262
  %v1288 = vmax.f32 %v1238, %v1263
  %v1289 = vmax.f32 %v1239, %v1264
  %v1290 = vmax.f32 %v1240, %v1265
  %v1291 = vmax.f32 %v1241, %v1266
  %v1292 = vmax.f32 %v1242, %v1267
  %v1293 = vmax.f32 %v1243, %v1268
  %v1294 = vmax.f32 %v1244, %v1269
  %v1295 = vmax.f32 %v1245, %v1270
  %v1296 = vmax.f32 %v1246, %v1271
  %v1297 = vmax.f32 %v1247, %v1272
  %v1298 = vmax.f32 %v1248, %v1273
  %v1299 = vmax.f32 %v1249, %v1274
  %v1300 = vmax.f32 %v1250, %v1275
  %v1301 = vmax.f32 %v1251, %v1276
  %v1302 = vmax.f32 %v1252, %v1277
  %v1303 = vmax.f32 %v1253, %v1278
  %v1304 = vmax.f32 %v1254, %v1279
  %v1305 = vmax.f32 %v1255, %v1280
  %v1306 = vmax.f32 %v1256, %v1281
  %v1307 = vmax.f32 %v1257, %v1282
  %v1308 = vmax.f32 %v1258, %v1283
  %v1309 = vmax.f32 %v1259, %v1284
  %v1310 = vmax.f32 %v1260, %v1285
  %v1311 = vld [vmem:[%s2] sm:$0x1]
  %v1313 = vlaneseq
  %v1314 = vshrl.u32 %v1313, 7
  %v1315 = vsub.s32 0, %v1314
  %v1316 = vrot.slane %v1311, %v1315
  %v1318 = vadd.f32 %v1286, %v1316
  %v1319 = vadd.f32 %v1287, %v1316
  %v1320 = vadd.f32 %v1288, %v1316
  %v1321 = vadd.f32 %v1289, %v1316
  %v1322 = vadd.f32 %v1290, %v1316
  %v1323 = vadd.f32 %v1291, %v1316
  %v1324 = vadd.f32 %v1292, %v1316
  %v1325 = vadd.f32 %v1293, %v1316
  %v1326 = vadd.f32 %v1294, %v1316
  %v1327 = vadd.f32 %v1295, %v1316
  %v1328 = vadd.f32 %v1296, %v1316
  %v1329 = vadd.f32 %v1297, %v1316
  %v1330 = vadd.f32 %v1298, %v1316
  %v1331 = vadd.f32 %v1299, %v1316
  %v1332 = vadd.f32 %v1300, %v1316
  %v1333 = vadd.f32 %v1301, %v1316
  %v1334 = vadd.f32 %v1302, %v1316
  %v1335 = vadd.f32 %v1303, %v1316
  %v1336 = vadd.f32 %v1304, %v1316
  %v1337 = vadd.f32 %v1305, %v1316
  %v1338 = vadd.f32 %v1306, %v1316
  %v1339 = vadd.f32 %v1307, %v1316
  %v1340 = vadd.f32 %v1308, %v1316
  %v1341 = vadd.f32 %v1309, %v1316
  %v1342 = vadd.f32 %v1310, %v1316
  %v1343 = vmax.f32 %v1318, 0.0
  %v1344 = vmax.f32 %v1319, 0.0
  %v1345 = vmax.f32 %v1320, 0.0
  %v1346 = vmax.f32 %v1321, 0.0
  %v1347 = vmax.f32 %v1322, 0.0
  %v1348 = vmax.f32 %v1323, 0.0
  %v1349 = vmax.f32 %v1324, 0.0
  %v1350 = vmax.f32 %v1325, 0.0
  %v1351 = vmax.f32 %v1326, 0.0
  %v1352 = vmax.f32 %v1327, 0.0
  %v1353 = vmax.f32 %v1328, 0.0
  %v1354 = vmax.f32 %v1329, 0.0
  %v1355 = vmax.f32 %v1330, 0.0
  %v1356 = vmax.f32 %v1331, 0.0
  %v1357 = vmax.f32 %v1332, 0.0
  %v1358 = vmax.f32 %v1333, 0.0
  %v1359 = vmax.f32 %v1334, 0.0
  %v1360 = vmax.f32 %v1335, 0.0
  %v1361 = vmax.f32 %v1336, 0.0
  %v1362 = vmax.f32 %v1337, 0.0
  %v1363 = vmax.f32 %v1338, 0.0
  %v1364 = vmax.f32 %v1339, 0.0
  %v1365 = vmax.f32 %v1340, 0.0
  %v1366 = vmax.f32 %v1341, 0.0
  %v1367 = vmax.f32 %v1342, 0.0
  %v1368 = vpack.c.bf16 %v1343, %v1343
  %v1369 = vld [vmem:[%s3] sm:$0xf]
  %v1370 = vld [vmem:[%s3 + $0x4] sm:$0xf]
  %v1371 = vld [vmem:[%s3 + $0x8] sm:$0xf]
  %v1372 = vld [vmem:[%s3 + $0xc] sm:$0xf]
  %v1373 = vld [vmem:[%s3 + $0x10] sm:$0xf]
  %v1374 = vld [vmem:[%s3 + $0x14] sm:$0xf]
  %v1375 = vld [vmem:[%s3 + $0x18] sm:$0xf]
  %v1376 = vld [vmem:[%s3 + $0x1c] sm:$0xf]
  %v1377 = vld [vmem:[%s3 + $0x20] sm:$0xf]
  %v1378 = vld [vmem:[%s3 + $0x24] sm:$0xf]
  %v1379 = vld [vmem:[%s3 + $0x28] sm:$0xf]
  %v1380 = vld [vmem:[%s3 + $0x2c] sm:$0xf]
  %v1381 = vld [vmem:[%s3 + $0x30] sm:$0xf]
  %v1382 = vld [vmem:[%s3 + $0x34] sm:$0xf]
  %v1383 = vld [vmem:[%s3 + $0x38] sm:$0xf]
  %v1384 = vld [vmem:[%s3 + $0x3c] sm:$0xf]
  %v1385 = vpack.c.bf16 %v1344, %v1344
  %s1386 = scalar_lea.vmem %s3, 64
  %v1387 = vld [vmem:[%s1386] sm:$0xf]
  %v1388 = vld [vmem:[%s1386 + $0x4] sm:$0xf]
  %v1389 = vld [vmem:[%s1386 + $0x8] sm:$0xf]
  %v1390 = vld [vmem:[%s1386 + $0xc] sm:$0xf]
  %v1391 = vld [vmem:[%s1386 + $0x10] sm:$0xf]
  %v1392 = vld [vmem:[%s1386 + $0x14] sm:$0xf]
  %v1393 = vld [vmem:[%s1386 + $0x18] sm:$0xf]
  %v1394 = vld [vmem:[%s1386 + $0x1c] sm:$0xf]
  %v1395 = vld [vmem:[%s1386 + $0x20] sm:$0xf]
  %v1396 = vld [vmem:[%s1386 + $0x24] sm:$0xf]
  %v1397 = vld [vmem:[%s1386 + $0x28] sm:$0xf]
  %v1398 = vld [vmem:[%s1386 + $0x2c] sm:$0xf]
  %v1399 = vld [vmem:[%s1386 + $0x30] sm:$0xf]
  %v1400 = vld [vmem:[%s1386 + $0x34] sm:$0xf]
  %v1401 = vld [vmem:[%s1386 + $0x38] sm:$0xf]
  %v1402 = vld [vmem:[%s1386 + $0x3c] sm:$0xf]
  %v1419 = vunpack.c.l.b16 %v1387
  %v1420 = vunpack.c.l.b16 %v1388
  %v1421 = vunpack.c.l.b16 %v1389
  %v1422 = vunpack.c.l.b16 %v1390
  %v1423 = vunpack.c.l.b16 %v1391
  %v1424 = vunpack.c.l.b16 %v1392
  %v1425 = vunpack.c.l.b16 %v1393
  %v1426 = vunpack.c.l.b16 %v1394
  %v1427 = vunpack.c.l.b16 %v1395
  %v1428 = vunpack.c.l.b16 %v1396
  %v1429 = vunpack.c.l.b16 %v1397
  %v1430 = vunpack.c.l.b16 %v1398
  %v1431 = vunpack.c.l.b16 %v1399
  %v1432 = vunpack.c.l.b16 %v1400
  %v1433 = vunpack.c.l.b16 %v1401
  %v1434 = vunpack.c.l.b16 %v1402
  %v1435 = vpack.c.b16 %v1420, %v1419
  %v1436 = vpack.c.b16 %v1422, %v1421
  %v1437 = vpack.c.b16 %v1424, %v1423
  %v1438 = vpack.c.b16 %v1426, %v1425
  %v1439 = vpack.c.b16 %v1428, %v1427
  %v1440 = vpack.c.b16 %v1430, %v1429
  %v1441 = vpack.c.b16 %v1432, %v1431
  %v1442 = vpack.c.b16 %v1434, %v1433
  %1451 = vmatprep.subr.bf16.mxu0 0
  %1452 = vmatpush1.bf16.msra.mxu0 %v1435
  %1453 = vmatprep.subr.bf16.mxu0 0
  %1454 = vmatpush1.bf16.msra.mxu0 %v1436
  %1455 = vmatprep.subr.bf16.mxu0 0
  %1456 = vmatpush1.bf16.msra.mxu0 %v1437
  %1457 = vmatprep.subr.bf16.mxu0 0
  %1458 = vmatpush1.bf16.msra.mxu0 %v1438
  %1459 = vmatprep.subr.bf16.mxu0 0
  %1460 = vmatpush1.bf16.msra.mxu0 %v1439
  %1461 = vmatprep.subr.bf16.mxu0 0
  %1462 = vmatpush1.bf16.msra.mxu0 %v1440
  %1463 = vmatprep.subr.bf16.mxu0 0
  %1464 = vmatpush1.bf16.msra.mxu0 %v1441
  %1465 = vmatprep.subr.bf16.mxu0 0
  %1466 = vmatpush1.bf16.msra.mxu0 %v1442
  %1467 = vmatprep.subr.bf16.mxu0 0
  %1468 = vmatpush1.bf16.msra.mxu0 0
  %1469 = vmatprep.subr.bf16.mxu0 0
  %1470 = vmatpush1.bf16.msra.mxu0 0
  %1471 = vmatprep.subr.bf16.mxu0 0
  %1472 = vmatpush1.bf16.msra.mxu0 0
  %1473 = vmatprep.subr.bf16.mxu0 0
  %1474 = vmatpush1.bf16.msra.mxu0 0
  %1475 = vmatprep.subr.bf16.mxu0 0
  %1476 = vmatpush1.bf16.msra.mxu0 0
  %1477 = vmatprep.subr.bf16.mxu0 0
  %1478 = vmatpush1.bf16.msra.mxu0 0
  %1479 = vmatprep.subr.bf16.mxu0 0
  %1480 = vmatpush1.bf16.msra.mxu0 0
  %1481 = vmatprep.subr.bf16.mxu0 0
  %1482 = vmatpush1.bf16.msra.mxu0 0
  %1483 = vmatprep.mubr.bf16.mxu0 0
  %1484 = vmatmul.mubr.bf16.gmra.mrb[0].mxu0 %v1385
  %v1485 = vpop.f32.mrb[0].mxu0
  %v1486 = vadd.f32 0.0, %v1485
  %v1487 = vpop.f32.mrb[0].mxu0
  %v1488 = vpop.f32.mrb[0].mxu0
  %v1489 = vpop.f32.mrb[0].mxu0
  %1490 = vdwg.mxu0
  %v1507 = vunpack.c.l.b16 %v1369
  %v1508 = vunpack.c.l.b16 %v1370
  %v1509 = vunpack.c.l.b16 %v1371
  %v1510 = vunpack.c.l.b16 %v1372
  %v1511 = vunpack.c.l.b16 %v1373
  %v1512 = vunpack.c.l.b16 %v1374
  %v1513 = vunpack.c.l.b16 %v1375
  %v1514 = vunpack.c.l.b16 %v1376
  %v1515 = vunpack.c.l.b16 %v1377
  %v1516 = vunpack.c.l.b16 %v1378
  %v1517 = vunpack.c.l.b16 %v1379
  %v1518 = vunpack.c.l.b16 %v1380
  %v1519 = vunpack.c.l.b16 %v1381
  %v1520 = vunpack.c.l.b16 %v1382
  %v1521 = vunpack.c.l.b16 %v1383
  %v1522 = vunpack.c.l.b16 %v1384
  %v1523 = vpack.c.b16 %v1508, %v1507
  %v1524 = vpack.c.b16 %v1510, %v1509
  %v1525 = vpack.c.b16 %v1512, %v1511
  %v1526 = vpack.c.b16 %v1514, %v1513
  %v1527 = vpack.c.b16 %v1516, %v1515
  %v1528 = vpack.c.b16 %v1518, %v1517
  %v1529 = vpack.c.b16 %v1520, %v1519
  %v1530 = vpack.c.b16 %v1522, %v1521
  %1539 = vmatprep.subr.bf16.mxu0 0
  %1540 = vmatpush1.bf16.msra.mxu0 %v1523
  %1541 = vmatprep.subr.bf16.mxu0 0
  %1542 = vmatpush1.bf16.msra.mxu0 %v1524
  %1543 = vmatprep.subr.bf16.mxu0 0
  %1544 = vmatpush1.bf16.msra.mxu0 %v1525
  %1545 = vmatprep.subr.bf16.mxu0 0
  %1546 = vmatpush1.bf16.msra.mxu0 %v1526
  %1547 = vmatprep.subr.bf16.mxu0 0
  %1548 = vmatpush1.bf16.msra.mxu0 %v1527
  %1549 = vmatprep.subr.bf16.mxu0 0
  %1550 = vmatpush1.bf16.msra.mxu0 %v1528
  %1551 = vmatprep.subr.bf16.mxu0 0
  %1552 = vmatpush1.bf16.msra.mxu0 %v1529
  %1553 = vmatprep.subr.bf16.mxu0 0
  %1554 = vmatpush1.bf16.msra.mxu0 %v1530
  %1555 = vmatprep.subr.bf16.mxu0 0
  %1556 = vmatpush1.bf16.msra.mxu0 0
  %1557 = vmatprep.subr.bf16.mxu0 0
  %1558 = vmatpush1.bf16.msra.mxu0 0
  %1559 = vmatprep.subr.bf16.mxu0 0
  %1560 = vmatpush1.bf16.msra.mxu0 0
  %1561 = vmatprep.subr.bf16.mxu0 0
  %1562 = vmatpush1.bf16.msra.mxu0 0
  %1563 = vmatprep.subr.bf16.mxu0 0
  %1564 = vmatpush1.bf16.msra.mxu0 0
  %1565 = vmatprep.subr.bf16.mxu0 0
  %1566 = vmatpush1.bf16.msra.mxu0 0
  %1567 = vmatprep.subr.bf16.mxu0 0
  %1568 = vmatpush1.bf16.msra.mxu0 0
  %1569 = vmatprep.subr.bf16.mxu0 0
  %1570 = vmatpush1.bf16.msra.mxu0 0
  %1571 = vmatprep.mubr.bf16.mxu0 0
  %1572 = vmatmul.mubr.bf16.gmra.mrb[0].mxu0 %v1368
  %v1573 = vpop.f32.mrb[0].mxu0
  %v1574 = vadd.f32 %v1486, %v1573
  %v1575 = vpop.f32.mrb[0].mxu0
  %v1576 = vpop.f32.mrb[0].mxu0
  %v1577 = vpop.f32.mrb[0].mxu0
  %1578 = vdwg.mxu0
  %v1579 = vpack.c.bf16 %v1345, %v1345
  %s1580 = scalar_lea.vmem %s3, 128
  %v1581 = vld [vmem:[%s1580] sm:$0xf]
  %v1582 = vld [vmem:[%s1580 + $0x4] sm:$0xf]
  %v1583 = vld [vmem:[%s1580 + $0x8] sm:$0xf]
  %v1584 = vld [vmem:[%s1580 + $0xc] sm:$0xf]
  %v1585 = vld [vmem:[%s1580 + $0x10] sm:$0xf]
  %v1586 = vld [vmem:[%s1580 + $0x14] sm:$0xf]
  %v1587 = vld [vmem:[%s1580 + $0x18] sm:$0xf]
  %v1588 = vld [vmem:[%s1580 + $0x1c] sm:$0xf]
  %v1589 = vld [vmem:[%s1580 + $0x20] sm:$0xf]
  %v1590 = vld [vmem:[%s1580 + $0x24] sm:$0xf]
  %v1591 = vld [vmem:[%s1580 + $0x28] sm:$0xf]
  %v1592 = vld [vmem:[%s1580 + $0x2c] sm:$0xf]
  %v1593 = vld [vmem:[%s1580 + $0x30] sm:$0xf]
  %v1594 = vld [vmem:[%s1580 + $0x34] sm:$0xf]
  %v1595 = vld [vmem:[%s1580 + $0x38] sm:$0xf]
  %v1596 = vld [vmem:[%s1580 + $0x3c] sm:$0xf]
  %v1613 = vunpack.c.l.b16 %v1581
  %v1614 = vunpack.c.l.b16 %v1582
  %v1615 = vunpack.c.l.b16 %v1583
  %v1616 = vunpack.c.l.b16 %v1584
  %v1617 = vunpack.c.l.b16 %v1585
  %v1618 = vunpack.c.l.b16 %v1586
  %v1619 = vunpack.c.l.b16 %v1587
  %v1620 = vunpack.c.l.b16 %v1588
  %v1621 = vunpack.c.l.b16 %v1589
  %v1622 = vunpack.c.l.b16 %v1590
  %v1623 = vunpack.c.l.b16 %v1591
  %v1624 = vunpack.c.l.b16 %v1592
  %v1625 = vunpack.c.l.b16 %v1593
  %v1626 = vunpack.c.l.b16 %v1594
  %v1627 = vunpack.c.l.b16 %v1595
  %v1628 = vunpack.c.l.b16 %v1596
  %v1629 = vpack.c.b16 %v1614, %v1613
  %v1630 = vpack.c.b16 %v1616, %v1615
  %v1631 = vpack.c.b16 %v1618, %v1617
  %v1632 = vpack.c.b16 %v1620, %v1619
  %v1633 = vpack.c.b16 %v1622, %v1621
  %v1634 = vpack.c.b16 %v1624, %v1623
  %v1635 = vpack.c.b16 %v1626, %v1625
  %v1636 = vpack.c.b16 %v1628, %v1627
  %1645 = vmatprep.subr.bf16.mxu0 0
  %1646 = vmatpush1.bf16.msra.mxu0 %v1629
  %1647 = vmatprep.subr.bf16.mxu0 0
  %1648 = vmatpush1.bf16.msra.mxu0 %v1630
  %1649 = vmatprep.subr.bf16.mxu0 0
  %1650 = vmatpush1.bf16.msra.mxu0 %v1631
  %1651 = vmatprep.subr.bf16.mxu0 0
  %1652 = vmatpush1.bf16.msra.mxu0 %v1632
  %1653 = vmatprep.subr.bf16.mxu0 0
  %1654 = vmatpush1.bf16.msra.mxu0 %v1633
  %1655 = vmatprep.subr.bf16.mxu0 0
  %1656 = vmatpush1.bf16.msra.mxu0 %v1634
  %1657 = vmatprep.subr.bf16.mxu0 0
  %1658 = vmatpush1.bf16.msra.mxu0 %v1635
  %1659 = vmatprep.subr.bf16.mxu0 0
  %1660 = vmatpush1.bf16.msra.mxu0 %v1636
  %1661 = vmatprep.subr.bf16.mxu0 0
  %1662 = vmatpush1.bf16.msra.mxu0 0
  %1663 = vmatprep.subr.bf16.mxu0 0
  %1664 = vmatpush1.bf16.msra.mxu0 0
  %1665 = vmatprep.subr.bf16.mxu0 0
  %1666 = vmatpush1.bf16.msra.mxu0 0
  %1667 = vmatprep.subr.bf16.mxu0 0
  %1668 = vmatpush1.bf16.msra.mxu0 0
  %1669 = vmatprep.subr.bf16.mxu0 0
  %1670 = vmatpush1.bf16.msra.mxu0 0
  %1671 = vmatprep.subr.bf16.mxu0 0
  %1672 = vmatpush1.bf16.msra.mxu0 0
  %1673 = vmatprep.subr.bf16.mxu0 0
  %1674 = vmatpush1.bf16.msra.mxu0 0
  %1675 = vmatprep.subr.bf16.mxu0 0
  %1676 = vmatpush1.bf16.msra.mxu0 0
  %1677 = vmatprep.mubr.bf16.mxu0 0
  %1678 = vmatmul.mubr.bf16.gmra.mrb[0].mxu0 %v1579
  %v1679 = vpop.f32.mrb[0].mxu0
  %v1680 = vadd.f32 0.0, %v1679
  %v1681 = vpop.f32.mrb[0].mxu0
  %v1682 = vpop.f32.mrb[0].mxu0
  %v1683 = vpop.f32.mrb[0].mxu0
  %1684 = vdwg.mxu0
  %v1685 = vadd.f32 %v1574, %v1680
  %v1686 = vpack.c.bf16 %v1346, %v1346
  %s1687 = scalar_lea.vmem %s3, 192
  %v1688 = vld [vmem:[%s1687] sm:$0xf]
  %v1689 = vld [vmem:[%s1687 + $0x4] sm:$0xf]
  %v1690 = vld [vmem:[%s1687 + $0x8] sm:$0xf]
  %v1691 = vld [vmem:[%s1687 + $0xc] sm:$0xf]
  %v1692 = vld [vmem:[%s1687 + $0x10] sm:$0xf]
  %v1693 = vld [vmem:[%s1687 + $0x14] sm:$0xf]
  %v1694 = vld [vmem:[%s1687 + $0x18] sm:$0xf]
  %v1695 = vld [vmem:[%s1687 + $0x1c] sm:$0xf]
  %v1696 = vld [vmem:[%s1687 + $0x20] sm:$0xf]
  %v1697 = vld [vmem:[%s1687 + $0x24] sm:$0xf]
  %v1698 = vld [vmem:[%s1687 + $0x28] sm:$0xf]
  %v1699 = vld [vmem:[%s1687 + $0x2c] sm:$0xf]
  %v1700 = vld [vmem:[%s1687 + $0x30] sm:$0xf]
  %v1701 = vld [vmem:[%s1687 + $0x34] sm:$0xf]
  %v1702 = vld [vmem:[%s1687 + $0x38] sm:$0xf]
  %v1703 = vld [vmem:[%s1687 + $0x3c] sm:$0xf]
  %v1720 = vunpack.c.l.b16 %v1688
  %v1721 = vunpack.c.l.b16 %v1689
  %v1722 = vunpack.c.l.b16 %v1690
  %v1723 = vunpack.c.l.b16 %v1691
  %v1724 = vunpack.c.l.b16 %v1692
  %v1725 = vunpack.c.l.b16 %v1693
  %v1726 = vunpack.c.l.b16 %v1694
  %v1727 = vunpack.c.l.b16 %v1695
  %v1728 = vunpack.c.l.b16 %v1696
  %v1729 = vunpack.c.l.b16 %v1697
  %v1730 = vunpack.c.l.b16 %v1698
  %v1731 = vunpack.c.l.b16 %v1699
  %v1732 = vunpack.c.l.b16 %v1700
  %v1733 = vunpack.c.l.b16 %v1701
  %v1734 = vunpack.c.l.b16 %v1702
  %v1735 = vunpack.c.l.b16 %v1703
  %v1736 = vpack.c.b16 %v1721, %v1720
  %v1737 = vpack.c.b16 %v1723, %v1722
  %v1738 = vpack.c.b16 %v1725, %v1724
  %v1739 = vpack.c.b16 %v1727, %v1726
  %v1740 = vpack.c.b16 %v1729, %v1728
  %v1741 = vpack.c.b16 %v1731, %v1730
  %v1742 = vpack.c.b16 %v1733, %v1732
  %v1743 = vpack.c.b16 %v1735, %v1734
  %1752 = vmatprep.subr.bf16.mxu0 0
  %1753 = vmatpush1.bf16.msra.mxu0 %v1736
  %1754 = vmatprep.subr.bf16.mxu0 0
  %1755 = vmatpush1.bf16.msra.mxu0 %v1737
  %1756 = vmatprep.subr.bf16.mxu0 0
  %1757 = vmatpush1.bf16.msra.mxu0 %v1738
  %1758 = vmatprep.subr.bf16.mxu0 0
  %1759 = vmatpush1.bf16.msra.mxu0 %v1739
  %1760 = vmatprep.subr.bf16.mxu0 0
  %1761 = vmatpush1.bf16.msra.mxu0 %v1740
  %1762 = vmatprep.subr.bf16.mxu0 0
  %1763 = vmatpush1.bf16.msra.mxu0 %v1741
  %1764 = vmatprep.subr.bf16.mxu0 0
  %1765 = vmatpush1.bf16.msra.mxu0 %v1742
  %1766 = vmatprep.subr.bf16.mxu0 0
  %1767 = vmatpush1.bf16.msra.mxu0 %v1743
  %1768 = vmatprep.subr.bf16.mxu0 0
  %1769 = vmatpush1.bf16.msra.mxu0 0
  %1770 = vmatprep.subr.bf16.mxu0 0
  %1771 = vmatpush1.bf16.msra.mxu0 0
  %1772 = vmatprep.subr.bf16.mxu0 0
  %1773 = vmatpush1.bf16.msra.mxu0 0
  %1774 = vmatprep.subr.bf16.mxu0 0
  %1775 = vmatpush1.bf16.msra.mxu0 0
  %1776 = vmatprep.subr.bf16.mxu0 0
  %1777 = vmatpush1.bf16.msra.mxu0 0
  %1778 = vmatprep.subr.bf16.mxu0 0
  %1779 = vmatpush1.bf16.msra.mxu0 0
  %1780 = vmatprep.subr.bf16.mxu0 0
  %1781 = vmatpush1.bf16.msra.mxu0 0
  %1782 = vmatprep.subr.bf16.mxu0 0
  %1783 = vmatpush1.bf16.msra.mxu0 0
  %1784 = vmatprep.mubr.bf16.mxu0 0
  %1785 = vmatmul.mubr.bf16.gmra.mrb[0].mxu0 %v1686
  %v1786 = vpop.f32.mrb[0].mxu0
  %v1787 = vadd.f32 0.0, %v1786
  %v1788 = vpop.f32.mrb[0].mxu0
  %v1789 = vpop.f32.mrb[0].mxu0
  %v1790 = vpop.f32.mrb[0].mxu0
  %1791 = vdwg.mxu0
  %v1792 = vadd.f32 %v1685, %v1787
  %v1793 = vpack.c.bf16 %v1347, %v1347
  %s1794 = scalar_lea.vmem %s3, 256
  %v1795 = vld [vmem:[%s1794] sm:$0xf]
  %v1796 = vld [vmem:[%s1794 + $0x4] sm:$0xf]
  %v1797 = vld [vmem:[%s1794 + $0x8] sm:$0xf]
  %v1798 = vld [vmem:[%s1794 + $0xc] sm:$0xf]
  %v1799 = vld [vmem:[%s1794 + $0x10] sm:$0xf]
  %v1800 = vld [vmem:[%s1794 + $0x14] sm:$0xf]
  %v1801 = vld [vmem:[%s1794 + $0x18] sm:$0xf]
  %v1802 = vld [vmem:[%s1794 + $0x1c] sm:$0xf]
  %v1803 = vld [vmem:[%s1794 + $0x20] sm:$0xf]
  %v1804 = vld [vmem:[%s1794 + $0x24] sm:$0xf]
  %v1805 = vld [vmem:[%s1794 + $0x28] sm:$0xf]
  %v1806 = vld [vmem:[%s1794 + $0x2c] sm:$0xf]
  %v1807 = vld [vmem:[%s1794 + $0x30] sm:$0xf]
  %v1808 = vld [vmem:[%s1794 + $0x34] sm:$0xf]
  %v1809 = vld [vmem:[%s1794 + $0x38] sm:$0xf]
  %v1810 = vld [vmem:[%s1794 + $0x3c] sm:$0xf]
  %v1827 = vunpack.c.l.b16 %v1795
  %v1828 = vunpack.c.l.b16 %v1796
  %v1829 = vunpack.c.l.b16 %v1797
  %v1830 = vunpack.c.l.b16 %v1798
  %v1831 = vunpack.c.l.b16 %v1799
  %v1832 = vunpack.c.l.b16 %v1800
  %v1833 = vunpack.c.l.b16 %v1801
  %v1834 = vunpack.c.l.b16 %v1802
  %v1835 = vunpack.c.l.b16 %v1803
  %v1836 = vunpack.c.l.b16 %v1804
  %v1837 = vunpack.c.l.b16 %v1805
  %v1838 = vunpack.c.l.b16 %v1806
  %v1839 = vunpack.c.l.b16 %v1807
  %v1840 = vunpack.c.l.b16 %v1808
  %v1841 = vunpack.c.l.b16 %v1809
  %v1842 = vunpack.c.l.b16 %v1810
  %v1843 = vpack.c.b16 %v1828, %v1827
  %v1844 = vpack.c.b16 %v1830, %v1829
  %v1845 = vpack.c.b16 %v1832, %v1831
  %v1846 = vpack.c.b16 %v1834, %v1833
  %v1847 = vpack.c.b16 %v1836, %v1835
  %v1848 = vpack.c.b16 %v1838, %v1837
  %v1849 = vpack.c.b16 %v1840, %v1839
  %v1850 = vpack.c.b16 %v1842, %v1841
  %1859 = vmatprep.subr.bf16.mxu0 0
  %1860 = vmatpush1.bf16.msra.mxu0 %v1843
  %1861 = vmatprep.subr.bf16.mxu0 0
  %1862 = vmatpush1.bf16.msra.mxu0 %v1844
  %1863 = vmatprep.subr.bf16.mxu0 0
  %1864 = vmatpush1.bf16.msra.mxu0 %v1845
  %1865 = vmatprep.subr.bf16.mxu0 0
  %1866 = vmatpush1.bf16.msra.mxu0 %v1846
  %1867 = vmatprep.subr.bf16.mxu0 0
  %1868 = vmatpush1.bf16.msra.mxu0 %v1847
  %1869 = vmatprep.subr.bf16.mxu0 0
  %1870 = vmatpush1.bf16.msra.mxu0 %v1848
  %1871 = vmatprep.subr.bf16.mxu0 0
  %1872 = vmatpush1.bf16.msra.mxu0 %v1849
  %1873 = vmatprep.subr.bf16.mxu0 0
  %1874 = vmatpush1.bf16.msra.mxu0 %v1850
  %1875 = vmatprep.subr.bf16.mxu0 0
  %1876 = vmatpush1.bf16.msra.mxu0 0
  %1877 = vmatprep.subr.bf16.mxu0 0
  %1878 = vmatpush1.bf16.msra.mxu0 0
  %1879 = vmatprep.subr.bf16.mxu0 0
  %1880 = vmatpush1.bf16.msra.mxu0 0
  %1881 = vmatprep.subr.bf16.mxu0 0
  %1882 = vmatpush1.bf16.msra.mxu0 0
  %1883 = vmatprep.subr.bf16.mxu0 0
  %1884 = vmatpush1.bf16.msra.mxu0 0
  %1885 = vmatprep.subr.bf16.mxu0 0
  %1886 = vmatpush1.bf16.msra.mxu0 0
  %1887 = vmatprep.subr.bf16.mxu0 0
  %1888 = vmatpush1.bf16.msra.mxu0 0
  %1889 = vmatprep.subr.bf16.mxu0 0
  %1890 = vmatpush1.bf16.msra.mxu0 0
  %1891 = vmatprep.mubr.bf16.mxu0 0
  %1892 = vmatmul.mubr.bf16.gmra.mrb[0].mxu0 %v1793
  %v1893 = vpop.f32.mrb[0].mxu0
  %v1894 = vadd.f32 0.0, %v1893
  %v1895 = vpop.f32.mrb[0].mxu0
  %v1896 = vpop.f32.mrb[0].mxu0
  %v1897 = vpop.f32.mrb[0].mxu0
  %1898 = vdwg.mxu0
  %v1899 = vadd.f32 %v1792, %v1894
  %v1900 = vpack.c.bf16 %v1348, %v1348
  %s1901 = scalar_lea.vmem %s3, 320
  %v1902 = vld [vmem:[%s1901] sm:$0xf]
  %v1903 = vld [vmem:[%s1901 + $0x4] sm:$0xf]
  %v1904 = vld [vmem:[%s1901 + $0x8] sm:$0xf]
  %v1905 = vld [vmem:[%s1901 + $0xc] sm:$0xf]
  %v1906 = vld [vmem:[%s1901 + $0x10] sm:$0xf]
  %v1907 = vld [vmem:[%s1901 + $0x14] sm:$0xf]
  %v1908 = vld [vmem:[%s1901 + $0x18] sm:$0xf]
  %v1909 = vld [vmem:[%s1901 + $0x1c] sm:$0xf]
  %v1910 = vld [vmem:[%s1901 + $0x20] sm:$0xf]
  %v1911 = vld [vmem:[%s1901 + $0x24] sm:$0xf]
  %v1912 = vld [vmem:[%s1901 + $0x28] sm:$0xf]
  %v1913 = vld [vmem:[%s1901 + $0x2c] sm:$0xf]
  %v1914 = vld [vmem:[%s1901 + $0x30] sm:$0xf]
  %v1915 = vld [vmem:[%s1901 + $0x34] sm:$0xf]
  %v1916 = vld [vmem:[%s1901 + $0x38] sm:$0xf]
  %v1917 = vld [vmem:[%s1901 + $0x3c] sm:$0xf]
  %v1934 = vunpack.c.l.b16 %v1902
  %v1935 = vunpack.c.l.b16 %v1903
  %v1936 = vunpack.c.l.b16 %v1904
  %v1937 = vunpack.c.l.b16 %v1905
  %v1938 = vunpack.c.l.b16 %v1906
  %v1939 = vunpack.c.l.b16 %v1907
  %v1940 = vunpack.c.l.b16 %v1908
  %v1941 = vunpack.c.l.b16 %v1909
  %v1942 = vunpack.c.l.b16 %v1910
  %v1943 = vunpack.c.l.b16 %v1911
  %v1944 = vunpack.c.l.b16 %v1912
  %v1945 = vunpack.c.l.b16 %v1913
  %v1946 = vunpack.c.l.b16 %v1914
  %v1947 = vunpack.c.l.b16 %v1915
  %v1948 = vunpack.c.l.b16 %v1916
  %v1949 = vunpack.c.l.b16 %v1917
  %v1950 = vpack.c.b16 %v1935, %v1934
  %v1951 = vpack.c.b16 %v1937, %v1936
  %v1952 = vpack.c.b16 %v1939, %v1938
  %v1953 = vpack.c.b16 %v1941, %v1940
  %v1954 = vpack.c.b16 %v1943, %v1942
  %v1955 = vpack.c.b16 %v1945, %v1944
  %v1956 = vpack.c.b16 %v1947, %v1946
  %v1957 = vpack.c.b16 %v1949, %v1948
  %1966 = vmatprep.subr.bf16.mxu0 0
  %1967 = vmatpush1.bf16.msra.mxu0 %v1950
  %1968 = vmatprep.subr.bf16.mxu0 0
  %1969 = vmatpush1.bf16.msra.mxu0 %v1951
  %1970 = vmatprep.subr.bf16.mxu0 0
  %1971 = vmatpush1.bf16.msra.mxu0 %v1952
  %1972 = vmatprep.subr.bf16.mxu0 0
  %1973 = vmatpush1.bf16.msra.mxu0 %v1953
  %1974 = vmatprep.subr.bf16.mxu0 0
  %1975 = vmatpush1.bf16.msra.mxu0 %v1954
  %1976 = vmatprep.subr.bf16.mxu0 0
  %1977 = vmatpush1.bf16.msra.mxu0 %v1955
  %1978 = vmatprep.subr.bf16.mxu0 0
  %1979 = vmatpush1.bf16.msra.mxu0 %v1956
  %1980 = vmatprep.subr.bf16.mxu0 0
  %1981 = vmatpush1.bf16.msra.mxu0 %v1957
  %1982 = vmatprep.subr.bf16.mxu0 0
  %1983 = vmatpush1.bf16.msra.mxu0 0
  %1984 = vmatprep.subr.bf16.mxu0 0
  %1985 = vmatpush1.bf16.msra.mxu0 0
  %1986 = vmatprep.subr.bf16.mxu0 0
  %1987 = vmatpush1.bf16.msra.mxu0 0
  %1988 = vmatprep.subr.bf16.mxu0 0
  %1989 = vmatpush1.bf16.msra.mxu0 0
  %1990 = vmatprep.subr.bf16.mxu0 0
  %1991 = vmatpush1.bf16.msra.mxu0 0
  %1992 = vmatprep.subr.bf16.mxu0 0
  %1993 = vmatpush1.bf16.msra.mxu0 0
  %1994 = vmatprep.subr.bf16.mxu0 0
  %1995 = vmatpush1.bf16.msra.mxu0 0
  %1996 = vmatprep.subr.bf16.mxu0 0
  %1997 = vmatpush1.bf16.msra.mxu0 0
  %1998 = vmatprep.mubr.bf16.mxu0 0
  %1999 = vmatmul.mubr.bf16.gmra.mrb[0].mxu0 %v1900
  %v2000 = vpop.f32.mrb[0].mxu0
  %v2001 = vadd.f32 0.0, %v2000
  %v2002 = vpop.f32.mrb[0].mxu0
  %v2003 = vpop.f32.mrb[0].mxu0
  %v2004 = vpop.f32.mrb[0].mxu0
  %2005 = vdwg.mxu0
  %v2006 = vadd.f32 %v1899, %v2001
  %v2007 = vpack.c.bf16 %v1349, %v1349
  %s2008 = scalar_lea.vmem %s3, 384
  %v2009 = vld [vmem:[%s2008] sm:$0xf]
  %v2010 = vld [vmem:[%s2008 + $0x4] sm:$0xf]
  %v2011 = vld [vmem:[%s2008 + $0x8] sm:$0xf]
  %v2012 = vld [vmem:[%s2008 + $0xc] sm:$0xf]
  %v2013 = vld [vmem:[%s2008 + $0x10] sm:$0xf]
  %v2014 = vld [vmem:[%s2008 + $0x14] sm:$0xf]
  %v2015 = vld [vmem:[%s2008 + $0x18] sm:$0xf]
  %v2016 = vld [vmem:[%s2008 + $0x1c] sm:$0xf]
  %v2017 = vld [vmem:[%s2008 + $0x20] sm:$0xf]
  %v2018 = vld [vmem:[%s2008 + $0x24] sm:$0xf]
  %v2019 = vld [vmem:[%s2008 + $0x28] sm:$0xf]
  %v2020 = vld [vmem:[%s2008 + $0x2c] sm:$0xf]
  %v2021 = vld [vmem:[%s2008 + $0x30] sm:$0xf]
  %v2022 = vld [vmem:[%s2008 + $0x34] sm:$0xf]
  %v2023 = vld [vmem:[%s2008 + $0x38] sm:$0xf]
  %v2024 = vld [vmem:[%s2008 + $0x3c] sm:$0xf]
  %v2041 = vunpack.c.l.b16 %v2009
  %v2042 = vunpack.c.l.b16 %v2010
  %v2043 = vunpack.c.l.b16 %v2011
  %v2044 = vunpack.c.l.b16 %v2012
  %v2045 = vunpack.c.l.b16 %v2013
  %v2046 = vunpack.c.l.b16 %v2014
  %v2047 = vunpack.c.l.b16 %v2015
  %v2048 = vunpack.c.l.b16 %v2016
  %v2049 = vunpack.c.l.b16 %v2017
  %v2050 = vunpack.c.l.b16 %v2018
  %v2051 = vunpack.c.l.b16 %v2019
  %v2052 = vunpack.c.l.b16 %v2020
  %v2053 = vunpack.c.l.b16 %v2021
  %v2054 = vunpack.c.l.b16 %v2022
  %v2055 = vunpack.c.l.b16 %v2023
  %v2056 = vunpack.c.l.b16 %v2024
  %v2057 = vpack.c.b16 %v2042, %v2041
  %v2058 = vpack.c.b16 %v2044, %v2043
  %v2059 = vpack.c.b16 %v2046, %v2045
  %v2060 = vpack.c.b16 %v2048, %v2047
  %v2061 = vpack.c.b16 %v2050, %v2049
  %v2062 = vpack.c.b16 %v2052, %v2051
  %v2063 = vpack.c.b16 %v2054, %v2053
  %v2064 = vpack.c.b16 %v2056, %v2055
  %2073 = vmatprep.subr.bf16.mxu0 0
  %2074 = vmatpush1.bf16.msra.mxu0 %v2057
  %2075 = vmatprep.subr.bf16.mxu0 0
  %2076 = vmatpush1.bf16.msra.mxu0 %v2058
  %2077 = vmatprep.subr.bf16.mxu0 0
  %2078 = vmatpush1.bf16.msra.mxu0 %v2059
  %2079 = vmatprep.subr.bf16.mxu0 0
  %2080 = vmatpush1.bf16.msra.mxu0 %v2060
  %2081 = vmatprep.subr.bf16.mxu0 0
  %2082 = vmatpush1.bf16.msra.mxu0 %v2061
  %2083 = vmatprep.subr.bf16.mxu0 0
  %2084 = vmatpush1.bf16.msra.mxu0 %v2062
  %2085 = vmatprep.subr.bf16.mxu0 0
  %2086 = vmatpush1.bf16.msra.mxu0 %v2063
  %2087 = vmatprep.subr.bf16.mxu0 0
  %2088 = vmatpush1.bf16.msra.mxu0 %v2064
  %2089 = vmatprep.subr.bf16.mxu0 0
  %2090 = vmatpush1.bf16.msra.mxu0 0
  %2091 = vmatprep.subr.bf16.mxu0 0
  %2092 = vmatpush1.bf16.msra.mxu0 0
  %2093 = vmatprep.subr.bf16.mxu0 0
  %2094 = vmatpush1.bf16.msra.mxu0 0
  %2095 = vmatprep.subr.bf16.mxu0 0
  %2096 = vmatpush1.bf16.msra.mxu0 0
  %2097 = vmatprep.subr.bf16.mxu0 0
  %2098 = vmatpush1.bf16.msra.mxu0 0
  %2099 = vmatprep.subr.bf16.mxu0 0
  %2100 = vmatpush1.bf16.msra.mxu0 0
  %2101 = vmatprep.subr.bf16.mxu0 0
  %2102 = vmatpush1.bf16.msra.mxu0 0
  %2103 = vmatprep.subr.bf16.mxu0 0
  %2104 = vmatpush1.bf16.msra.mxu0 0
  %2105 = vmatprep.mubr.bf16.mxu0 0
  %2106 = vmatmul.mubr.bf16.gmra.mrb[0].mxu0 %v2007
  %v2107 = vpop.f32.mrb[0].mxu0
  %v2108 = vadd.f32 0.0, %v2107
  %v2109 = vpop.f32.mrb[0].mxu0
  %v2110 = vpop.f32.mrb[0].mxu0
  %v2111 = vpop.f32.mrb[0].mxu0
  %2112 = vdwg.mxu0
  %v2113 = vadd.f32 %v2006, %v2108
  %v2114 = vpack.c.bf16 %v1350, %v1350
  %s2115 = scalar_lea.vmem %s3, 448
  %v2116 = vld [vmem:[%s2115] sm:$0xf]
  %v2117 = vld [vmem:[%s2115 + $0x4] sm:$0xf]
  %v2118 = vld [vmem:[%s2115 + $0x8] sm:$0xf]
  %v2119 = vld [vmem:[%s2115 + $0xc] sm:$0xf]
  %v2120 = vld [vmem:[%s2115 + $0x10] sm:$0xf]
  %v2121 = vld [vmem:[%s2115 + $0x14] sm:$0xf]
  %v2122 = vld [vmem:[%s2115 + $0x18] sm:$0xf]
  %v2123 = vld [vmem:[%s2115 + $0x1c] sm:$0xf]
  %v2124 = vld [vmem:[%s2115 + $0x20] sm:$0xf]
  %v2125 = vld [vmem:[%s2115 + $0x24] sm:$0xf]
  %v2126 = vld [vmem:[%s2115 + $0x28] sm:$0xf]
  %v2127 = vld [vmem:[%s2115 + $0x2c] sm:$0xf]
  %v2128 = vld [vmem:[%s2115 + $0x30] sm:$0xf]
  %v2129 = vld [vmem:[%s2115 + $0x34] sm:$0xf]
  %v2130 = vld [vmem:[%s2115 + $0x38] sm:$0xf]
  %v2131 = vld [vmem:[%s2115 + $0x3c] sm:$0xf]
  %v2148 = vunpack.c.l.b16 %v2116
  %v2149 = vunpack.c.l.b16 %v2117
  %v2150 = vunpack.c.l.b16 %v2118
  %v2151 = vunpack.c.l.b16 %v2119
  %v2152 = vunpack.c.l.b16 %v2120
  %v2153 = vunpack.c.l.b16 %v2121
  %v2154 = vunpack.c.l.b16 %v2122
  %v2155 = vunpack.c.l.b16 %v2123
  %v2156 = vunpack.c.l.b16 %v2124
  %v2157 = vunpack.c.l.b16 %v2125
  %v2158 = vunpack.c.l.b16 %v2126
  %v2159 = vunpack.c.l.b16 %v2127
  %v2160 = vunpack.c.l.b16 %v2128
  %v2161 = vunpack.c.l.b16 %v2129
  %v2162 = vunpack.c.l.b16 %v2130
  %v2163 = vunpack.c.l.b16 %v2131
  %v2164 = vpack.c.b16 %v2149, %v2148
  %v2165 = vpack.c.b16 %v2151, %v2150
  %v2166 = vpack.c.b16 %v2153, %v2152
  %v2167 = vpack.c.b16 %v2155, %v2154
  %v2168 = vpack.c.b16 %v2157, %v2156
  %v2169 = vpack.c.b16 %v2159, %v2158
  %v2170 = vpack.c.b16 %v2161, %v2160
  %v2171 = vpack.c.b16 %v2163, %v2162
  %2180 = vmatprep.subr.bf16.mxu0 0
  %2181 = vmatpush1.bf16.msra.mxu0 %v2164
  %2182 = vmatprep.subr.bf16.mxu0 0
  %2183 = vmatpush1.bf16.msra.mxu0 %v2165
  %2184 = vmatprep.subr.bf16.mxu0 0
  %2185 = vmatpush1.bf16.msra.mxu0 %v2166
  %2186 = vmatprep.subr.bf16.mxu0 0
  %2187 = vmatpush1.bf16.msra.mxu0 %v2167
  %2188 = vmatprep.subr.bf16.mxu0 0
  %2189 = vmatpush1.bf16.msra.mxu0 %v2168
  %2190 = vmatprep.subr.bf16.mxu0 0
  %2191 = vmatpush1.bf16.msra.mxu0 %v2169
  %2192 = vmatprep.subr.bf16.mxu0 0
  %2193 = vmatpush1.bf16.msra.mxu0 %v2170
  %2194 = vmatprep.subr.bf16.mxu0 0
  %2195 = vmatpush1.bf16.msra.mxu0 %v2171
  %2196 = vmatprep.subr.bf16.mxu0 0
  %2197 = vmatpush1.bf16.msra.mxu0 0
  %2198 = vmatprep.subr.bf16.mxu0 0
  %2199 = vmatpush1.bf16.msra.mxu0 0
  %2200 = vmatprep.subr.bf16.mxu0 0
  %2201 = vmatpush1.bf16.msra.mxu0 0
  %2202 = vmatprep.subr.bf16.mxu0 0
  %2203 = vmatpush1.bf16.msra.mxu0 0
  %2204 = vmatprep.subr.bf16.mxu0 0
  %2205 = vmatpush1.bf16.msra.mxu0 0
  %2206 = vmatprep.subr.bf16.mxu0 0
  %2207 = vmatpush1.bf16.msra.mxu0 0
  %2208 = vmatprep.subr.bf16.mxu0 0
  %2209 = vmatpush1.bf16.msra.mxu0 0
  %2210 = vmatprep.subr.bf16.mxu0 0
  %2211 = vmatpush1.bf16.msra.mxu0 0
  %2212 = vmatprep.mubr.bf16.mxu0 0
  %2213 = vmatmul.mubr.bf16.gmra.mrb[0].mxu0 %v2114
  %v2214 = vpop.f32.mrb[0].mxu0
  %v2215 = vadd.f32 0.0, %v2214
  %v2216 = vpop.f32.mrb[0].mxu0
  %v2217 = vpop.f32.mrb[0].mxu0
  %v2218 = vpop.f32.mrb[0].mxu0
  %2219 = vdwg.mxu0
  %v2220 = vadd.f32 %v2113, %v2215
  %v2221 = vpack.c.bf16 %v1351, %v1351
  %s2222 = scalar_lea.vmem %s3, 512
  %v2223 = vld [vmem:[%s2222] sm:$0xf]
  %v2224 = vld [vmem:[%s2222 + $0x4] sm:$0xf]
  %v2225 = vld [vmem:[%s2222 + $0x8] sm:$0xf]
  %v2226 = vld [vmem:[%s2222 + $0xc] sm:$0xf]
  %v2227 = vld [vmem:[%s2222 + $0x10] sm:$0xf]
  %v2228 = vld [vmem:[%s2222 + $0x14] sm:$0xf]
  %v2229 = vld [vmem:[%s2222 + $0x18] sm:$0xf]
  %v2230 = vld [vmem:[%s2222 + $0x1c] sm:$0xf]
  %v2231 = vld [vmem:[%s2222 + $0x20] sm:$0xf]
  %v2232 = vld [vmem:[%s2222 + $0x24] sm:$0xf]
  %v2233 = vld [vmem:[%s2222 + $0x28] sm:$0xf]
  %v2234 = vld [vmem:[%s2222 + $0x2c] sm:$0xf]
  %v2235 = vld [vmem:[%s2222 + $0x30] sm:$0xf]
  %v2236 = vld [vmem:[%s2222 + $0x34] sm:$0xf]
  %v2237 = vld [vmem:[%s2222 + $0x38] sm:$0xf]
  %v2238 = vld [vmem:[%s2222 + $0x3c] sm:$0xf]
  %v2255 = vunpack.c.l.b16 %v2223
  %v2256 = vunpack.c.l.b16 %v2224
  %v2257 = vunpack.c.l.b16 %v2225
  %v2258 = vunpack.c.l.b16 %v2226
  %v2259 = vunpack.c.l.b16 %v2227
  %v2260 = vunpack.c.l.b16 %v2228
  %v2261 = vunpack.c.l.b16 %v2229
  %v2262 = vunpack.c.l.b16 %v2230
  %v2263 = vunpack.c.l.b16 %v2231
  %v2264 = vunpack.c.l.b16 %v2232
  %v2265 = vunpack.c.l.b16 %v2233
  %v2266 = vunpack.c.l.b16 %v2234
  %v2267 = vunpack.c.l.b16 %v2235
  %v2268 = vunpack.c.l.b16 %v2236
  %v2269 = vunpack.c.l.b16 %v2237
  %v2270 = vunpack.c.l.b16 %v2238
  %v2271 = vpack.c.b16 %v2256, %v2255
  %v2272 = vpack.c.b16 %v2258, %v2257
  %v2273 = vpack.c.b16 %v2260, %v2259
  %v2274 = vpack.c.b16 %v2262, %v2261
  %v2275 = vpack.c.b16 %v2264, %v2263
  %v2276 = vpack.c.b16 %v2266, %v2265
  %v2277 = vpack.c.b16 %v2268, %v2267
  %v2278 = vpack.c.b16 %v2270, %v2269
  %2287 = vmatprep.subr.bf16.mxu0 0
  %2288 = vmatpush1.bf16.msra.mxu0 %v2271
  %2289 = vmatprep.subr.bf16.mxu0 0
  %2290 = vmatpush1.bf16.msra.mxu0 %v2272
  %2291 = vmatprep.subr.bf16.mxu0 0
  %2292 = vmatpush1.bf16.msra.mxu0 %v2273
  %2293 = vmatprep.subr.bf16.mxu0 0
  %2294 = vmatpush1.bf16.msra.mxu0 %v2274
  %2295 = vmatprep.subr.bf16.mxu0 0
  %2296 = vmatpush1.bf16.msra.mxu0 %v2275
  %2297 = vmatprep.subr.bf16.mxu0 0
  %2298 = vmatpush1.bf16.msra.mxu0 %v2276
  %2299 = vmatprep.subr.bf16.mxu0 0
  %2300 = vmatpush1.bf16.msra.mxu0 %v2277
  %2301 = vmatprep.subr.bf16.mxu0 0
  %2302 = vmatpush1.bf16.msra.mxu0 %v2278
  %2303 = vmatprep.subr.bf16.mxu0 0
  %2304 = vmatpush1.bf16.msra.mxu0 0
  %2305 = vmatprep.subr.bf16.mxu0 0
  %2306 = vmatpush1.bf16.msra.mxu0 0
  %2307 = vmatprep.subr.bf16.mxu0 0
  %2308 = vmatpush1.bf16.msra.mxu0 0
  %2309 = vmatprep.subr.bf16.mxu0 0
  %2310 = vmatpush1.bf16.msra.mxu0 0
  %2311 = vmatprep.subr.bf16.mxu0 0
  %2312 = vmatpush1.bf16.msra.mxu0 0
  %2313 = vmatprep.subr.bf16.mxu0 0
  %2314 = vmatpush1.bf16.msra.mxu0 0
  %2315 = vmatprep.subr.bf16.mxu0 0
  %2316 = vmatpush1.bf16.msra.mxu0 0
  %2317 = vmatprep.subr.bf16.mxu0 0
  %2318 = vmatpush1.bf16.msra.mxu0 0
  %2319 = vmatprep.mubr.bf16.mxu0 0
  %2320 = vmatmul.mubr.bf16.gmra.mrb[0].mxu0 %v2221
  %v2321 = vpop.f32.mrb[0].mxu0
  %v2322 = vadd.f32 0.0, %v2321
  %v2323 = vpop.f32.mrb[0].mxu0
  %v2324 = vpop.f32.mrb[0].mxu0
  %v2325 = vpop.f32.mrb[0].mxu0
  %2326 = vdwg.mxu0
  %v2327 = vadd.f32 %v2220, %v2322
  %v2328 = vpack.c.bf16 %v1352, %v1352
  %s2329 = scalar_lea.vmem %s3, 576
  %v2330 = vld [vmem:[%s2329] sm:$0xf]
  %v2331 = vld [vmem:[%s2329 + $0x4] sm:$0xf]
  %v2332 = vld [vmem:[%s2329 + $0x8] sm:$0xf]
  %v2333 = vld [vmem:[%s2329 + $0xc] sm:$0xf]
  %v2334 = vld [vmem:[%s2329 + $0x10] sm:$0xf]
  %v2335 = vld [vmem:[%s2329 + $0x14] sm:$0xf]
  %v2336 = vld [vmem:[%s2329 + $0x18] sm:$0xf]
  %v2337 = vld [vmem:[%s2329 + $0x1c] sm:$0xf]
  %v2338 = vld [vmem:[%s2329 + $0x20] sm:$0xf]
  %v2339 = vld [vmem:[%s2329 + $0x24] sm:$0xf]
  %v2340 = vld [vmem:[%s2329 + $0x28] sm:$0xf]
  %v2341 = vld [vmem:[%s2329 + $0x2c] sm:$0xf]
  %v2342 = vld [vmem:[%s2329 + $0x30] sm:$0xf]
  %v2343 = vld [vmem:[%s2329 + $0x34] sm:$0xf]
  %v2344 = vld [vmem:[%s2329 + $0x38] sm:$0xf]
  %v2345 = vld [vmem:[%s2329 + $0x3c] sm:$0xf]
  %v2362 = vunpack.c.l.b16 %v2330
  %v2363 = vunpack.c.l.b16 %v2331
  %v2364 = vunpack.c.l.b16 %v2332
  %v2365 = vunpack.c.l.b16 %v2333
  %v2366 = vunpack.c.l.b16 %v2334
  %v2367 = vunpack.c.l.b16 %v2335
  %v2368 = vunpack.c.l.b16 %v2336
  %v2369 = vunpack.c.l.b16 %v2337
  %v2370 = vunpack.c.l.b16 %v2338
  %v2371 = vunpack.c.l.b16 %v2339
  %v2372 = vunpack.c.l.b16 %v2340
  %v2373 = vunpack.c.l.b16 %v2341
  %v2374 = vunpack.c.l.b16 %v2342
  %v2375 = vunpack.c.l.b16 %v2343
  %v2376 = vunpack.c.l.b16 %v2344
  %v2377 = vunpack.c.l.b16 %v2345
  %v2378 = vpack.c.b16 %v2363, %v2362
  %v2379 = vpack.c.b16 %v2365, %v2364
  %v2380 = vpack.c.b16 %v2367, %v2366
  %v2381 = vpack.c.b16 %v2369, %v2368
  %v2382 = vpack.c.b16 %v2371, %v2370
  %v2383 = vpack.c.b16 %v2373, %v2372
  %v2384 = vpack.c.b16 %v2375, %v2374
  %v2385 = vpack.c.b16 %v2377, %v2376
  %2394 = vmatprep.subr.bf16.mxu0 0
  %2395 = vmatpush1.bf16.msra.mxu0 %v2378
  %2396 = vmatprep.subr.bf16.mxu0 0
  %2397 = vmatpush1.bf16.msra.mxu0 %v2379
  %2398 = vmatprep.subr.bf16.mxu0 0
  %2399 = vmatpush1.bf16.msra.mxu0 %v2380
  %2400 = vmatprep.subr.bf16.mxu0 0
  %2401 = vmatpush1.bf16.msra.mxu0 %v2381
  %2402 = vmatprep.subr.bf16.mxu0 0
  %2403 = vmatpush1.bf16.msra.mxu0 %v2382
  %2404 = vmatprep.subr.bf16.mxu0 0
  %2405 = vmatpush1.bf16.msra.mxu0 %v2383
  %2406 = vmatprep.subr.bf16.mxu0 0
  %2407 = vmatpush1.bf16.msra.mxu0 %v2384
  %2408 = vmatprep.subr.bf16.mxu0 0
  %2409 = vmatpush1.bf16.msra.mxu0 %v2385
  %2410 = vmatprep.subr.bf16.mxu0 0
  %2411 = vmatpush1.bf16.msra.mxu0 0
  %2412 = vmatprep.subr.bf16.mxu0 0
  %2413 = vmatpush1.bf16.msra.mxu0 0
  %2414 = vmatprep.subr.bf16.mxu0 0
  %2415 = vmatpush1.bf16.msra.mxu0 0
  %2416 = vmatprep.subr.bf16.mxu0 0
  %2417 = vmatpush1.bf16.msra.mxu0 0
  %2418 = vmatprep.subr.bf16.mxu0 0
  %2419 = vmatpush1.bf16.msra.mxu0 0
  %2420 = vmatprep.subr.bf16.mxu0 0
  %2421 = vmatpush1.bf16.msra.mxu0 0
  %2422 = vmatprep.subr.bf16.mxu0 0
  %2423 = vmatpush1.bf16.msra.mxu0 0
  %2424 = vmatprep.subr.bf16.mxu0 0
  %2425 = vmatpush1.bf16.msra.mxu0 0
  %2426 = vmatprep.mubr.bf16.mxu0 0
  %2427 = vmatmul.mubr.bf16.gmra.mrb[0].mxu0 %v2328
  %v2428 = vpop.f32.mrb[0].mxu0
  %v2429 = vadd.f32 0.0, %v2428
  %v2430 = vpop.f32.mrb[0].mxu0
  %v2431 = vpop.f32.mrb[0].mxu0
  %v2432 = vpop.f32.mrb[0].mxu0
  %2433 = vdwg.mxu0
  %v2434 = vadd.f32 %v2327, %v2429
  %v2435 = vpack.c.bf16 %v1353, %v1353
  %s2436 = scalar_lea.vmem %s3, 640
  %v2437 = vld [vmem:[%s2436] sm:$0xf]
  %v2438 = vld [vmem:[%s2436 + $0x4] sm:$0xf]
  %v2439 = vld [vmem:[%s2436 + $0x8] sm:$0xf]
  %v2440 = vld [vmem:[%s2436 + $0xc] sm:$0xf]
  %v2441 = vld [vmem:[%s2436 + $0x10] sm:$0xf]
  %v2442 = vld [vmem:[%s2436 + $0x14] sm:$0xf]
  %v2443 = vld [vmem:[%s2436 + $0x18] sm:$0xf]
  %v2444 = vld [vmem:[%s2436 + $0x1c] sm:$0xf]
  %v2445 = vld [vmem:[%s2436 + $0x20] sm:$0xf]
  %v2446 = vld [vmem:[%s2436 + $0x24] sm:$0xf]
  %v2447 = vld [vmem:[%s2436 + $0x28] sm:$0xf]
  %v2448 = vld [vmem:[%s2436 + $0x2c] sm:$0xf]
  %v2449 = vld [vmem:[%s2436 + $0x30] sm:$0xf]
  %v2450 = vld [vmem:[%s2436 + $0x34] sm:$0xf]
  %v2451 = vld [vmem:[%s2436 + $0x38] sm:$0xf]
  %v2452 = vld [vmem:[%s2436 + $0x3c] sm:$0xf]
  %v2469 = vunpack.c.l.b16 %v2437
  %v2470 = vunpack.c.l.b16 %v2438
  %v2471 = vunpack.c.l.b16 %v2439
  %v2472 = vunpack.c.l.b16 %v2440
  %v2473 = vunpack.c.l.b16 %v2441
  %v2474 = vunpack.c.l.b16 %v2442
  %v2475 = vunpack.c.l.b16 %v2443
  %v2476 = vunpack.c.l.b16 %v2444
  %v2477 = vunpack.c.l.b16 %v2445
  %v2478 = vunpack.c.l.b16 %v2446
  %v2479 = vunpack.c.l.b16 %v2447
  %v2480 = vunpack.c.l.b16 %v2448
  %v2481 = vunpack.c.l.b16 %v2449
  %v2482 = vunpack.c.l.b16 %v2450
  %v2483 = vunpack.c.l.b16 %v2451
  %v2484 = vunpack.c.l.b16 %v2452
  %v2485 = vpack.c.b16 %v2470, %v2469
  %v2486 = vpack.c.b16 %v2472, %v2471
  %v2487 = vpack.c.b16 %v2474, %v2473
  %v2488 = vpack.c.b16 %v2476, %v2475
  %v2489 = vpack.c.b16 %v2478, %v2477
  %v2490 = vpack.c.b16 %v2480, %v2479
  %v2491 = vpack.c.b16 %v2482, %v2481
  %v2492 = vpack.c.b16 %v2484, %v2483
  %2501 = vmatprep.subr.bf16.mxu0 0
  %2502 = vmatpush1.bf16.msra.mxu0 %v2485
  %2503 = vmatprep.subr.bf16.mxu0 0
  %2504 = vmatpush1.bf16.msra.mxu0 %v2486
  %2505 = vmatprep.subr.bf16.mxu0 0
  %2506 = vmatpush1.bf16.msra.mxu0 %v2487
  %2507 = vmatprep.subr.bf16.mxu0 0
  %2508 = vmatpush1.bf16.msra.mxu0 %v2488
  %2509 = vmatprep.subr.bf16.mxu0 0
  %2510 = vmatpush1.bf16.msra.mxu0 %v2489
  %2511 = vmatprep.subr.bf16.mxu0 0
  %2512 = vmatpush1.bf16.msra.mxu0 %v2490
  %2513 = vmatprep.subr.bf16.mxu0 0
  %2514 = vmatpush1.bf16.msra.mxu0 %v2491
  %2515 = vmatprep.subr.bf16.mxu0 0
  %2516 = vmatpush1.bf16.msra.mxu0 %v2492
  %2517 = vmatprep.subr.bf16.mxu0 0
  %2518 = vmatpush1.bf16.msra.mxu0 0
  %2519 = vmatprep.subr.bf16.mxu0 0
  %2520 = vmatpush1.bf16.msra.mxu0 0
  %2521 = vmatprep.subr.bf16.mxu0 0
  %2522 = vmatpush1.bf16.msra.mxu0 0
  %2523 = vmatprep.subr.bf16.mxu0 0
  %2524 = vmatpush1.bf16.msra.mxu0 0
  %2525 = vmatprep.subr.bf16.mxu0 0
  %2526 = vmatpush1.bf16.msra.mxu0 0
  %2527 = vmatprep.subr.bf16.mxu0 0
  %2528 = vmatpush1.bf16.msra.mxu0 0
  %2529 = vmatprep.subr.bf16.mxu0 0
  %2530 = vmatpush1.bf16.msra.mxu0 0
  %2531 = vmatprep.subr.bf16.mxu0 0
  %2532 = vmatpush1.bf16.msra.mxu0 0
  %2533 = vmatprep.mubr.bf16.mxu0 0
  %2534 = vmatmul.mubr.bf16.gmra.mrb[0].mxu0 %v2435
  %v2535 = vpop.f32.mrb[0].mxu0
  %v2536 = vadd.f32 0.0, %v2535
  %v2537 = vpop.f32.mrb[0].mxu0
  %v2538 = vpop.f32.mrb[0].mxu0
  %v2539 = vpop.f32.mrb[0].mxu0
  %2540 = vdwg.mxu0
  %v2541 = vadd.f32 %v2434, %v2536
  %v2542 = vpack.c.bf16 %v1354, %v1354
  %s2543 = scalar_lea.vmem %s3, 704
  %v2544 = vld [vmem:[%s2543] sm:$0xf]
  %v2545 = vld [vmem:[%s2543 + $0x4] sm:$0xf]
  %v2546 = vld [vmem:[%s2543 + $0x8] sm:$0xf]
  %v2547 = vld [vmem:[%s2543 + $0xc] sm:$0xf]
  %v2548 = vld [vmem:[%s2543 + $0x10] sm:$0xf]
  %v2549 = vld [vmem:[%s2543 + $0x14] sm:$0xf]
  %v2550 = vld [vmem:[%s2543 + $0x18] sm:$0xf]
  %v2551 = vld [vmem:[%s2543 + $0x1c] sm:$0xf]
  %v2552 = vld [vmem:[%s2543 + $0x20] sm:$0xf]
  %v2553 = vld [vmem:[%s2543 + $0x24] sm:$0xf]
  %v2554 = vld [vmem:[%s2543 + $0x28] sm:$0xf]
  %v2555 = vld [vmem:[%s2543 + $0x2c] sm:$0xf]
  %v2556 = vld [vmem:[%s2543 + $0x30] sm:$0xf]
  %v2557 = vld [vmem:[%s2543 + $0x34] sm:$0xf]
  %v2558 = vld [vmem:[%s2543 + $0x38] sm:$0xf]
  %v2559 = vld [vmem:[%s2543 + $0x3c] sm:$0xf]
  %v2576 = vunpack.c.l.b16 %v2544
  %v2577 = vunpack.c.l.b16 %v2545
  %v2578 = vunpack.c.l.b16 %v2546
  %v2579 = vunpack.c.l.b16 %v2547
  %v2580 = vunpack.c.l.b16 %v2548
  %v2581 = vunpack.c.l.b16 %v2549
  %v2582 = vunpack.c.l.b16 %v2550
  %v2583 = vunpack.c.l.b16 %v2551
  %v2584 = vunpack.c.l.b16 %v2552
  %v2585 = vunpack.c.l.b16 %v2553
  %v2586 = vunpack.c.l.b16 %v2554
  %v2587 = vunpack.c.l.b16 %v2555
  %v2588 = vunpack.c.l.b16 %v2556
  %v2589 = vunpack.c.l.b16 %v2557
  %v2590 = vunpack.c.l.b16 %v2558
  %v2591 = vunpack.c.l.b16 %v2559
  %v2592 = vpack.c.b16 %v2577, %v2576
  %v2593 = vpack.c.b16 %v2579, %v2578
  %v2594 = vpack.c.b16 %v2581, %v2580
  %v2595 = vpack.c.b16 %v2583, %v2582
  %v2596 = vpack.c.b16 %v2585, %v2584
  %v2597 = vpack.c.b16 %v2587, %v2586
  %v2598 = vpack.c.b16 %v2589, %v2588
  %v2599 = vpack.c.b16 %v2591, %v2590
  %2608 = vmatprep.subr.bf16.mxu0 0
  %2609 = vmatpush1.bf16.msra.mxu0 %v2592
  %2610 = vmatprep.subr.bf16.mxu0 0
  %2611 = vmatpush1.bf16.msra.mxu0 %v2593
  %2612 = vmatprep.subr.bf16.mxu0 0
  %2613 = vmatpush1.bf16.msra.mxu0 %v2594
  %2614 = vmatprep.subr.bf16.mxu0 0
  %2615 = vmatpush1.bf16.msra.mxu0 %v2595
  %2616 = vmatprep.subr.bf16.mxu0 0
  %2617 = vmatpush1.bf16.msra.mxu0 %v2596
  %2618 = vmatprep.subr.bf16.mxu0 0
  %2619 = vmatpush1.bf16.msra.mxu0 %v2597
  %2620 = vmatprep.subr.bf16.mxu0 0
  %2621 = vmatpush1.bf16.msra.mxu0 %v2598
  %2622 = vmatprep.subr.bf16.mxu0 0
  %2623 = vmatpush1.bf16.msra.mxu0 %v2599
  %2624 = vmatprep.subr.bf16.mxu0 0
  %2625 = vmatpush1.bf16.msra.mxu0 0
  %2626 = vmatprep.subr.bf16.mxu0 0
  %2627 = vmatpush1.bf16.msra.mxu0 0
  %2628 = vmatprep.subr.bf16.mxu0 0
  %2629 = vmatpush1.bf16.msra.mxu0 0
  %2630 = vmatprep.subr.bf16.mxu0 0
  %2631 = vmatpush1.bf16.msra.mxu0 0
  %2632 = vmatprep.subr.bf16.mxu0 0
  %2633 = vmatpush1.bf16.msra.mxu0 0
  %2634 = vmatprep.subr.bf16.mxu0 0
  %2635 = vmatpush1.bf16.msra.mxu0 0
  %2636 = vmatprep.subr.bf16.mxu0 0
  %2637 = vmatpush1.bf16.msra.mxu0 0
  %2638 = vmatprep.subr.bf16.mxu0 0
  %2639 = vmatpush1.bf16.msra.mxu0 0
  %2640 = vmatprep.mubr.bf16.mxu0 0
  %2641 = vmatmul.mubr.bf16.gmra.mrb[0].mxu0 %v2542
  %v2642 = vpop.f32.mrb[0].mxu0
  %v2643 = vadd.f32 0.0, %v2642
  %v2644 = vpop.f32.mrb[0].mxu0
  %v2645 = vpop.f32.mrb[0].mxu0
  %v2646 = vpop.f32.mrb[0].mxu0
  %2647 = vdwg.mxu0
  %v2648 = vadd.f32 %v2541, %v2643
  %v2649 = vpack.c.bf16 %v1355, %v1355
  %s2650 = scalar_lea.vmem %s3, 768
  %v2651 = vld [vmem:[%s2650] sm:$0xf]
  %v2652 = vld [vmem:[%s2650 + $0x4] sm:$0xf]
  %v2653 = vld [vmem:[%s2650 + $0x8] sm:$0xf]
  %v2654 = vld [vmem:[%s2650 + $0xc] sm:$0xf]
  %v2655 = vld [vmem:[%s2650 + $0x10] sm:$0xf]
  %v2656 = vld [vmem:[%s2650 + $0x14] sm:$0xf]
  %v2657 = vld [vmem:[%s2650 + $0x18] sm:$0xf]
  %v2658 = vld [vmem:[%s2650 + $0x1c] sm:$0xf]
  %v2659 = vld [vmem:[%s2650 + $0x20] sm:$0xf]
  %v2660 = vld [vmem:[%s2650 + $0x24] sm:$0xf]
  %v2661 = vld [vmem:[%s2650 + $0x28] sm:$0xf]
  %v2662 = vld [vmem:[%s2650 + $0x2c] sm:$0xf]
  %v2663 = vld [vmem:[%s2650 + $0x30] sm:$0xf]
  %v2664 = vld [vmem:[%s2650 + $0x34] sm:$0xf]
  %v2665 = vld [vmem:[%s2650 + $0x38] sm:$0xf]
  %v2666 = vld [vmem:[%s2650 + $0x3c] sm:$0xf]
  %v2683 = vunpack.c.l.b16 %v2651
  %v2684 = vunpack.c.l.b16 %v2652
  %v2685 = vunpack.c.l.b16 %v2653
  %v2686 = vunpack.c.l.b16 %v2654
  %v2687 = vunpack.c.l.b16 %v2655
  %v2688 = vunpack.c.l.b16 %v2656
  %v2689 = vunpack.c.l.b16 %v2657
  %v2690 = vunpack.c.l.b16 %v2658
  %v2691 = vunpack.c.l.b16 %v2659
  %v2692 = vunpack.c.l.b16 %v2660
  %v2693 = vunpack.c.l.b16 %v2661
  %v2694 = vunpack.c.l.b16 %v2662
  %v2695 = vunpack.c.l.b16 %v2663
  %v2696 = vunpack.c.l.b16 %v2664
  %v2697 = vunpack.c.l.b16 %v2665
  %v2698 = vunpack.c.l.b16 %v2666
  %v2699 = vpack.c.b16 %v2684, %v2683
  %v2700 = vpack.c.b16 %v2686, %v2685
  %v2701 = vpack.c.b16 %v2688, %v2687
  %v2702 = vpack.c.b16 %v2690, %v2689
  %v2703 = vpack.c.b16 %v2692, %v2691
  %v2704 = vpack.c.b16 %v2694, %v2693
  %v2705 = vpack.c.b16 %v2696, %v2695
  %v2706 = vpack.c.b16 %v2698, %v2697
  %2715 = vmatprep.subr.bf16.mxu0 0
  %2716 = vmatpush1.bf16.msra.mxu0 %v2699
  %2717 = vmatprep.subr.bf16.mxu0 0
  %2718 = vmatpush1.bf16.msra.mxu0 %v2700
  %2719 = vmatprep.subr.bf16.mxu0 0
  %2720 = vmatpush1.bf16.msra.mxu0 %v2701
  %2721 = vmatprep.subr.bf16.mxu0 0
  %2722 = vmatpush1.bf16.msra.mxu0 %v2702
  %2723 = vmatprep.subr.bf16.mxu0 0
  %2724 = vmatpush1.bf16.msra.mxu0 %v2703
  %2725 = vmatprep.subr.bf16.mxu0 0
  %2726 = vmatpush1.bf16.msra.mxu0 %v2704
  %2727 = vmatprep.subr.bf16.mxu0 0
  %2728 = vmatpush1.bf16.msra.mxu0 %v2705
  %2729 = vmatprep.subr.bf16.mxu0 0
  %2730 = vmatpush1.bf16.msra.mxu0 %v2706
  %2731 = vmatprep.subr.bf16.mxu0 0
  %2732 = vmatpush1.bf16.msra.mxu0 0
  %2733 = vmatprep.subr.bf16.mxu0 0
  %2734 = vmatpush1.bf16.msra.mxu0 0
  %2735 = vmatprep.subr.bf16.mxu0 0
  %2736 = vmatpush1.bf16.msra.mxu0 0
  %2737 = vmatprep.subr.bf16.mxu0 0
  %2738 = vmatpush1.bf16.msra.mxu0 0
  %2739 = vmatprep.subr.bf16.mxu0 0
  %2740 = vmatpush1.bf16.msra.mxu0 0
  %2741 = vmatprep.subr.bf16.mxu0 0
  %2742 = vmatpush1.bf16.msra.mxu0 0
  %2743 = vmatprep.subr.bf16.mxu0 0
  %2744 = vmatpush1.bf16.msra.mxu0 0
  %2745 = vmatprep.subr.bf16.mxu0 0
  %2746 = vmatpush1.bf16.msra.mxu0 0
  %2747 = vmatprep.mubr.bf16.mxu0 0
  %2748 = vmatmul.mubr.bf16.gmra.mrb[0].mxu0 %v2649
  %v2749 = vpop.f32.mrb[0].mxu0
  %v2750 = vadd.f32 0.0, %v2749
  %v2751 = vpop.f32.mrb[0].mxu0
  %v2752 = vpop.f32.mrb[0].mxu0
  %v2753 = vpop.f32.mrb[0].mxu0
  %2754 = vdwg.mxu0
  %v2755 = vadd.f32 %v2648, %v2750
  %v2756 = vpack.c.bf16 %v1356, %v1356
  %s2757 = scalar_lea.vmem %s3, 832
  %v2758 = vld [vmem:[%s2757] sm:$0xf]
  %v2759 = vld [vmem:[%s2757 + $0x4] sm:$0xf]
  %v2760 = vld [vmem:[%s2757 + $0x8] sm:$0xf]
  %v2761 = vld [vmem:[%s2757 + $0xc] sm:$0xf]
  %v2762 = vld [vmem:[%s2757 + $0x10] sm:$0xf]
  %v2763 = vld [vmem:[%s2757 + $0x14] sm:$0xf]
  %v2764 = vld [vmem:[%s2757 + $0x18] sm:$0xf]
  %v2765 = vld [vmem:[%s2757 + $0x1c] sm:$0xf]
  %v2766 = vld [vmem:[%s2757 + $0x20] sm:$0xf]
  %v2767 = vld [vmem:[%s2757 + $0x24] sm:$0xf]
  %v2768 = vld [vmem:[%s2757 + $0x28] sm:$0xf]
  %v2769 = vld [vmem:[%s2757 + $0x2c] sm:$0xf]
  %v2770 = vld [vmem:[%s2757 + $0x30] sm:$0xf]
  %v2771 = vld [vmem:[%s2757 + $0x34] sm:$0xf]
  %v2772 = vld [vmem:[%s2757 + $0x38] sm:$0xf]
  %v2773 = vld [vmem:[%s2757 + $0x3c] sm:$0xf]
  %v2790 = vunpack.c.l.b16 %v2758
  %v2791 = vunpack.c.l.b16 %v2759
  %v2792 = vunpack.c.l.b16 %v2760
  %v2793 = vunpack.c.l.b16 %v2761
  %v2794 = vunpack.c.l.b16 %v2762
  %v2795 = vunpack.c.l.b16 %v2763
  %v2796 = vunpack.c.l.b16 %v2764
  %v2797 = vunpack.c.l.b16 %v2765
  %v2798 = vunpack.c.l.b16 %v2766
  %v2799 = vunpack.c.l.b16 %v2767
  %v2800 = vunpack.c.l.b16 %v2768
  %v2801 = vunpack.c.l.b16 %v2769
  %v2802 = vunpack.c.l.b16 %v2770
  %v2803 = vunpack.c.l.b16 %v2771
  %v2804 = vunpack.c.l.b16 %v2772
  %v2805 = vunpack.c.l.b16 %v2773
  %v2806 = vpack.c.b16 %v2791, %v2790
  %v2807 = vpack.c.b16 %v2793, %v2792
  %v2808 = vpack.c.b16 %v2795, %v2794
  %v2809 = vpack.c.b16 %v2797, %v2796
  %v2810 = vpack.c.b16 %v2799, %v2798
  %v2811 = vpack.c.b16 %v2801, %v2800
  %v2812 = vpack.c.b16 %v2803, %v2802
  %v2813 = vpack.c.b16 %v2805, %v2804
  %2822 = vmatprep.subr.bf16.mxu0 0
  %2823 = vmatpush1.bf16.msra.mxu0 %v2806
  %2824 = vmatprep.subr.bf16.mxu0 0
  %2825 = vmatpush1.bf16.msra.mxu0 %v2807
  %2826 = vmatprep.subr.bf16.mxu0 0
  %2827 = vmatpush1.bf16.msra.mxu0 %v2808
  %2828 = vmatprep.subr.bf16.mxu0 0
  %2829 = vmatpush1.bf16.msra.mxu0 %v2809
  %2830 = vmatprep.subr.bf16.mxu0 0
  %2831 = vmatpush1.bf16.msra.mxu0 %v2810
  %2832 = vmatprep.subr.bf16.mxu0 0
  %2833 = vmatpush1.bf16.msra.mxu0 %v2811
  %2834 = vmatprep.subr.bf16.mxu0 0
  %2835 = vmatpush1.bf16.msra.mxu0 %v2812
  %2836 = vmatprep.subr.bf16.mxu0 0
  %2837 = vmatpush1.bf16.msra.mxu0 %v2813
  %2838 = vmatprep.subr.bf16.mxu0 0
  %2839 = vmatpush1.bf16.msra.mxu0 0
  %2840 = vmatprep.subr.bf16.mxu0 0
  %2841 = vmatpush1.bf16.msra.mxu0 0
  %2842 = vmatprep.subr.bf16.mxu0 0
  %2843 = vmatpush1.bf16.msra.mxu0 0
  %2844 = vmatprep.subr.bf16.mxu0 0
  %2845 = vmatpush1.bf16.msra.mxu0 0
  %2846 = vmatprep.subr.bf16.mxu0 0
  %2847 = vmatpush1.bf16.msra.mxu0 0
  %2848 = vmatprep.subr.bf16.mxu0 0
  %2849 = vmatpush1.bf16.msra.mxu0 0
  %2850 = vmatprep.subr.bf16.mxu0 0
  %2851 = vmatpush1.bf16.msra.mxu0 0
  %2852 = vmatprep.subr.bf16.mxu0 0
  %2853 = vmatpush1.bf16.msra.mxu0 0
  %2854 = vmatprep.mubr.bf16.mxu0 0
  %2855 = vmatmul.mubr.bf16.gmra.mrb[0].mxu0 %v2756
  %v2856 = vpop.f32.mrb[0].mxu0
  %v2857 = vadd.f32 0.0, %v2856
  %v2858 = vpop.f32.mrb[0].mxu0
  %v2859 = vpop.f32.mrb[0].mxu0
  %v2860 = vpop.f32.mrb[0].mxu0
  %2861 = vdwg.mxu0
  %v2862 = vadd.f32 %v2755, %v2857
  %v2863 = vpack.c.bf16 %v1357, %v1357
  %s2864 = scalar_lea.vmem %s3, 896
  %v2865 = vld [vmem:[%s2864] sm:$0xf]
  %v2866 = vld [vmem:[%s2864 + $0x4] sm:$0xf]
  %v2867 = vld [vmem:[%s2864 + $0x8] sm:$0xf]
  %v2868 = vld [vmem:[%s2864 + $0xc] sm:$0xf]
  %v2869 = vld [vmem:[%s2864 + $0x10] sm:$0xf]
  %v2870 = vld [vmem:[%s2864 + $0x14] sm:$0xf]
  %v2871 = vld [vmem:[%s2864 + $0x18] sm:$0xf]
  %v2872 = vld [vmem:[%s2864 + $0x1c] sm:$0xf]
  %v2873 = vld [vmem:[%s2864 + $0x20] sm:$0xf]
  %v2874 = vld [vmem:[%s2864 + $0x24] sm:$0xf]
  %v2875 = vld [vmem:[%s2864 + $0x28] sm:$0xf]
  %v2876 = vld [vmem:[%s2864 + $0x2c] sm:$0xf]
  %v2877 = vld [vmem:[%s2864 + $0x30] sm:$0xf]
  %v2878 = vld [vmem:[%s2864 + $0x34] sm:$0xf]
  %v2879 = vld [vmem:[%s2864 + $0x38] sm:$0xf]
  %v2880 = vld [vmem:[%s2864 + $0x3c] sm:$0xf]
  %v2897 = vunpack.c.l.b16 %v2865
  %v2898 = vunpack.c.l.b16 %v2866
  %v2899 = vunpack.c.l.b16 %v2867
  %v2900 = vunpack.c.l.b16 %v2868
  %v2901 = vunpack.c.l.b16 %v2869
  %v2902 = vunpack.c.l.b16 %v2870
  %v2903 = vunpack.c.l.b16 %v2871
  %v2904 = vunpack.c.l.b16 %v2872
  %v2905 = vunpack.c.l.b16 %v2873
  %v2906 = vunpack.c.l.b16 %v2874
  %v2907 = vunpack.c.l.b16 %v2875
  %v2908 = vunpack.c.l.b16 %v2876
  %v2909 = vunpack.c.l.b16 %v2877
  %v2910 = vunpack.c.l.b16 %v2878
  %v2911 = vunpack.c.l.b16 %v2879
  %v2912 = vunpack.c.l.b16 %v2880
  %v2913 = vpack.c.b16 %v2898, %v2897
  %v2914 = vpack.c.b16 %v2900, %v2899
  %v2915 = vpack.c.b16 %v2902, %v2901
  %v2916 = vpack.c.b16 %v2904, %v2903
  %v2917 = vpack.c.b16 %v2906, %v2905
  %v2918 = vpack.c.b16 %v2908, %v2907
  %v2919 = vpack.c.b16 %v2910, %v2909
  %v2920 = vpack.c.b16 %v2912, %v2911
  %2929 = vmatprep.subr.bf16.mxu0 0
  %2930 = vmatpush1.bf16.msra.mxu0 %v2913
  %2931 = vmatprep.subr.bf16.mxu0 0
  %2932 = vmatpush1.bf16.msra.mxu0 %v2914
  %2933 = vmatprep.subr.bf16.mxu0 0
  %2934 = vmatpush1.bf16.msra.mxu0 %v2915
  %2935 = vmatprep.subr.bf16.mxu0 0
  %2936 = vmatpush1.bf16.msra.mxu0 %v2916
  %2937 = vmatprep.subr.bf16.mxu0 0
  %2938 = vmatpush1.bf16.msra.mxu0 %v2917
  %2939 = vmatprep.subr.bf16.mxu0 0
  %2940 = vmatpush1.bf16.msra.mxu0 %v2918
  %2941 = vmatprep.subr.bf16.mxu0 0
  %2942 = vmatpush1.bf16.msra.mxu0 %v2919
  %2943 = vmatprep.subr.bf16.mxu0 0
  %2944 = vmatpush1.bf16.msra.mxu0 %v2920
  %2945 = vmatprep.subr.bf16.mxu0 0
  %2946 = vmatpush1.bf16.msra.mxu0 0
  %2947 = vmatprep.subr.bf16.mxu0 0
  %2948 = vmatpush1.bf16.msra.mxu0 0
  %2949 = vmatprep.subr.bf16.mxu0 0
  %2950 = vmatpush1.bf16.msra.mxu0 0
  %2951 = vmatprep.subr.bf16.mxu0 0
  %2952 = vmatpush1.bf16.msra.mxu0 0
  %2953 = vmatprep.subr.bf16.mxu0 0
  %2954 = vmatpush1.bf16.msra.mxu0 0
  %2955 = vmatprep.subr.bf16.mxu0 0
  %2956 = vmatpush1.bf16.msra.mxu0 0
  %2957 = vmatprep.subr.bf16.mxu0 0
  %2958 = vmatpush1.bf16.msra.mxu0 0
  %2959 = vmatprep.subr.bf16.mxu0 0
  %2960 = vmatpush1.bf16.msra.mxu0 0
  %2961 = vmatprep.mubr.bf16.mxu0 0
  %2962 = vmatmul.mubr.bf16.gmra.mrb[0].mxu0 %v2863
  %v2963 = vpop.f32.mrb[0].mxu0
  %v2964 = vadd.f32 0.0, %v2963
  %v2965 = vpop.f32.mrb[0].mxu0
  %v2966 = vpop.f32.mrb[0].mxu0
  %v2967 = vpop.f32.mrb[0].mxu0
  %2968 = vdwg.mxu0
  %v2969 = vadd.f32 %v2862, %v2964
  %v2970 = vpack.c.bf16 %v1358, %v1358
  %s2971 = scalar_lea.vmem %s3, 960
  %v2972 = vld [vmem:[%s2971] sm:$0xf]
  %v2973 = vld [vmem:[%s2971 + $0x4] sm:$0xf]
  %v2974 = vld [vmem:[%s2971 + $0x8] sm:$0xf]
  %v2975 = vld [vmem:[%s2971 + $0xc] sm:$0xf]
  %v2976 = vld [vmem:[%s2971 + $0x10] sm:$0xf]
  %v2977 = vld [vmem:[%s2971 + $0x14] sm:$0xf]
  %v2978 = vld [vmem:[%s2971 + $0x18] sm:$0xf]
  %v2979 = vld [vmem:[%s2971 + $0x1c] sm:$0xf]
  %v2980 = vld [vmem:[%s2971 + $0x20] sm:$0xf]
  %v2981 = vld [vmem:[%s2971 + $0x24] sm:$0xf]
  %v2982 = vld [vmem:[%s2971 + $0x28] sm:$0xf]
  %v2983 = vld [vmem:[%s2971 + $0x2c] sm:$0xf]
  %v2984 = vld [vmem:[%s2971 + $0x30] sm:$0xf]
  %v2985 = vld [vmem:[%s2971 + $0x34] sm:$0xf]
  %v2986 = vld [vmem:[%s2971 + $0x38] sm:$0xf]
  %v2987 = vld [vmem:[%s2971 + $0x3c] sm:$0xf]
  %v3004 = vunpack.c.l.b16 %v2972
  %v3005 = vunpack.c.l.b16 %v2973
  %v3006 = vunpack.c.l.b16 %v2974
  %v3007 = vunpack.c.l.b16 %v2975
  %v3008 = vunpack.c.l.b16 %v2976
  %v3009 = vunpack.c.l.b16 %v2977
  %v3010 = vunpack.c.l.b16 %v2978
  %v3011 = vunpack.c.l.b16 %v2979
  %v3012 = vunpack.c.l.b16 %v2980
  %v3013 = vunpack.c.l.b16 %v2981
  %v3014 = vunpack.c.l.b16 %v2982
  %v3015 = vunpack.c.l.b16 %v2983
  %v3016 = vunpack.c.l.b16 %v2984
  %v3017 = vunpack.c.l.b16 %v2985
  %v3018 = vunpack.c.l.b16 %v2986
  %v3019 = vunpack.c.l.b16 %v2987
  %v3020 = vpack.c.b16 %v3005, %v3004
  %v3021 = vpack.c.b16 %v3007, %v3006
  %v3022 = vpack.c.b16 %v3009, %v3008
  %v3023 = vpack.c.b16 %v3011, %v3010
  %v3024 = vpack.c.b16 %v3013, %v3012
  %v3025 = vpack.c.b16 %v3015, %v3014
  %v3026 = vpack.c.b16 %v3017, %v3016
  %v3027 = vpack.c.b16 %v3019, %v3018
  %3036 = vmatprep.subr.bf16.mxu0 0
  %3037 = vmatpush1.bf16.msra.mxu0 %v3020
  %3038 = vmatprep.subr.bf16.mxu0 0
  %3039 = vmatpush1.bf16.msra.mxu0 %v3021
  %3040 = vmatprep.subr.bf16.mxu0 0
  %3041 = vmatpush1.bf16.msra.mxu0 %v3022
  %3042 = vmatprep.subr.bf16.mxu0 0
  %3043 = vmatpush1.bf16.msra.mxu0 %v3023
  %3044 = vmatprep.subr.bf16.mxu0 0
  %3045 = vmatpush1.bf16.msra.mxu0 %v3024
  %3046 = vmatprep.subr.bf16.mxu0 0
  %3047 = vmatpush1.bf16.msra.mxu0 %v3025
  %3048 = vmatprep.subr.bf16.mxu0 0
  %3049 = vmatpush1.bf16.msra.mxu0 %v3026
  %3050 = vmatprep.subr.bf16.mxu0 0
  %3051 = vmatpush1.bf16.msra.mxu0 %v3027
  %3052 = vmatprep.subr.bf16.mxu0 0
  %3053 = vmatpush1.bf16.msra.mxu0 0
  %3054 = vmatprep.subr.bf16.mxu0 0
  %3055 = vmatpush1.bf16.msra.mxu0 0
  %3056 = vmatprep.subr.bf16.mxu0 0
  %3057 = vmatpush1.bf16.msra.mxu0 0
  %3058 = vmatprep.subr.bf16.mxu0 0
  %3059 = vmatpush1.bf16.msra.mxu0 0
  %3060 = vmatprep.subr.bf16.mxu0 0
  %3061 = vmatpush1.bf16.msra.mxu0 0
  %3062 = vmatprep.subr.bf16.mxu0 0
  %3063 = vmatpush1.bf16.msra.mxu0 0
  %3064 = vmatprep.subr.bf16.mxu0 0
  %3065 = vmatpush1.bf16.msra.mxu0 0
  %3066 = vmatprep.subr.bf16.mxu0 0
  %3067 = vmatpush1.bf16.msra.mxu0 0
  %3068 = vmatprep.mubr.bf16.mxu0 0
  %3069 = vmatmul.mubr.bf16.gmra.mrb[0].mxu0 %v2970
  %v3070 = vpop.f32.mrb[0].mxu0
  %v3071 = vadd.f32 0.0, %v3070
  %v3072 = vpop.f32.mrb[0].mxu0
  %v3073 = vpop.f32.mrb[0].mxu0
  %v3074 = vpop.f32.mrb[0].mxu0
  %3075 = vdwg.mxu0
  %v3076 = vadd.f32 %v2969, %v3071
  %v3077 = vpack.c.bf16 %v1359, %v1359
  %s3078 = scalar_lea.vmem %s3, 1024
  %v3079 = vld [vmem:[%s3078] sm:$0xf]
  %v3080 = vld [vmem:[%s3078 + $0x4] sm:$0xf]
  %v3081 = vld [vmem:[%s3078 + $0x8] sm:$0xf]
  %v3082 = vld [vmem:[%s3078 + $0xc] sm:$0xf]
  %v3083 = vld [vmem:[%s3078 + $0x10] sm:$0xf]
  %v3084 = vld [vmem:[%s3078 + $0x14] sm:$0xf]
  %v3085 = vld [vmem:[%s3078 + $0x18] sm:$0xf]
  %v3086 = vld [vmem:[%s3078 + $0x1c] sm:$0xf]
  %v3087 = vld [vmem:[%s3078 + $0x20] sm:$0xf]
  %v3088 = vld [vmem:[%s3078 + $0x24] sm:$0xf]
  %v3089 = vld [vmem:[%s3078 + $0x28] sm:$0xf]
  %v3090 = vld [vmem:[%s3078 + $0x2c] sm:$0xf]
  %v3091 = vld [vmem:[%s3078 + $0x30] sm:$0xf]
  %v3092 = vld [vmem:[%s3078 + $0x34] sm:$0xf]
  %v3093 = vld [vmem:[%s3078 + $0x38] sm:$0xf]
  %v3094 = vld [vmem:[%s3078 + $0x3c] sm:$0xf]
  %v3111 = vunpack.c.l.b16 %v3079
  %v3112 = vunpack.c.l.b16 %v3080
  %v3113 = vunpack.c.l.b16 %v3081
  %v3114 = vunpack.c.l.b16 %v3082
  %v3115 = vunpack.c.l.b16 %v3083
  %v3116 = vunpack.c.l.b16 %v3084
  %v3117 = vunpack.c.l.b16 %v3085
  %v3118 = vunpack.c.l.b16 %v3086
  %v3119 = vunpack.c.l.b16 %v3087
  %v3120 = vunpack.c.l.b16 %v3088
  %v3121 = vunpack.c.l.b16 %v3089
  %v3122 = vunpack.c.l.b16 %v3090
  %v3123 = vunpack.c.l.b16 %v3091
  %v3124 = vunpack.c.l.b16 %v3092
  %v3125 = vunpack.c.l.b16 %v3093
  %v3126 = vunpack.c.l.b16 %v3094
  %v3127 = vpack.c.b16 %v3112, %v3111
  %v3128 = vpack.c.b16 %v3114, %v3113
  %v3129 = vpack.c.b16 %v3116, %v3115
  %v3130 = vpack.c.b16 %v3118, %v3117
  %v3131 = vpack.c.b16 %v3120, %v3119
  %v3132 = vpack.c.b16 %v3122, %v3121
  %v3133 = vpack.c.b16 %v3124, %v3123
  %v3134 = vpack.c.b16 %v3126, %v3125
  %3143 = vmatprep.subr.bf16.mxu0 0
  %3144 = vmatpush1.bf16.msra.mxu0 %v3127
  %3145 = vmatprep.subr.bf16.mxu0 0
  %3146 = vmatpush1.bf16.msra.mxu0 %v3128
  %3147 = vmatprep.subr.bf16.mxu0 0
  %3148 = vmatpush1.bf16.msra.mxu0 %v3129
  %3149 = vmatprep.subr.bf16.mxu0 0
  %3150 = vmatpush1.bf16.msra.mxu0 %v3130
  %3151 = vmatprep.subr.bf16.mxu0 0
  %3152 = vmatpush1.bf16.msra.mxu0 %v3131
  %3153 = vmatprep.subr.bf16.mxu0 0
  %3154 = vmatpush1.bf16.msra.mxu0 %v3132
  %3155 = vmatprep.subr.bf16.mxu0 0
  %3156 = vmatpush1.bf16.msra.mxu0 %v3133
  %3157 = vmatprep.subr.bf16.mxu0 0
  %3158 = vmatpush1.bf16.msra.mxu0 %v3134
  %3159 = vmatprep.subr.bf16.mxu0 0
  %3160 = vmatpush1.bf16.msra.mxu0 0
  %3161 = vmatprep.subr.bf16.mxu0 0
  %3162 = vmatpush1.bf16.msra.mxu0 0
  %3163 = vmatprep.subr.bf16.mxu0 0
  %3164 = vmatpush1.bf16.msra.mxu0 0
  %3165 = vmatprep.subr.bf16.mxu0 0
  %3166 = vmatpush1.bf16.msra.mxu0 0
  %3167 = vmatprep.subr.bf16.mxu0 0
  %3168 = vmatpush1.bf16.msra.mxu0 0
  %3169 = vmatprep.subr.bf16.mxu0 0
  %3170 = vmatpush1.bf16.msra.mxu0 0
  %3171 = vmatprep.subr.bf16.mxu0 0
  %3172 = vmatpush1.bf16.msra.mxu0 0
  %3173 = vmatprep.subr.bf16.mxu0 0
  %3174 = vmatpush1.bf16.msra.mxu0 0
  %3175 = vmatprep.mubr.bf16.mxu0 0
  %3176 = vmatmul.mubr.bf16.gmra.mrb[0].mxu0 %v3077
  %v3177 = vpop.f32.mrb[0].mxu0
  %v3178 = vadd.f32 0.0, %v3177
  %v3179 = vpop.f32.mrb[0].mxu0
  %v3180 = vpop.f32.mrb[0].mxu0
  %v3181 = vpop.f32.mrb[0].mxu0
  %3182 = vdwg.mxu0
  %v3183 = vadd.f32 %v3076, %v3178
  %v3184 = vpack.c.bf16 %v1360, %v1360
  %s3185 = scalar_lea.vmem %s3, 1088
  %v3186 = vld [vmem:[%s3185] sm:$0xf]
  %v3187 = vld [vmem:[%s3185 + $0x4] sm:$0xf]
  %v3188 = vld [vmem:[%s3185 + $0x8] sm:$0xf]
  %v3189 = vld [vmem:[%s3185 + $0xc] sm:$0xf]
  %v3190 = vld [vmem:[%s3185 + $0x10] sm:$0xf]
  %v3191 = vld [vmem:[%s3185 + $0x14] sm:$0xf]
  %v3192 = vld [vmem:[%s3185 + $0x18] sm:$0xf]
  %v3193 = vld [vmem:[%s3185 + $0x1c] sm:$0xf]
  %v3194 = vld [vmem:[%s3185 + $0x20] sm:$0xf]
  %v3195 = vld [vmem:[%s3185 + $0x24] sm:$0xf]
  %v3196 = vld [vmem:[%s3185 + $0x28] sm:$0xf]
  %v3197 = vld [vmem:[%s3185 + $0x2c] sm:$0xf]
  %v3198 = vld [vmem:[%s3185 + $0x30] sm:$0xf]
  %v3199 = vld [vmem:[%s3185 + $0x34] sm:$0xf]
  %v3200 = vld [vmem:[%s3185 + $0x38] sm:$0xf]
  %v3201 = vld [vmem:[%s3185 + $0x3c] sm:$0xf]
  %v3218 = vunpack.c.l.b16 %v3186
  %v3219 = vunpack.c.l.b16 %v3187
  %v3220 = vunpack.c.l.b16 %v3188
  %v3221 = vunpack.c.l.b16 %v3189
  %v3222 = vunpack.c.l.b16 %v3190
  %v3223 = vunpack.c.l.b16 %v3191
  %v3224 = vunpack.c.l.b16 %v3192
  %v3225 = vunpack.c.l.b16 %v3193
  %v3226 = vunpack.c.l.b16 %v3194
  %v3227 = vunpack.c.l.b16 %v3195
  %v3228 = vunpack.c.l.b16 %v3196
  %v3229 = vunpack.c.l.b16 %v3197
  %v3230 = vunpack.c.l.b16 %v3198
  %v3231 = vunpack.c.l.b16 %v3199
  %v3232 = vunpack.c.l.b16 %v3200
  %v3233 = vunpack.c.l.b16 %v3201
  %v3234 = vpack.c.b16 %v3219, %v3218
  %v3235 = vpack.c.b16 %v3221, %v3220
  %v3236 = vpack.c.b16 %v3223, %v3222
  %v3237 = vpack.c.b16 %v3225, %v3224
  %v3238 = vpack.c.b16 %v3227, %v3226
  %v3239 = vpack.c.b16 %v3229, %v3228
  %v3240 = vpack.c.b16 %v3231, %v3230
  %v3241 = vpack.c.b16 %v3233, %v3232
  %3250 = vmatprep.subr.bf16.mxu0 0
  %3251 = vmatpush1.bf16.msra.mxu0 %v3234
  %3252 = vmatprep.subr.bf16.mxu0 0
  %3253 = vmatpush1.bf16.msra.mxu0 %v3235
  %3254 = vmatprep.subr.bf16.mxu0 0
  %3255 = vmatpush1.bf16.msra.mxu0 %v3236
  %3256 = vmatprep.subr.bf16.mxu0 0
  %3257 = vmatpush1.bf16.msra.mxu0 %v3237
  %3258 = vmatprep.subr.bf16.mxu0 0
  %3259 = vmatpush1.bf16.msra.mxu0 %v3238
  %3260 = vmatprep.subr.bf16.mxu0 0
  %3261 = vmatpush1.bf16.msra.mxu0 %v3239
  %3262 = vmatprep.subr.bf16.mxu0 0
  %3263 = vmatpush1.bf16.msra.mxu0 %v3240
  %3264 = vmatprep.subr.bf16.mxu0 0
  %3265 = vmatpush1.bf16.msra.mxu0 %v3241
  %3266 = vmatprep.subr.bf16.mxu0 0
  %3267 = vmatpush1.bf16.msra.mxu0 0
  %3268 = vmatprep.subr.bf16.mxu0 0
  %3269 = vmatpush1.bf16.msra.mxu0 0
  %3270 = vmatprep.subr.bf16.mxu0 0
  %3271 = vmatpush1.bf16.msra.mxu0 0
  %3272 = vmatprep.subr.bf16.mxu0 0
  %3273 = vmatpush1.bf16.msra.mxu0 0
  %3274 = vmatprep.subr.bf16.mxu0 0
  %3275 = vmatpush1.bf16.msra.mxu0 0
  %3276 = vmatprep.subr.bf16.mxu0 0
  %3277 = vmatpush1.bf16.msra.mxu0 0
  %3278 = vmatprep.subr.bf16.mxu0 0
  %3279 = vmatpush1.bf16.msra.mxu0 0
  %3280 = vmatprep.subr.bf16.mxu0 0
  %3281 = vmatpush1.bf16.msra.mxu0 0
  %3282 = vmatprep.mubr.bf16.mxu0 0
  %3283 = vmatmul.mubr.bf16.gmra.mrb[0].mxu0 %v3184
  %v3284 = vpop.f32.mrb[0].mxu0
  %v3285 = vadd.f32 0.0, %v3284
  %v3286 = vpop.f32.mrb[0].mxu0
  %v3287 = vpop.f32.mrb[0].mxu0
  %v3288 = vpop.f32.mrb[0].mxu0
  %3289 = vdwg.mxu0
  %v3290 = vadd.f32 %v3183, %v3285
  %v3291 = vpack.c.bf16 %v1361, %v1361
  %s3292 = scalar_lea.vmem %s3, 1152
  %v3293 = vld [vmem:[%s3292] sm:$0xf]
  %v3294 = vld [vmem:[%s3292 + $0x4] sm:$0xf]
  %v3295 = vld [vmem:[%s3292 + $0x8] sm:$0xf]
  %v3296 = vld [vmem:[%s3292 + $0xc] sm:$0xf]
  %v3297 = vld [vmem:[%s3292 + $0x10] sm:$0xf]
  %v3298 = vld [vmem:[%s3292 + $0x14] sm:$0xf]
  %v3299 = vld [vmem:[%s3292 + $0x18] sm:$0xf]
  %v3300 = vld [vmem:[%s3292 + $0x1c] sm:$0xf]
  %v3301 = vld [vmem:[%s3292 + $0x20] sm:$0xf]
  %v3302 = vld [vmem:[%s3292 + $0x24] sm:$0xf]
  %v3303 = vld [vmem:[%s3292 + $0x28] sm:$0xf]
  %v3304 = vld [vmem:[%s3292 + $0x2c] sm:$0xf]
  %v3305 = vld [vmem:[%s3292 + $0x30] sm:$0xf]
  %v3306 = vld [vmem:[%s3292 + $0x34] sm:$0xf]
  %v3307 = vld [vmem:[%s3292 + $0x38] sm:$0xf]
  %v3308 = vld [vmem:[%s3292 + $0x3c] sm:$0xf]
  %v3325 = vunpack.c.l.b16 %v3293
  %v3326 = vunpack.c.l.b16 %v3294
  %v3327 = vunpack.c.l.b16 %v3295
  %v3328 = vunpack.c.l.b16 %v3296
  %v3329 = vunpack.c.l.b16 %v3297
  %v3330 = vunpack.c.l.b16 %v3298
  %v3331 = vunpack.c.l.b16 %v3299
  %v3332 = vunpack.c.l.b16 %v3300
  %v3333 = vunpack.c.l.b16 %v3301
  %v3334 = vunpack.c.l.b16 %v3302
  %v3335 = vunpack.c.l.b16 %v3303
  %v3336 = vunpack.c.l.b16 %v3304
  %v3337 = vunpack.c.l.b16 %v3305
  %v3338 = vunpack.c.l.b16 %v3306
  %v3339 = vunpack.c.l.b16 %v3307
  %v3340 = vunpack.c.l.b16 %v3308
  %v3341 = vpack.c.b16 %v3326, %v3325
  %v3342 = vpack.c.b16 %v3328, %v3327
  %v3343 = vpack.c.b16 %v3330, %v3329
  %v3344 = vpack.c.b16 %v3332, %v3331
  %v3345 = vpack.c.b16 %v3334, %v3333
  %v3346 = vpack.c.b16 %v3336, %v3335
  %v3347 = vpack.c.b16 %v3338, %v3337
  %v3348 = vpack.c.b16 %v3340, %v3339
  %3357 = vmatprep.subr.bf16.mxu0 0
  %3358 = vmatpush1.bf16.msra.mxu0 %v3341
  %3359 = vmatprep.subr.bf16.mxu0 0
  %3360 = vmatpush1.bf16.msra.mxu0 %v3342
  %3361 = vmatprep.subr.bf16.mxu0 0
  %3362 = vmatpush1.bf16.msra.mxu0 %v3343
  %3363 = vmatprep.subr.bf16.mxu0 0
  %3364 = vmatpush1.bf16.msra.mxu0 %v3344
  %3365 = vmatprep.subr.bf16.mxu0 0
  %3366 = vmatpush1.bf16.msra.mxu0 %v3345
  %3367 = vmatprep.subr.bf16.mxu0 0
  %3368 = vmatpush1.bf16.msra.mxu0 %v3346
  %3369 = vmatprep.subr.bf16.mxu0 0
  %3370 = vmatpush1.bf16.msra.mxu0 %v3347
  %3371 = vmatprep.subr.bf16.mxu0 0
  %3372 = vmatpush1.bf16.msra.mxu0 %v3348
  %3373 = vmatprep.subr.bf16.mxu0 0
  %3374 = vmatpush1.bf16.msra.mxu0 0
  %3375 = vmatprep.subr.bf16.mxu0 0
  %3376 = vmatpush1.bf16.msra.mxu0 0
  %3377 = vmatprep.subr.bf16.mxu0 0
  %3378 = vmatpush1.bf16.msra.mxu0 0
  %3379 = vmatprep.subr.bf16.mxu0 0
  %3380 = vmatpush1.bf16.msra.mxu0 0
  %3381 = vmatprep.subr.bf16.mxu0 0
  %3382 = vmatpush1.bf16.msra.mxu0 0
  %3383 = vmatprep.subr.bf16.mxu0 0
  %3384 = vmatpush1.bf16.msra.mxu0 0
  %3385 = vmatprep.subr.bf16.mxu0 0
  %3386 = vmatpush1.bf16.msra.mxu0 0
  %3387 = vmatprep.subr.bf16.mxu0 0
  %3388 = vmatpush1.bf16.msra.mxu0 0
  %3389 = vmatprep.mubr.bf16.mxu0 0
  %3390 = vmatmul.mubr.bf16.gmra.mrb[0].mxu0 %v3291
  %v3391 = vpop.f32.mrb[0].mxu0
  %v3392 = vadd.f32 0.0, %v3391
  %v3393 = vpop.f32.mrb[0].mxu0
  %v3394 = vpop.f32.mrb[0].mxu0
  %v3395 = vpop.f32.mrb[0].mxu0
  %3396 = vdwg.mxu0
  %v3397 = vadd.f32 %v3290, %v3392
  %v3398 = vpack.c.bf16 %v1362, %v1362
  %s3399 = scalar_lea.vmem %s3, 1216
  %v3400 = vld [vmem:[%s3399] sm:$0xf]
  %v3401 = vld [vmem:[%s3399 + $0x4] sm:$0xf]
  %v3402 = vld [vmem:[%s3399 + $0x8] sm:$0xf]
  %v3403 = vld [vmem:[%s3399 + $0xc] sm:$0xf]
  %v3404 = vld [vmem:[%s3399 + $0x10] sm:$0xf]
  %v3405 = vld [vmem:[%s3399 + $0x14] sm:$0xf]
  %v3406 = vld [vmem:[%s3399 + $0x18] sm:$0xf]
  %v3407 = vld [vmem:[%s3399 + $0x1c] sm:$0xf]
  %v3408 = vld [vmem:[%s3399 + $0x20] sm:$0xf]
  %v3409 = vld [vmem:[%s3399 + $0x24] sm:$0xf]
  %v3410 = vld [vmem:[%s3399 + $0x28] sm:$0xf]
  %v3411 = vld [vmem:[%s3399 + $0x2c] sm:$0xf]
  %v3412 = vld [vmem:[%s3399 + $0x30] sm:$0xf]
  %v3413 = vld [vmem:[%s3399 + $0x34] sm:$0xf]
  %v3414 = vld [vmem:[%s3399 + $0x38] sm:$0xf]
  %v3415 = vld [vmem:[%s3399 + $0x3c] sm:$0xf]
  %v3432 = vunpack.c.l.b16 %v3400
  %v3433 = vunpack.c.l.b16 %v3401
  %v3434 = vunpack.c.l.b16 %v3402
  %v3435 = vunpack.c.l.b16 %v3403
  %v3436 = vunpack.c.l.b16 %v3404
  %v3437 = vunpack.c.l.b16 %v3405
  %v3438 = vunpack.c.l.b16 %v3406
  %v3439 = vunpack.c.l.b16 %v3407
  %v3440 = vunpack.c.l.b16 %v3408
  %v3441 = vunpack.c.l.b16 %v3409
  %v3442 = vunpack.c.l.b16 %v3410
  %v3443 = vunpack.c.l.b16 %v3411
  %v3444 = vunpack.c.l.b16 %v3412
  %v3445 = vunpack.c.l.b16 %v3413
  %v3446 = vunpack.c.l.b16 %v3414
  %v3447 = vunpack.c.l.b16 %v3415
  %v3448 = vpack.c.b16 %v3433, %v3432
  %v3449 = vpack.c.b16 %v3435, %v3434
  %v3450 = vpack.c.b16 %v3437, %v3436
  %v3451 = vpack.c.b16 %v3439, %v3438
  %v3452 = vpack.c.b16 %v3441, %v3440
  %v3453 = vpack.c.b16 %v3443, %v3442
  %v3454 = vpack.c.b16 %v3445, %v3444
  %v3455 = vpack.c.b16 %v3447, %v3446
  %3464 = vmatprep.subr.bf16.mxu0 0
  %3465 = vmatpush1.bf16.msra.mxu0 %v3448
  %3466 = vmatprep.subr.bf16.mxu0 0
  %3467 = vmatpush1.bf16.msra.mxu0 %v3449
  %3468 = vmatprep.subr.bf16.mxu0 0
  %3469 = vmatpush1.bf16.msra.mxu0 %v3450
  %3470 = vmatprep.subr.bf16.mxu0 0
  %3471 = vmatpush1.bf16.msra.mxu0 %v3451
  %3472 = vmatprep.subr.bf16.mxu0 0
  %3473 = vmatpush1.bf16.msra.mxu0 %v3452
  %3474 = vmatprep.subr.bf16.mxu0 0
  %3475 = vmatpush1.bf16.msra.mxu0 %v3453
  %3476 = vmatprep.subr.bf16.mxu0 0
  %3477 = vmatpush1.bf16.msra.mxu0 %v3454
  %3478 = vmatprep.subr.bf16.mxu0 0
  %3479 = vmatpush1.bf16.msra.mxu0 %v3455
  %3480 = vmatprep.subr.bf16.mxu0 0
  %3481 = vmatpush1.bf16.msra.mxu0 0
  %3482 = vmatprep.subr.bf16.mxu0 0
  %3483 = vmatpush1.bf16.msra.mxu0 0
  %3484 = vmatprep.subr.bf16.mxu0 0
  %3485 = vmatpush1.bf16.msra.mxu0 0
  %3486 = vmatprep.subr.bf16.mxu0 0
  %3487 = vmatpush1.bf16.msra.mxu0 0
  %3488 = vmatprep.subr.bf16.mxu0 0
  %3489 = vmatpush1.bf16.msra.mxu0 0
  %3490 = vmatprep.subr.bf16.mxu0 0
  %3491 = vmatpush1.bf16.msra.mxu0 0
  %3492 = vmatprep.subr.bf16.mxu0 0
  %3493 = vmatpush1.bf16.msra.mxu0 0
  %3494 = vmatprep.subr.bf16.mxu0 0
  %3495 = vmatpush1.bf16.msra.mxu0 0
  %3496 = vmatprep.mubr.bf16.mxu0 0
  %3497 = vmatmul.mubr.bf16.gmra.mrb[0].mxu0 %v3398
  %v3498 = vpop.f32.mrb[0].mxu0
  %v3499 = vadd.f32 0.0, %v3498
  %v3500 = vpop.f32.mrb[0].mxu0
  %v3501 = vpop.f32.mrb[0].mxu0
  %v3502 = vpop.f32.mrb[0].mxu0
  %3503 = vdwg.mxu0
  %v3504 = vadd.f32 %v3397, %v3499
  %v3505 = vpack.c.bf16 %v1363, %v1363
  %s3506 = scalar_lea.vmem %s3, 1280
  %v3507 = vld [vmem:[%s3506] sm:$0xf]
  %v3508 = vld [vmem:[%s3506 + $0x4] sm:$0xf]
  %v3509 = vld [vmem:[%s3506 + $0x8] sm:$0xf]
  %v3510 = vld [vmem:[%s3506 + $0xc] sm:$0xf]
  %v3511 = vld [vmem:[%s3506 + $0x10] sm:$0xf]
  %v3512 = vld [vmem:[%s3506 + $0x14] sm:$0xf]
  %v3513 = vld [vmem:[%s3506 + $0x18] sm:$0xf]
  %v3514 = vld [vmem:[%s3506 + $0x1c] sm:$0xf]
  %v3515 = vld [vmem:[%s3506 + $0x20] sm:$0xf]
  %v3516 = vld [vmem:[%s3506 + $0x24] sm:$0xf]
  %v3517 = vld [vmem:[%s3506 + $0x28] sm:$0xf]
  %v3518 = vld [vmem:[%s3506 + $0x2c] sm:$0xf]
  %v3519 = vld [vmem:[%s3506 + $0x30] sm:$0xf]
  %v3520 = vld [vmem:[%s3506 + $0x34] sm:$0xf]
  %v3521 = vld [vmem:[%s3506 + $0x38] sm:$0xf]
  %v3522 = vld [vmem:[%s3506 + $0x3c] sm:$0xf]
  %v3539 = vunpack.c.l.b16 %v3507
  %v3540 = vunpack.c.l.b16 %v3508
  %v3541 = vunpack.c.l.b16 %v3509
  %v3542 = vunpack.c.l.b16 %v3510
  %v3543 = vunpack.c.l.b16 %v3511
  %v3544 = vunpack.c.l.b16 %v3512
  %v3545 = vunpack.c.l.b16 %v3513
  %v3546 = vunpack.c.l.b16 %v3514
  %v3547 = vunpack.c.l.b16 %v3515
  %v3548 = vunpack.c.l.b16 %v3516
  %v3549 = vunpack.c.l.b16 %v3517
  %v3550 = vunpack.c.l.b16 %v3518
  %v3551 = vunpack.c.l.b16 %v3519
  %v3552 = vunpack.c.l.b16 %v3520
  %v3553 = vunpack.c.l.b16 %v3521
  %v3554 = vunpack.c.l.b16 %v3522
  %v3555 = vpack.c.b16 %v3540, %v3539
  %v3556 = vpack.c.b16 %v3542, %v3541
  %v3557 = vpack.c.b16 %v3544, %v3543
  %v3558 = vpack.c.b16 %v3546, %v3545
  %v3559 = vpack.c.b16 %v3548, %v3547
  %v3560 = vpack.c.b16 %v3550, %v3549
  %v3561 = vpack.c.b16 %v3552, %v3551
  %v3562 = vpack.c.b16 %v3554, %v3553
  %3571 = vmatprep.subr.bf16.mxu0 0
  %3572 = vmatpush1.bf16.msra.mxu0 %v3555
  %3573 = vmatprep.subr.bf16.mxu0 0
  %3574 = vmatpush1.bf16.msra.mxu0 %v3556
  %3575 = vmatprep.subr.bf16.mxu0 0
  %3576 = vmatpush1.bf16.msra.mxu0 %v3557
  %3577 = vmatprep.subr.bf16.mxu0 0
  %3578 = vmatpush1.bf16.msra.mxu0 %v3558
  %3579 = vmatprep.subr.bf16.mxu0 0
  %3580 = vmatpush1.bf16.msra.mxu0 %v3559
  %3581 = vmatprep.subr.bf16.mxu0 0
  %3582 = vmatpush1.bf16.msra.mxu0 %v3560
  %3583 = vmatprep.subr.bf16.mxu0 0
  %3584 = vmatpush1.bf16.msra.mxu0 %v3561
  %3585 = vmatprep.subr.bf16.mxu0 0
  %3586 = vmatpush1.bf16.msra.mxu0 %v3562
  %3587 = vmatprep.subr.bf16.mxu0 0
  %3588 = vmatpush1.bf16.msra.mxu0 0
  %3589 = vmatprep.subr.bf16.mxu0 0
  %3590 = vmatpush1.bf16.msra.mxu0 0
  %3591 = vmatprep.subr.bf16.mxu0 0
  %3592 = vmatpush1.bf16.msra.mxu0 0
  %3593 = vmatprep.subr.bf16.mxu0 0
  %3594 = vmatpush1.bf16.msra.mxu0 0
  %3595 = vmatprep.subr.bf16.mxu0 0
  %3596 = vmatpush1.bf16.msra.mxu0 0
  %3597 = vmatprep.subr.bf16.mxu0 0
  %3598 = vmatpush1.bf16.msra.mxu0 0
  %3599 = vmatprep.subr.bf16.mxu0 0
  %3600 = vmatpush1.bf16.msra.mxu0 0
  %3601 = vmatprep.subr.bf16.mxu0 0
  %3602 = vmatpush1.bf16.msra.mxu0 0
  %3603 = vmatprep.mubr.bf16.mxu0 0
  %3604 = vmatmul.mubr.bf16.gmra.mrb[0].mxu0 %v3505
  %v3605 = vpop.f32.mrb[0].mxu0
  %v3606 = vadd.f32 0.0, %v3605
  %v3607 = vpop.f32.mrb[0].mxu0
  %v3608 = vpop.f32.mrb[0].mxu0
  %v3609 = vpop.f32.mrb[0].mxu0
  %3610 = vdwg.mxu0
  %v3611 = vadd.f32 %v3504, %v3606
  %v3612 = vpack.c.bf16 %v1364, %v1364
  %s3613 = scalar_lea.vmem %s3, 1344
  %v3614 = vld [vmem:[%s3613] sm:$0xf]
  %v3615 = vld [vmem:[%s3613 + $0x4] sm:$0xf]
  %v3616 = vld [vmem:[%s3613 + $0x8] sm:$0xf]
  %v3617 = vld [vmem:[%s3613 + $0xc] sm:$0xf]
  %v3618 = vld [vmem:[%s3613 + $0x10] sm:$0xf]
  %v3619 = vld [vmem:[%s3613 + $0x14] sm:$0xf]
  %v3620 = vld [vmem:[%s3613 + $0x18] sm:$0xf]
  %v3621 = vld [vmem:[%s3613 + $0x1c] sm:$0xf]
  %v3622 = vld [vmem:[%s3613 + $0x20] sm:$0xf]
  %v3623 = vld [vmem:[%s3613 + $0x24] sm:$0xf]
  %v3624 = vld [vmem:[%s3613 + $0x28] sm:$0xf]
  %v3625 = vld [vmem:[%s3613 + $0x2c] sm:$0xf]
  %v3626 = vld [vmem:[%s3613 + $0x30] sm:$0xf]
  %v3627 = vld [vmem:[%s3613 + $0x34] sm:$0xf]
  %v3628 = vld [vmem:[%s3613 + $0x38] sm:$0xf]
  %v3629 = vld [vmem:[%s3613 + $0x3c] sm:$0xf]
  %v3646 = vunpack.c.l.b16 %v3614
  %v3647 = vunpack.c.l.b16 %v3615
  %v3648 = vunpack.c.l.b16 %v3616
  %v3649 = vunpack.c.l.b16 %v3617
  %v3650 = vunpack.c.l.b16 %v3618
  %v3651 = vunpack.c.l.b16 %v3619
  %v3652 = vunpack.c.l.b16 %v3620
  %v3653 = vunpack.c.l.b16 %v3621
  %v3654 = vunpack.c.l.b16 %v3622
  %v3655 = vunpack.c.l.b16 %v3623
  %v3656 = vunpack.c.l.b16 %v3624
  %v3657 = vunpack.c.l.b16 %v3625
  %v3658 = vunpack.c.l.b16 %v3626
  %v3659 = vunpack.c.l.b16 %v3627
  %v3660 = vunpack.c.l.b16 %v3628
  %v3661 = vunpack.c.l.b16 %v3629
  %v3662 = vpack.c.b16 %v3647, %v3646
  %v3663 = vpack.c.b16 %v3649, %v3648
  %v3664 = vpack.c.b16 %v3651, %v3650
  %v3665 = vpack.c.b16 %v3653, %v3652
  %v3666 = vpack.c.b16 %v3655, %v3654
  %v3667 = vpack.c.b16 %v3657, %v3656
  %v3668 = vpack.c.b16 %v3659, %v3658
  %v3669 = vpack.c.b16 %v3661, %v3660
  %3678 = vmatprep.subr.bf16.mxu0 0
  %3679 = vmatpush1.bf16.msra.mxu0 %v3662
  %3680 = vmatprep.subr.bf16.mxu0 0
  %3681 = vmatpush1.bf16.msra.mxu0 %v3663
  %3682 = vmatprep.subr.bf16.mxu0 0
  %3683 = vmatpush1.bf16.msra.mxu0 %v3664
  %3684 = vmatprep.subr.bf16.mxu0 0
  %3685 = vmatpush1.bf16.msra.mxu0 %v3665
  %3686 = vmatprep.subr.bf16.mxu0 0
  %3687 = vmatpush1.bf16.msra.mxu0 %v3666
  %3688 = vmatprep.subr.bf16.mxu0 0
  %3689 = vmatpush1.bf16.msra.mxu0 %v3667
  %3690 = vmatprep.subr.bf16.mxu0 0
  %3691 = vmatpush1.bf16.msra.mxu0 %v3668
  %3692 = vmatprep.subr.bf16.mxu0 0
  %3693 = vmatpush1.bf16.msra.mxu0 %v3669
  %3694 = vmatprep.subr.bf16.mxu0 0
  %3695 = vmatpush1.bf16.msra.mxu0 0
  %3696 = vmatprep.subr.bf16.mxu0 0
  %3697 = vmatpush1.bf16.msra.mxu0 0
  %3698 = vmatprep.subr.bf16.mxu0 0
  %3699 = vmatpush1.bf16.msra.mxu0 0
  %3700 = vmatprep.subr.bf16.mxu0 0
  %3701 = vmatpush1.bf16.msra.mxu0 0
  %3702 = vmatprep.subr.bf16.mxu0 0
  %3703 = vmatpush1.bf16.msra.mxu0 0
  %3704 = vmatprep.subr.bf16.mxu0 0
  %3705 = vmatpush1.bf16.msra.mxu0 0
  %3706 = vmatprep.subr.bf16.mxu0 0
  %3707 = vmatpush1.bf16.msra.mxu0 0
  %3708 = vmatprep.subr.bf16.mxu0 0
  %3709 = vmatpush1.bf16.msra.mxu0 0
  %3710 = vmatprep.mubr.bf16.mxu0 0
  %3711 = vmatmul.mubr.bf16.gmra.mrb[0].mxu0 %v3612
  %v3712 = vpop.f32.mrb[0].mxu0
  %v3713 = vadd.f32 0.0, %v3712
  %v3714 = vpop.f32.mrb[0].mxu0
  %v3715 = vpop.f32.mrb[0].mxu0
  %v3716 = vpop.f32.mrb[0].mxu0
  %3717 = vdwg.mxu0
  %v3718 = vadd.f32 %v3611, %v3713
  %v3719 = vpack.c.bf16 %v1365, %v1365
  %s3720 = scalar_lea.vmem %s3, 1408
  %v3721 = vld [vmem:[%s3720] sm:$0xf]
  %v3722 = vld [vmem:[%s3720 + $0x4] sm:$0xf]
  %v3723 = vld [vmem:[%s3720 + $0x8] sm:$0xf]
  %v3724 = vld [vmem:[%s3720 + $0xc] sm:$0xf]
  %v3725 = vld [vmem:[%s3720 + $0x10] sm:$0xf]
  %v3726 = vld [vmem:[%s3720 + $0x14] sm:$0xf]
  %v3727 = vld [vmem:[%s3720 + $0x18] sm:$0xf]
  %v3728 = vld [vmem:[%s3720 + $0x1c] sm:$0xf]
  %v3729 = vld [vmem:[%s3720 + $0x20] sm:$0xf]
  %v3730 = vld [vmem:[%s3720 + $0x24] sm:$0xf]
  %v3731 = vld [vmem:[%s3720 + $0x28] sm:$0xf]
  %v3732 = vld [vmem:[%s3720 + $0x2c] sm:$0xf]
  %v3733 = vld [vmem:[%s3720 + $0x30] sm:$0xf]
  %v3734 = vld [vmem:[%s3720 + $0x34] sm:$0xf]
  %v3735 = vld [vmem:[%s3720 + $0x38] sm:$0xf]
  %v3736 = vld [vmem:[%s3720 + $0x3c] sm:$0xf]
  %v3753 = vunpack.c.l.b16 %v3721
  %v3754 = vunpack.c.l.b16 %v3722
  %v3755 = vunpack.c.l.b16 %v3723
  %v3756 = vunpack.c.l.b16 %v3724
  %v3757 = vunpack.c.l.b16 %v3725
  %v3758 = vunpack.c.l.b16 %v3726
  %v3759 = vunpack.c.l.b16 %v3727
  %v3760 = vunpack.c.l.b16 %v3728
  %v3761 = vunpack.c.l.b16 %v3729
  %v3762 = vunpack.c.l.b16 %v3730
  %v3763 = vunpack.c.l.b16 %v3731
  %v3764 = vunpack.c.l.b16 %v3732
  %v3765 = vunpack.c.l.b16 %v3733
  %v3766 = vunpack.c.l.b16 %v3734
  %v3767 = vunpack.c.l.b16 %v3735
  %v3768 = vunpack.c.l.b16 %v3736
  %v3769 = vpack.c.b16 %v3754, %v3753
  %v3770 = vpack.c.b16 %v3756, %v3755
  %v3771 = vpack.c.b16 %v3758, %v3757
  %v3772 = vpack.c.b16 %v3760, %v3759
  %v3773 = vpack.c.b16 %v3762, %v3761
  %v3774 = vpack.c.b16 %v3764, %v3763
  %v3775 = vpack.c.b16 %v3766, %v3765
  %v3776 = vpack.c.b16 %v3768, %v3767
  %3785 = vmatprep.subr.bf16.mxu0 0
  %3786 = vmatpush1.bf16.msra.mxu0 %v3769
  %3787 = vmatprep.subr.bf16.mxu0 0
  %3788 = vmatpush1.bf16.msra.mxu0 %v3770
  %3789 = vmatprep.subr.bf16.mxu0 0
  %3790 = vmatpush1.bf16.msra.mxu0 %v3771
  %3791 = vmatprep.subr.bf16.mxu0 0
  %3792 = vmatpush1.bf16.msra.mxu0 %v3772
  %3793 = vmatprep.subr.bf16.mxu0 0
  %3794 = vmatpush1.bf16.msra.mxu0 %v3773
  %3795 = vmatprep.subr.bf16.mxu0 0
  %3796 = vmatpush1.bf16.msra.mxu0 %v3774
  %3797 = vmatprep.subr.bf16.mxu0 0
  %3798 = vmatpush1.bf16.msra.mxu0 %v3775
  %3799 = vmatprep.subr.bf16.mxu0 0
  %3800 = vmatpush1.bf16.msra.mxu0 %v3776
  %3801 = vmatprep.subr.bf16.mxu0 0
  %3802 = vmatpush1.bf16.msra.mxu0 0
  %3803 = vmatprep.subr.bf16.mxu0 0
  %3804 = vmatpush1.bf16.msra.mxu0 0
  %3805 = vmatprep.subr.bf16.mxu0 0
  %3806 = vmatpush1.bf16.msra.mxu0 0
  %3807 = vmatprep.subr.bf16.mxu0 0
  %3808 = vmatpush1.bf16.msra.mxu0 0
  %3809 = vmatprep.subr.bf16.mxu0 0
  %3810 = vmatpush1.bf16.msra.mxu0 0
  %3811 = vmatprep.subr.bf16.mxu0 0
  %3812 = vmatpush1.bf16.msra.mxu0 0
  %3813 = vmatprep.subr.bf16.mxu0 0
  %3814 = vmatpush1.bf16.msra.mxu0 0
  %3815 = vmatprep.subr.bf16.mxu0 0
  %3816 = vmatpush1.bf16.msra.mxu0 0
  %3817 = vmatprep.mubr.bf16.mxu0 0
  %3818 = vmatmul.mubr.bf16.gmra.mrb[0].mxu0 %v3719
  %v3819 = vpop.f32.mrb[0].mxu0
  %v3820 = vadd.f32 0.0, %v3819
  %v3821 = vpop.f32.mrb[0].mxu0
  %v3822 = vpop.f32.mrb[0].mxu0
  %v3823 = vpop.f32.mrb[0].mxu0
  %3824 = vdwg.mxu0
  %v3825 = vadd.f32 %v3718, %v3820
  %v3826 = vpack.c.bf16 %v1366, %v1366
  %s3827 = scalar_lea.vmem %s3, 1472
  %v3828 = vld [vmem:[%s3827] sm:$0xf]
  %v3829 = vld [vmem:[%s3827 + $0x4] sm:$0xf]
  %v3830 = vld [vmem:[%s3827 + $0x8] sm:$0xf]
  %v3831 = vld [vmem:[%s3827 + $0xc] sm:$0xf]
  %v3832 = vld [vmem:[%s3827 + $0x10] sm:$0xf]
  %v3833 = vld [vmem:[%s3827 + $0x14] sm:$0xf]
  %v3834 = vld [vmem:[%s3827 + $0x18] sm:$0xf]
  %v3835 = vld [vmem:[%s3827 + $0x1c] sm:$0xf]
  %v3836 = vld [vmem:[%s3827 + $0x20] sm:$0xf]
  %v3837 = vld [vmem:[%s3827 + $0x24] sm:$0xf]
  %v3838 = vld [vmem:[%s3827 + $0x28] sm:$0xf]
  %v3839 = vld [vmem:[%s3827 + $0x2c] sm:$0xf]
  %v3840 = vld [vmem:[%s3827 + $0x30] sm:$0xf]
  %v3841 = vld [vmem:[%s3827 + $0x34] sm:$0xf]
  %v3842 = vld [vmem:[%s3827 + $0x38] sm:$0xf]
  %v3843 = vld [vmem:[%s3827 + $0x3c] sm:$0xf]
  %v3860 = vunpack.c.l.b16 %v3828
  %v3861 = vunpack.c.l.b16 %v3829
  %v3862 = vunpack.c.l.b16 %v3830
  %v3863 = vunpack.c.l.b16 %v3831
  %v3864 = vunpack.c.l.b16 %v3832
  %v3865 = vunpack.c.l.b16 %v3833
  %v3866 = vunpack.c.l.b16 %v3834
  %v3867 = vunpack.c.l.b16 %v3835
  %v3868 = vunpack.c.l.b16 %v3836
  %v3869 = vunpack.c.l.b16 %v3837
  %v3870 = vunpack.c.l.b16 %v3838
  %v3871 = vunpack.c.l.b16 %v3839
  %v3872 = vunpack.c.l.b16 %v3840
  %v3873 = vunpack.c.l.b16 %v3841
  %v3874 = vunpack.c.l.b16 %v3842
  %v3875 = vunpack.c.l.b16 %v3843
  %v3876 = vpack.c.b16 %v3861, %v3860
  %v3877 = vpack.c.b16 %v3863, %v3862
  %v3878 = vpack.c.b16 %v3865, %v3864
  %v3879 = vpack.c.b16 %v3867, %v3866
  %v3880 = vpack.c.b16 %v3869, %v3868
  %v3881 = vpack.c.b16 %v3871, %v3870
  %v3882 = vpack.c.b16 %v3873, %v3872
  %v3883 = vpack.c.b16 %v3875, %v3874
  %3892 = vmatprep.subr.bf16.mxu0 0
  %3893 = vmatpush1.bf16.msra.mxu0 %v3876
  %3894 = vmatprep.subr.bf16.mxu0 0
  %3895 = vmatpush1.bf16.msra.mxu0 %v3877
  %3896 = vmatprep.subr.bf16.mxu0 0
  %3897 = vmatpush1.bf16.msra.mxu0 %v3878
  %3898 = vmatprep.subr.bf16.mxu0 0
  %3899 = vmatpush1.bf16.msra.mxu0 %v3879
  %3900 = vmatprep.subr.bf16.mxu0 0
  %3901 = vmatpush1.bf16.msra.mxu0 %v3880
  %3902 = vmatprep.subr.bf16.mxu0 0
  %3903 = vmatpush1.bf16.msra.mxu0 %v3881
  %3904 = vmatprep.subr.bf16.mxu0 0
  %3905 = vmatpush1.bf16.msra.mxu0 %v3882
  %3906 = vmatprep.subr.bf16.mxu0 0
  %3907 = vmatpush1.bf16.msra.mxu0 %v3883
  %3908 = vmatprep.subr.bf16.mxu0 0
  %3909 = vmatpush1.bf16.msra.mxu0 0
  %3910 = vmatprep.subr.bf16.mxu0 0
  %3911 = vmatpush1.bf16.msra.mxu0 0
  %3912 = vmatprep.subr.bf16.mxu0 0
  %3913 = vmatpush1.bf16.msra.mxu0 0
  %3914 = vmatprep.subr.bf16.mxu0 0
  %3915 = vmatpush1.bf16.msra.mxu0 0
  %3916 = vmatprep.subr.bf16.mxu0 0
  %3917 = vmatpush1.bf16.msra.mxu0 0
  %3918 = vmatprep.subr.bf16.mxu0 0
  %3919 = vmatpush1.bf16.msra.mxu0 0
  %3920 = vmatprep.subr.bf16.mxu0 0
  %3921 = vmatpush1.bf16.msra.mxu0 0
  %3922 = vmatprep.subr.bf16.mxu0 0
  %3923 = vmatpush1.bf16.msra.mxu0 0
  %3924 = vmatprep.mubr.bf16.mxu0 0
  %3925 = vmatmul.mubr.bf16.gmra.mrb[0].mxu0 %v3826
  %v3926 = vpop.f32.mrb[0].mxu0
  %v3927 = vadd.f32 0.0, %v3926
  %v3928 = vpop.f32.mrb[0].mxu0
  %v3929 = vpop.f32.mrb[0].mxu0
  %v3930 = vpop.f32.mrb[0].mxu0
  %3931 = vdwg.mxu0
  %v3932 = vadd.f32 %v3825, %v3927
  %v3933 = vpack.c.bf16 %v1367, %v1367
  %s3934 = scalar_lea.vmem %s3, 1536
  %v3935 = vld [vmem:[%s3934] sm:$0xf]
  %v3936 = vld [vmem:[%s3934 + $0x4] sm:$0xf]
  %v3937 = vld [vmem:[%s3934 + $0x8] sm:$0xf]
  %v3938 = vld [vmem:[%s3934 + $0xc] sm:$0xf]
  %v3939 = vld [vmem:[%s3934 + $0x10] sm:$0xf]
  %v3940 = vld [vmem:[%s3934 + $0x14] sm:$0xf]
  %v3941 = vld [vmem:[%s3934 + $0x18] sm:$0xf]
  %v3942 = vld [vmem:[%s3934 + $0x1c] sm:$0xf]
  %v3943 = vld [vmem:[%s3934 + $0x20] sm:$0xf]
  %v3944 = vld [vmem:[%s3934 + $0x24] sm:$0xf]
  %v3945 = vld [vmem:[%s3934 + $0x28] sm:$0xf]
  %v3946 = vld [vmem:[%s3934 + $0x2c] sm:$0xf]
  %v3947 = vld [vmem:[%s3934 + $0x30] sm:$0xf]
  %v3948 = vld [vmem:[%s3934 + $0x34] sm:$0xf]
  %v3949 = vld [vmem:[%s3934 + $0x38] sm:$0xf]
  %v3950 = vld [vmem:[%s3934 + $0x3c] sm:$0xf]
  %v3967 = vunpack.c.l.b16 %v3935
  %v3968 = vunpack.c.l.b16 %v3936
  %v3969 = vunpack.c.l.b16 %v3937
  %v3970 = vunpack.c.l.b16 %v3938
  %v3971 = vunpack.c.l.b16 %v3939
  %v3972 = vunpack.c.l.b16 %v3940
  %v3973 = vunpack.c.l.b16 %v3941
  %v3974 = vunpack.c.l.b16 %v3942
  %v3975 = vunpack.c.l.b16 %v3943
  %v3976 = vunpack.c.l.b16 %v3944
  %v3977 = vunpack.c.l.b16 %v3945
  %v3978 = vunpack.c.l.b16 %v3946
  %v3979 = vunpack.c.l.b16 %v3947
  %v3980 = vunpack.c.l.b16 %v3948
  %v3981 = vunpack.c.l.b16 %v3949
  %v3982 = vunpack.c.l.b16 %v3950
  %v3983 = vpack.c.b16 %v3968, %v3967
  %v3984 = vpack.c.b16 %v3970, %v3969
  %v3985 = vpack.c.b16 %v3972, %v3971
  %v3986 = vpack.c.b16 %v3974, %v3973
  %v3987 = vpack.c.b16 %v3976, %v3975
  %v3988 = vpack.c.b16 %v3978, %v3977
  %v3989 = vpack.c.b16 %v3980, %v3979
  %v3990 = vpack.c.b16 %v3982, %v3981
  %3999 = vmatprep.subr.bf16.mxu0 0
  %4000 = vmatpush1.bf16.msra.mxu0 %v3983
  %4001 = vmatprep.subr.bf16.mxu0 0
  %4002 = vmatpush1.bf16.msra.mxu0 %v3984
  %4003 = vmatprep.subr.bf16.mxu0 0
  %4004 = vmatpush1.bf16.msra.mxu0 %v3985
  %4005 = vmatprep.subr.bf16.mxu0 0
  %4006 = vmatpush1.bf16.msra.mxu0 %v3986
  %4007 = vmatprep.subr.bf16.mxu0 0
  %4008 = vmatpush1.bf16.msra.mxu0 %v3987
  %4009 = vmatprep.subr.bf16.mxu0 0
  %4010 = vmatpush1.bf16.msra.mxu0 %v3988
  %4011 = vmatprep.subr.bf16.mxu0 0
  %4012 = vmatpush1.bf16.msra.mxu0 %v3989
  %4013 = vmatprep.subr.bf16.mxu0 0
  %4014 = vmatpush1.bf16.msra.mxu0 %v3990
  %4015 = vmatprep.subr.bf16.mxu0 0
  %4016 = vmatpush1.bf16.msra.mxu0 0
  %4017 = vmatprep.subr.bf16.mxu0 0
  %4018 = vmatpush1.bf16.msra.mxu0 0
  %4019 = vmatprep.subr.bf16.mxu0 0
  %4020 = vmatpush1.bf16.msra.mxu0 0
  %4021 = vmatprep.subr.bf16.mxu0 0
  %4022 = vmatpush1.bf16.msra.mxu0 0
  %4023 = vmatprep.subr.bf16.mxu0 0
  %4024 = vmatpush1.bf16.msra.mxu0 0
  %4025 = vmatprep.subr.bf16.mxu0 0
  %4026 = vmatpush1.bf16.msra.mxu0 0
  %4027 = vmatprep.subr.bf16.mxu0 0
  %4028 = vmatpush1.bf16.msra.mxu0 0
  %4029 = vmatprep.subr.bf16.mxu0 0
  %4030 = vmatpush1.bf16.msra.mxu0 0
  %4031 = vmatprep.mubr.bf16.mxu0 0
  %4032 = vmatmul.mubr.bf16.gmra.mrb[0].mxu0 %v3933
  %v4033 = vpop.f32.mrb[0].mxu0
  %v4034 = vadd.f32 0.0, %v4033
  %v4035 = vpop.f32.mrb[0].mxu0
  %v4036 = vpop.f32.mrb[0].mxu0
  %v4037 = vpop.f32.mrb[0].mxu0
  %4038 = vdwg.mxu0
  %v4039 = vadd.f32 %v3932, %v4034
  %v4040 = vld [vmem:[%s4] sm:$0x1]
  %v4042 = vlaneseq
  %v4043 = vshrl.u32 %v4042, 7
  %v4044 = vsub.s32 0, %v4043
  %v4045 = vrot.slane %v4040, %v4044
  %v4047 = vadd.f32 %v4039, %v4045
  %v4048 = vmax.f32 %v4047, 0.0
  %v4049 = vpack.c.bf16 %v4048, %v4048
  %v4050 = vld [vmem:[%s5] sm:$0xf]
  %v4051 = vld [vmem:[%s5 + $0x4] sm:$0xf]
  %v4052 = vld [vmem:[%s5 + $0x8] sm:$0xf]
  %v4053 = vld [vmem:[%s5 + $0xc] sm:$0xf]
  %v4054 = vld [vmem:[%s5 + $0x10] sm:$0xf]
  %v4055 = vld [vmem:[%s5 + $0x14] sm:$0xf]
  %v4056 = vld [vmem:[%s5 + $0x18] sm:$0xf]
  %v4057 = vld [vmem:[%s5 + $0x1c] sm:$0xf]
  %v4058 = vld [vmem:[%s5 + $0x20] sm:$0xf]
  %v4059 = vld [vmem:[%s5 + $0x24] sm:$0xf]
  %v4060 = vld [vmem:[%s5 + $0x28] sm:$0xf]
  %v4061 = vld [vmem:[%s5 + $0x2c] sm:$0xf]
  %v4062 = vld [vmem:[%s5 + $0x30] sm:$0xf]
  %v4063 = vld [vmem:[%s5 + $0x34] sm:$0xf]
  %v4064 = vld [vmem:[%s5 + $0x38] sm:$0xf]
  %v4065 = vld [vmem:[%s5 + $0x3c] sm:$0xf]
  %v4066 = vld [vmem:[%s6] sm:$0x1]
  %v4068 = vlaneseq
  %v4069 = vshrl.u32 %v4068, 7
  %v4070 = vsub.s32 0, %v4069
  %v4071 = vrot.slane %v4066, %v4070
  %v4089 = vunpack.c.l.b16 %v4050
  %v4090 = vunpack.c.l.b16 %v4051
  %v4091 = vunpack.c.l.b16 %v4052
  %v4092 = vunpack.c.l.b16 %v4053
  %v4093 = vunpack.c.l.b16 %v4054
  %v4094 = vunpack.c.l.b16 %v4055
  %v4095 = vunpack.c.l.b16 %v4056
  %v4096 = vunpack.c.l.b16 %v4057
  %v4097 = vunpack.c.l.b16 %v4058
  %v4098 = vunpack.c.l.b16 %v4059
  %v4099 = vunpack.c.l.b16 %v4060
  %v4100 = vunpack.c.l.b16 %v4061
  %v4101 = vunpack.c.l.b16 %v4062
  %v4102 = vunpack.c.l.b16 %v4063
  %v4103 = vunpack.c.l.b16 %v4064
  %v4104 = vunpack.c.l.b16 %v4065
  %v4105 = vpack.c.b16 %v4090, %v4089
  %v4106 = vpack.c.b16 %v4092, %v4091
  %v4107 = vpack.c.b16 %v4094, %v4093
  %v4108 = vpack.c.b16 %v4096, %v4095
  %v4109 = vpack.c.b16 %v4098, %v4097
  %v4110 = vpack.c.b16 %v4100, %v4099
  %v4111 = vpack.c.b16 %v4102, %v4101
  %v4112 = vpack.c.b16 %v4104, %v4103
  %4121 = vmatprep.subr.bf16.mxu0 0
  %4122 = vmatpush1.bf16.msra.mxu0 %v4105
  %4123 = vmatprep.subr.bf16.mxu0 0
  %4124 = vmatpush1.bf16.msra.mxu0 %v4106
  %4125 = vmatprep.subr.bf16.mxu0 0
  %4126 = vmatpush1.bf16.msra.mxu0 %v4107
  %4127 = vmatprep.subr.bf16.mxu0 0
  %4128 = vmatpush1.bf16.msra.mxu0 %v4108
  %4129 = vmatprep.subr.bf16.mxu0 0
  %4130 = vmatpush1.bf16.msra.mxu0 %v4109
  %4131 = vmatprep.subr.bf16.mxu0 0
  %4132 = vmatpush1.bf16.msra.mxu0 %v4110
  %4133 = vmatprep.subr.bf16.mxu0 0
  %4134 = vmatpush1.bf16.msra.mxu0 %v4111
  %4135 = vmatprep.subr.bf16.mxu0 0
  %4136 = vmatpush1.bf16.msra.mxu0 %v4112
  %4137 = vmatprep.subr.bf16.mxu0 0
  %4138 = vmatpush1.bf16.msra.mxu0 0
  %4139 = vmatprep.subr.bf16.mxu0 0
  %4140 = vmatpush1.bf16.msra.mxu0 0
  %4141 = vmatprep.subr.bf16.mxu0 0
  %4142 = vmatpush1.bf16.msra.mxu0 0
  %4143 = vmatprep.subr.bf16.mxu0 0
  %4144 = vmatpush1.bf16.msra.mxu0 0
  %4145 = vmatprep.subr.bf16.mxu0 0
  %4146 = vmatpush1.bf16.msra.mxu0 0
  %4147 = vmatprep.subr.bf16.mxu0 0
  %4148 = vmatpush1.bf16.msra.mxu0 0
  %4149 = vmatprep.subr.bf16.mxu0 0
  %4150 = vmatpush1.bf16.msra.mxu0 0
  %4151 = vmatprep.subr.bf16.mxu0 0
  %4152 = vmatpush1.bf16.msra.mxu0 0
  %4153 = vmatprep.mubr.bf16.mxu0 0
  %4154 = vmatmul.mubr.bf16.gmra.mrb[0].mxu0 %v4049
  %v4155 = vpop.f32.mrb[0].mxu0
  %v4156 = vadd.f32 %v4071, %v4155
  %v4157 = vpop.f32.mrb[0].mxu0
  %v4158 = vpop.f32.mrb[0].mxu0
  %v4159 = vpop.f32.mrb[0].mxu0
  %4160 = vdwg.mxu0
  %v4161 = vmax.f32 %v4156, 0.0
  %v4162 = vpack.c.bf16 %v4161, %v4161
  %v4163 = vld [vmem:[%s7] sm:$0xf]
  %v4164 = vld [vmem:[%s7 + $0x4] sm:$0xf]
  %v4165 = vld [vmem:[%s7 + $0x8] sm:$0xf]
  %v4166 = vld [vmem:[%s7 + $0xc] sm:$0xf]
  %v4167 = vld [vmem:[%s7 + $0x10] sm:$0xf]
  %v4168 = vld [vmem:[%s7 + $0x14] sm:$0xf]
  %v4169 = vld [vmem:[%s7 + $0x18] sm:$0xf]
  %v4170 = vld [vmem:[%s7 + $0x1c] sm:$0xf]
  %v4171 = vld [vmem:[%s7 + $0x20] sm:$0xf]
  %v4172 = vld [vmem:[%s7 + $0x24] sm:$0xf]
  %v4173 = vld [vmem:[%s7 + $0x28] sm:$0xf]
  %v4174 = vld [vmem:[%s7 + $0x2c] sm:$0xf]
  %v4175 = vld [vmem:[%s7 + $0x30] sm:$0xf]
  %v4176 = vld [vmem:[%s7 + $0x34] sm:$0xf]
  %v4177 = vld [vmem:[%s7 + $0x38] sm:$0xf]
  %v4178 = vld [vmem:[%s7 + $0x3c] sm:$0xf]
  %v4179 = vld [vmem:[%s8] sm:$0x1]
  %v4181 = vlaneseq
  %v4182 = vshrl.u32 %v4181, 7
  %v4183 = vsub.s32 0, %v4182
  %v4184 = vrot.slane %v4179, %v4183
  %v4202 = vunpack.c.l.b16 %v4163
  %v4203 = vunpack.c.l.b16 %v4164
  %v4204 = vunpack.c.l.b16 %v4165
  %v4205 = vunpack.c.l.b16 %v4166
  %v4206 = vunpack.c.l.b16 %v4167
  %v4207 = vunpack.c.l.b16 %v4168
  %v4208 = vunpack.c.l.b16 %v4169
  %v4209 = vunpack.c.l.b16 %v4170
  %v4210 = vunpack.c.l.b16 %v4171
  %v4211 = vunpack.c.l.b16 %v4172
  %v4212 = vunpack.c.l.b16 %v4173
  %v4213 = vunpack.c.l.b16 %v4174
  %v4214 = vunpack.c.l.b16 %v4175
  %v4215 = vunpack.c.l.b16 %v4176
  %v4216 = vunpack.c.l.b16 %v4177
  %v4217 = vunpack.c.l.b16 %v4178
  %v4218 = vpack.c.b16 %v4203, %v4202
  %v4219 = vpack.c.b16 %v4205, %v4204
  %v4220 = vpack.c.b16 %v4207, %v4206
  %v4221 = vpack.c.b16 %v4209, %v4208
  %v4222 = vpack.c.b16 %v4211, %v4210
  %v4223 = vpack.c.b16 %v4213, %v4212
  %v4224 = vpack.c.b16 %v4215, %v4214
  %v4225 = vpack.c.b16 %v4217, %v4216
  %4234 = vmatprep.subr.bf16.mxu0 0
  %4235 = vmatpush1.bf16.msra.mxu0 %v4218
  %4236 = vmatprep.subr.bf16.mxu0 0
  %4237 = vmatpush1.bf16.msra.mxu0 %v4219
  %4238 = vmatprep.subr.bf16.mxu0 0
  %4239 = vmatpush1.bf16.msra.mxu0 %v4220
  %4240 = vmatprep.subr.bf16.mxu0 0
  %4241 = vmatpush1.bf16.msra.mxu0 %v4221
  %4242 = vmatprep.subr.bf16.mxu0 0
  %4243 = vmatpush1.bf16.msra.mxu0 %v4222
  %4244 = vmatprep.subr.bf16.mxu0 0
  %4245 = vmatpush1.bf16.msra.mxu0 %v4223
  %4246 = vmatprep.subr.bf16.mxu0 0
  %4247 = vmatpush1.bf16.msra.mxu0 %v4224
  %4248 = vmatprep.subr.bf16.mxu0 0
  %4249 = vmatpush1.bf16.msra.mxu0 %v4225
  %4250 = vmatprep.subr.bf16.mxu0 0
  %4251 = vmatpush1.bf16.msra.mxu0 0
  %4252 = vmatprep.subr.bf16.mxu0 0
  %4253 = vmatpush1.bf16.msra.mxu0 0
  %4254 = vmatprep.subr.bf16.mxu0 0
  %4255 = vmatpush1.bf16.msra.mxu0 0
  %4256 = vmatprep.subr.bf16.mxu0 0
  %4257 = vmatpush1.bf16.msra.mxu0 0
  %4258 = vmatprep.subr.bf16.mxu0 0
  %4259 = vmatpush1.bf16.msra.mxu0 0
  %4260 = vmatprep.subr.bf16.mxu0 0
  %4261 = vmatpush1.bf16.msra.mxu0 0
  %4262 = vmatprep.subr.bf16.mxu0 0
  %4263 = vmatpush1.bf16.msra.mxu0 0
  %4264 = vmatprep.subr.bf16.mxu0 0
  %4265 = vmatpush1.bf16.msra.mxu0 0
  %4266 = vmatprep.mubr.bf16.mxu0 0
  %4267 = vmatmul.mubr.bf16.gmra.mrb[0].mxu0 %v4162
  %v4268 = vpop.f32.mrb[0].mxu0
  %v4269 = vadd.f32 %v4184, %v4268
  %v4270 = vpop.f32.mrb[0].mxu0
  %v4271 = vpop.f32.mrb[0].mxu0
  %v4272 = vpop.f32.mrb[0].mxu0
  %4273 = vdwg.mxu0
  %v4274 = vmax.f32 %v4269, 0.0
  %v4275 = vpack.c.bf16 %v4274, %v4274
  %v4276 = vld [vmem:[%s9] sm:$0xf]
  %v4277 = vld [vmem:[%s9 + $0x4] sm:$0xf]
  %v4278 = vld [vmem:[%s9 + $0x8] sm:$0xf]
  %v4279 = vld [vmem:[%s9 + $0xc] sm:$0xf]
  %v4280 = vld [vmem:[%s9 + $0x10] sm:$0xf]
  %v4281 = vld [vmem:[%s9 + $0x14] sm:$0xf]
  %v4282 = vld [vmem:[%s9 + $0x18] sm:$0xf]
  %v4283 = vld [vmem:[%s9 + $0x1c] sm:$0xf]
  %v4284 = vld [vmem:[%s9 + $0x20] sm:$0xf]
  %v4285 = vld [vmem:[%s9 + $0x24] sm:$0xf]
  %v4286 = vld [vmem:[%s9 + $0x28] sm:$0xf]
  %v4287 = vld [vmem:[%s9 + $0x2c] sm:$0xf]
  %v4288 = vld [vmem:[%s9 + $0x30] sm:$0xf]
  %v4289 = vld [vmem:[%s9 + $0x34] sm:$0xf]
  %v4290 = vld [vmem:[%s9 + $0x38] sm:$0xf]
  %v4291 = vld [vmem:[%s9 + $0x3c] sm:$0xf]
  %v4292 = vld [vmem:[%s10] sm:$0x1]
  %v4294 = vlaneseq
  %v4295 = vshrl.u32 %v4294, 7
  %v4296 = vsub.s32 0, %v4295
  %v4297 = vrot.slane %v4292, %v4296
  %v4315 = vunpack.c.l.b16 %v4276
  %v4316 = vunpack.c.l.b16 %v4277
  %v4317 = vunpack.c.l.b16 %v4278
  %v4318 = vunpack.c.l.b16 %v4279
  %v4319 = vunpack.c.l.b16 %v4280
  %v4320 = vunpack.c.l.b16 %v4281
  %v4321 = vunpack.c.l.b16 %v4282
  %v4322 = vunpack.c.l.b16 %v4283
  %v4323 = vunpack.c.l.b16 %v4284
  %v4324 = vunpack.c.l.b16 %v4285
  %v4325 = vunpack.c.l.b16 %v4286
  %v4326 = vunpack.c.l.b16 %v4287
  %v4327 = vunpack.c.l.b16 %v4288
  %v4328 = vunpack.c.l.b16 %v4289
  %v4329 = vunpack.c.l.b16 %v4290
  %v4330 = vunpack.c.l.b16 %v4291
  %v4331 = vpack.c.b16 %v4316, %v4315
  %v4332 = vpack.c.b16 %v4318, %v4317
  %v4333 = vpack.c.b16 %v4320, %v4319
  %v4334 = vpack.c.b16 %v4322, %v4321
  %v4335 = vpack.c.b16 %v4324, %v4323
  %v4336 = vpack.c.b16 %v4326, %v4325
  %v4337 = vpack.c.b16 %v4328, %v4327
  %v4338 = vpack.c.b16 %v4330, %v4329
  %4347 = vmatprep.subr.bf16.mxu0 0
  %4348 = vmatpush1.bf16.msra.mxu0 %v4331
  %4349 = vmatprep.subr.bf16.mxu0 0
  %4350 = vmatpush1.bf16.msra.mxu0 %v4332
  %4351 = vmatprep.subr.bf16.mxu0 0
  %4352 = vmatpush1.bf16.msra.mxu0 %v4333
  %4353 = vmatprep.subr.bf16.mxu0 0
  %4354 = vmatpush1.bf16.msra.mxu0 %v4334
  %4355 = vmatprep.subr.bf16.mxu0 0
  %4356 = vmatpush1.bf16.msra.mxu0 %v4335
  %4357 = vmatprep.subr.bf16.mxu0 0
  %4358 = vmatpush1.bf16.msra.mxu0 %v4336
  %4359 = vmatprep.subr.bf16.mxu0 0
  %4360 = vmatpush1.bf16.msra.mxu0 %v4337
  %4361 = vmatprep.subr.bf16.mxu0 0
  %4362 = vmatpush1.bf16.msra.mxu0 %v4338
  %4363 = vmatprep.subr.bf16.mxu0 0
  %4364 = vmatpush1.bf16.msra.mxu0 0
  %4365 = vmatprep.subr.bf16.mxu0 0
  %4366 = vmatpush1.bf16.msra.mxu0 0
  %4367 = vmatprep.subr.bf16.mxu0 0
  %4368 = vmatpush1.bf16.msra.mxu0 0
  %4369 = vmatprep.subr.bf16.mxu0 0
  %4370 = vmatpush1.bf16.msra.mxu0 0
  %4371 = vmatprep.subr.bf16.mxu0 0
  %4372 = vmatpush1.bf16.msra.mxu0 0
  %4373 = vmatprep.subr.bf16.mxu0 0
  %4374 = vmatpush1.bf16.msra.mxu0 0
  %4375 = vmatprep.subr.bf16.mxu0 0
  %4376 = vmatpush1.bf16.msra.mxu0 0
  %4377 = vmatprep.subr.bf16.mxu0 0
  %4378 = vmatpush1.bf16.msra.mxu0 0
  %4379 = vmatprep.mubr.bf16.mxu0 0
  %4380 = vmatmul.mubr.bf16.gmra.mrb[0].mxu0 %v4275
  %v4381 = vpop.f32.mrb[0].mxu0
  %v4382 = vadd.f32 %v4297, %v4381
  %v4383 = vpop.f32.mrb[0].mxu0
  %v4384 = vpop.f32.mrb[0].mxu0
  %v4385 = vpop.f32.mrb[0].mxu0
  %4386 = vdwg.mxu0
  %4387 = vst [vmem:[%s11] sm:$0xff] %v4382
  // Predicated region
  $region46: #{lenet5_forward.3} parent=0 // pred_check
    _
  $region47: #{lenet5_forward.3} parent=0 // pred_check_branch
    %4389 = sbr.rel (0) target = $region49
  $region48: #{lenet5_forward.3} parent=0 // pred_region
    _
  $region49: #{lenet5_forward.3} parent=0 // pred_fallthru
    _
  // Predicated region
  $region50: #{lenet5_forward.3} parent=0 // pred_check
    _
  $region51: #{lenet5_forward.3} parent=0 // pred_check_branch
    %4391 = sbr.rel (0) target = $region53
  $region52: #{lenet5_forward.3} parent=0 // pred_region
    _
  $region53: #{lenet5_forward.3} parent=0 // pred_fallthru
    _

</llo_original>
